<compile_context>
chip_gen: v7x
topology: tpu7x:2x2x1
jax: 0.10.0
libtpu: 0.0.40
codegen_flags: <defaults>
</compile_context>

<pallas_src>
import functools

import jax
import jax.numpy as jnp
import numpy as np
from jax.experimental import pallas as pl
from jax.experimental.pallas import tpu as pltpu

LANE = 128                      # native TPU lane tile
_COMPUTE_DTYPE = jnp.bfloat16   # MXU matmul operand dtype; accumulation is f32


# ----------------------------------------------------------------------------
# Fused kernel: [3x3 conv -> BN(eval) -> ReLU] x 2, one image per grid step.
# ----------------------------------------------------------------------------
def _fused_conv_bn_relu_x2_kernel(x_ref, w1_ref, s1_ref, w2_ref, s2_ref,
                                  o_ref, pad_ref, lhs_ref, *, H, W, K):
    # x_ref  : (1, H, W, Cin)        f32   unpadded input image
    # w?_ref : (K*K*LANE, LANE)      bf16  im2col weights (BN scale folded in,
    #                                      rows/cols beyond real channels = 0)
    # s?_ref : (1, LANE)             f32   fused BN/bias shift (zero padded)
    # o_ref  : (1, H*W, LANE)        f32   output block (full 128-lane stores)
    # pad_ref: (H+K-1, W+K-1, LANE)  bf16  zero-padded activation (VMEM scratch)
    # lhs_ref: (H*W, K*K*LANE)       bf16  im2col LHS (VMEM scratch)
    p = K // 2
    cin = x_ref.shape[-1]
    cdt = lhs_ref.dtype

    def conv_layer(w_ref, s_ref):
        # Gather the K*K shifted windows of pad_ref into lane-tile-aligned
        # column blocks of lhs_ref.  All reshapes are layout-preserving
        # (second-minor dims are multiples of 8, minor dim is exactly one lane
        # tile) and all stores are full 128-lane tiles.
        for j in range(K * K):
            kh, kw = divmod(j, K)
            win = pad_ref[kh:kh + H, kw:kw + W, :]                # (H, W, LANE)
            lhs_ref[:, j * LANE:(j + 1) * LANE] = win.reshape(H * W, LANE)
        # One MXU matmul per conv layer: contraction dim = K*K*LANE.
        acc = jnp.dot(lhs_ref[...], w_ref[...],
                      preferred_element_type=jnp.float32)         # (H*W, LANE) f32
        return jnp.maximum(acc + s_ref[0], 0.0)                   # fused BN shift + ReLU

    # ---- layer 1: zero padding happens inside the kernel (no wrapper jnp.pad,
    #      no extra HBM pass over the input) --------------------------------
    pad_ref[...] = jnp.zeros_like(pad_ref)
    pad_ref[p:p + H, p:p + W, :cin] = x_ref[0].astype(cdt)
    y1 = conv_layer(w1_ref, s1_ref)

    # ---- layer 2: the intermediate activation stays in VMEM ----------------
    # (layer-1 output channels are already padded to LANE with exact zeros)
    pad_ref[p:p + H, p:p + W, :] = y1.reshape(H, W, LANE).astype(cdt)
    y2 = conv_layer(w2_ref, s2_ref)

    o_ref[0] = y2.astype(o_ref.dtype)


def fused_double_conv_bn_relu(x_nhwc, w1, s1, w2, s2, *, K=3):
    """Two fused [KxK conv (stride 1, pad K//2) + affine + ReLU] layers.

    Returns (N, H*W, LANE) float32; real output channels are [:, :, :Cout].
    """
    N, H, W, Cin = x_nhwc.shape
    Hp, Wp = H + K - 1, W + K - 1
    kernel = functools.partial(_fused_conv_bn_relu_x2_kernel, H=H, W=W, K=K)
    return pl.pallas_call(
        kernel,
        out_shape=jax.ShapeDtypeStruct((N, H * W, LANE), jnp.float32),
        grid=(N,),
        in_specs=[
            pl.BlockSpec((1, H, W, Cin), lambda n: (n, 0, 0, 0)),
            pl.BlockSpec((K * K * LANE, LANE), lambda n: (0, 0)),
            pl.BlockSpec((1, LANE), lambda n: (0, 0)),
            pl.BlockSpec((K * K * LANE, LANE), lambda n: (0, 0)),
            pl.BlockSpec((1, LANE), lambda n: (0, 0)),
        ],
        out_specs=pl.BlockSpec((1, H * W, LANE), lambda n: (n, 0, 0)),
        scratch_shapes=[
            pltpu.VMEM((Hp, Wp, LANE), _COMPUTE_DTYPE),           # padded activation
            pltpu.VMEM((H * W, K * K * LANE), _COMPUTE_DTYPE),    # im2col LHS
        ],
        compiler_params=pltpu.CompilerParams(
            dimension_semantics=("parallel",)),   # v7x megacore: 1 image per TC
    )(x_nhwc, w1, s1.reshape(1, -1), w2, s2.reshape(1, -1))


# ----------------------------------------------------------------------------
# out_dim branch: 1x1 conv + bias + ReLU.  Whole batch flattened into the
# matmul M dimension, single grid-less call (per-image steps would be pure
# launch overhead at this size).
# ----------------------------------------------------------------------------
def _conv1x1_relu_kernel(x_ref, w_ref, b_ref, o_ref):
    x = x_ref[...].astype(w_ref.dtype)            # bf16 for the MXU
    acc = jnp.dot(x, w_ref[...], preferred_element_type=jnp.float32)
    o_ref[...] = jnp.maximum(acc + b_ref[0], 0.0).astype(o_ref.dtype)


def conv1x1_relu(x2d, w, b):
    M = x2d.shape[0]
    cout = w.shape[-1]
    return pl.pallas_call(
        _conv1x1_relu_kernel,
        out_shape=jax.ShapeDtypeStruct((M, cout), jnp.float32),
    )(x2d, w, b.reshape(1, -1))


# ----------------------------------------------------------------------------
# Parameter construction (deterministic, synthetic) + module wrapper
# ----------------------------------------------------------------------------
def _fold_bn(conv_b, gamma, beta, mean, var, eps=1e-5):
    """Fold conv bias + eval-mode BatchNorm into (scale, shift)."""
    scale = gamma / jnp.sqrt(var + eps)
    shift = (conv_b - mean) * scale + beta
    return scale, shift


def _im2col_weight(w_oihw, scale):
    """OIHW conv weight (+ folded BN scale) -> (K*K*LANE, LANE) bf16 matrix."""
    cout, cin, K, _ = w_oihw.shape
    w = jnp.transpose(w_oihw, (2, 3, 1, 0)) * scale[None, None, None, :]  # HWIO, scaled
    wp = jnp.zeros((K, K, LANE, LANE), jnp.float32).at[:, :, :cin, :cout].set(w)
    return wp.reshape(K * K * LANE, LANE).astype(_COMPUTE_DTYPE)


def _pad_lane(v):
    return jnp.zeros((LANE,), jnp.float32).at[:v.shape[0]].set(v)


class CONVNetPallas:
    """JAX/Pallas port of CONVNet's forward pass (model_conv of MyGCNNet)."""

    def __init__(self, layer_num=6, out_dim=None, key=None):
        if key is None:
            key = jax.random.PRNGKey(0)
        self.out_dim = out_dim
        if out_dim:
            # Conv2d(3, out_dim, kernel_size=1, padding=0) + ReLU
            kw, kb = jax.random.split(key)
            w = 0.1 * jax.random.normal(kw, (out_dim, 3, 1, 1), jnp.float32)  # OIHW
            b = 0.1 * jax.random.normal(kb, (out_dim,), jnp.float32)
            self.w1x1 = jnp.transpose(w, (2, 3, 1, 0)).reshape(3, out_dim)
            self.w1x1 = self.w1x1.astype(_COMPUTE_DTYPE)
            self.b1x1 = b
        else:
            assert layer_num == 6, "only vgg13_bn.features[0:6] is implemented"
            # TODO(synk): pretrained VGG13-BN weights are not loadable here;
            # weights are deterministic synthetic values with matching shapes.
            mats, shifts, chans = [], [], []
            cin = 3
            for i, cout in enumerate([64, 64]):
                k = jax.random.fold_in(key, i)
                kwk, kbk, kg, kbe, km, kv = jax.random.split(k, 6)
                w = 0.05 * jax.random.normal(kwk, (cout, cin, 3, 3), jnp.float32)
                b = 0.05 * jax.random.normal(kbk, (cout,), jnp.float32)
                gamma = 1.0 + 0.1 * jax.random.normal(kg, (cout,), jnp.float32)
                beta = 0.1 * jax.random.normal(kbe, (cout,), jnp.float32)
                mean = 0.1 * jax.random.normal(km, (cout,), jnp.float32)
                var = jnp.abs(jax.random.normal(kv, (cout,), jnp.float32)) + 0.5
                scale, shift = _fold_bn(b, gamma, beta, mean, var)
                mats.append(_im2col_weight(w, scale))   # BN scale folded into W
                shifts.append(_pad_lane(shift))         # shift stays f32
                chans.append(cout)
                cin = cout
            self.w1_mat, self.w2_mat = mats
            self.shift1, self.shift2 = shifts
            self.c1, self.c2 = chans

    def __call__(self, x_nchw):
        N, C, H, W = x_nchw.shape
        if self.out_dim:
            x2d = jnp.transpose(x_nchw, (0, 2, 3, 1)).reshape(N * H * W, C)
            y = conv1x1_relu(x2d, self.w1x1, self.b1x1)
            y = y.reshape(N, H, W, self.out_dim)
        else:
            x = jnp.transpose(x_nchw, (0, 2, 3, 1))                 # NCHW -> NHWC
            y = fused_double_conv_bn_relu(x, self.w1_mat, self.shift1,
                                          self.w2_mat, self.shift2)
            y = y[:, :, :self.c2].reshape(N, H, W, self.c2)         # drop lane padding
        return jnp.transpose(y, (0, 3, 1, 2))                       # NHWC -> NCHW


# ----------------------------------------------------------------------------
# Pure-JAX reference for validation (mirrors the kernel's bf16 quantization
# points: bf16 inputs/weights, f32 accumulation, f32 affine+ReLU, bf16
# inter-layer activation).
# ----------------------------------------------------------------------------
def _reference(model, x_nchw):
    hi = jax.lax.Precision.HIGHEST
    x = jnp.transpose(x_nchw, (0, 2, 3, 1)).astype(jnp.float32)
    if model.out_dim:
        w = model.w1x1.astype(jnp.float32).reshape(1, 1, 3, model.out_dim)
        xq = x.astype(_COMPUTE_DTYPE).astype(jnp.float32)
        y = jax.lax.conv_general_dilated(
            xq, w, (1, 1), ((0, 0), (0, 0)),
            dimension_numbers=("NHWC", "HWIO", "NHWC"), precision=hi)
        y = jnp.maximum(y + model.b1x1, 0.0)
    else:
        def layer(inp, w_mat, shift, cin, cout):
            w = w_mat.astype(jnp.float32).reshape(3, 3, LANE, LANE)
            w = w[:, :, :cin, :cout]
            inp_q = inp.astype(_COMPUTE_DTYPE).astype(jnp.float32)
            z = jax.lax.conv_general_dilated(
                inp_q, w, (1, 1), ((1, 1), (1, 1)),
                dimension_numbers=("NHWC", "HWIO", "NHWC"), precision=hi)
            return jnp.maximum(z + shift[:cout], 0.0)

        y = layer(x, model.w1_mat, model.shift1, 3, model.c1)
        y = layer(y, model.w2_mat, model.shift2, model.c1, model.c2)
    return jnp.transpose(y, (0, 3, 1, 2))


if __name__ == "__main__":
    key = jax.random.PRNGKey(0)
    k_in, k_net = jax.random.split(key)

    # Small CIFAR-like input: NCHW, batch=2, 3 channels, 16x16 spatial.
    x = jax.random.normal(k_in, (2, 3, 16, 16), jnp.float32)

    # Default branch: vgg13_bn features[0:6] (2x [conv3x3 -> BN -> ReLU]).
    net = CONVNetPallas(layer_num=6, out_dim=None, key=k_net)
    out = jax.block_until_ready(net(x))
    ref = jax.block_until_ready(_reference(net, x))
    assert out.shape == (2, 64, 16, 16), out.shape
    np.testing.assert_allclose(np.asarray(out), np.asarray(ref),
                               rtol=1e-4, atol=1e-4)

    # out_dim branch: 1x1 conv (3 -> out_dim) + ReLU.
    net1 = CONVNetPallas(out_dim=4, key=k_net)
    out1 = jax.block_until_ready(net1(x))
    ref1 = jax.block_until_ready(_reference(net1, x))
    assert out1.shape == (2, 4, 16, 16), out1.shape
    np.testing.assert_allclose(np.asarray(out1), np.asarray(ref1),
                               rtol=1e-4, atol=1e-4)

    print("KERNEL_OK")
</pallas_src>

<mosaic_0001>
module attributes {stable_mosaic.version = 11 : i64} {
  func.func @_fused_conv_bn_relu_x2_kernel(%arg0: i32, %arg1: memref<1x16x16x3xf32, #tpu.memory_space<vmem>>, %arg2: memref<1152x128xbf16, #tpu.memory_space<vmem>>, %arg3: memref<1x128xf32, #tpu.memory_space<vmem>>, %arg4: memref<1152x128xbf16, #tpu.memory_space<vmem>>, %arg5: memref<1x128xf32, #tpu.memory_space<vmem>>, %arg6: memref<1x256x128xf32, #tpu.memory_space<vmem>>, %arg7: memref<18x18x128xbf16, #tpu.memory_space<vmem>>, %arg8: memref<256x1152xbf16, #tpu.memory_space<vmem>>) attributes {dimension_semantics = [#tpu.dimension_semantics<parallel>], iteration_bounds = array<i64: 2>, scalar_prefetch = 0 : i64, scratch_operands = 2 : i64, tpu.core_type = #tpu.core_type<tc>, window_params = [{transform_indices = @transform_0, window_bounds = array<i64: 1, 16, 16, 3>}, {pipeline_mode = #tpu.pipeline_mode<synchronous>, transform_indices = @transform_1, window_bounds = array<i64: 1152, 128>}, {pipeline_mode = #tpu.pipeline_mode<synchronous>, transform_indices = @transform_2, window_bounds = array<i64: 1, 128>}, {pipeline_mode = #tpu.pipeline_mode<synchronous>, transform_indices = @transform_3, window_bounds = array<i64: 1152, 128>}, {pipeline_mode = #tpu.pipeline_mode<synchronous>, transform_indices = @transform_4, window_bounds = array<i64: 1, 128>}, {transform_indices = @transform_5, window_bounds = array<i64: 1, 256, 128>}]} {
    %cst = arith.constant 0.000000e+00 : bf16
    %0 = vector.broadcast %cst : bf16 to vector<18x18x128xbf16>
    %c0 = arith.constant 0 : index
    %c0_0 = arith.constant 0 : index
    %c0_1 = arith.constant 0 : index
    %1 = vector.load %arg7[%c0, %c0_0, %c0_1] : memref<18x18x128xbf16, #tpu.memory_space<vmem>>, vector<18x18x128xbf16>
    tpu.vector_store %arg7[%c0, %c0_0, %c0_1], %0 {strides = array<i32>} : memref<18x18x128xbf16, #tpu.memory_space<vmem>>, vector<18x18x128xbf16>,
    %c0_2 = arith.constant 0 : index
    %c0_3 = arith.constant 0 : index
    %c0_4 = arith.constant 0 : index
    %c0_5 = arith.constant 0 : index
    %2 = vector.load %arg1[%c0_2, %c0_3, %c0_4, %c0_5] : memref<1x16x16x3xf32, #tpu.memory_space<vmem>>, vector<1x16x16x3xf32>
    %3 = vector.shape_cast %2 : vector<1x16x16x3xf32> to vector<16x16x3xf32>
    %4 = arith.truncf %3 : vector<16x16x3xf32> to vector<16x16x3xbf16>
    %c1 = arith.constant 1 : index
    %c1_6 = arith.constant 1 : index
    %c0_7 = arith.constant 0 : index
    %5 = vector.load %arg7[%c1, %c1_6, %c0_7] : memref<18x18x128xbf16, #tpu.memory_space<vmem>>, vector<16x16x3xbf16>
    tpu.vector_store %arg7[%c1, %c1_6, %c0_7], %4 {strides = array<i32>} : memref<18x18x128xbf16, #tpu.memory_space<vmem>>, vector<16x16x3xbf16>,
    %c0_8 = arith.constant 0 : index
    %c0_9 = arith.constant 0 : index
    %c0_10 = arith.constant 0 : index
    %6 = vector.load %arg7[%c0_8, %c0_9, %c0_10] : memref<18x18x128xbf16, #tpu.memory_space<vmem>>, vector<16x16x128xbf16>
    %7 = vector.shape_cast %6 : vector<16x16x128xbf16> to vector<256x128xbf16>
    %c0_11 = arith.constant 0 : index
    %c0_12 = arith.constant 0 : index
    %8 = vector.load %arg8[%c0_11, %c0_12] : memref<256x1152xbf16, #tpu.memory_space<vmem>>, vector<256x128xbf16>
    tpu.vector_store %arg8[%c0_11, %c0_12], %7 {strides = array<i32>} : memref<256x1152xbf16, #tpu.memory_space<vmem>>, vector<256x128xbf16>,
    %c0_13 = arith.constant 0 : index
    %c1_14 = arith.constant 1 : index
    %c0_15 = arith.constant 0 : index
    %9 = vector.load %arg7[%c0_13, %c1_14, %c0_15] : memref<18x18x128xbf16, #tpu.memory_space<vmem>>, vector<16x16x128xbf16>
    %10 = vector.shape_cast %9 : vector<16x16x128xbf16> to vector<256x128xbf16>
    %c0_16 = arith.constant 0 : index
    %c128 = arith.constant 128 : index
    %11 = vector.load %arg8[%c0_16, %c128] : memref<256x1152xbf16, #tpu.memory_space<vmem>>, vector<256x128xbf16>
    tpu.vector_store %arg8[%c0_16, %c128], %10 {strides = array<i32>} : memref<256x1152xbf16, #tpu.memory_space<vmem>>, vector<256x128xbf16>,
    %c0_17 = arith.constant 0 : index
    %c2 = arith.constant 2 : index
    %c0_18 = arith.constant 0 : index
    %12 = vector.load %arg7[%c0_17, %c2, %c0_18] : memref<18x18x128xbf16, #tpu.memory_space<vmem>>, vector<16x16x128xbf16>
    %13 = vector.shape_cast %12 : vector<16x16x128xbf16> to vector<256x128xbf16>
    %c0_19 = arith.constant 0 : index
    %c256 = arith.constant 256 : index
    %14 = vector.load %arg8[%c0_19, %c256] : memref<256x1152xbf16, #tpu.memory_space<vmem>>, vector<256x128xbf16>
    tpu.vector_store %arg8[%c0_19, %c256], %13 {strides = array<i32>} : memref<256x1152xbf16, #tpu.memory_space<vmem>>, vector<256x128xbf16>,
    %c1_20 = arith.constant 1 : index
    %c0_21 = arith.constant 0 : index
    %c0_22 = arith.constant 0 : index
    %15 = vector.load %arg7[%c1_20, %c0_21, %c0_22] : memref<18x18x128xbf16, #tpu.memory_space<vmem>>, vector<16x16x128xbf16>
    %16 = vector.shape_cast %15 : vector<16x16x128xbf16> to vector<256x128xbf16>
    %c0_23 = arith.constant 0 : index
    %c384 = arith.constant 384 : index
    %17 = vector.load %arg8[%c0_23, %c384] : memref<256x1152xbf16, #tpu.memory_space<vmem>>, vector<256x128xbf16>
    tpu.vector_store %arg8[%c0_23, %c384], %16 {strides = array<i32>} : memref<256x1152xbf16, #tpu.memory_space<vmem>>, vector<256x128xbf16>,
    %c1_24 = arith.constant 1 : index
    %c1_25 = arith.constant 1 : index
    %c0_26 = arith.constant 0 : index
    %18 = vector.load %arg7[%c1_24, %c1_25, %c0_26] : memref<18x18x128xbf16, #tpu.memory_space<vmem>>, vector<16x16x128xbf16>
    %19 = vector.shape_cast %18 : vector<16x16x128xbf16> to vector<256x128xbf16>
    %c0_27 = arith.constant 0 : index
    %c512 = arith.constant 512 : index
    %20 = vector.load %arg8[%c0_27, %c512] : memref<256x1152xbf16, #tpu.memory_space<vmem>>, vector<256x128xbf16>
    tpu.vector_store %arg8[%c0_27, %c512], %19 {strides = array<i32>} : memref<256x1152xbf16, #tpu.memory_space<vmem>>, vector<256x128xbf16>,
    %c1_28 = arith.constant 1 : index
    %c2_29 = arith.constant 2 : index
    %c0_30 = arith.constant 0 : index
    %21 = vector.load %arg7[%c1_28, %c2_29, %c0_30] : memref<18x18x128xbf16, #tpu.memory_space<vmem>>, vector<16x16x128xbf16>
    %22 = vector.shape_cast %21 : vector<16x16x128xbf16> to vector<256x128xbf16>
    %c0_31 = arith.constant 0 : index
    %c640 = arith.constant 640 : index
    %23 = vector.load %arg8[%c0_31, %c640] : memref<256x1152xbf16, #tpu.memory_space<vmem>>, vector<256x128xbf16>
    tpu.vector_store %arg8[%c0_31, %c640], %22 {strides = array<i32>} : memref<256x1152xbf16, #tpu.memory_space<vmem>>, vector<256x128xbf16>,
    %c2_32 = arith.constant 2 : index
    %c0_33 = arith.constant 0 : index
    %c0_34 = arith.constant 0 : index
    %24 = vector.load %arg7[%c2_32, %c0_33, %c0_34] : memref<18x18x128xbf16, #tpu.memory_space<vmem>>, vector<16x16x128xbf16>
    %25 = vector.shape_cast %24 : vector<16x16x128xbf16> to vector<256x128xbf16>
    %c0_35 = arith.constant 0 : index
    %c768 = arith.constant 768 : index
    %26 = vector.load %arg8[%c0_35, %c768] : memref<256x1152xbf16, #tpu.memory_space<vmem>>, vector<256x128xbf16>
    tpu.vector_store %arg8[%c0_35, %c768], %25 {strides = array<i32>} : memref<256x1152xbf16, #tpu.memory_space<vmem>>, vector<256x128xbf16>,
    %c2_36 = arith.constant 2 : index
    %c1_37 = arith.constant 1 : index
    %c0_38 = arith.constant 0 : index
    %27 = vector.load %arg7[%c2_36, %c1_37, %c0_38] : memref<18x18x128xbf16, #tpu.memory_space<vmem>>, vector<16x16x128xbf16>
    %28 = vector.shape_cast %27 : vector<16x16x128xbf16> to vector<256x128xbf16>
    %c0_39 = arith.constant 0 : index
    %c896 = arith.constant 896 : index
    %29 = vector.load %arg8[%c0_39, %c896] : memref<256x1152xbf16, #tpu.memory_space<vmem>>, vector<256x128xbf16>
    tpu.vector_store %arg8[%c0_39, %c896], %28 {strides = array<i32>} : memref<256x1152xbf16, #tpu.memory_space<vmem>>, vector<256x128xbf16>,
    %c2_40 = arith.constant 2 : index
    %c2_41 = arith.constant 2 : index
    %c0_42 = arith.constant 0 : index
    %30 = vector.load %arg7[%c2_40, %c2_41, %c0_42] : memref<18x18x128xbf16, #tpu.memory_space<vmem>>, vector<16x16x128xbf16>
    %31 = vector.shape_cast %30 : vector<16x16x128xbf16> to vector<256x128xbf16>
    %c0_43 = arith.constant 0 : index
    %c1024 = arith.constant 1024 : index
    %32 = vector.load %arg8[%c0_43, %c1024] : memref<256x1152xbf16, #tpu.memory_space<vmem>>, vector<256x128xbf16>
    tpu.vector_store %arg8[%c0_43, %c1024], %31 {strides = array<i32>} : memref<256x1152xbf16, #tpu.memory_space<vmem>>, vector<256x128xbf16>,
    %c0_44 = arith.constant 0 : index
    %c0_45 = arith.constant 0 : index
    %33 = vector.load %arg8[%c0_44, %c0_45] : memref<256x1152xbf16, #tpu.memory_space<vmem>>, vector<256x1152xbf16>
    %c0_46 = arith.constant 0 : index
    %c0_47 = arith.constant 0 : index
    %34 = vector.load %arg2[%c0_46, %c0_47] : memref<1152x128xbf16, #tpu.memory_space<vmem>>, vector<1152x128xbf16>
    %cst_48 = arith.constant dense<0.000000e+00> : vector<256x128xf32>
    %35 = tpu.matmul %33, %34, %cst_48 {dimension_numbers = #tpu.dot_dimension_numbers<[1], [0], [0], [1], [0, 0, 1, 1], [], []>} : vector<256x1152xbf16>, vector<1152x128xbf16>, vector<256x128xf32> -> vector<256x128xf32>
    %c0_49 = arith.constant 0 : index
    %c0_50 = arith.constant 0 : index
    %36 = vector.load %arg3[%c0_49, %c0_50] : memref<1x128xf32, #tpu.memory_space<vmem>>, vector<1x128xf32>
    %37 = vector.shape_cast %36 : vector<1x128xf32> to vector<128xf32>
    %38 = vector.shape_cast %37 : vector<128xf32> to vector<1x128xf32>
    %39 = vector.broadcast %38 : vector<1x128xf32> to vector<256x128xf32>
    %40 = arith.addf %35, %39 : vector<256x128xf32>
    %cst_51 = arith.constant 0.000000e+00 : f32
    %41 = vector.broadcast %cst_51 : f32 to vector<256x128xf32>
    %42 = arith.maximumf %40, %41 : vector<256x128xf32>
    %43 = vector.shape_cast %42 : vector<256x128xf32> to vector<16x16x128xf32>
    %44 = arith.truncf %43 : vector<16x16x128xf32> to vector<16x16x128xbf16>
    %c1_52 = arith.constant 1 : index
    %c1_53 = arith.constant 1 : index
    %c0_54 = arith.constant 0 : index
    %45 = vector.load %arg7[%c1_52, %c1_53, %c0_54] : memref<18x18x128xbf16, #tpu.memory_space<vmem>>, vector<16x16x128xbf16>
    tpu.vector_store %arg7[%c1_52, %c1_53, %c0_54], %44 {strides = array<i32>} : memref<18x18x128xbf16, #tpu.memory_space<vmem>>, vector<16x16x128xbf16>,
    %c0_55 = arith.constant 0 : index
    %c0_56 = arith.constant 0 : index
    %c0_57 = arith.constant 0 : index
    %46 = vector.load %arg7[%c0_55, %c0_56, %c0_57] : memref<18x18x128xbf16, #tpu.memory_space<vmem>>, vector<16x16x128xbf16>
    %47 = vector.shape_cast %46 : vector<16x16x128xbf16> to vector<256x128xbf16>
    %c0_58 = arith.constant 0 : index
    %c0_59 = arith.constant 0 : index
    %48 = vector.load %arg8[%c0_58, %c0_59] : memref<256x1152xbf16, #tpu.memory_space<vmem>>, vector<256x128xbf16>
    tpu.vector_store %arg8[%c0_58, %c0_59], %47 {strides = array<i32>} : memref<256x1152xbf16, #tpu.memory_space<vmem>>, vector<256x128xbf16>,
    %c0_60 = arith.constant 0 : index
    %c1_61 = arith.constant 1 : index
    %c0_62 = arith.constant 0 : index
    %49 = vector.load %arg7[%c0_60, %c1_61, %c0_62] : memref<18x18x128xbf16, #tpu.memory_space<vmem>>, vector<16x16x128xbf16>
    %50 = vector.shape_cast %49 : vector<16x16x128xbf16> to vector<256x128xbf16>
    %c0_63 = arith.constant 0 : index
    %c128_64 = arith.constant 128 : index
    %51 = vector.load %arg8[%c0_63, %c128_64] : memref<256x1152xbf16, #tpu.memory_space<vmem>>, vector<256x128xbf16>
    tpu.vector_store %arg8[%c0_63, %c128_64], %50 {strides = array<i32>} : memref<256x1152xbf16, #tpu.memory_space<vmem>>, vector<256x128xbf16>,
    %c0_65 = arith.constant 0 : index
    %c2_66 = arith.constant 2 : index
    %c0_67 = arith.constant 0 : index
    %52 = vector.load %arg7[%c0_65, %c2_66, %c0_67] : memref<18x18x128xbf16, #tpu.memory_space<vmem>>, vector<16x16x128xbf16>
    %53 = vector.shape_cast %52 : vector<16x16x128xbf16> to vector<256x128xbf16>
    %c0_68 = arith.constant 0 : index
    %c256_69 = arith.constant 256 : index
    %54 = vector.load %arg8[%c0_68, %c256_69] : memref<256x1152xbf16, #tpu.memory_space<vmem>>, vector<256x128xbf16>
    tpu.vector_store %arg8[%c0_68, %c256_69], %53 {strides = array<i32>} : memref<256x1152xbf16, #tpu.memory_space<vmem>>, vector<256x128xbf16>,
    %c1_70 = arith.constant 1 : index
    %c0_71 = arith.constant 0 : index
    %c0_72 = arith.constant 0 : index
    %55 = vector.load %arg7[%c1_70, %c0_71, %c0_72] : memref<18x18x128xbf16, #tpu.memory_space<vmem>>, vector<16x16x128xbf16>
    %56 = vector.shape_cast %55 : vector<16x16x128xbf16> to vector<256x128xbf16>
    %c0_73 = arith.constant 0 : index
    %c384_74 = arith.constant 384 : index
    %57 = vector.load %arg8[%c0_73, %c384_74] : memref<256x1152xbf16, #tpu.memory_space<vmem>>, vector<256x128xbf16>
    tpu.vector_store %arg8[%c0_73, %c384_74], %56 {strides = array<i32>} : memref<256x1152xbf16, #tpu.memory_space<vmem>>, vector<256x128xbf16>,
    %c1_75 = arith.constant 1 : index
    %c1_76 = arith.constant 1 : index
    %c0_77 = arith.constant 0 : index
    %58 = vector.load %arg7[%c1_75, %c1_76, %c0_77] : memref<18x18x128xbf16, #tpu.memory_space<vmem>>, vector<16x16x128xbf16>
    %59 = vector.shape_cast %58 : vector<16x16x128xbf16> to vector<256x128xbf16>
    %c0_78 = arith.constant 0 : index
    %c512_79 = arith.constant 512 : index
    %60 = vector.load %arg8[%c0_78, %c512_79] : memref<256x1152xbf16, #tpu.memory_space<vmem>>, vector<256x128xbf16>
    tpu.vector_store %arg8[%c0_78, %c512_79], %59 {strides = array<i32>} : memref<256x1152xbf16, #tpu.memory_space<vmem>>, vector<256x128xbf16>,
    %c1_80 = arith.constant 1 : index
    %c2_81 = arith.constant 2 : index
    %c0_82 = arith.constant 0 : index
    %61 = vector.load %arg7[%c1_80, %c2_81, %c0_82] : memref<18x18x128xbf16, #tpu.memory_space<vmem>>, vector<16x16x128xbf16>
    %62 = vector.shape_cast %61 : vector<16x16x128xbf16> to vector<256x128xbf16>
    %c0_83 = arith.constant 0 : index
    %c640_84 = arith.constant 640 : index
    %63 = vector.load %arg8[%c0_83, %c640_84] : memref<256x1152xbf16, #tpu.memory_space<vmem>>, vector<256x128xbf16>
    tpu.vector_store %arg8[%c0_83, %c640_84], %62 {strides = array<i32>} : memref<256x1152xbf16, #tpu.memory_space<vmem>>, vector<256x128xbf16>,
    %c2_85 = arith.constant 2 : index
    %c0_86 = arith.constant 0 : index
    %c0_87 = arith.constant 0 : index
    %64 = vector.load %arg7[%c2_85, %c0_86, %c0_87] : memref<18x18x128xbf16, #tpu.memory_space<vmem>>, vector<16x16x128xbf16>
    %65 = vector.shape_cast %64 : vector<16x16x128xbf16> to vector<256x128xbf16>
    %c0_88 = arith.constant 0 : index
    %c768_89 = arith.constant 768 : index
    %66 = vector.load %arg8[%c0_88, %c768_89] : memref<256x1152xbf16, #tpu.memory_space<vmem>>, vector<256x128xbf16>
    tpu.vector_store %arg8[%c0_88, %c768_89], %65 {strides = array<i32>} : memref<256x1152xbf16, #tpu.memory_space<vmem>>, vector<256x128xbf16>,
    %c2_90 = arith.constant 2 : index
    %c1_91 = arith.constant 1 : index
    %c0_92 = arith.constant 0 : index
    %67 = vector.load %arg7[%c2_90, %c1_91, %c0_92] : memref<18x18x128xbf16, #tpu.memory_space<vmem>>, vector<16x16x128xbf16>
    %68 = vector.shape_cast %67 : vector<16x16x128xbf16> to vector<256x128xbf16>
    %c0_93 = arith.constant 0 : index
    %c896_94 = arith.constant 896 : index
    %69 = vector.load %arg8[%c0_93, %c896_94] : memref<256x1152xbf16, #tpu.memory_space<vmem>>, vector<256x128xbf16>
    tpu.vector_store %arg8[%c0_93, %c896_94], %68 {strides = array<i32>} : memref<256x1152xbf16, #tpu.memory_space<vmem>>, vector<256x128xbf16>,
    %c2_95 = arith.constant 2 : index
    %c2_96 = arith.constant 2 : index
    %c0_97 = arith.constant 0 : index
    %70 = vector.load %arg7[%c2_95, %c2_96, %c0_97] : memref<18x18x128xbf16, #tpu.memory_space<vmem>>, vector<16x16x128xbf16>
    %71 = vector.shape_cast %70 : vector<16x16x128xbf16> to vector<256x128xbf16>
    %c0_98 = arith.constant 0 : index
    %c1024_99 = arith.constant 1024 : index
    %72 = vector.load %arg8[%c0_98, %c1024_99] : memref<256x1152xbf16, #tpu.memory_space<vmem>>, vector<256x128xbf16>
    tpu.vector_store %arg8[%c0_98, %c1024_99], %71 {strides = array<i32>} : memref<256x1152xbf16, #tpu.memory_space<vmem>>, vector<256x128xbf16>,
    %c0_100 = arith.constant 0 : index
    %c0_101 = arith.constant 0 : index
    %73 = vector.load %arg8[%c0_100, %c0_101] : memref<256x1152xbf16, #tpu.memory_space<vmem>>, vector<256x1152xbf16>
    %c0_102 = arith.constant 0 : index
    %c0_103 = arith.constant 0 : index
    %74 = vector.load %arg4[%c0_102, %c0_103] : memref<1152x128xbf16, #tpu.memory_space<vmem>>, vector<1152x128xbf16>
    %cst_104 = arith.constant dense<0.000000e+00> : vector<256x128xf32>
    %75 = tpu.matmul %73, %74, %cst_104 {dimension_numbers = #tpu.dot_dimension_numbers<[1], [0], [0], [1], [0, 0, 1, 1], [], []>} : vector<256x1152xbf16>, vector<1152x128xbf16>, vector<256x128xf32> -> vector<256x128xf32>
    %c0_105 = arith.constant 0 : index
    %c0_106 = arith.constant 0 : index
    %76 = vector.load %arg5[%c0_105, %c0_106] : memref<1x128xf32, #tpu.memory_space<vmem>>, vector<1x128xf32>
    %77 = vector.shape_cast %76 : vector<1x128xf32> to vector<128xf32>
    %78 = vector.shape_cast %77 : vector<128xf32> to vector<1x128xf32>
    %79 = vector.broadcast %78 : vector<1x128xf32> to vector<256x128xf32>
    %80 = arith.addf %75, %79 : vector<256x128xf32>
    %cst_107 = arith.constant 0.000000e+00 : f32
    %81 = vector.broadcast %cst_107 : f32 to vector<256x128xf32>
    %82 = arith.maximumf %80, %81 : vector<256x128xf32>
    %c0_108 = arith.constant 0 : index
    %c0_109 = arith.constant 0 : index
    %c0_110 = arith.constant 0 : index
    %83 = vector.load %arg6[%c0_108, %c0_109, %c0_110] : memref<1x256x128xf32, #tpu.memory_space<vmem>>, vector<1x256x128xf32>
    %84 = vector.shape_cast %83 : vector<1x256x128xf32> to vector<256x128xf32>
    %85 = vector.shape_cast %82 : vector<256x128xf32> to vector<1x256x128xf32>
    tpu.vector_store %arg6[%c0_108, %c0_109, %c0_110], %85 {strides = array<i32>} : memref<1x256x128xf32, #tpu.memory_space<vmem>>, vector<1x256x128xf32>,
    return
  }
  func.func @transform_0(%arg0: i32) -> (i32, i32, i32, i32) {
    %c0_i32 = arith.constant 0 : i32
    %c0_i32_0 = arith.constant 0 : i32
    %c0_i32_1 = arith.constant 0 : i32
    %c0_i32_2 = arith.constant 0 : i32
    return %arg0, %c0_i32, %c0_i32_0, %c0_i32_1 : i32, i32, i32, i32
  }
  func.func @transform_1(%arg0: i32) -> (i32, i32) {
    %c0_i32 = arith.constant 0 : i32
    %c0_i32_0 = arith.constant 0 : i32
    %c0_i32_1 = arith.constant 0 : i32
    return %c0_i32, %c0_i32_0 : i32, i32
  }
  func.func @transform_2(%arg0: i32) -> (i32, i32) {
    %c0_i32 = arith.constant 0 : i32
    %c0_i32_0 = arith.constant 0 : i32
    %c0_i32_1 = arith.constant 0 : i32
    return %c0_i32, %c0_i32_0 : i32, i32
  }
  func.func @transform_3(%arg0: i32) -> (i32, i32) {
    %c0_i32 = arith.constant 0 : i32
    %c0_i32_0 = arith.constant 0 : i32
    %c0_i32_1 = arith.constant 0 : i32
    return %c0_i32, %c0_i32_0 : i32, i32
  }
  func.func @transform_4(%arg0: i32) -> (i32, i32) {
    %c0_i32 = arith.constant 0 : i32
    %c0_i32_0 = arith.constant 0 : i32
    %c0_i32_1 = arith.constant 0 : i32
    return %c0_i32, %c0_i32_0 : i32, i32
  }
  func.func @transform_5(%arg0: i32) -> (i32, i32, i32) {
    %c0_i32 = arith.constant 0 : i32
    %c0_i32_0 = arith.constant 0 : i32
    %c0_i32_1 = arith.constant 0 : i32
    return %arg0, %c0_i32, %c0_i32_0 : i32, i32, i32
  }
}

</mosaic_0001>

<llo_original>
// kernel: tpu_custom_call.1
$region0: #{tpu_custom_call.1}
  #allocation0 [shape = 'u32[]', space=smem, size = 0x4, offset = 0x4, fixed_abs, tag = 'smem constant byte address 0x4 - core index']
  #allocation1 [shape = 'u32[144,128]{1,0:T(1,128)}', space=vmem, size = 0x12000, scoped, tag = 'internal scratch']
  #allocation2 [shape = 'bf16[18,18,128]{2,1,0:T(8,128)(2,1)}', space=vmem, size = 0x1b000, scoped, tag = 'scratch operand']
  #allocation3 [shape = 'bf16[256,1152]{1,0:T(16,128)(2,1)}', space=vmem, size = 0x90000, scoped, tag = 'scratch operand']
  %s0 = inlined_call_operand.vmem [shape: f32[2,16,16,3], index: 0, kind: input, shape index: {}]
  %s1 = inlined_call_operand.vmem [shape: bf16[1152,128], index: 1, kind: input, shape index: {}]
  %s2 = inlined_call_operand.vmem [shape: f32[1,128], index: 2, kind: input, shape index: {}]
  %s3 = inlined_call_operand.hbm [shape: bf16[1152,128], index: 3, kind: input, shape index: {}]
  %s4 = inlined_call_operand.vmem [shape: f32[1,128], index: 4, kind: input, shape index: {}]
  %s5 = inlined_call_operand.hbm [shape: f32[2,256,128], index: 5, kind: output, shape index: {}]
  %s6 = sld [smem:[#allocation0]]
  $region57: #{tpu_custom_call.1} parent=0
    _
  %s8 = ssub.s32 1, %s6
  %s9 = scalar_select 0, %s8, %s6
  $region1: #{tpu_custom_call.1} parent=0
    #allocation4 [shape = 'u8[294912]{0}', space=vmem, size = 0x48000, scoped, tag = 'input window, operand 3, single buffered']
    #allocation5 [shape = 's32[2]{0}', space=sflag, size = 0x8, scoped, tag = 'scoped memory for tpu_custom_call.1']
    #allocation6 [shape = 's32[2]{0}', space=sflag, size = 0x8, scoped, tag = 'scoped memory for tpu_custom_call.1']
    #allocation7 [shape = 'u8[262144]{0}', space=vmem, size = 0x40000, scoped, tag = 'output window, operand 0']
    %10 = vsyncpa [#allocation5], 0
    %11 = vsyncpa [#allocation6], 0
    %s12 = scalar_lea.sflag [#allocation6], 1
    %13 = vsyncpa %s12, 0
    loop: start=0, step=1, limit=4
    $region2: #{tpu_custom_call.1} parent=1 // loop_pre_header
      _
    $region3: #{tpu_custom_call.1} parent=1 // loop_header
      %s15 = sphi 0, %s19
      %p16 = scmp.ge.s32.totalorder %s15, 4
      %s25 = sphi 0, %s27
      %s28 = sphi 0, %s25
      %s29 = sphi 0, %s28
      %s45 = sphi 0, %s29
      %s49 = sphi 0, %s49
      %s51 = sphi 0, %s49
      %s52 = sphi 0, %s51
      %s66 = sphi 0, %s52
      %s70 = sphi 0, %s70
      %s72 = sphi 0, %s70
      %s73 = sphi 0, %s72
      %s87 = sphi 0, %s73
      %s91 = sphi 0, %s91
      %s93 = sphi 0, %s91
      %s94 = sphi 0, %s93
      %s108 = sphi 0, %s94
      %s112 = sphi 0, %s112
      %s114 = sphi 0, %s112
      %s115 = sphi 0, %s114
      %s129 = sphi 0, %s115
      %s135 = sphi 0, %s137
      %s138 = sphi 0, %s135
      %s139 = sphi 0, %s138
      %s155 = sphi 0, %s139
    $region4: #{tpu_custom_call.1} parent=1 // loop_header_branch
      %18 = sbr.rel (%p16) target = $region8
    $region5: #{tpu_custom_call.1} parent=1 // loop_body
      %s20 = ssub.s32 %s15, 1
      %s21 = ssub.s32 %s15, 2
      %s22 = sadd.s32 %s15, 1
      %s23 = ssub.s32 %s15, %s22
      %p24 = scmp.eq.s32.totalorder %s23, 0
      %s26 = sadd.s32 %s25, 1
      %s27 = scalar_select %p24, %s25, %s26
      %p30 = pneg %p24
      %p31 = scmp.eq.s32.totalorder %s15, 1
      %p32 = por %p30, %p31
      %p33 = scmp.ne.s32.totalorder %s25, %s28
      %p34 = scmp.eq.s32.totalorder %s15, 0
      %p35 = por %p33, %p34
      %p36 = scmp.ne.s32.totalorder %s25, %s28
      %p37 = scmp.eq.s32.totalorder %s20, 1
      %p38 = por %p36, %p37
      %p39 = scmp.ne.s32.totalorder %s28, %s29
      %p40 = scmp.eq.s32.totalorder %s20, 0
      %p41 = por %p39, %p40
      %p42 = scmp.ne.s32.totalorder %s28, %s29
      %p43 = scmp.eq.s32.totalorder %s21, 1
      %p44 = por %p42, %p43
      %p46 = scmp.ne.s32.totalorder %s29, %s45
      %p47 = scmp.eq.s32.totalorder %s21, 0
      %p48 = por %p46, %p47
      %s50 = sadd.s32 %s49, 1
      %p53 = scmp.eq.s32.totalorder %s15, 1
      %p54 = scmp.ne.s32.totalorder %s49, %s51
      %p55 = scmp.eq.s32.totalorder %s15, 0
      %p56 = por %p54, %p55
      %p57 = scmp.ne.s32.totalorder %s49, %s51
      %p58 = scmp.eq.s32.totalorder %s20, 1
      %p59 = por %p57, %p58
      %p60 = scmp.ne.s32.totalorder %s51, %s52
      %p61 = scmp.eq.s32.totalorder %s20, 0
      %p62 = por %p60, %p61
      %p63 = scmp.ne.s32.totalorder %s51, %s52
      %p64 = scmp.eq.s32.totalorder %s21, 1
      %p65 = por %p63, %p64
      %p67 = scmp.ne.s32.totalorder %s52, %s66
      %p68 = scmp.eq.s32.totalorder %s21, 0
      %p69 = por %p67, %p68
      %s71 = sadd.s32 %s70, 1
      %p74 = scmp.eq.s32.totalorder %s15, 1
      %p75 = scmp.ne.s32.totalorder %s70, %s72
      %p76 = scmp.eq.s32.totalorder %s15, 0
      %p77 = por %p75, %p76
      %p78 = scmp.ne.s32.totalorder %s70, %s72
      %p79 = scmp.eq.s32.totalorder %s20, 1
      %p80 = por %p78, %p79
      %p81 = scmp.ne.s32.totalorder %s72, %s73
      %p82 = scmp.eq.s32.totalorder %s20, 0
      %p83 = por %p81, %p82
      %p84 = scmp.ne.s32.totalorder %s72, %s73
      %p85 = scmp.eq.s32.totalorder %s21, 1
      %p86 = por %p84, %p85
      %p88 = scmp.ne.s32.totalorder %s73, %s87
      %p89 = scmp.eq.s32.totalorder %s21, 0
      %p90 = por %p88, %p89
      %s92 = sadd.s32 %s91, 1
      %p95 = scmp.eq.s32.totalorder %s15, 1
      %p96 = scmp.ne.s32.totalorder %s91, %s93
      %p97 = scmp.eq.s32.totalorder %s15, 0
      %p98 = por %p96, %p97
      %p99 = scmp.ne.s32.totalorder %s91, %s93
      %p100 = scmp.eq.s32.totalorder %s20, 1
      %p101 = por %p99, %p100
      %p102 = scmp.ne.s32.totalorder %s93, %s94
      %p103 = scmp.eq.s32.totalorder %s20, 0
      %p104 = por %p102, %p103
      %p105 = scmp.ne.s32.totalorder %s93, %s94
      %p106 = scmp.eq.s32.totalorder %s21, 1
      %p107 = por %p105, %p106
      %p109 = scmp.ne.s32.totalorder %s94, %s108
      %p110 = scmp.eq.s32.totalorder %s21, 0
      %p111 = por %p109, %p110
      %s113 = sadd.s32 %s112, 1
      %p116 = scmp.eq.s32.totalorder %s15, 1
      %p117 = scmp.ne.s32.totalorder %s112, %s114
      %p118 = scmp.eq.s32.totalorder %s15, 0
      %p119 = por %p117, %p118
      %p120 = scmp.ne.s32.totalorder %s112, %s114
      %p121 = scmp.eq.s32.totalorder %s20, 1
      %p122 = por %p120, %p121
      %p123 = scmp.ne.s32.totalorder %s114, %s115
      %p124 = scmp.eq.s32.totalorder %s20, 0
      %p125 = por %p123, %p124
      %p126 = scmp.ne.s32.totalorder %s114, %s115
      %p127 = scmp.eq.s32.totalorder %s21, 1
      %p128 = por %p126, %p127
      %p130 = scmp.ne.s32.totalorder %s115, %s129
      %p131 = scmp.eq.s32.totalorder %s21, 0
      %p132 = por %p130, %p131
      %s133 = ssub.s32 %s15, %s22
      %p134 = scmp.eq.s32.totalorder %s133, 0
      %s136 = sadd.s32 %s135, 1
      %s137 = scalar_select %p134, %s135, %s136
      %p140 = pneg %p134
      %p141 = scmp.eq.s32.totalorder %s15, 1
      %p142 = por %p140, %p141
      %p143 = scmp.ne.s32.totalorder %s135, %s138
      %p144 = scmp.eq.s32.totalorder %s15, 0
      %p145 = por %p143, %p144
      %p146 = scmp.ne.s32.totalorder %s135, %s138
      %p147 = scmp.eq.s32.totalorder %s20, 1
      %p148 = por %p146, %p147
      %p149 = scmp.ne.s32.totalorder %s138, %s139
      %p150 = scmp.eq.s32.totalorder %s20, 0
      %p151 = por %p149, %p150
      %p152 = scmp.ne.s32.totalorder %s138, %s139
      %p153 = scmp.eq.s32.totalorder %s21, 1
      %p154 = por %p152, %p153
      %p156 = scmp.ne.s32.totalorder %s139, %s155
      %p157 = scmp.eq.s32.totalorder %s21, 0
      %p158 = por %p156, %p157
      %p159 = scmp.le.s32.totalorder 1, %s15
      %p160 = scmp.lt.s32.totalorder %s15, 3
      %p161 = pnand %p159, %p160
      %p162 = pneg %p161
      // Predicated region
      $region9: #{tpu_custom_call.1} parent=5 // pred_check
        _
      $region10: #{tpu_custom_call.1} parent=5 // pred_check_branch
        %164 = sbr.rel (%p161) target = $region12
      $region11: #{tpu_custom_call.1} parent=5 // pred_region
        %s165 = ssub.s32 %s15, 1
        // Predicated region
        $region13: #{tpu_custom_call.1} parent=11 // pred_check
          %p166 = pneg %p62
        $region14: #{tpu_custom_call.1} parent=11 // pred_check_branch
          %168 = sbr.rel (%p166) target = $region16
        $region15: #{tpu_custom_call.1} parent=11 // pred_region
          _
        $region16: #{tpu_custom_call.1} parent=11 // pred_fallthru
          _
        // Predicated region
        $region17: #{tpu_custom_call.1} parent=11 // pred_check
          %p169 = pneg %p83
        $region18: #{tpu_custom_call.1} parent=11 // pred_check_branch
          %171 = sbr.rel (%p169) target = $region20
        $region19: #{tpu_custom_call.1} parent=11 // pred_region
          _
        $region20: #{tpu_custom_call.1} parent=11 // pred_fallthru
          _
        // Predicated region
        $region21: #{tpu_custom_call.1} parent=11 // pred_check
          %p172 = pneg %p104
        $region22: #{tpu_custom_call.1} parent=11 // pred_check_branch
          %174 = sbr.rel (%p172) target = $region24
        $region23: #{tpu_custom_call.1} parent=11 // pred_region
          %s176 = ssub.s32 9216, 9216
          %177 = vsyncadd [#allocation5], %s176
          %s178 = sshll.u32 [#allocation4], 4
          %s179 = int_to_ptr.vmem [resolvable:$true] %s178
          %184 = dma.hbm_to_vmem [thread:$0]  %s3, 9216, %s179, [#allocation5], 64, 64, 4
        $region24: #{tpu_custom_call.1} parent=11 // pred_fallthru
          _
        // Predicated region
        $region25: #{tpu_custom_call.1} parent=11 // pred_check
          %p185 = pneg %p125
        $region26: #{tpu_custom_call.1} parent=11 // pred_check_branch
          %187 = sbr.rel (%p185) target = $region28
        $region27: #{tpu_custom_call.1} parent=11 // pred_region
          _
        $region28: #{tpu_custom_call.1} parent=11 // pred_fallthru
          _
      $region12: #{tpu_custom_call.1} parent=5 // pred_fallthru
        _
      %p188 = scmp.lt.s32.totalorder %s15, 2
      // Predicated region
      $region29: #{tpu_custom_call.1} parent=5 // pred_check
        %p189 = pneg %p188
      $region30: #{tpu_custom_call.1} parent=5 // pred_check_branch
        %191 = sbr.rel (%p189) target = $region32
      $region31: #{tpu_custom_call.1} parent=5 // pred_region
        // Predicated region
        $region33: #{tpu_custom_call.1} parent=31 // pred_check
          %p192 = pneg %p35
        $region34: #{tpu_custom_call.1} parent=31 // pred_check_branch
          %194 = sbr.rel (%p192) target = $region36
        $region35: #{tpu_custom_call.1} parent=31 // pred_region
          %p195 = scmp.lt.s32.totalorder %s15, 1
          %s196 = scalar_select %p195, %s15, 1
          %s197 = smul.addr %s196, 32
          %s198 = smul.addr %s197, 8
          %s199 = scalar_lea.vmem %s0, %s198
        $region36: #{tpu_custom_call.1} parent=31 // pred_fallthru
          _
      $region32: #{tpu_custom_call.1} parent=5 // pred_fallthru
        _
      %p200 = scmp.le.s32.totalorder 1, %s15
      %p201 = scmp.lt.s32.totalorder %s15, 3
      %p202 = pnand %p200, %p201
      %p203 = pneg %p202
      // Predicated region
      $region37: #{tpu_custom_call.1} parent=5 // pred_check
        _
      $region38: #{tpu_custom_call.1} parent=5 // pred_check_branch
        %205 = sbr.rel (%p202) target = $region40
      $region39: #{tpu_custom_call.1} parent=5 // pred_region
        %s206 = ssub.s32 %s15, 1
        // Predicated region
        $region41: #{tpu_custom_call.1} parent=39 // pred_check
          %p207 = pneg %p104
        $region42: #{tpu_custom_call.1} parent=39 // pred_check_branch
          %209 = sbr.rel (%p207) target = $region44
        $region43: #{tpu_custom_call.1} parent=39 // pred_region
          %210 = dma.done [#allocation5], 9216
        $region44: #{tpu_custom_call.1} parent=39 // pred_fallthru
          _
        %p211 = scmp.lt.s32.totalorder %s20, 1
        %s212 = scalar_select %p211, %s20, 1
        %s213 = smul.addr %s212, 32
        %s214 = smul.addr %s213, 8
        %s215 = scalar_lea.vmem %s0, %s214
        %p216 = pneg %p41
        %p217 = pneg %p38
        %p218 = pneg %p62
        %p219 = pneg %p59
        %p220 = pneg %p83
        %p221 = pneg %p80
        %p222 = pneg %p104
        %p223 = pneg %p101
        %p224 = pneg %p125
        %p225 = pneg %p122
        %p226 = pneg %p151
        %p227 = pneg %p148
        %s228 = sand.u32 %s138, 1
        %s229 = scalar_lea.sflag [#allocation6], %s228
        %s230 = sand.u32 %s138, 1
        %s231 = smul.addr %s230, 256
        %s232 = scalar_lea.vmem [#allocation7], %s231
        %p233 = scmp.lt.s32.totalorder %s20, 1
        %s234 = scalar_select %p233, %s20, 1
        %s235 = smul.addr %s234, 32
        %s236 = smul.addr %s235, 8
        %s237 = scalar_lea.vmem %s0, %s236
        %239 = vst [vmem:[#allocation2] sm:$0xf] 0
        %240 = vst [vmem:[#allocation2 + $0x4] sm:$0xf] 0
        %241 = vst [vmem:[#allocation2 + $0x8] sm:$0x1] 0
        %242 = vst [vmem:[#allocation2 + $0xc] sm:$0xf] 0
        %243 = vst [vmem:[#allocation2 + $0x10] sm:$0xf] 0
        %244 = vst [vmem:[#allocation2 + $0x14] sm:$0x1] 0
        %245 = vst [vmem:[#allocation2 + $0x18] sm:$0xf] 0
        %246 = vst [vmem:[#allocation2 + $0x1c] sm:$0xf] 0
        %247 = vst [vmem:[#allocation2 + $0x20] sm:$0x1] 0
        %248 = vst [vmem:[#allocation2 + $0x24] sm:$0xf] 0
        %249 = vst [vmem:[#allocation2 + $0x28] sm:$0xf] 0
        %250 = vst [vmem:[#allocation2 + $0x2c] sm:$0x1] 0
        %251 = vst [vmem:[#allocation2 + $0x30] sm:$0xf] 0
        %252 = vst [vmem:[#allocation2 + $0x34] sm:$0xf] 0
        %253 = vst [vmem:[#allocation2 + $0x38] sm:$0x1] 0
        %254 = vst [vmem:[#allocation2 + $0x3c] sm:$0xf] 0
        %255 = vst [vmem:[#allocation2 + $0x40] sm:$0xf] 0
        %256 = vst [vmem:[#allocation2 + $0x44] sm:$0x1] 0
        %257 = vst [vmem:[#allocation2 + $0x48] sm:$0xf] 0
        %258 = vst [vmem:[#allocation2 + $0x4c] sm:$0xf] 0
        %259 = vst [vmem:[#allocation2 + $0x50] sm:$0x1] 0
        %260 = vst [vmem:[#allocation2 + $0x54] sm:$0xf] 0
        %261 = vst [vmem:[#allocation2 + $0x58] sm:$0xf] 0
        %262 = vst [vmem:[#allocation2 + $0x5c] sm:$0x1] 0
        %263 = vst [vmem:[#allocation2 + $0x60] sm:$0xf] 0
        %264 = vst [vmem:[#allocation2 + $0x64] sm:$0xf] 0
        %265 = vst [vmem:[#allocation2 + $0x68] sm:$0x1] 0
        %266 = vst [vmem:[#allocation2 + $0x6c] sm:$0xf] 0
        %267 = vst [vmem:[#allocation2 + $0x70] sm:$0xf] 0
        %268 = vst [vmem:[#allocation2 + $0x74] sm:$0x1] 0
        %269 = vst [vmem:[#allocation2 + $0x78] sm:$0xf] 0
        %270 = vst [vmem:[#allocation2 + $0x7c] sm:$0xf] 0
        %271 = vst [vmem:[#allocation2 + $0x80] sm:$0x1] 0
        %272 = vst [vmem:[#allocation2 + $0x84] sm:$0xf] 0
        %273 = vst [vmem:[#allocation2 + $0x88] sm:$0xf] 0
        %274 = vst [vmem:[#allocation2 + $0x8c] sm:$0x1] 0
        %275 = vst [vmem:[#allocation2 + $0x90] sm:$0xf] 0
        %276 = vst [vmem:[#allocation2 + $0x94] sm:$0xf] 0
        %277 = vst [vmem:[#allocation2 + $0x98] sm:$0x1] 0
        %278 = vst [vmem:[#allocation2 + $0x9c] sm:$0xf] 0
        %279 = vst [vmem:[#allocation2 + $0xa0] sm:$0xf] 0
        %280 = vst [vmem:[#allocation2 + $0xa4] sm:$0x1] 0
        %281 = vst [vmem:[#allocation2 + $0xa8] sm:$0xf] 0
        %282 = vst [vmem:[#allocation2 + $0xac] sm:$0xf] 0
        %283 = vst [vmem:[#allocation2 + $0xb0] sm:$0x1] 0
        %284 = vst [vmem:[#allocation2 + $0xb4] sm:$0xf] 0
        %285 = vst [vmem:[#allocation2 + $0xb8] sm:$0xf] 0
        %286 = vst [vmem:[#allocation2 + $0xbc] sm:$0x1] 0
        %287 = vst [vmem:[#allocation2 + $0xc0] sm:$0xf] 0
        %288 = vst [vmem:[#allocation2 + $0xc4] sm:$0xf] 0
        %289 = vst [vmem:[#allocation2 + $0xc8] sm:$0x1] 0
        %290 = vst [vmem:[#allocation2 + $0xcc] sm:$0xf] 0
        %291 = vst [vmem:[#allocation2 + $0xd0] sm:$0xf] 0
        %292 = vst [vmem:[#allocation2 + $0xd4] sm:$0x1] 0
        %v293 = vld [vmem:[%s237] sm:$0xff]
        %v294 = vld [vmem:[%s237 + $0x8] sm:$0xff]
        %v295 = vld [vmem:[%s237 + $0x10] sm:$0xff]
        %v296 = vld [vmem:[%s237 + $0x18] sm:$0xff]
        %v297 = vld [vmem:[%s237 + $0x20] sm:$0xff]
        %v298 = vld [vmem:[%s237 + $0x28] sm:$0xff]
        %v299 = vld [vmem:[%s237 + $0x30] sm:$0xff]
        %v300 = vld [vmem:[%s237 + $0x38] sm:$0xff]
        %v301 = vld [vmem:[%s237 + $0x40] sm:$0xff]
        %v302 = vld [vmem:[%s237 + $0x48] sm:$0xff]
        %v303 = vld [vmem:[%s237 + $0x50] sm:$0xff]
        %v304 = vld [vmem:[%s237 + $0x58] sm:$0xff]
        %v305 = vld [vmem:[%s237 + $0x60] sm:$0xff]
        %v306 = vld [vmem:[%s237 + $0x68] sm:$0xff]
        %v307 = vld [vmem:[%s237 + $0x70] sm:$0xff]
        %v308 = vld [vmem:[%s237 + $0x78] sm:$0xff]
        %v309 = vld [vmem:[%s237 + $0x80] sm:$0xff]
        %v310 = vld [vmem:[%s237 + $0x88] sm:$0xff]
        %v311 = vld [vmem:[%s237 + $0x90] sm:$0xff]
        %v312 = vld [vmem:[%s237 + $0x98] sm:$0xff]
        %v313 = vld [vmem:[%s237 + $0xa0] sm:$0xff]
        %v314 = vld [vmem:[%s237 + $0xa8] sm:$0xff]
        %v315 = vld [vmem:[%s237 + $0xb0] sm:$0xff]
        %v316 = vld [vmem:[%s237 + $0xb8] sm:$0xff]
        %v317 = vld [vmem:[%s237 + $0xc0] sm:$0xff]
        %v318 = vld [vmem:[%s237 + $0xc8] sm:$0xff]
        %v319 = vld [vmem:[%s237 + $0xd0] sm:$0xff]
        %v320 = vld [vmem:[%s237 + $0xd8] sm:$0xff]
        %v321 = vld [vmem:[%s237 + $0xe0] sm:$0xff]
        %v322 = vld [vmem:[%s237 + $0xe8] sm:$0xff]
        %v323 = vld [vmem:[%s237 + $0xf0] sm:$0xff]
        %v324 = vld [vmem:[%s237 + $0xf8] sm:$0xff]
        %v325 = vpack.c.bf16 %v294, %v293
        %v326 = vpack.c.bf16 %v296, %v295
        %v327 = vpack.c.bf16 %v298, %v297
        %v328 = vpack.c.bf16 %v300, %v299
        %v329 = vpack.c.bf16 %v302, %v301
        %v330 = vpack.c.bf16 %v304, %v303
        %v331 = vpack.c.bf16 %v306, %v305
        %v332 = vpack.c.bf16 %v308, %v307
        %v333 = vpack.c.bf16 %v310, %v309
        %v334 = vpack.c.bf16 %v312, %v311
        %v335 = vpack.c.bf16 %v314, %v313
        %v336 = vpack.c.bf16 %v316, %v315
        %v337 = vpack.c.bf16 %v318, %v317
        %v338 = vpack.c.bf16 %v320, %v319
        %v339 = vpack.c.bf16 %v322, %v321
        %v340 = vpack.c.bf16 %v324, %v323
        %v357 = vunpack.c.l.b16 %v325
        %v358 = vunpack.c.h.b16 %v325
        %v359 = vunpack.c.l.b16 %v326
        %v360 = vunpack.c.h.b16 %v326
        %v361 = vunpack.c.l.b16 %v327
        %v362 = vunpack.c.h.b16 %v327
        %v363 = vunpack.c.l.b16 %v328
        %v364 = vunpack.c.h.b16 %v328
        %v365 = vunpack.c.l.b16 %v329
        %v366 = vunpack.c.h.b16 %v329
        %v367 = vunpack.c.l.b16 %v330
        %v368 = vunpack.c.h.b16 %v330
        %v369 = vunpack.c.l.b16 %v331
        %v370 = vunpack.c.h.b16 %v331
        %v371 = vunpack.c.l.b16 %v332
        %v372 = vunpack.c.h.b16 %v332
        %v373 = vunpack.c.l.b16 %v333
        %v374 = vunpack.c.h.b16 %v333
        %v375 = vunpack.c.l.b16 %v334
        %v376 = vunpack.c.h.b16 %v334
        %v377 = vunpack.c.l.b16 %v335
        %v378 = vunpack.c.h.b16 %v335
        %v379 = vunpack.c.l.b16 %v336
        %v380 = vunpack.c.h.b16 %v336
        %v381 = vunpack.c.l.b16 %v337
        %v382 = vunpack.c.h.b16 %v337
        %v383 = vunpack.c.l.b16 %v338
        %v384 = vunpack.c.h.b16 %v338
        %v385 = vunpack.c.l.b16 %v339
        %v386 = vunpack.c.h.b16 %v339
        %v387 = vunpack.c.l.b16 %v340
        %v388 = vunpack.c.h.b16 %v340
        %v389 = vpack.c.b16 %v357, %v357
        %v390 = vpack.c.b16 %v358, %v358
        %v391 = vpack.c.b16 %v359, %v359
        %v392 = vpack.c.b16 %v360, %v360
        %v393 = vpack.c.b16 %v361, %v361
        %v394 = vpack.c.b16 %v362, %v362
        %v395 = vpack.c.b16 %v363, %v363
        %v396 = vpack.c.b16 %v364, %v364
        %v397 = vpack.c.b16 %v365, %v365
        %v398 = vpack.c.b16 %v366, %v366
        %v399 = vpack.c.b16 %v367, %v367
        %v400 = vpack.c.b16 %v368, %v368
        %v401 = vpack.c.b16 %v369, %v369
        %v402 = vpack.c.b16 %v370, %v370
        %v403 = vpack.c.b16 %v371, %v371
        %v404 = vpack.c.b16 %v372, %v372
        %v405 = vpack.c.b16 %v373, %v373
        %v406 = vpack.c.b16 %v374, %v374
        %v407 = vpack.c.b16 %v375, %v375
        %v408 = vpack.c.b16 %v376, %v376
        %v409 = vpack.c.b16 %v377, %v377
        %v410 = vpack.c.b16 %v378, %v378
        %v411 = vpack.c.b16 %v379, %v379
        %v412 = vpack.c.b16 %v380, %v380
        %v413 = vpack.c.b16 %v381, %v381
        %v414 = vpack.c.b16 %v382, %v382
        %v415 = vpack.c.b16 %v383, %v383
        %v416 = vpack.c.b16 %v384, %v384
        %v417 = vpack.c.b16 %v385, %v385
        %v418 = vpack.c.b16 %v386, %v386
        %v419 = vpack.c.b16 %v387, %v387
        %v420 = vpack.c.b16 %v388, %v388
        %vm421 = vsmask.f32 256
        %vm422 = vsmask.f32 4368
        %vm423 = vmor %vm421, %vm422
        %v425 = vshrl.u32 %v389, 16
        %v427 = vrot.slane %v425, 7
        %v428 = vshll.u32 %v389, 16
        %v430 = vor.u32 %v427, %v428
        %v431 = vrot.slane %v427, 4
        %v433 = vshrl.u32 %v390, 16
        %v435 = vrot.slane %v433, 7
        %v436 = vshll.u32 %v390, 16
        %v438 = vor.u32 %v435, %v436
        %v439 = vsel %vm423, %v431, %v438
        %v440 = vrot.slane %v435, 4
        %v442 = vshrl.u32 %v391, 16
        %v444 = vrot.slane %v442, 7
        %v445 = vshll.u32 %v391, 16
        %v447 = vor.u32 %v444, %v445
        %v448 = vrot.slane %v444, 4
        %v450 = vshrl.u32 %v392, 16
        %v452 = vrot.slane %v450, 7
        %v453 = vshll.u32 %v392, 16
        %v455 = vor.u32 %v452, %v453
        %v456 = vsel %vm423, %v448, %v455
        %v457 = vrot.slane %v452, 4
        %v459 = vshrl.u32 %v393, 16
        %v461 = vrot.slane %v459, 7
        %v462 = vshll.u32 %v393, 16
        %v464 = vor.u32 %v461, %v462
        %v465 = vrot.slane %v461, 4
        %v467 = vshrl.u32 %v394, 16
        %v469 = vrot.slane %v467, 7
        %v470 = vshll.u32 %v394, 16
        %v472 = vor.u32 %v469, %v470
        %v473 = vsel %vm423, %v465, %v472
        %v474 = vrot.slane %v469, 4
        %v476 = vshrl.u32 %v395, 16
        %v478 = vrot.slane %v476, 7
        %v479 = vshll.u32 %v395, 16
        %v481 = vor.u32 %v478, %v479
        %v482 = vrot.slane %v478, 4
        %v484 = vshrl.u32 %v396, 16
        %v486 = vrot.slane %v484, 7
        %v487 = vshll.u32 %v396, 16
        %v489 = vor.u32 %v486, %v487
        %v490 = vsel %vm423, %v482, %v489
        %v491 = vrot.slane %v486, 4
        %v493 = vshrl.u32 %v397, 16
        %v495 = vrot.slane %v493, 7
        %v496 = vshll.u32 %v397, 16
        %v498 = vor.u32 %v495, %v496
        %v499 = vrot.slane %v495, 4
        %v501 = vshrl.u32 %v398, 16
        %v503 = vrot.slane %v501, 7
        %v504 = vshll.u32 %v398, 16
        %v506 = vor.u32 %v503, %v504
        %v507 = vsel %vm423, %v499, %v506
        %v508 = vrot.slane %v503, 4
        %v510 = vshrl.u32 %v399, 16
        %v512 = vrot.slane %v510, 7
        %v513 = vshll.u32 %v399, 16
        %v515 = vor.u32 %v512, %v513
        %v516 = vrot.slane %v512, 4
        %v518 = vshrl.u32 %v400, 16
        %v520 = vrot.slane %v518, 7
        %v521 = vshll.u32 %v400, 16
        %v523 = vor.u32 %v520, %v521
        %v524 = vsel %vm423, %v516, %v523
        %v525 = vrot.slane %v520, 4
        %v527 = vshrl.u32 %v401, 16
        %v529 = vrot.slane %v527, 7
        %v530 = vshll.u32 %v401, 16
        %v532 = vor.u32 %v529, %v530
        %v533 = vrot.slane %v529, 4
        %v535 = vshrl.u32 %v402, 16
        %v537 = vrot.slane %v535, 7
        %v538 = vshll.u32 %v402, 16
        %v540 = vor.u32 %v537, %v538
        %v541 = vsel %vm423, %v533, %v540
        %v542 = vrot.slane %v537, 4
        %v544 = vshrl.u32 %v403, 16
        %v546 = vrot.slane %v544, 7
        %v547 = vshll.u32 %v403, 16
        %v549 = vor.u32 %v546, %v547
        %v550 = vrot.slane %v546, 4
        %v552 = vshrl.u32 %v404, 16
        %v554 = vrot.slane %v552, 7
        %v555 = vshll.u32 %v404, 16
        %v557 = vor.u32 %v554, %v555
        %v558 = vsel %vm423, %v550, %v557
        %v559 = vrot.slane %v554, 4
        %v561 = vshrl.u32 %v405, 16
        %v563 = vrot.slane %v561, 7
        %v564 = vshll.u32 %v405, 16
        %v566 = vor.u32 %v563, %v564
        %v567 = vrot.slane %v563, 4
        %v569 = vshrl.u32 %v406, 16
        %v571 = vrot.slane %v569, 7
        %v572 = vshll.u32 %v406, 16
        %v574 = vor.u32 %v571, %v572
        %v575 = vsel %vm423, %v567, %v574
        %v576 = vrot.slane %v571, 4
        %v578 = vshrl.u32 %v407, 16
        %v580 = vrot.slane %v578, 7
        %v581 = vshll.u32 %v407, 16
        %v583 = vor.u32 %v580, %v581
        %v584 = vrot.slane %v580, 4
        %v586 = vshrl.u32 %v408, 16
        %v588 = vrot.slane %v586, 7
        %v589 = vshll.u32 %v408, 16
        %v591 = vor.u32 %v588, %v589
        %v592 = vsel %vm423, %v584, %v591
        %v593 = vrot.slane %v588, 4
        %v595 = vshrl.u32 %v409, 16
        %v597 = vrot.slane %v595, 7
        %v598 = vshll.u32 %v409, 16
        %v600 = vor.u32 %v597, %v598
        %v601 = vrot.slane %v597, 4
        %v603 = vshrl.u32 %v410, 16
        %v605 = vrot.slane %v603, 7
        %v606 = vshll.u32 %v410, 16
        %v608 = vor.u32 %v605, %v606
        %v609 = vsel %vm423, %v601, %v608
        %v610 = vrot.slane %v605, 4
        %v612 = vshrl.u32 %v411, 16
        %v614 = vrot.slane %v612, 7
        %v615 = vshll.u32 %v411, 16
        %v617 = vor.u32 %v614, %v615
        %v618 = vrot.slane %v614, 4
        %v620 = vshrl.u32 %v412, 16
        %v622 = vrot.slane %v620, 7
        %v623 = vshll.u32 %v412, 16
        %v625 = vor.u32 %v622, %v623
        %v626 = vsel %vm423, %v618, %v625
        %v627 = vrot.slane %v622, 4
        %v629 = vshrl.u32 %v413, 16
        %v631 = vrot.slane %v629, 7
        %v632 = vshll.u32 %v413, 16
        %v634 = vor.u32 %v631, %v632
        %v635 = vrot.slane %v631, 4
        %v637 = vshrl.u32 %v414, 16
        %v639 = vrot.slane %v637, 7
        %v640 = vshll.u32 %v414, 16
        %v642 = vor.u32 %v639, %v640
        %v643 = vsel %vm423, %v635, %v642
        %v644 = vrot.slane %v639, 4
        %v646 = vshrl.u32 %v415, 16
        %v648 = vrot.slane %v646, 7
        %v649 = vshll.u32 %v415, 16
        %v651 = vor.u32 %v648, %v649
        %v652 = vrot.slane %v648, 4
        %v654 = vshrl.u32 %v416, 16
        %v656 = vrot.slane %v654, 7
        %v657 = vshll.u32 %v416, 16
        %v659 = vor.u32 %v656, %v657
        %v660 = vsel %vm423, %v652, %v659
        %v661 = vrot.slane %v656, 4
        %v663 = vshrl.u32 %v417, 16
        %v665 = vrot.slane %v663, 7
        %v666 = vshll.u32 %v417, 16
        %v668 = vor.u32 %v665, %v666
        %v669 = vrot.slane %v665, 4
        %v671 = vshrl.u32 %v418, 16
        %v673 = vrot.slane %v671, 7
        %v674 = vshll.u32 %v418, 16
        %v676 = vor.u32 %v673, %v674
        %v677 = vsel %vm423, %v669, %v676
        %v678 = vrot.slane %v673, 4
        %v680 = vshrl.u32 %v419, 16
        %v682 = vrot.slane %v680, 7
        %v683 = vshll.u32 %v419, 16
        %v685 = vor.u32 %v682, %v683
        %v686 = vrot.slane %v682, 4
        %v688 = vshrl.u32 %v420, 16
        %v690 = vrot.slane %v688, 7
        %v691 = vshll.u32 %v420, 16
        %v693 = vor.u32 %v690, %v691
        %v694 = vsel %vm423, %v686, %v693
        %v695 = vrot.slane %v690, 4
        %s744 = scalar_lea.vmem [#allocation2], 12
        %vm745 = vcmask 19456
        %vm746 = vsmask.f32 7938
        %vm747 = vmand %vm745, %vm746
        %v748 = vld [vmem:[%s744] sm:$0xf]
        %v749 = vsel %vm747, %v430, %v748
        %750 = vst [vmem:[%s744] sm:$0xf] %v749
        %vm751 = vcmask 19456
        %752 = vst.msk [vmem:[%s744 + $0x4] sm:$0xf] %vm751, %v439
        %vm753 = vcmask 16384
        %vm754 = vmand %vm753, %vm421
        %v755 = vld [vmem:[%s744 + $0x8] sm:$0x1]
        %v756 = vsel %vm754, %v440, %v755
        %757 = vst [vmem:[%s744 + $0x8] sm:$0x1] %v756
        %v758 = vld [vmem:[%s744 + $0xc] sm:$0xf]
        %v759 = vsel %vm747, %v447, %v758
        %760 = vst [vmem:[%s744 + $0xc] sm:$0xf] %v759
        %761 = vst.msk [vmem:[%s744 + $0x10] sm:$0xf] %vm751, %v456
        %v762 = vld [vmem:[%s744 + $0x14] sm:$0x1]
        %v763 = vsel %vm754, %v457, %v762
        %764 = vst [vmem:[%s744 + $0x14] sm:$0x1] %v763
        %v765 = vld [vmem:[%s744 + $0x18] sm:$0xf]
        %v766 = vsel %vm747, %v464, %v765
        %767 = vst [vmem:[%s744 + $0x18] sm:$0xf] %v766
        %768 = vst.msk [vmem:[%s744 + $0x1c] sm:$0xf] %vm751, %v473
        %v769 = vld [vmem:[%s744 + $0x20] sm:$0x1]
        %v770 = vsel %vm754, %v474, %v769
        %771 = vst [vmem:[%s744 + $0x20] sm:$0x1] %v770
        %v772 = vld [vmem:[%s744 + $0x24] sm:$0xf]
        %v773 = vsel %vm747, %v481, %v772
        %774 = vst [vmem:[%s744 + $0x24] sm:$0xf] %v773
        %775 = vst.msk [vmem:[%s744 + $0x28] sm:$0xf] %vm751, %v490
        %v776 = vld [vmem:[%s744 + $0x2c] sm:$0x1]
        %v777 = vsel %vm754, %v491, %v776
        %778 = vst [vmem:[%s744 + $0x2c] sm:$0x1] %v777
        %v779 = vld [vmem:[%s744 + $0x30] sm:$0xf]
        %v780 = vsel %vm747, %v498, %v779
        %781 = vst [vmem:[%s744 + $0x30] sm:$0xf] %v780
        %782 = vst.msk [vmem:[%s744 + $0x34] sm:$0xf] %vm751, %v507
        %v783 = vld [vmem:[%s744 + $0x38] sm:$0x1]
        %v784 = vsel %vm754, %v508, %v783
        %785 = vst [vmem:[%s744 + $0x38] sm:$0x1] %v784
        %v786 = vld [vmem:[%s744 + $0x3c] sm:$0xf]
        %v787 = vsel %vm747, %v515, %v786
        %788 = vst [vmem:[%s744 + $0x3c] sm:$0xf] %v787
        %789 = vst.msk [vmem:[%s744 + $0x40] sm:$0xf] %vm751, %v524
        %v790 = vld [vmem:[%s744 + $0x44] sm:$0x1]
        %v791 = vsel %vm754, %v525, %v790
        %792 = vst [vmem:[%s744 + $0x44] sm:$0x1] %v791
        %v793 = vld [vmem:[%s744 + $0x48] sm:$0xf]
        %v794 = vsel %vm747, %v532, %v793
        %795 = vst [vmem:[%s744 + $0x48] sm:$0xf] %v794
        %796 = vst.msk [vmem:[%s744 + $0x4c] sm:$0xf] %vm751, %v541
        %v797 = vld [vmem:[%s744 + $0x50] sm:$0x1]
        %v798 = vsel %vm754, %v542, %v797
        %799 = vst [vmem:[%s744 + $0x50] sm:$0x1] %v798
        %v800 = vld [vmem:[%s744 + $0x54] sm:$0xf]
        %v801 = vsel %vm747, %v549, %v800
        %802 = vst [vmem:[%s744 + $0x54] sm:$0xf] %v801
        %803 = vst.msk [vmem:[%s744 + $0x58] sm:$0xf] %vm751, %v558
        %v804 = vld [vmem:[%s744 + $0x5c] sm:$0x1]
        %v805 = vsel %vm754, %v559, %v804
        %806 = vst [vmem:[%s744 + $0x5c] sm:$0x1] %v805
        %v807 = vld [vmem:[%s744 + $0x60] sm:$0xf]
        %v808 = vsel %vm747, %v566, %v807
        %809 = vst [vmem:[%s744 + $0x60] sm:$0xf] %v808
        %810 = vst.msk [vmem:[%s744 + $0x64] sm:$0xf] %vm751, %v575
        %v811 = vld [vmem:[%s744 + $0x68] sm:$0x1]
        %v812 = vsel %vm754, %v576, %v811
        %813 = vst [vmem:[%s744 + $0x68] sm:$0x1] %v812
        %v814 = vld [vmem:[%s744 + $0x6c] sm:$0xf]
        %v815 = vsel %vm747, %v583, %v814
        %816 = vst [vmem:[%s744 + $0x6c] sm:$0xf] %v815
        %817 = vst.msk [vmem:[%s744 + $0x70] sm:$0xf] %vm751, %v592
        %v818 = vld [vmem:[%s744 + $0x74] sm:$0x1]
        %v819 = vsel %vm754, %v593, %v818
        %820 = vst [vmem:[%s744 + $0x74] sm:$0x1] %v819
        %v821 = vld [vmem:[%s744 + $0x78] sm:$0xf]
        %v822 = vsel %vm747, %v600, %v821
        %823 = vst [vmem:[%s744 + $0x78] sm:$0xf] %v822
        %824 = vst.msk [vmem:[%s744 + $0x7c] sm:$0xf] %vm751, %v609
        %v825 = vld [vmem:[%s744 + $0x80] sm:$0x1]
        %v826 = vsel %vm754, %v610, %v825
        %827 = vst [vmem:[%s744 + $0x80] sm:$0x1] %v826
        %v828 = vld [vmem:[%s744 + $0x84] sm:$0xf]
        %v829 = vsel %vm747, %v617, %v828
        %830 = vst [vmem:[%s744 + $0x84] sm:$0xf] %v829
        %831 = vst.msk [vmem:[%s744 + $0x88] sm:$0xf] %vm751, %v626
        %v832 = vld [vmem:[%s744 + $0x8c] sm:$0x1]
        %v833 = vsel %vm754, %v627, %v832
        %834 = vst [vmem:[%s744 + $0x8c] sm:$0x1] %v833
        %v835 = vld [vmem:[%s744 + $0x90] sm:$0xf]
        %v836 = vsel %vm747, %v634, %v835
        %837 = vst [vmem:[%s744 + $0x90] sm:$0xf] %v836
        %838 = vst.msk [vmem:[%s744 + $0x94] sm:$0xf] %vm751, %v643
        %v839 = vld [vmem:[%s744 + $0x98] sm:$0x1]
        %v840 = vsel %vm754, %v644, %v839
        %841 = vst [vmem:[%s744 + $0x98] sm:$0x1] %v840
        %v842 = vld [vmem:[%s744 + $0x9c] sm:$0xf]
        %v843 = vsel %vm747, %v651, %v842
        %844 = vst [vmem:[%s744 + $0x9c] sm:$0xf] %v843
        %845 = vst.msk [vmem:[%s744 + $0xa0] sm:$0xf] %vm751, %v660
        %v846 = vld [vmem:[%s744 + $0xa4] sm:$0x1]
        %v847 = vsel %vm754, %v661, %v846
        %848 = vst [vmem:[%s744 + $0xa4] sm:$0x1] %v847
        %v849 = vld [vmem:[%s744 + $0xa8] sm:$0xf]
        %v850 = vsel %vm747, %v668, %v849
        %851 = vst [vmem:[%s744 + $0xa8] sm:$0xf] %v850
        %852 = vst.msk [vmem:[%s744 + $0xac] sm:$0xf] %vm751, %v677
        %v853 = vld [vmem:[%s744 + $0xb0] sm:$0x1]
        %v854 = vsel %vm754, %v678, %v853
        %855 = vst [vmem:[%s744 + $0xb0] sm:$0x1] %v854
        %v856 = vld [vmem:[%s744 + $0xb4] sm:$0xf]
        %v857 = vsel %vm747, %v685, %v856
        %858 = vst [vmem:[%s744 + $0xb4] sm:$0xf] %v857
        %859 = vst.msk [vmem:[%s744 + $0xb8] sm:$0xf] %vm751, %v694
        %v860 = vld [vmem:[%s744 + $0xbc] sm:$0x1]
        %v861 = vsel %vm754, %v695, %v860
        %862 = vst [vmem:[%s744 + $0xbc] sm:$0x1] %v861
        %v863 = vld [vmem:[#allocation2] sm:$0xf]
        %v864 = vld [vmem:[#allocation2 + $0x4] sm:$0xf]
        %v865 = vld [vmem:[#allocation2 + $0xc] sm:$0xf]
        %v866 = vld [vmem:[#allocation2 + $0x10] sm:$0xf]
        %v867 = vld [vmem:[#allocation2 + $0x18] sm:$0xf]
        %v868 = vld [vmem:[#allocation2 + $0x1c] sm:$0xf]
        %v869 = vld [vmem:[#allocation2 + $0x24] sm:$0xf]
        %v870 = vld [vmem:[#allocation2 + $0x28] sm:$0xf]
        %v871 = vld [vmem:[#allocation2 + $0x30] sm:$0xf]
        %v872 = vld [vmem:[#allocation2 + $0x34] sm:$0xf]
        %v873 = vld [vmem:[#allocation2 + $0x3c] sm:$0xf]
        %v874 = vld [vmem:[#allocation2 + $0x40] sm:$0xf]
        %v875 = vld [vmem:[#allocation2 + $0x48] sm:$0xf]
        %v876 = vld [vmem:[#allocation2 + $0x4c] sm:$0xf]
        %v877 = vld [vmem:[#allocation2 + $0x54] sm:$0xf]
        %v878 = vld [vmem:[#allocation2 + $0x58] sm:$0xf]
        %v879 = vld [vmem:[#allocation2 + $0x60] sm:$0xf]
        %v880 = vld [vmem:[#allocation2 + $0x64] sm:$0xf]
        %v881 = vld [vmem:[#allocation2 + $0x6c] sm:$0xf]
        %v882 = vld [vmem:[#allocation2 + $0x70] sm:$0xf]
        %v883 = vld [vmem:[#allocation2 + $0x78] sm:$0xf]
        %v884 = vld [vmem:[#allocation2 + $0x7c] sm:$0xf]
        %v885 = vld [vmem:[#allocation2 + $0x84] sm:$0xf]
        %v886 = vld [vmem:[#allocation2 + $0x88] sm:$0xf]
        %v887 = vld [vmem:[#allocation2 + $0x90] sm:$0xf]
        %v888 = vld [vmem:[#allocation2 + $0x94] sm:$0xf]
        %v889 = vld [vmem:[#allocation2 + $0x9c] sm:$0xf]
        %v890 = vld [vmem:[#allocation2 + $0xa0] sm:$0xf]
        %v891 = vld [vmem:[#allocation2 + $0xa8] sm:$0xf]
        %v892 = vld [vmem:[#allocation2 + $0xac] sm:$0xf]
        %v893 = vld [vmem:[#allocation2 + $0xb4] sm:$0xf]
        %v894 = vld [vmem:[#allocation2 + $0xb8] sm:$0xf]
        %v927 = vunpack.c.l.b16 %v863
        %v928 = vunpack.c.l.b16 %v864
        %v929 = vunpack.c.l.b16 %v865
        %v930 = vunpack.c.l.b16 %v866
        %v931 = vunpack.c.l.b16 %v867
        %v932 = vunpack.c.l.b16 %v868
        %v933 = vunpack.c.l.b16 %v869
        %v934 = vunpack.c.l.b16 %v870
        %v935 = vunpack.c.l.b16 %v871
        %v936 = vunpack.c.l.b16 %v872
        %v937 = vunpack.c.l.b16 %v873
        %v938 = vunpack.c.l.b16 %v874
        %v939 = vunpack.c.l.b16 %v875
        %v940 = vunpack.c.l.b16 %v876
        %v941 = vunpack.c.l.b16 %v877
        %v942 = vunpack.c.l.b16 %v878
        %v943 = vunpack.c.l.b16 %v879
        %v944 = vunpack.c.l.b16 %v880
        %v945 = vunpack.c.l.b16 %v881
        %v946 = vunpack.c.l.b16 %v882
        %v947 = vunpack.c.l.b16 %v883
        %v948 = vunpack.c.l.b16 %v884
        %v949 = vunpack.c.l.b16 %v885
        %v950 = vunpack.c.l.b16 %v886
        %v951 = vunpack.c.l.b16 %v887
        %v952 = vunpack.c.l.b16 %v888
        %v953 = vunpack.c.l.b16 %v889
        %v954 = vunpack.c.l.b16 %v890
        %v955 = vunpack.c.l.b16 %v891
        %v956 = vunpack.c.l.b16 %v892
        %v957 = vunpack.c.l.b16 %v893
        %v958 = vunpack.c.l.b16 %v894
        %v959 = vpack.c.b16 %v928, %v927
        %v960 = vpack.c.b16 %v930, %v929
        %v961 = vpack.c.b16 %v932, %v931
        %v962 = vpack.c.b16 %v934, %v933
        %v963 = vpack.c.b16 %v936, %v935
        %v964 = vpack.c.b16 %v938, %v937
        %v965 = vpack.c.b16 %v940, %v939
        %v966 = vpack.c.b16 %v942, %v941
        %v967 = vpack.c.b16 %v944, %v943
        %v968 = vpack.c.b16 %v946, %v945
        %v969 = vpack.c.b16 %v948, %v947
        %v970 = vpack.c.b16 %v950, %v949
        %v971 = vpack.c.b16 %v952, %v951
        %v972 = vpack.c.b16 %v954, %v953
        %v973 = vpack.c.b16 %v956, %v955
        %v974 = vpack.c.b16 %v958, %v957
        %991 = vst [vmem:[#allocation3] sm:$0xff] %v959
        %992 = vst [vmem:[#allocation3 + $0x48] sm:$0xff] %v960
        %993 = vst [vmem:[#allocation3 + $0x90] sm:$0xff] %v961
        %994 = vst [vmem:[#allocation3 + $0xd8] sm:$0xff] %v962
        %995 = vst [vmem:[#allocation3 + $0x120] sm:$0xff] %v963
        %996 = vst [vmem:[#allocation3 + $0x168] sm:$0xff] %v964
        %997 = vst [vmem:[#allocation3 + $0x1b0] sm:$0xff] %v965
        %998 = vst [vmem:[#allocation3 + $0x1f8] sm:$0xff] %v966
        %999 = vst [vmem:[#allocation3 + $0x240] sm:$0xff] %v967
        %1000 = vst [vmem:[#allocation3 + $0x288] sm:$0xff] %v968
        %1001 = vst [vmem:[#allocation3 + $0x2d0] sm:$0xff] %v969
        %1002 = vst [vmem:[#allocation3 + $0x318] sm:$0xff] %v970
        %1003 = vst [vmem:[#allocation3 + $0x360] sm:$0xff] %v971
        %1004 = vst [vmem:[#allocation3 + $0x3a8] sm:$0xff] %v972
        %1005 = vst [vmem:[#allocation3 + $0x3f0] sm:$0xff] %v973
        %1006 = vst [vmem:[#allocation3 + $0x438] sm:$0xff] %v974
        %v1007 = vld [vmem:[#allocation2] sm:$0xf]
        %v1008 = vld [vmem:[#allocation2 + $0x4] sm:$0xf]
        %v1009 = vld [vmem:[#allocation2 + $0x8] sm:$0x1]
        %v1010 = vld [vmem:[#allocation2 + $0xc] sm:$0xf]
        %v1011 = vld [vmem:[#allocation2 + $0x10] sm:$0xf]
        %v1012 = vld [vmem:[#allocation2 + $0x14] sm:$0x1]
        %v1013 = vld [vmem:[#allocation2 + $0x18] sm:$0xf]
        %v1014 = vld [vmem:[#allocation2 + $0x1c] sm:$0xf]
        %v1015 = vld [vmem:[#allocation2 + $0x20] sm:$0x1]
        %v1016 = vld [vmem:[#allocation2 + $0x24] sm:$0xf]
        %v1017 = vld [vmem:[#allocation2 + $0x28] sm:$0xf]
        %v1018 = vld [vmem:[#allocation2 + $0x2c] sm:$0x1]
        %v1019 = vld [vmem:[#allocation2 + $0x30] sm:$0xf]
        %v1020 = vld [vmem:[#allocation2 + $0x34] sm:$0xf]
        %v1021 = vld [vmem:[#allocation2 + $0x38] sm:$0x1]
        %v1022 = vld [vmem:[#allocation2 + $0x3c] sm:$0xf]
        %v1023 = vld [vmem:[#allocation2 + $0x40] sm:$0xf]
        %v1024 = vld [vmem:[#allocation2 + $0x44] sm:$0x1]
        %v1025 = vld [vmem:[#allocation2 + $0x48] sm:$0xf]
        %v1026 = vld [vmem:[#allocation2 + $0x4c] sm:$0xf]
        %v1027 = vld [vmem:[#allocation2 + $0x50] sm:$0x1]
        %v1028 = vld [vmem:[#allocation2 + $0x54] sm:$0xf]
        %v1029 = vld [vmem:[#allocation2 + $0x58] sm:$0xf]
        %v1030 = vld [vmem:[#allocation2 + $0x5c] sm:$0x1]
        %v1031 = vld [vmem:[#allocation2 + $0x60] sm:$0xf]
        %v1032 = vld [vmem:[#allocation2 + $0x64] sm:$0xf]
        %v1033 = vld [vmem:[#allocation2 + $0x68] sm:$0x1]
        %v1034 = vld [vmem:[#allocation2 + $0x6c] sm:$0xf]
        %v1035 = vld [vmem:[#allocation2 + $0x70] sm:$0xf]
        %v1036 = vld [vmem:[#allocation2 + $0x74] sm:$0x1]
        %v1037 = vld [vmem:[#allocation2 + $0x78] sm:$0xf]
        %v1038 = vld [vmem:[#allocation2 + $0x7c] sm:$0xf]
        %v1039 = vld [vmem:[#allocation2 + $0x80] sm:$0x1]
        %v1040 = vld [vmem:[#allocation2 + $0x84] sm:$0xf]
        %v1041 = vld [vmem:[#allocation2 + $0x88] sm:$0xf]
        %v1042 = vld [vmem:[#allocation2 + $0x8c] sm:$0x1]
        %v1043 = vld [vmem:[#allocation2 + $0x90] sm:$0xf]
        %v1044 = vld [vmem:[#allocation2 + $0x94] sm:$0xf]
        %v1045 = vld [vmem:[#allocation2 + $0x98] sm:$0x1]
        %v1046 = vld [vmem:[#allocation2 + $0x9c] sm:$0xf]
        %v1047 = vld [vmem:[#allocation2 + $0xa0] sm:$0xf]
        %v1048 = vld [vmem:[#allocation2 + $0xa4] sm:$0x1]
        %v1049 = vld [vmem:[#allocation2 + $0xa8] sm:$0xf]
        %v1050 = vld [vmem:[#allocation2 + $0xac] sm:$0xf]
        %v1051 = vld [vmem:[#allocation2 + $0xb0] sm:$0x1]
        %v1052 = vld [vmem:[#allocation2 + $0xb4] sm:$0xf]
        %v1053 = vld [vmem:[#allocation2 + $0xb8] sm:$0xf]
        %v1054 = vld [vmem:[#allocation2 + $0xbc] sm:$0x1]
        %vm1055 = vsmask.f32 3328
        %vm1056 = vsmask.f32 7440
        %vm1057 = vmor %vm1055, %vm1056
        %v1059 = vshrl.u32 %v1007, 16
        %v1061 = vrot.slane %v1059, 4
        %v1062 = vshll.u32 %v1007, 16
        %v1064 = vrot.slane %v1062, 5
        %v1065 = vor.u32 %v1061, %v1064
        %v1066 = vrot.slane %v1065, 4
        %v1068 = vshll.u32 %v1008, 16
        %v1070 = vrot.slane %v1068, 5
        %v1071 = vsel %vm1057, %v1066, %v1070
        %v1072 = vshrl.u32 %v1008, 16
        %v1074 = vrot.slane %v1072, 4
        %v1075 = vor.u32 %v1074, %v1070
        %v1076 = vrot.slane %v1075, 4
        %v1078 = vshll.u32 %v1009, 16
        %v1080 = vrot.slane %v1078, 5
        %v1081 = vsel %vm1057, %v1076, %v1080
        %v1083 = vshrl.u32 %v1010, 16
        %v1085 = vrot.slane %v1083, 4
        %v1086 = vshll.u32 %v1010, 16
        %v1088 = vrot.slane %v1086, 5
        %v1089 = vor.u32 %v1085, %v1088
        %v1090 = vrot.slane %v1089, 4
        %v1092 = vshll.u32 %v1011, 16
        %v1094 = vrot.slane %v1092, 5
        %v1095 = vsel %vm1057, %v1090, %v1094
        %v1096 = vshrl.u32 %v1011, 16
        %v1098 = vrot.slane %v1096, 4
        %v1099 = vor.u32 %v1098, %v1094
        %v1100 = vrot.slane %v1099, 4
        %v1102 = vshll.u32 %v1012, 16
        %v1104 = vrot.slane %v1102, 5
        %v1105 = vsel %vm1057, %v1100, %v1104
        %v1107 = vshrl.u32 %v1013, 16
        %v1109 = vrot.slane %v1107, 4
        %v1110 = vshll.u32 %v1013, 16
        %v1112 = vrot.slane %v1110, 5
        %v1113 = vor.u32 %v1109, %v1112
        %v1114 = vrot.slane %v1113, 4
        %v1116 = vshll.u32 %v1014, 16
        %v1118 = vrot.slane %v1116, 5
        %v1119 = vsel %vm1057, %v1114, %v1118
        %v1120 = vshrl.u32 %v1014, 16
        %v1122 = vrot.slane %v1120, 4
        %v1123 = vor.u32 %v1122, %v1118
        %v1124 = vrot.slane %v1123, 4
        %v1126 = vshll.u32 %v1015, 16
        %v1128 = vrot.slane %v1126, 5
        %v1129 = vsel %vm1057, %v1124, %v1128
        %v1131 = vshrl.u32 %v1016, 16
        %v1133 = vrot.slane %v1131, 4
        %v1134 = vshll.u32 %v1016, 16
        %v1136 = vrot.slane %v1134, 5
        %v1137 = vor.u32 %v1133, %v1136
        %v1138 = vrot.slane %v1137, 4
        %v1140 = vshll.u32 %v1017, 16
        %v1142 = vrot.slane %v1140, 5
        %v1143 = vsel %vm1057, %v1138, %v1142
        %v1144 = vshrl.u32 %v1017, 16
        %v1146 = vrot.slane %v1144, 4
        %v1147 = vor.u32 %v1146, %v1142
        %v1148 = vrot.slane %v1147, 4
        %v1150 = vshll.u32 %v1018, 16
        %v1152 = vrot.slane %v1150, 5
        %v1153 = vsel %vm1057, %v1148, %v1152
        %v1155 = vshrl.u32 %v1019, 16
        %v1157 = vrot.slane %v1155, 4
        %v1158 = vshll.u32 %v1019, 16
        %v1160 = vrot.slane %v1158, 5
        %v1161 = vor.u32 %v1157, %v1160
        %v1162 = vrot.slane %v1161, 4
        %v1164 = vshll.u32 %v1020, 16
        %v1166 = vrot.slane %v1164, 5
        %v1167 = vsel %vm1057, %v1162, %v1166
        %v1168 = vshrl.u32 %v1020, 16
        %v1170 = vrot.slane %v1168, 4
        %v1171 = vor.u32 %v1170, %v1166
        %v1172 = vrot.slane %v1171, 4
        %v1174 = vshll.u32 %v1021, 16
        %v1176 = vrot.slane %v1174, 5
        %v1177 = vsel %vm1057, %v1172, %v1176
        %v1179 = vshrl.u32 %v1022, 16
        %v1181 = vrot.slane %v1179, 4
        %v1182 = vshll.u32 %v1022, 16
        %v1184 = vrot.slane %v1182, 5
        %v1185 = vor.u32 %v1181, %v1184
        %v1186 = vrot.slane %v1185, 4
        %v1188 = vshll.u32 %v1023, 16
        %v1190 = vrot.slane %v1188, 5
        %v1191 = vsel %vm1057, %v1186, %v1190
        %v1192 = vshrl.u32 %v1023, 16
        %v1194 = vrot.slane %v1192, 4
        %v1195 = vor.u32 %v1194, %v1190
        %v1196 = vrot.slane %v1195, 4
        %v1198 = vshll.u32 %v1024, 16
        %v1200 = vrot.slane %v1198, 5
        %v1201 = vsel %vm1057, %v1196, %v1200
        %v1203 = vshrl.u32 %v1025, 16
        %v1205 = vrot.slane %v1203, 4
        %v1206 = vshll.u32 %v1025, 16
        %v1208 = vrot.slane %v1206, 5
        %v1209 = vor.u32 %v1205, %v1208
        %v1210 = vrot.slane %v1209, 4
        %v1212 = vshll.u32 %v1026, 16
        %v1214 = vrot.slane %v1212, 5
        %v1215 = vsel %vm1057, %v1210, %v1214
        %v1216 = vshrl.u32 %v1026, 16
        %v1218 = vrot.slane %v1216, 4
        %v1219 = vor.u32 %v1218, %v1214
        %v1220 = vrot.slane %v1219, 4
        %v1222 = vshll.u32 %v1027, 16
        %v1224 = vrot.slane %v1222, 5
        %v1225 = vsel %vm1057, %v1220, %v1224
        %v1227 = vshrl.u32 %v1028, 16
        %v1229 = vrot.slane %v1227, 4
        %v1230 = vshll.u32 %v1028, 16
        %v1232 = vrot.slane %v1230, 5
        %v1233 = vor.u32 %v1229, %v1232
        %v1234 = vrot.slane %v1233, 4
        %v1236 = vshll.u32 %v1029, 16
        %v1238 = vrot.slane %v1236, 5
        %v1239 = vsel %vm1057, %v1234, %v1238
        %v1240 = vshrl.u32 %v1029, 16
        %v1242 = vrot.slane %v1240, 4
        %v1243 = vor.u32 %v1242, %v1238
        %v1244 = vrot.slane %v1243, 4
        %v1246 = vshll.u32 %v1030, 16
        %v1248 = vrot.slane %v1246, 5
        %v1249 = vsel %vm1057, %v1244, %v1248
        %v1251 = vshrl.u32 %v1031, 16
        %v1253 = vrot.slane %v1251, 4
        %v1254 = vshll.u32 %v1031, 16
        %v1256 = vrot.slane %v1254, 5
        %v1257 = vor.u32 %v1253, %v1256
        %v1258 = vrot.slane %v1257, 4
        %v1260 = vshll.u32 %v1032, 16
        %v1262 = vrot.slane %v1260, 5
        %v1263 = vsel %vm1057, %v1258, %v1262
        %v1264 = vshrl.u32 %v1032, 16
        %v1266 = vrot.slane %v1264, 4
        %v1267 = vor.u32 %v1266, %v1262
        %v1268 = vrot.slane %v1267, 4
        %v1270 = vshll.u32 %v1033, 16
        %v1272 = vrot.slane %v1270, 5
        %v1273 = vsel %vm1057, %v1268, %v1272
        %v1275 = vshrl.u32 %v1034, 16
        %v1277 = vrot.slane %v1275, 4
        %v1278 = vshll.u32 %v1034, 16
        %v1280 = vrot.slane %v1278, 5
        %v1281 = vor.u32 %v1277, %v1280
        %v1282 = vrot.slane %v1281, 4
        %v1284 = vshll.u32 %v1035, 16
        %v1286 = vrot.slane %v1284, 5
        %v1287 = vsel %vm1057, %v1282, %v1286
        %v1288 = vshrl.u32 %v1035, 16
        %v1290 = vrot.slane %v1288, 4
        %v1291 = vor.u32 %v1290, %v1286
        %v1292 = vrot.slane %v1291, 4
        %v1294 = vshll.u32 %v1036, 16
        %v1296 = vrot.slane %v1294, 5
        %v1297 = vsel %vm1057, %v1292, %v1296
        %v1299 = vshrl.u32 %v1037, 16
        %v1301 = vrot.slane %v1299, 4
        %v1302 = vshll.u32 %v1037, 16
        %v1304 = vrot.slane %v1302, 5
        %v1305 = vor.u32 %v1301, %v1304
        %v1306 = vrot.slane %v1305, 4
        %v1308 = vshll.u32 %v1038, 16
        %v1310 = vrot.slane %v1308, 5
        %v1311 = vsel %vm1057, %v1306, %v1310
        %v1312 = vshrl.u32 %v1038, 16
        %v1314 = vrot.slane %v1312, 4
        %v1315 = vor.u32 %v1314, %v1310
        %v1316 = vrot.slane %v1315, 4
        %v1318 = vshll.u32 %v1039, 16
        %v1320 = vrot.slane %v1318, 5
        %v1321 = vsel %vm1057, %v1316, %v1320
        %v1323 = vshrl.u32 %v1040, 16
        %v1325 = vrot.slane %v1323, 4
        %v1326 = vshll.u32 %v1040, 16
        %v1328 = vrot.slane %v1326, 5
        %v1329 = vor.u32 %v1325, %v1328
        %v1330 = vrot.slane %v1329, 4
        %v1332 = vshll.u32 %v1041, 16
        %v1334 = vrot.slane %v1332, 5
        %v1335 = vsel %vm1057, %v1330, %v1334
        %v1336 = vshrl.u32 %v1041, 16
        %v1338 = vrot.slane %v1336, 4
        %v1339 = vor.u32 %v1338, %v1334
        %v1340 = vrot.slane %v1339, 4
        %v1342 = vshll.u32 %v1042, 16
        %v1344 = vrot.slane %v1342, 5
        %v1345 = vsel %vm1057, %v1340, %v1344
        %v1347 = vshrl.u32 %v1043, 16
        %v1349 = vrot.slane %v1347, 4
        %v1350 = vshll.u32 %v1043, 16
        %v1352 = vrot.slane %v1350, 5
        %v1353 = vor.u32 %v1349, %v1352
        %v1354 = vrot.slane %v1353, 4
        %v1356 = vshll.u32 %v1044, 16
        %v1358 = vrot.slane %v1356, 5
        %v1359 = vsel %vm1057, %v1354, %v1358
        %v1360 = vshrl.u32 %v1044, 16
        %v1362 = vrot.slane %v1360, 4
        %v1363 = vor.u32 %v1362, %v1358
        %v1364 = vrot.slane %v1363, 4
        %v1366 = vshll.u32 %v1045, 16
        %v1368 = vrot.slane %v1366, 5
        %v1369 = vsel %vm1057, %v1364, %v1368
        %v1371 = vshrl.u32 %v1046, 16
        %v1373 = vrot.slane %v1371, 4
        %v1374 = vshll.u32 %v1046, 16
        %v1376 = vrot.slane %v1374, 5
        %v1377 = vor.u32 %v1373, %v1376
        %v1378 = vrot.slane %v1377, 4
        %v1380 = vshll.u32 %v1047, 16
        %v1382 = vrot.slane %v1380, 5
        %v1383 = vsel %vm1057, %v1378, %v1382
        %v1384 = vshrl.u32 %v1047, 16
        %v1386 = vrot.slane %v1384, 4
        %v1387 = vor.u32 %v1386, %v1382
        %v1388 = vrot.slane %v1387, 4
        %v1390 = vshll.u32 %v1048, 16
        %v1392 = vrot.slane %v1390, 5
        %v1393 = vsel %vm1057, %v1388, %v1392
        %v1395 = vshrl.u32 %v1049, 16
        %v1397 = vrot.slane %v1395, 4
        %v1398 = vshll.u32 %v1049, 16
        %v1400 = vrot.slane %v1398, 5
        %v1401 = vor.u32 %v1397, %v1400
        %v1402 = vrot.slane %v1401, 4
        %v1404 = vshll.u32 %v1050, 16
        %v1406 = vrot.slane %v1404, 5
        %v1407 = vsel %vm1057, %v1402, %v1406
        %v1408 = vshrl.u32 %v1050, 16
        %v1410 = vrot.slane %v1408, 4
        %v1411 = vor.u32 %v1410, %v1406
        %v1412 = vrot.slane %v1411, 4
        %v1414 = vshll.u32 %v1051, 16
        %v1416 = vrot.slane %v1414, 5
        %v1417 = vsel %vm1057, %v1412, %v1416
        %v1419 = vshrl.u32 %v1052, 16
        %v1421 = vrot.slane %v1419, 4
        %v1422 = vshll.u32 %v1052, 16
        %v1424 = vrot.slane %v1422, 5
        %v1425 = vor.u32 %v1421, %v1424
        %v1426 = vrot.slane %v1425, 4
        %v1428 = vshll.u32 %v1053, 16
        %v1430 = vrot.slane %v1428, 5
        %v1431 = vsel %vm1057, %v1426, %v1430
        %v1432 = vshrl.u32 %v1053, 16
        %v1434 = vrot.slane %v1432, 4
        %v1435 = vor.u32 %v1434, %v1430
        %v1436 = vrot.slane %v1435, 4
        %v1438 = vshll.u32 %v1054, 16
        %v1440 = vrot.slane %v1438, 5
        %v1441 = vsel %vm1057, %v1436, %v1440
        %v1442 = vunpack.c.l.b16 %v1071
        %v1443 = vunpack.c.l.b16 %v1081
        %v1444 = vunpack.c.l.b16 %v1095
        %v1445 = vunpack.c.l.b16 %v1105
        %v1446 = vunpack.c.l.b16 %v1119
        %v1447 = vunpack.c.l.b16 %v1129
        %v1448 = vunpack.c.l.b16 %v1143
        %v1449 = vunpack.c.l.b16 %v1153
        %v1450 = vunpack.c.l.b16 %v1167
        %v1451 = vunpack.c.l.b16 %v1177
        %v1452 = vunpack.c.l.b16 %v1191
        %v1453 = vunpack.c.l.b16 %v1201
        %v1454 = vunpack.c.l.b16 %v1215
        %v1455 = vunpack.c.l.b16 %v1225
        %v1456 = vunpack.c.l.b16 %v1239
        %v1457 = vunpack.c.l.b16 %v1249
        %v1458 = vunpack.c.l.b16 %v1263
        %v1459 = vunpack.c.l.b16 %v1273
        %v1460 = vunpack.c.l.b16 %v1287
        %v1461 = vunpack.c.l.b16 %v1297
        %v1462 = vunpack.c.l.b16 %v1311
        %v1463 = vunpack.c.l.b16 %v1321
        %v1464 = vunpack.c.l.b16 %v1335
        %v1465 = vunpack.c.l.b16 %v1345
        %v1466 = vunpack.c.l.b16 %v1359
        %v1467 = vunpack.c.l.b16 %v1369
        %v1468 = vunpack.c.l.b16 %v1383
        %v1469 = vunpack.c.l.b16 %v1393
        %v1470 = vunpack.c.l.b16 %v1407
        %v1471 = vunpack.c.l.b16 %v1417
        %v1472 = vunpack.c.l.b16 %v1431
        %v1473 = vunpack.c.l.b16 %v1441
        %v1474 = vpack.c.b16 %v1443, %v1442
        %v1475 = vpack.c.b16 %v1445, %v1444
        %v1476 = vpack.c.b16 %v1447, %v1446
        %v1477 = vpack.c.b16 %v1449, %v1448
        %v1478 = vpack.c.b16 %v1451, %v1450
        %v1479 = vpack.c.b16 %v1453, %v1452
        %v1480 = vpack.c.b16 %v1455, %v1454
        %v1481 = vpack.c.b16 %v1457, %v1456
        %v1482 = vpack.c.b16 %v1459, %v1458
        %v1483 = vpack.c.b16 %v1461, %v1460
        %v1484 = vpack.c.b16 %v1463, %v1462
        %v1485 = vpack.c.b16 %v1465, %v1464
        %v1486 = vpack.c.b16 %v1467, %v1466
        %v1487 = vpack.c.b16 %v1469, %v1468
        %v1488 = vpack.c.b16 %v1471, %v1470
        %v1489 = vpack.c.b16 %v1473, %v1472
        %1506 = vst [vmem:[#allocation3 + $0x8] sm:$0xff] %v1474
        %1507 = vst [vmem:[#allocation3 + $0x50] sm:$0xff] %v1475
        %1508 = vst [vmem:[#allocation3 + $0x98] sm:$0xff] %v1476
        %1509 = vst [vmem:[#allocation3 + $0xe0] sm:$0xff] %v1477
        %1510 = vst [vmem:[#allocation3 + $0x128] sm:$0xff] %v1478
        %1511 = vst [vmem:[#allocation3 + $0x170] sm:$0xff] %v1479
        %1512 = vst [vmem:[#allocation3 + $0x1b8] sm:$0xff] %v1480
        %1513 = vst [vmem:[#allocation3 + $0x200] sm:$0xff] %v1481
        %1514 = vst [vmem:[#allocation3 + $0x248] sm:$0xff] %v1482
        %1515 = vst [vmem:[#allocation3 + $0x290] sm:$0xff] %v1483
        %1516 = vst [vmem:[#allocation3 + $0x2d8] sm:$0xff] %v1484
        %1517 = vst [vmem:[#allocation3 + $0x320] sm:$0xff] %v1485
        %1518 = vst [vmem:[#allocation3 + $0x368] sm:$0xff] %v1486
        %1519 = vst [vmem:[#allocation3 + $0x3b0] sm:$0xff] %v1487
        %1520 = vst [vmem:[#allocation3 + $0x3f8] sm:$0xff] %v1488
        %1521 = vst [vmem:[#allocation3 + $0x440] sm:$0xff] %v1489
        %v1522 = vld [vmem:[#allocation2] sm:$0xe]
        %v1523 = vld [vmem:[#allocation2 + $0x4] sm:$0xf]
        %v1524 = vld [vmem:[#allocation2 + $0x8] sm:$0x1]
        %v1525 = vld [vmem:[#allocation2 + $0xc] sm:$0xe]
        %v1526 = vld [vmem:[#allocation2 + $0x10] sm:$0xf]
        %v1527 = vld [vmem:[#allocation2 + $0x14] sm:$0x1]
        %v1528 = vld [vmem:[#allocation2 + $0x18] sm:$0xe]
        %v1529 = vld [vmem:[#allocation2 + $0x1c] sm:$0xf]
        %v1530 = vld [vmem:[#allocation2 + $0x20] sm:$0x1]
        %v1531 = vld [vmem:[#allocation2 + $0x24] sm:$0xe]
        %v1532 = vld [vmem:[#allocation2 + $0x28] sm:$0xf]
        %v1533 = vld [vmem:[#allocation2 + $0x2c] sm:$0x1]
        %v1534 = vld [vmem:[#allocation2 + $0x30] sm:$0xe]
        %v1535 = vld [vmem:[#allocation2 + $0x34] sm:$0xf]
        %v1536 = vld [vmem:[#allocation2 + $0x38] sm:$0x1]
        %v1537 = vld [vmem:[#allocation2 + $0x3c] sm:$0xe]
        %v1538 = vld [vmem:[#allocation2 + $0x40] sm:$0xf]
        %v1539 = vld [vmem:[#allocation2 + $0x44] sm:$0x1]
        %v1540 = vld [vmem:[#allocation2 + $0x48] sm:$0xe]
        %v1541 = vld [vmem:[#allocation2 + $0x4c] sm:$0xf]
        %v1542 = vld [vmem:[#allocation2 + $0x50] sm:$0x1]
        %v1543 = vld [vmem:[#allocation2 + $0x54] sm:$0xe]
        %v1544 = vld [vmem:[#allocation2 + $0x58] sm:$0xf]
        %v1545 = vld [vmem:[#allocation2 + $0x5c] sm:$0x1]
        %v1546 = vld [vmem:[#allocation2 + $0x60] sm:$0xe]
        %v1547 = vld [vmem:[#allocation2 + $0x64] sm:$0xf]
        %v1548 = vld [vmem:[#allocation2 + $0x68] sm:$0x1]
        %v1549 = vld [vmem:[#allocation2 + $0x6c] sm:$0xe]
        %v1550 = vld [vmem:[#allocation2 + $0x70] sm:$0xf]
        %v1551 = vld [vmem:[#allocation2 + $0x74] sm:$0x1]
        %v1552 = vld [vmem:[#allocation2 + $0x78] sm:$0xe]
        %v1553 = vld [vmem:[#allocation2 + $0x7c] sm:$0xf]
        %v1554 = vld [vmem:[#allocation2 + $0x80] sm:$0x1]
        %v1555 = vld [vmem:[#allocation2 + $0x84] sm:$0xe]
        %v1556 = vld [vmem:[#allocation2 + $0x88] sm:$0xf]
        %v1557 = vld [vmem:[#allocation2 + $0x8c] sm:$0x1]
        %v1558 = vld [vmem:[#allocation2 + $0x90] sm:$0xe]
        %v1559 = vld [vmem:[#allocation2 + $0x94] sm:$0xf]
        %v1560 = vld [vmem:[#allocation2 + $0x98] sm:$0x1]
        %v1561 = vld [vmem:[#allocation2 + $0x9c] sm:$0xe]
        %v1562 = vld [vmem:[#allocation2 + $0xa0] sm:$0xf]
        %v1563 = vld [vmem:[#allocation2 + $0xa4] sm:$0x1]
        %v1564 = vld [vmem:[#allocation2 + $0xa8] sm:$0xe]
        %v1565 = vld [vmem:[#allocation2 + $0xac] sm:$0xf]
        %v1566 = vld [vmem:[#allocation2 + $0xb0] sm:$0x1]
        %v1567 = vld [vmem:[#allocation2 + $0xb4] sm:$0xe]
        %v1568 = vld [vmem:[#allocation2 + $0xb8] sm:$0xf]
        %v1569 = vld [vmem:[#allocation2 + $0xbc] sm:$0x1]
        %vm1618 = vcmask 1042432
        %vm1619 = vcmask 1046532
        %vm1620 = vmor %vm1618, %vm1619
        %v1621 = vrot.slane %v1522, 5
        %v1622 = vrot.slane %v1621, 4
        %v1623 = vrot.slane %v1523, 5
        %v1624 = vsel %vm1620, %v1622, %v1623
        %v1625 = vrot.slane %v1623, 4
        %v1626 = vrot.slane %v1524, 5
        %v1627 = vsel %vm1620, %v1625, %v1626
        %v1628 = vrot.slane %v1525, 5
        %v1629 = vrot.slane %v1628, 4
        %v1630 = vrot.slane %v1526, 5
        %v1631 = vsel %vm1620, %v1629, %v1630
        %v1632 = vrot.slane %v1630, 4
        %v1633 = vrot.slane %v1527, 5
        %v1634 = vsel %vm1620, %v1632, %v1633
        %v1635 = vrot.slane %v1528, 5
        %v1636 = vrot.slane %v1635, 4
        %v1637 = vrot.slane %v1529, 5
        %v1638 = vsel %vm1620, %v1636, %v1637
        %v1639 = vrot.slane %v1637, 4
        %v1640 = vrot.slane %v1530, 5
        %v1641 = vsel %vm1620, %v1639, %v1640
        %v1642 = vrot.slane %v1531, 5
        %v1643 = vrot.slane %v1642, 4
        %v1644 = vrot.slane %v1532, 5
        %v1645 = vsel %vm1620, %v1643, %v1644
        %v1646 = vrot.slane %v1644, 4
        %v1647 = vrot.slane %v1533, 5
        %v1648 = vsel %vm1620, %v1646, %v1647
        %v1649 = vrot.slane %v1534, 5
        %v1650 = vrot.slane %v1649, 4
        %v1651 = vrot.slane %v1535, 5
        %v1652 = vsel %vm1620, %v1650, %v1651
        %v1653 = vrot.slane %v1651, 4
        %v1654 = vrot.slane %v1536, 5
        %v1655 = vsel %vm1620, %v1653, %v1654
        %v1656 = vrot.slane %v1537, 5
        %v1657 = vrot.slane %v1656, 4
        %v1658 = vrot.slane %v1538, 5
        %v1659 = vsel %vm1620, %v1657, %v1658
        %v1660 = vrot.slane %v1658, 4
        %v1661 = vrot.slane %v1539, 5
        %v1662 = vsel %vm1620, %v1660, %v1661
        %v1663 = vrot.slane %v1540, 5
        %v1664 = vrot.slane %v1663, 4
        %v1665 = vrot.slane %v1541, 5
        %v1666 = vsel %vm1620, %v1664, %v1665
        %v1667 = vrot.slane %v1665, 4
        %v1668 = vrot.slane %v1542, 5
        %v1669 = vsel %vm1620, %v1667, %v1668
        %v1670 = vrot.slane %v1543, 5
        %v1671 = vrot.slane %v1670, 4
        %v1672 = vrot.slane %v1544, 5
        %v1673 = vsel %vm1620, %v1671, %v1672
        %v1674 = vrot.slane %v1672, 4
        %v1675 = vrot.slane %v1545, 5
        %v1676 = vsel %vm1620, %v1674, %v1675
        %v1677 = vrot.slane %v1546, 5
        %v1678 = vrot.slane %v1677, 4
        %v1679 = vrot.slane %v1547, 5
        %v1680 = vsel %vm1620, %v1678, %v1679
        %v1681 = vrot.slane %v1679, 4
        %v1682 = vrot.slane %v1548, 5
        %v1683 = vsel %vm1620, %v1681, %v1682
        %v1684 = vrot.slane %v1549, 5
        %v1685 = vrot.slane %v1684, 4
        %v1686 = vrot.slane %v1550, 5
        %v1687 = vsel %vm1620, %v1685, %v1686
        %v1688 = vrot.slane %v1686, 4
        %v1689 = vrot.slane %v1551, 5
        %v1690 = vsel %vm1620, %v1688, %v1689
        %v1691 = vrot.slane %v1552, 5
        %v1692 = vrot.slane %v1691, 4
        %v1693 = vrot.slane %v1553, 5
        %v1694 = vsel %vm1620, %v1692, %v1693
        %v1695 = vrot.slane %v1693, 4
        %v1696 = vrot.slane %v1554, 5
        %v1697 = vsel %vm1620, %v1695, %v1696
        %v1698 = vrot.slane %v1555, 5
        %v1699 = vrot.slane %v1698, 4
        %v1700 = vrot.slane %v1556, 5
        %v1701 = vsel %vm1620, %v1699, %v1700
        %v1702 = vrot.slane %v1700, 4
        %v1703 = vrot.slane %v1557, 5
        %v1704 = vsel %vm1620, %v1702, %v1703
        %v1705 = vrot.slane %v1558, 5
        %v1706 = vrot.slane %v1705, 4
        %v1707 = vrot.slane %v1559, 5
        %v1708 = vsel %vm1620, %v1706, %v1707
        %v1709 = vrot.slane %v1707, 4
        %v1710 = vrot.slane %v1560, 5
        %v1711 = vsel %vm1620, %v1709, %v1710
        %v1712 = vrot.slane %v1561, 5
        %v1713 = vrot.slane %v1712, 4
        %v1714 = vrot.slane %v1562, 5
        %v1715 = vsel %vm1620, %v1713, %v1714
        %v1716 = vrot.slane %v1714, 4
        %v1717 = vrot.slane %v1563, 5
        %v1718 = vsel %vm1620, %v1716, %v1717
        %v1719 = vrot.slane %v1564, 5
        %v1720 = vrot.slane %v1719, 4
        %v1721 = vrot.slane %v1565, 5
        %v1722 = vsel %vm1620, %v1720, %v1721
        %v1723 = vrot.slane %v1721, 4
        %v1724 = vrot.slane %v1566, 5
        %v1725 = vsel %vm1620, %v1723, %v1724
        %v1726 = vrot.slane %v1567, 5
        %v1727 = vrot.slane %v1726, 4
        %v1728 = vrot.slane %v1568, 5
        %v1729 = vsel %vm1620, %v1727, %v1728
        %v1730 = vrot.slane %v1728, 4
        %v1731 = vrot.slane %v1569, 5
        %v1732 = vsel %vm1620, %v1730, %v1731
        %v1733 = vunpack.c.l.b16 %v1624
        %v1734 = vunpack.c.l.b16 %v1627
        %v1735 = vunpack.c.l.b16 %v1631
        %v1736 = vunpack.c.l.b16 %v1634
        %v1737 = vunpack.c.l.b16 %v1638
        %v1738 = vunpack.c.l.b16 %v1641
        %v1739 = vunpack.c.l.b16 %v1645
        %v1740 = vunpack.c.l.b16 %v1648
        %v1741 = vunpack.c.l.b16 %v1652
        %v1742 = vunpack.c.l.b16 %v1655
        %v1743 = vunpack.c.l.b16 %v1659
        %v1744 = vunpack.c.l.b16 %v1662
        %v1745 = vunpack.c.l.b16 %v1666
        %v1746 = vunpack.c.l.b16 %v1669
        %v1747 = vunpack.c.l.b16 %v1673
        %v1748 = vunpack.c.l.b16 %v1676
        %v1749 = vunpack.c.l.b16 %v1680
        %v1750 = vunpack.c.l.b16 %v1683
        %v1751 = vunpack.c.l.b16 %v1687
        %v1752 = vunpack.c.l.b16 %v1690
        %v1753 = vunpack.c.l.b16 %v1694
        %v1754 = vunpack.c.l.b16 %v1697
        %v1755 = vunpack.c.l.b16 %v1701
        %v1756 = vunpack.c.l.b16 %v1704
        %v1757 = vunpack.c.l.b16 %v1708
        %v1758 = vunpack.c.l.b16 %v1711
        %v1759 = vunpack.c.l.b16 %v1715
        %v1760 = vunpack.c.l.b16 %v1718
        %v1761 = vunpack.c.l.b16 %v1722
        %v1762 = vunpack.c.l.b16 %v1725
        %v1763 = vunpack.c.l.b16 %v1729
        %v1764 = vunpack.c.l.b16 %v1732
        %v1765 = vpack.c.b16 %v1734, %v1733
        %v1766 = vpack.c.b16 %v1736, %v1735
        %v1767 = vpack.c.b16 %v1738, %v1737
        %v1768 = vpack.c.b16 %v1740, %v1739
        %v1769 = vpack.c.b16 %v1742, %v1741
        %v1770 = vpack.c.b16 %v1744, %v1743
        %v1771 = vpack.c.b16 %v1746, %v1745
        %v1772 = vpack.c.b16 %v1748, %v1747
        %v1773 = vpack.c.b16 %v1750, %v1749
        %v1774 = vpack.c.b16 %v1752, %v1751
        %v1775 = vpack.c.b16 %v1754, %v1753
        %v1776 = vpack.c.b16 %v1756, %v1755
        %v1777 = vpack.c.b16 %v1758, %v1757
        %v1778 = vpack.c.b16 %v1760, %v1759
        %v1779 = vpack.c.b16 %v1762, %v1761
        %v1780 = vpack.c.b16 %v1764, %v1763
        %1797 = vst [vmem:[#allocation3 + $0x10] sm:$0xff] %v1765
        %1798 = vst [vmem:[#allocation3 + $0x58] sm:$0xff] %v1766
        %1799 = vst [vmem:[#allocation3 + $0xa0] sm:$0xff] %v1767
        %1800 = vst [vmem:[#allocation3 + $0xe8] sm:$0xff] %v1768
        %1801 = vst [vmem:[#allocation3 + $0x130] sm:$0xff] %v1769
        %1802 = vst [vmem:[#allocation3 + $0x178] sm:$0xff] %v1770
        %1803 = vst [vmem:[#allocation3 + $0x1c0] sm:$0xff] %v1771
        %1804 = vst [vmem:[#allocation3 + $0x208] sm:$0xff] %v1772
        %1805 = vst [vmem:[#allocation3 + $0x250] sm:$0xff] %v1773
        %1806 = vst [vmem:[#allocation3 + $0x298] sm:$0xff] %v1774
        %1807 = vst [vmem:[#allocation3 + $0x2e0] sm:$0xff] %v1775
        %1808 = vst [vmem:[#allocation3 + $0x328] sm:$0xff] %v1776
        %1809 = vst [vmem:[#allocation3 + $0x370] sm:$0xff] %v1777
        %1810 = vst [vmem:[#allocation3 + $0x3b8] sm:$0xff] %v1778
        %1811 = vst [vmem:[#allocation3 + $0x400] sm:$0xff] %v1779
        %1812 = vst [vmem:[#allocation3 + $0x448] sm:$0xff] %v1780
        %v1813 = vld [vmem:[%s744] sm:$0xf]
        %v1814 = vld [vmem:[%s744 + $0x4] sm:$0xf]
        %v1815 = vld [vmem:[%s744 + $0xc] sm:$0xf]
        %v1816 = vld [vmem:[%s744 + $0x10] sm:$0xf]
        %v1817 = vld [vmem:[%s744 + $0x18] sm:$0xf]
        %v1818 = vld [vmem:[%s744 + $0x1c] sm:$0xf]
        %v1819 = vld [vmem:[%s744 + $0x24] sm:$0xf]
        %v1820 = vld [vmem:[%s744 + $0x28] sm:$0xf]
        %v1821 = vld [vmem:[%s744 + $0x30] sm:$0xf]
        %v1822 = vld [vmem:[%s744 + $0x34] sm:$0xf]
        %v1823 = vld [vmem:[%s744 + $0x3c] sm:$0xf]
        %v1824 = vld [vmem:[%s744 + $0x40] sm:$0xf]
        %v1825 = vld [vmem:[%s744 + $0x48] sm:$0xf]
        %v1826 = vld [vmem:[%s744 + $0x4c] sm:$0xf]
        %v1827 = vld [vmem:[%s744 + $0x54] sm:$0xf]
        %v1828 = vld [vmem:[%s744 + $0x58] sm:$0xf]
        %v1829 = vld [vmem:[%s744 + $0x60] sm:$0xf]
        %v1830 = vld [vmem:[%s744 + $0x64] sm:$0xf]
        %v1831 = vld [vmem:[%s744 + $0x6c] sm:$0xf]
        %v1832 = vld [vmem:[%s744 + $0x70] sm:$0xf]
        %v1833 = vld [vmem:[%s744 + $0x78] sm:$0xf]
        %v1834 = vld [vmem:[%s744 + $0x7c] sm:$0xf]
        %v1835 = vld [vmem:[%s744 + $0x84] sm:$0xf]
        %v1836 = vld [vmem:[%s744 + $0x88] sm:$0xf]
        %v1837 = vld [vmem:[%s744 + $0x90] sm:$0xf]
        %v1838 = vld [vmem:[%s744 + $0x94] sm:$0xf]
        %v1839 = vld [vmem:[%s744 + $0x9c] sm:$0xf]
        %v1840 = vld [vmem:[%s744 + $0xa0] sm:$0xf]
        %v1841 = vld [vmem:[%s744 + $0xa8] sm:$0xf]
        %v1842 = vld [vmem:[%s744 + $0xac] sm:$0xf]
        %v1843 = vld [vmem:[%s744 + $0xb4] sm:$0xf]
        %v1844 = vld [vmem:[%s744 + $0xb8] sm:$0xf]
        %v1877 = vunpack.c.l.b16 %v1813
        %v1878 = vunpack.c.l.b16 %v1814
        %v1879 = vunpack.c.l.b16 %v1815
        %v1880 = vunpack.c.l.b16 %v1816
        %v1881 = vunpack.c.l.b16 %v1817
        %v1882 = vunpack.c.l.b16 %v1818
        %v1883 = vunpack.c.l.b16 %v1819
        %v1884 = vunpack.c.l.b16 %v1820
        %v1885 = vunpack.c.l.b16 %v1821
        %v1886 = vunpack.c.l.b16 %v1822
        %v1887 = vunpack.c.l.b16 %v1823
        %v1888 = vunpack.c.l.b16 %v1824
        %v1889 = vunpack.c.l.b16 %v1825
        %v1890 = vunpack.c.l.b16 %v1826
        %v1891 = vunpack.c.l.b16 %v1827
        %v1892 = vunpack.c.l.b16 %v1828
        %v1893 = vunpack.c.l.b16 %v1829
        %v1894 = vunpack.c.l.b16 %v1830
        %v1895 = vunpack.c.l.b16 %v1831
        %v1896 = vunpack.c.l.b16 %v1832
        %v1897 = vunpack.c.l.b16 %v1833
        %v1898 = vunpack.c.l.b16 %v1834
        %v1899 = vunpack.c.l.b16 %v1835
        %v1900 = vunpack.c.l.b16 %v1836
        %v1901 = vunpack.c.l.b16 %v1837
        %v1902 = vunpack.c.l.b16 %v1838
        %v1903 = vunpack.c.l.b16 %v1839
        %v1904 = vunpack.c.l.b16 %v1840
        %v1905 = vunpack.c.l.b16 %v1841
        %v1906 = vunpack.c.l.b16 %v1842
        %v1907 = vunpack.c.l.b16 %v1843
        %v1908 = vunpack.c.l.b16 %v1844
        %v1909 = vpack.c.b16 %v1878, %v1877
        %v1910 = vpack.c.b16 %v1880, %v1879
        %v1911 = vpack.c.b16 %v1882, %v1881
        %v1912 = vpack.c.b16 %v1884, %v1883
        %v1913 = vpack.c.b16 %v1886, %v1885
        %v1914 = vpack.c.b16 %v1888, %v1887
        %v1915 = vpack.c.b16 %v1890, %v1889
        %v1916 = vpack.c.b16 %v1892, %v1891
        %v1917 = vpack.c.b16 %v1894, %v1893
        %v1918 = vpack.c.b16 %v1896, %v1895
        %v1919 = vpack.c.b16 %v1898, %v1897
        %v1920 = vpack.c.b16 %v1900, %v1899
        %v1921 = vpack.c.b16 %v1902, %v1901
        %v1922 = vpack.c.b16 %v1904, %v1903
        %v1923 = vpack.c.b16 %v1906, %v1905
        %v1924 = vpack.c.b16 %v1908, %v1907
        %1941 = vst [vmem:[#allocation3 + $0x18] sm:$0xff] %v1909
        %1942 = vst [vmem:[#allocation3 + $0x60] sm:$0xff] %v1910
        %1943 = vst [vmem:[#allocation3 + $0xa8] sm:$0xff] %v1911
        %1944 = vst [vmem:[#allocation3 + $0xf0] sm:$0xff] %v1912
        %1945 = vst [vmem:[#allocation3 + $0x138] sm:$0xff] %v1913
        %1946 = vst [vmem:[#allocation3 + $0x180] sm:$0xff] %v1914
        %1947 = vst [vmem:[#allocation3 + $0x1c8] sm:$0xff] %v1915
        %1948 = vst [vmem:[#allocation3 + $0x210] sm:$0xff] %v1916
        %1949 = vst [vmem:[#allocation3 + $0x258] sm:$0xff] %v1917
        %1950 = vst [vmem:[#allocation3 + $0x2a0] sm:$0xff] %v1918
        %1951 = vst [vmem:[#allocation3 + $0x2e8] sm:$0xff] %v1919
        %1952 = vst [vmem:[#allocation3 + $0x330] sm:$0xff] %v1920
        %1953 = vst [vmem:[#allocation3 + $0x378] sm:$0xff] %v1921
        %1954 = vst [vmem:[#allocation3 + $0x3c0] sm:$0xff] %v1922
        %1955 = vst [vmem:[#allocation3 + $0x408] sm:$0xff] %v1923
        %1956 = vst [vmem:[#allocation3 + $0x450] sm:$0xff] %v1924
        %v1957 = vld [vmem:[%s744] sm:$0xf]
        %v1958 = vld [vmem:[%s744 + $0x4] sm:$0xf]
        %v1959 = vld [vmem:[%s744 + $0x8] sm:$0x1]
        %v1960 = vld [vmem:[%s744 + $0xc] sm:$0xf]
        %v1961 = vld [vmem:[%s744 + $0x10] sm:$0xf]
        %v1962 = vld [vmem:[%s744 + $0x14] sm:$0x1]
        %v1963 = vld [vmem:[%s744 + $0x18] sm:$0xf]
        %v1964 = vld [vmem:[%s744 + $0x1c] sm:$0xf]
        %v1965 = vld [vmem:[%s744 + $0x20] sm:$0x1]
        %v1966 = vld [vmem:[%s744 + $0x24] sm:$0xf]
        %v1967 = vld [vmem:[%s744 + $0x28] sm:$0xf]
        %v1968 = vld [vmem:[%s744 + $0x2c] sm:$0x1]
        %v1969 = vld [vmem:[%s744 + $0x30] sm:$0xf]
        %v1970 = vld [vmem:[%s744 + $0x34] sm:$0xf]
        %v1971 = vld [vmem:[%s744 + $0x38] sm:$0x1]
        %v1972 = vld [vmem:[%s744 + $0x3c] sm:$0xf]
        %v1973 = vld [vmem:[%s744 + $0x40] sm:$0xf]
        %v1974 = vld [vmem:[%s744 + $0x44] sm:$0x1]
        %v1975 = vld [vmem:[%s744 + $0x48] sm:$0xf]
        %v1976 = vld [vmem:[%s744 + $0x4c] sm:$0xf]
        %v1977 = vld [vmem:[%s744 + $0x50] sm:$0x1]
        %v1978 = vld [vmem:[%s744 + $0x54] sm:$0xf]
        %v1979 = vld [vmem:[%s744 + $0x58] sm:$0xf]
        %v1980 = vld [vmem:[%s744 + $0x5c] sm:$0x1]
        %v1981 = vld [vmem:[%s744 + $0x60] sm:$0xf]
        %v1982 = vld [vmem:[%s744 + $0x64] sm:$0xf]
        %v1983 = vld [vmem:[%s744 + $0x68] sm:$0x1]
        %v1984 = vld [vmem:[%s744 + $0x6c] sm:$0xf]
        %v1985 = vld [vmem:[%s744 + $0x70] sm:$0xf]
        %v1986 = vld [vmem:[%s744 + $0x74] sm:$0x1]
        %v1987 = vld [vmem:[%s744 + $0x78] sm:$0xf]
        %v1988 = vld [vmem:[%s744 + $0x7c] sm:$0xf]
        %v1989 = vld [vmem:[%s744 + $0x80] sm:$0x1]
        %v1990 = vld [vmem:[%s744 + $0x84] sm:$0xf]
        %v1991 = vld [vmem:[%s744 + $0x88] sm:$0xf]
        %v1992 = vld [vmem:[%s744 + $0x8c] sm:$0x1]
        %v1993 = vld [vmem:[%s744 + $0x90] sm:$0xf]
        %v1994 = vld [vmem:[%s744 + $0x94] sm:$0xf]
        %v1995 = vld [vmem:[%s744 + $0x98] sm:$0x1]
        %v1996 = vld [vmem:[%s744 + $0x9c] sm:$0xf]
        %v1997 = vld [vmem:[%s744 + $0xa0] sm:$0xf]
        %v1998 = vld [vmem:[%s744 + $0xa4] sm:$0x1]
        %v1999 = vld [vmem:[%s744 + $0xa8] sm:$0xf]
        %v2000 = vld [vmem:[%s744 + $0xac] sm:$0xf]
        %v2001 = vld [vmem:[%s744 + $0xb0] sm:$0x1]
        %v2002 = vld [vmem:[%s744 + $0xb4] sm:$0xf]
        %v2003 = vld [vmem:[%s744 + $0xb8] sm:$0xf]
        %v2004 = vld [vmem:[%s744 + $0xbc] sm:$0x1]
        %v2006 = vshrl.u32 %v1957, 16
        %v2008 = vrot.slane %v2006, 4
        %v2009 = vshll.u32 %v1957, 16
        %v2011 = vrot.slane %v2009, 5
        %v2012 = vor.u32 %v2008, %v2011
        %v2013 = vrot.slane %v2012, 4
        %v2015 = vshll.u32 %v1958, 16
        %v2017 = vrot.slane %v2015, 5
        %v2018 = vsel %vm1057, %v2013, %v2017
        %v2019 = vshrl.u32 %v1958, 16
        %v2021 = vrot.slane %v2019, 4
        %v2022 = vor.u32 %v2021, %v2017
        %v2023 = vrot.slane %v2022, 4
        %v2025 = vshll.u32 %v1959, 16
        %v2027 = vrot.slane %v2025, 5
        %v2028 = vsel %vm1057, %v2023, %v2027
        %v2030 = vshrl.u32 %v1960, 16
        %v2032 = vrot.slane %v2030, 4
        %v2033 = vshll.u32 %v1960, 16
        %v2035 = vrot.slane %v2033, 5
        %v2036 = vor.u32 %v2032, %v2035
        %v2037 = vrot.slane %v2036, 4
        %v2039 = vshll.u32 %v1961, 16
        %v2041 = vrot.slane %v2039, 5
        %v2042 = vsel %vm1057, %v2037, %v2041
        %v2043 = vshrl.u32 %v1961, 16
        %v2045 = vrot.slane %v2043, 4
        %v2046 = vor.u32 %v2045, %v2041
        %v2047 = vrot.slane %v2046, 4
        %v2049 = vshll.u32 %v1962, 16
        %v2051 = vrot.slane %v2049, 5
        %v2052 = vsel %vm1057, %v2047, %v2051
        %v2054 = vshrl.u32 %v1963, 16
        %v2056 = vrot.slane %v2054, 4
        %v2057 = vshll.u32 %v1963, 16
        %v2059 = vrot.slane %v2057, 5
        %v2060 = vor.u32 %v2056, %v2059
        %v2061 = vrot.slane %v2060, 4
        %v2063 = vshll.u32 %v1964, 16
        %v2065 = vrot.slane %v2063, 5
        %v2066 = vsel %vm1057, %v2061, %v2065
        %v2067 = vshrl.u32 %v1964, 16
        %v2069 = vrot.slane %v2067, 4
        %v2070 = vor.u32 %v2069, %v2065
        %v2071 = vrot.slane %v2070, 4
        %v2073 = vshll.u32 %v1965, 16
        %v2075 = vrot.slane %v2073, 5
        %v2076 = vsel %vm1057, %v2071, %v2075
        %v2078 = vshrl.u32 %v1966, 16
        %v2080 = vrot.slane %v2078, 4
        %v2081 = vshll.u32 %v1966, 16
        %v2083 = vrot.slane %v2081, 5
        %v2084 = vor.u32 %v2080, %v2083
        %v2085 = vrot.slane %v2084, 4
        %v2087 = vshll.u32 %v1967, 16
        %v2089 = vrot.slane %v2087, 5
        %v2090 = vsel %vm1057, %v2085, %v2089
        %v2091 = vshrl.u32 %v1967, 16
        %v2093 = vrot.slane %v2091, 4
        %v2094 = vor.u32 %v2093, %v2089
        %v2095 = vrot.slane %v2094, 4
        %v2097 = vshll.u32 %v1968, 16
        %v2099 = vrot.slane %v2097, 5
        %v2100 = vsel %vm1057, %v2095, %v2099
        %v2102 = vshrl.u32 %v1969, 16
        %v2104 = vrot.slane %v2102, 4
        %v2105 = vshll.u32 %v1969, 16
        %v2107 = vrot.slane %v2105, 5
        %v2108 = vor.u32 %v2104, %v2107
        %v2109 = vrot.slane %v2108, 4
        %v2111 = vshll.u32 %v1970, 16
        %v2113 = vrot.slane %v2111, 5
        %v2114 = vsel %vm1057, %v2109, %v2113
        %v2115 = vshrl.u32 %v1970, 16
        %v2117 = vrot.slane %v2115, 4
        %v2118 = vor.u32 %v2117, %v2113
        %v2119 = vrot.slane %v2118, 4
        %v2121 = vshll.u32 %v1971, 16
        %v2123 = vrot.slane %v2121, 5
        %v2124 = vsel %vm1057, %v2119, %v2123
        %v2126 = vshrl.u32 %v1972, 16
        %v2128 = vrot.slane %v2126, 4
        %v2129 = vshll.u32 %v1972, 16
        %v2131 = vrot.slane %v2129, 5
        %v2132 = vor.u32 %v2128, %v2131
        %v2133 = vrot.slane %v2132, 4
        %v2135 = vshll.u32 %v1973, 16
        %v2137 = vrot.slane %v2135, 5
        %v2138 = vsel %vm1057, %v2133, %v2137
        %v2139 = vshrl.u32 %v1973, 16
        %v2141 = vrot.slane %v2139, 4
        %v2142 = vor.u32 %v2141, %v2137
        %v2143 = vrot.slane %v2142, 4
        %v2145 = vshll.u32 %v1974, 16
        %v2147 = vrot.slane %v2145, 5
        %v2148 = vsel %vm1057, %v2143, %v2147
        %v2150 = vshrl.u32 %v1975, 16
        %v2152 = vrot.slane %v2150, 4
        %v2153 = vshll.u32 %v1975, 16
        %v2155 = vrot.slane %v2153, 5
        %v2156 = vor.u32 %v2152, %v2155
        %v2157 = vrot.slane %v2156, 4
        %v2159 = vshll.u32 %v1976, 16
        %v2161 = vrot.slane %v2159, 5
        %v2162 = vsel %vm1057, %v2157, %v2161
        %v2163 = vshrl.u32 %v1976, 16
        %v2165 = vrot.slane %v2163, 4
        %v2166 = vor.u32 %v2165, %v2161
        %v2167 = vrot.slane %v2166, 4
        %v2169 = vshll.u32 %v1977, 16
        %v2171 = vrot.slane %v2169, 5
        %v2172 = vsel %vm1057, %v2167, %v2171
        %v2174 = vshrl.u32 %v1978, 16
        %v2176 = vrot.slane %v2174, 4
        %v2177 = vshll.u32 %v1978, 16
        %v2179 = vrot.slane %v2177, 5
        %v2180 = vor.u32 %v2176, %v2179
        %v2181 = vrot.slane %v2180, 4
        %v2183 = vshll.u32 %v1979, 16
        %v2185 = vrot.slane %v2183, 5
        %v2186 = vsel %vm1057, %v2181, %v2185
        %v2187 = vshrl.u32 %v1979, 16
        %v2189 = vrot.slane %v2187, 4
        %v2190 = vor.u32 %v2189, %v2185
        %v2191 = vrot.slane %v2190, 4
        %v2193 = vshll.u32 %v1980, 16
        %v2195 = vrot.slane %v2193, 5
        %v2196 = vsel %vm1057, %v2191, %v2195
        %v2198 = vshrl.u32 %v1981, 16
        %v2200 = vrot.slane %v2198, 4
        %v2201 = vshll.u32 %v1981, 16
        %v2203 = vrot.slane %v2201, 5
        %v2204 = vor.u32 %v2200, %v2203
        %v2205 = vrot.slane %v2204, 4
        %v2207 = vshll.u32 %v1982, 16
        %v2209 = vrot.slane %v2207, 5
        %v2210 = vsel %vm1057, %v2205, %v2209
        %v2211 = vshrl.u32 %v1982, 16
        %v2213 = vrot.slane %v2211, 4
        %v2214 = vor.u32 %v2213, %v2209
        %v2215 = vrot.slane %v2214, 4
        %v2217 = vshll.u32 %v1983, 16
        %v2219 = vrot.slane %v2217, 5
        %v2220 = vsel %vm1057, %v2215, %v2219
        %v2222 = vshrl.u32 %v1984, 16
        %v2224 = vrot.slane %v2222, 4
        %v2225 = vshll.u32 %v1984, 16
        %v2227 = vrot.slane %v2225, 5
        %v2228 = vor.u32 %v2224, %v2227
        %v2229 = vrot.slane %v2228, 4
        %v2231 = vshll.u32 %v1985, 16
        %v2233 = vrot.slane %v2231, 5
        %v2234 = vsel %vm1057, %v2229, %v2233
        %v2235 = vshrl.u32 %v1985, 16
        %v2237 = vrot.slane %v2235, 4
        %v2238 = vor.u32 %v2237, %v2233
        %v2239 = vrot.slane %v2238, 4
        %v2241 = vshll.u32 %v1986, 16
        %v2243 = vrot.slane %v2241, 5
        %v2244 = vsel %vm1057, %v2239, %v2243
        %v2246 = vshrl.u32 %v1987, 16
        %v2248 = vrot.slane %v2246, 4
        %v2249 = vshll.u32 %v1987, 16
        %v2251 = vrot.slane %v2249, 5
        %v2252 = vor.u32 %v2248, %v2251
        %v2253 = vrot.slane %v2252, 4
        %v2255 = vshll.u32 %v1988, 16
        %v2257 = vrot.slane %v2255, 5
        %v2258 = vsel %vm1057, %v2253, %v2257
        %v2259 = vshrl.u32 %v1988, 16
        %v2261 = vrot.slane %v2259, 4
        %v2262 = vor.u32 %v2261, %v2257
        %v2263 = vrot.slane %v2262, 4
        %v2265 = vshll.u32 %v1989, 16
        %v2267 = vrot.slane %v2265, 5
        %v2268 = vsel %vm1057, %v2263, %v2267
        %v2270 = vshrl.u32 %v1990, 16
        %v2272 = vrot.slane %v2270, 4
        %v2273 = vshll.u32 %v1990, 16
        %v2275 = vrot.slane %v2273, 5
        %v2276 = vor.u32 %v2272, %v2275
        %v2277 = vrot.slane %v2276, 4
        %v2279 = vshll.u32 %v1991, 16
        %v2281 = vrot.slane %v2279, 5
        %v2282 = vsel %vm1057, %v2277, %v2281
        %v2283 = vshrl.u32 %v1991, 16
        %v2285 = vrot.slane %v2283, 4
        %v2286 = vor.u32 %v2285, %v2281
        %v2287 = vrot.slane %v2286, 4
        %v2289 = vshll.u32 %v1992, 16
        %v2291 = vrot.slane %v2289, 5
        %v2292 = vsel %vm1057, %v2287, %v2291
        %v2294 = vshrl.u32 %v1993, 16
        %v2296 = vrot.slane %v2294, 4
        %v2297 = vshll.u32 %v1993, 16
        %v2299 = vrot.slane %v2297, 5
        %v2300 = vor.u32 %v2296, %v2299
        %v2301 = vrot.slane %v2300, 4
        %v2303 = vshll.u32 %v1994, 16
        %v2305 = vrot.slane %v2303, 5
        %v2306 = vsel %vm1057, %v2301, %v2305
        %v2307 = vshrl.u32 %v1994, 16
        %v2309 = vrot.slane %v2307, 4
        %v2310 = vor.u32 %v2309, %v2305
        %v2311 = vrot.slane %v2310, 4
        %v2313 = vshll.u32 %v1995, 16
        %v2315 = vrot.slane %v2313, 5
        %v2316 = vsel %vm1057, %v2311, %v2315
        %v2318 = vshrl.u32 %v1996, 16
        %v2320 = vrot.slane %v2318, 4
        %v2321 = vshll.u32 %v1996, 16
        %v2323 = vrot.slane %v2321, 5
        %v2324 = vor.u32 %v2320, %v2323
        %v2325 = vrot.slane %v2324, 4
        %v2327 = vshll.u32 %v1997, 16
        %v2329 = vrot.slane %v2327, 5
        %v2330 = vsel %vm1057, %v2325, %v2329
        %v2331 = vshrl.u32 %v1997, 16
        %v2333 = vrot.slane %v2331, 4
        %v2334 = vor.u32 %v2333, %v2329
        %v2335 = vrot.slane %v2334, 4
        %v2337 = vshll.u32 %v1998, 16
        %v2339 = vrot.slane %v2337, 5
        %v2340 = vsel %vm1057, %v2335, %v2339
        %v2342 = vshrl.u32 %v1999, 16
        %v2344 = vrot.slane %v2342, 4
        %v2345 = vshll.u32 %v1999, 16
        %v2347 = vrot.slane %v2345, 5
        %v2348 = vor.u32 %v2344, %v2347
        %v2349 = vrot.slane %v2348, 4
        %v2351 = vshll.u32 %v2000, 16
        %v2353 = vrot.slane %v2351, 5
        %v2354 = vsel %vm1057, %v2349, %v2353
        %v2355 = vshrl.u32 %v2000, 16
        %v2357 = vrot.slane %v2355, 4
        %v2358 = vor.u32 %v2357, %v2353
        %v2359 = vrot.slane %v2358, 4
        %v2361 = vshll.u32 %v2001, 16
        %v2363 = vrot.slane %v2361, 5
        %v2364 = vsel %vm1057, %v2359, %v2363
        %v2366 = vshrl.u32 %v2002, 16
        %v2368 = vrot.slane %v2366, 4
        %v2369 = vshll.u32 %v2002, 16
        %v2371 = vrot.slane %v2369, 5
        %v2372 = vor.u32 %v2368, %v2371
        %v2373 = vrot.slane %v2372, 4
        %v2375 = vshll.u32 %v2003, 16
        %v2377 = vrot.slane %v2375, 5
        %v2378 = vsel %vm1057, %v2373, %v2377
        %v2379 = vshrl.u32 %v2003, 16
        %v2381 = vrot.slane %v2379, 4
        %v2382 = vor.u32 %v2381, %v2377
        %v2383 = vrot.slane %v2382, 4
        %v2385 = vshll.u32 %v2004, 16
        %v2387 = vrot.slane %v2385, 5
        %v2388 = vsel %vm1057, %v2383, %v2387
        %v2389 = vunpack.c.l.b16 %v2018
        %v2390 = vunpack.c.l.b16 %v2028
        %v2391 = vunpack.c.l.b16 %v2042
        %v2392 = vunpack.c.l.b16 %v2052
        %v2393 = vunpack.c.l.b16 %v2066
        %v2394 = vunpack.c.l.b16 %v2076
        %v2395 = vunpack.c.l.b16 %v2090
        %v2396 = vunpack.c.l.b16 %v2100
        %v2397 = vunpack.c.l.b16 %v2114
        %v2398 = vunpack.c.l.b16 %v2124
        %v2399 = vunpack.c.l.b16 %v2138
        %v2400 = vunpack.c.l.b16 %v2148
        %v2401 = vunpack.c.l.b16 %v2162
        %v2402 = vunpack.c.l.b16 %v2172
        %v2403 = vunpack.c.l.b16 %v2186
        %v2404 = vunpack.c.l.b16 %v2196
        %v2405 = vunpack.c.l.b16 %v2210
        %v2406 = vunpack.c.l.b16 %v2220
        %v2407 = vunpack.c.l.b16 %v2234
        %v2408 = vunpack.c.l.b16 %v2244
        %v2409 = vunpack.c.l.b16 %v2258
        %v2410 = vunpack.c.l.b16 %v2268
        %v2411 = vunpack.c.l.b16 %v2282
        %v2412 = vunpack.c.l.b16 %v2292
        %v2413 = vunpack.c.l.b16 %v2306
        %v2414 = vunpack.c.l.b16 %v2316
        %v2415 = vunpack.c.l.b16 %v2330
        %v2416 = vunpack.c.l.b16 %v2340
        %v2417 = vunpack.c.l.b16 %v2354
        %v2418 = vunpack.c.l.b16 %v2364
        %v2419 = vunpack.c.l.b16 %v2378
        %v2420 = vunpack.c.l.b16 %v2388
        %v2421 = vpack.c.b16 %v2390, %v2389
        %v2422 = vpack.c.b16 %v2392, %v2391
        %v2423 = vpack.c.b16 %v2394, %v2393
        %v2424 = vpack.c.b16 %v2396, %v2395
        %v2425 = vpack.c.b16 %v2398, %v2397
        %v2426 = vpack.c.b16 %v2400, %v2399
        %v2427 = vpack.c.b16 %v2402, %v2401
        %v2428 = vpack.c.b16 %v2404, %v2403
        %v2429 = vpack.c.b16 %v2406, %v2405
        %v2430 = vpack.c.b16 %v2408, %v2407
        %v2431 = vpack.c.b16 %v2410, %v2409
        %v2432 = vpack.c.b16 %v2412, %v2411
        %v2433 = vpack.c.b16 %v2414, %v2413
        %v2434 = vpack.c.b16 %v2416, %v2415
        %v2435 = vpack.c.b16 %v2418, %v2417
        %v2436 = vpack.c.b16 %v2420, %v2419
        %2453 = vst [vmem:[#allocation3 + $0x20] sm:$0xff] %v2421
        %2454 = vst [vmem:[#allocation3 + $0x68] sm:$0xff] %v2422
        %2455 = vst [vmem:[#allocation3 + $0xb0] sm:$0xff] %v2423
        %2456 = vst [vmem:[#allocation3 + $0xf8] sm:$0xff] %v2424
        %2457 = vst [vmem:[#allocation3 + $0x140] sm:$0xff] %v2425
        %2458 = vst [vmem:[#allocation3 + $0x188] sm:$0xff] %v2426
        %2459 = vst [vmem:[#allocation3 + $0x1d0] sm:$0xff] %v2427
        %2460 = vst [vmem:[#allocation3 + $0x218] sm:$0xff] %v2428
        %2461 = vst [vmem:[#allocation3 + $0x260] sm:$0xff] %v2429
        %2462 = vst [vmem:[#allocation3 + $0x2a8] sm:$0xff] %v2430
        %2463 = vst [vmem:[#allocation3 + $0x2f0] sm:$0xff] %v2431
        %2464 = vst [vmem:[#allocation3 + $0x338] sm:$0xff] %v2432
        %2465 = vst [vmem:[#allocation3 + $0x380] sm:$0xff] %v2433
        %2466 = vst [vmem:[#allocation3 + $0x3c8] sm:$0xff] %v2434
        %2467 = vst [vmem:[#allocation3 + $0x410] sm:$0xff] %v2435
        %2468 = vst [vmem:[#allocation3 + $0x458] sm:$0xff] %v2436
        %v2469 = vld [vmem:[%s744] sm:$0xe]
        %v2470 = vld [vmem:[%s744 + $0x4] sm:$0xf]
        %v2471 = vld [vmem:[%s744 + $0x8] sm:$0x1]
        %v2472 = vld [vmem:[%s744 + $0xc] sm:$0xe]
        %v2473 = vld [vmem:[%s744 + $0x10] sm:$0xf]
        %v2474 = vld [vmem:[%s744 + $0x14] sm:$0x1]
        %v2475 = vld [vmem:[%s744 + $0x18] sm:$0xe]
        %v2476 = vld [vmem:[%s744 + $0x1c] sm:$0xf]
        %v2477 = vld [vmem:[%s744 + $0x20] sm:$0x1]
        %v2478 = vld [vmem:[%s744 + $0x24] sm:$0xe]
        %v2479 = vld [vmem:[%s744 + $0x28] sm:$0xf]
        %v2480 = vld [vmem:[%s744 + $0x2c] sm:$0x1]
        %v2481 = vld [vmem:[%s744 + $0x30] sm:$0xe]
        %v2482 = vld [vmem:[%s744 + $0x34] sm:$0xf]
        %v2483 = vld [vmem:[%s744 + $0x38] sm:$0x1]
        %v2484 = vld [vmem:[%s744 + $0x3c] sm:$0xe]
        %v2485 = vld [vmem:[%s744 + $0x40] sm:$0xf]
        %v2486 = vld [vmem:[%s744 + $0x44] sm:$0x1]
        %v2487 = vld [vmem:[%s744 + $0x48] sm:$0xe]
        %v2488 = vld [vmem:[%s744 + $0x4c] sm:$0xf]
        %v2489 = vld [vmem:[%s744 + $0x50] sm:$0x1]
        %v2490 = vld [vmem:[%s744 + $0x54] sm:$0xe]
        %v2491 = vld [vmem:[%s744 + $0x58] sm:$0xf]
        %v2492 = vld [vmem:[%s744 + $0x5c] sm:$0x1]
        %v2493 = vld [vmem:[%s744 + $0x60] sm:$0xe]
        %v2494 = vld [vmem:[%s744 + $0x64] sm:$0xf]
        %v2495 = vld [vmem:[%s744 + $0x68] sm:$0x1]
        %v2496 = vld [vmem:[%s744 + $0x6c] sm:$0xe]
        %v2497 = vld [vmem:[%s744 + $0x70] sm:$0xf]
        %v2498 = vld [vmem:[%s744 + $0x74] sm:$0x1]
        %v2499 = vld [vmem:[%s744 + $0x78] sm:$0xe]
        %v2500 = vld [vmem:[%s744 + $0x7c] sm:$0xf]
        %v2501 = vld [vmem:[%s744 + $0x80] sm:$0x1]
        %v2502 = vld [vmem:[%s744 + $0x84] sm:$0xe]
        %v2503 = vld [vmem:[%s744 + $0x88] sm:$0xf]
        %v2504 = vld [vmem:[%s744 + $0x8c] sm:$0x1]
        %v2505 = vld [vmem:[%s744 + $0x90] sm:$0xe]
        %v2506 = vld [vmem:[%s744 + $0x94] sm:$0xf]
        %v2507 = vld [vmem:[%s744 + $0x98] sm:$0x1]
        %v2508 = vld [vmem:[%s744 + $0x9c] sm:$0xe]
        %v2509 = vld [vmem:[%s744 + $0xa0] sm:$0xf]
        %v2510 = vld [vmem:[%s744 + $0xa4] sm:$0x1]
        %v2511 = vld [vmem:[%s744 + $0xa8] sm:$0xe]
        %v2512 = vld [vmem:[%s744 + $0xac] sm:$0xf]
        %v2513 = vld [vmem:[%s744 + $0xb0] sm:$0x1]
        %v2514 = vld [vmem:[%s744 + $0xb4] sm:$0xe]
        %v2515 = vld [vmem:[%s744 + $0xb8] sm:$0xf]
        %v2516 = vld [vmem:[%s744 + $0xbc] sm:$0x1]
        %v2565 = vrot.slane %v2469, 5
        %v2566 = vrot.slane %v2565, 4
        %v2567 = vrot.slane %v2470, 5
        %v2568 = vsel %vm1620, %v2566, %v2567
        %v2569 = vrot.slane %v2567, 4
        %v2570 = vrot.slane %v2471, 5
        %v2571 = vsel %vm1620, %v2569, %v2570
        %v2572 = vrot.slane %v2472, 5
        %v2573 = vrot.slane %v2572, 4
        %v2574 = vrot.slane %v2473, 5
        %v2575 = vsel %vm1620, %v2573, %v2574
        %v2576 = vrot.slane %v2574, 4
        %v2577 = vrot.slane %v2474, 5
        %v2578 = vsel %vm1620, %v2576, %v2577
        %v2579 = vrot.slane %v2475, 5
        %v2580 = vrot.slane %v2579, 4
        %v2581 = vrot.slane %v2476, 5
        %v2582 = vsel %vm1620, %v2580, %v2581
        %v2583 = vrot.slane %v2581, 4
        %v2584 = vrot.slane %v2477, 5
        %v2585 = vsel %vm1620, %v2583, %v2584
        %v2586 = vrot.slane %v2478, 5
        %v2587 = vrot.slane %v2586, 4
        %v2588 = vrot.slane %v2479, 5
        %v2589 = vsel %vm1620, %v2587, %v2588
        %v2590 = vrot.slane %v2588, 4
        %v2591 = vrot.slane %v2480, 5
        %v2592 = vsel %vm1620, %v2590, %v2591
        %v2593 = vrot.slane %v2481, 5
        %v2594 = vrot.slane %v2593, 4
        %v2595 = vrot.slane %v2482, 5
        %v2596 = vsel %vm1620, %v2594, %v2595
        %v2597 = vrot.slane %v2595, 4
        %v2598 = vrot.slane %v2483, 5
        %v2599 = vsel %vm1620, %v2597, %v2598
        %v2600 = vrot.slane %v2484, 5
        %v2601 = vrot.slane %v2600, 4
        %v2602 = vrot.slane %v2485, 5
        %v2603 = vsel %vm1620, %v2601, %v2602
        %v2604 = vrot.slane %v2602, 4
        %v2605 = vrot.slane %v2486, 5
        %v2606 = vsel %vm1620, %v2604, %v2605
        %v2607 = vrot.slane %v2487, 5
        %v2608 = vrot.slane %v2607, 4
        %v2609 = vrot.slane %v2488, 5
        %v2610 = vsel %vm1620, %v2608, %v2609
        %v2611 = vrot.slane %v2609, 4
        %v2612 = vrot.slane %v2489, 5
        %v2613 = vsel %vm1620, %v2611, %v2612
        %v2614 = vrot.slane %v2490, 5
        %v2615 = vrot.slane %v2614, 4
        %v2616 = vrot.slane %v2491, 5
        %v2617 = vsel %vm1620, %v2615, %v2616
        %v2618 = vrot.slane %v2616, 4
        %v2619 = vrot.slane %v2492, 5
        %v2620 = vsel %vm1620, %v2618, %v2619
        %v2621 = vrot.slane %v2493, 5
        %v2622 = vrot.slane %v2621, 4
        %v2623 = vrot.slane %v2494, 5
        %v2624 = vsel %vm1620, %v2622, %v2623
        %v2625 = vrot.slane %v2623, 4
        %v2626 = vrot.slane %v2495, 5
        %v2627 = vsel %vm1620, %v2625, %v2626
        %v2628 = vrot.slane %v2496, 5
        %v2629 = vrot.slane %v2628, 4
        %v2630 = vrot.slane %v2497, 5
        %v2631 = vsel %vm1620, %v2629, %v2630
        %v2632 = vrot.slane %v2630, 4
        %v2633 = vrot.slane %v2498, 5
        %v2634 = vsel %vm1620, %v2632, %v2633
        %v2635 = vrot.slane %v2499, 5
        %v2636 = vrot.slane %v2635, 4
        %v2637 = vrot.slane %v2500, 5
        %v2638 = vsel %vm1620, %v2636, %v2637
        %v2639 = vrot.slane %v2637, 4
        %v2640 = vrot.slane %v2501, 5
        %v2641 = vsel %vm1620, %v2639, %v2640
        %v2642 = vrot.slane %v2502, 5
        %v2643 = vrot.slane %v2642, 4
        %v2644 = vrot.slane %v2503, 5
        %v2645 = vsel %vm1620, %v2643, %v2644
        %v2646 = vrot.slane %v2644, 4
        %v2647 = vrot.slane %v2504, 5
        %v2648 = vsel %vm1620, %v2646, %v2647
        %v2649 = vrot.slane %v2505, 5
        %v2650 = vrot.slane %v2649, 4
        %v2651 = vrot.slane %v2506, 5
        %v2652 = vsel %vm1620, %v2650, %v2651
        %v2653 = vrot.slane %v2651, 4
        %v2654 = vrot.slane %v2507, 5
        %v2655 = vsel %vm1620, %v2653, %v2654
        %v2656 = vrot.slane %v2508, 5
        %v2657 = vrot.slane %v2656, 4
        %v2658 = vrot.slane %v2509, 5
        %v2659 = vsel %vm1620, %v2657, %v2658
        %v2660 = vrot.slane %v2658, 4
        %v2661 = vrot.slane %v2510, 5
        %v2662 = vsel %vm1620, %v2660, %v2661
        %v2663 = vrot.slane %v2511, 5
        %v2664 = vrot.slane %v2663, 4
        %v2665 = vrot.slane %v2512, 5
        %v2666 = vsel %vm1620, %v2664, %v2665
        %v2667 = vrot.slane %v2665, 4
        %v2668 = vrot.slane %v2513, 5
        %v2669 = vsel %vm1620, %v2667, %v2668
        %v2670 = vrot.slane %v2514, 5
        %v2671 = vrot.slane %v2670, 4
        %v2672 = vrot.slane %v2515, 5
        %v2673 = vsel %vm1620, %v2671, %v2672
        %v2674 = vrot.slane %v2672, 4
        %v2675 = vrot.slane %v2516, 5
        %v2676 = vsel %vm1620, %v2674, %v2675
        %v2677 = vunpack.c.l.b16 %v2568
        %v2678 = vunpack.c.l.b16 %v2571
        %v2679 = vunpack.c.l.b16 %v2575
        %v2680 = vunpack.c.l.b16 %v2578
        %v2681 = vunpack.c.l.b16 %v2582
        %v2682 = vunpack.c.l.b16 %v2585
        %v2683 = vunpack.c.l.b16 %v2589
        %v2684 = vunpack.c.l.b16 %v2592
        %v2685 = vunpack.c.l.b16 %v2596
        %v2686 = vunpack.c.l.b16 %v2599
        %v2687 = vunpack.c.l.b16 %v2603
        %v2688 = vunpack.c.l.b16 %v2606
        %v2689 = vunpack.c.l.b16 %v2610
        %v2690 = vunpack.c.l.b16 %v2613
        %v2691 = vunpack.c.l.b16 %v2617
        %v2692 = vunpack.c.l.b16 %v2620
        %v2693 = vunpack.c.l.b16 %v2624
        %v2694 = vunpack.c.l.b16 %v2627
        %v2695 = vunpack.c.l.b16 %v2631
        %v2696 = vunpack.c.l.b16 %v2634
        %v2697 = vunpack.c.l.b16 %v2638
        %v2698 = vunpack.c.l.b16 %v2641
        %v2699 = vunpack.c.l.b16 %v2645
        %v2700 = vunpack.c.l.b16 %v2648
        %v2701 = vunpack.c.l.b16 %v2652
        %v2702 = vunpack.c.l.b16 %v2655
        %v2703 = vunpack.c.l.b16 %v2659
        %v2704 = vunpack.c.l.b16 %v2662
        %v2705 = vunpack.c.l.b16 %v2666
        %v2706 = vunpack.c.l.b16 %v2669
        %v2707 = vunpack.c.l.b16 %v2673
        %v2708 = vunpack.c.l.b16 %v2676
        %v2709 = vpack.c.b16 %v2678, %v2677
        %v2710 = vpack.c.b16 %v2680, %v2679
        %v2711 = vpack.c.b16 %v2682, %v2681
        %v2712 = vpack.c.b16 %v2684, %v2683
        %v2713 = vpack.c.b16 %v2686, %v2685
        %v2714 = vpack.c.b16 %v2688, %v2687
        %v2715 = vpack.c.b16 %v2690, %v2689
        %v2716 = vpack.c.b16 %v2692, %v2691
        %v2717 = vpack.c.b16 %v2694, %v2693
        %v2718 = vpack.c.b16 %v2696, %v2695
        %v2719 = vpack.c.b16 %v2698, %v2697
        %v2720 = vpack.c.b16 %v2700, %v2699
        %v2721 = vpack.c.b16 %v2702, %v2701
        %v2722 = vpack.c.b16 %v2704, %v2703
        %v2723 = vpack.c.b16 %v2706, %v2705
        %v2724 = vpack.c.b16 %v2708, %v2707
        %2741 = vst [vmem:[#allocation3 + $0x28] sm:$0xff] %v2709
        %2742 = vst [vmem:[#allocation3 + $0x70] sm:$0xff] %v2710
        %2743 = vst [vmem:[#allocation3 + $0xb8] sm:$0xff] %v2711
        %2744 = vst [vmem:[#allocation3 + $0x100] sm:$0xff] %v2712
        %2745 = vst [vmem:[#allocation3 + $0x148] sm:$0xff] %v2713
        %2746 = vst [vmem:[#allocation3 + $0x190] sm:$0xff] %v2714
        %2747 = vst [vmem:[#allocation3 + $0x1d8] sm:$0xff] %v2715
        %2748 = vst [vmem:[#allocation3 + $0x220] sm:$0xff] %v2716
        %2749 = vst [vmem:[#allocation3 + $0x268] sm:$0xff] %v2717
        %2750 = vst [vmem:[#allocation3 + $0x2b0] sm:$0xff] %v2718
        %2751 = vst [vmem:[#allocation3 + $0x2f8] sm:$0xff] %v2719
        %2752 = vst [vmem:[#allocation3 + $0x340] sm:$0xff] %v2720
        %2753 = vst [vmem:[#allocation3 + $0x388] sm:$0xff] %v2721
        %2754 = vst [vmem:[#allocation3 + $0x3d0] sm:$0xff] %v2722
        %2755 = vst [vmem:[#allocation3 + $0x418] sm:$0xff] %v2723
        %2756 = vst [vmem:[#allocation3 + $0x460] sm:$0xff] %v2724
        %s2757 = scalar_lea.vmem [#allocation2], 24
        %v2758 = vld [vmem:[%s2757] sm:$0xf]
        %v2759 = vld [vmem:[%s2757 + $0x4] sm:$0xf]
        %v2760 = vld [vmem:[%s2757 + $0xc] sm:$0xf]
        %v2761 = vld [vmem:[%s2757 + $0x10] sm:$0xf]
        %v2762 = vld [vmem:[%s2757 + $0x18] sm:$0xf]
        %v2763 = vld [vmem:[%s2757 + $0x1c] sm:$0xf]
        %v2764 = vld [vmem:[%s2757 + $0x24] sm:$0xf]
        %v2765 = vld [vmem:[%s2757 + $0x28] sm:$0xf]
        %v2766 = vld [vmem:[%s2757 + $0x30] sm:$0xf]
        %v2767 = vld [vmem:[%s2757 + $0x34] sm:$0xf]
        %v2768 = vld [vmem:[%s2757 + $0x3c] sm:$0xf]
        %v2769 = vld [vmem:[%s2757 + $0x40] sm:$0xf]
        %v2770 = vld [vmem:[%s2757 + $0x48] sm:$0xf]
        %v2771 = vld [vmem:[%s2757 + $0x4c] sm:$0xf]
        %v2772 = vld [vmem:[%s2757 + $0x54] sm:$0xf]
        %v2773 = vld [vmem:[%s2757 + $0x58] sm:$0xf]
        %v2774 = vld [vmem:[%s2757 + $0x60] sm:$0xf]
        %v2775 = vld [vmem:[%s2757 + $0x64] sm:$0xf]
        %v2776 = vld [vmem:[%s2757 + $0x6c] sm:$0xf]
        %v2777 = vld [vmem:[%s2757 + $0x70] sm:$0xf]
        %v2778 = vld [vmem:[%s2757 + $0x78] sm:$0xf]
        %v2779 = vld [vmem:[%s2757 + $0x7c] sm:$0xf]
        %v2780 = vld [vmem:[%s2757 + $0x84] sm:$0xf]
        %v2781 = vld [vmem:[%s2757 + $0x88] sm:$0xf]
        %v2782 = vld [vmem:[%s2757 + $0x90] sm:$0xf]
        %v2783 = vld [vmem:[%s2757 + $0x94] sm:$0xf]
        %v2784 = vld [vmem:[%s2757 + $0x9c] sm:$0xf]
        %v2785 = vld [vmem:[%s2757 + $0xa0] sm:$0xf]
        %v2786 = vld [vmem:[%s2757 + $0xa8] sm:$0xf]
        %v2787 = vld [vmem:[%s2757 + $0xac] sm:$0xf]
        %v2788 = vld [vmem:[%s2757 + $0xb4] sm:$0xf]
        %v2789 = vld [vmem:[%s2757 + $0xb8] sm:$0xf]
        %v2822 = vunpack.c.l.b16 %v2758
        %v2823 = vunpack.c.l.b16 %v2759
        %v2824 = vunpack.c.l.b16 %v2760
        %v2825 = vunpack.c.l.b16 %v2761
        %v2826 = vunpack.c.l.b16 %v2762
        %v2827 = vunpack.c.l.b16 %v2763
        %v2828 = vunpack.c.l.b16 %v2764
        %v2829 = vunpack.c.l.b16 %v2765
        %v2830 = vunpack.c.l.b16 %v2766
        %v2831 = vunpack.c.l.b16 %v2767
        %v2832 = vunpack.c.l.b16 %v2768
        %v2833 = vunpack.c.l.b16 %v2769
        %v2834 = vunpack.c.l.b16 %v2770
        %v2835 = vunpack.c.l.b16 %v2771
        %v2836 = vunpack.c.l.b16 %v2772
        %v2837 = vunpack.c.l.b16 %v2773
        %v2838 = vunpack.c.l.b16 %v2774
        %v2839 = vunpack.c.l.b16 %v2775
        %v2840 = vunpack.c.l.b16 %v2776
        %v2841 = vunpack.c.l.b16 %v2777
        %v2842 = vunpack.c.l.b16 %v2778
        %v2843 = vunpack.c.l.b16 %v2779
        %v2844 = vunpack.c.l.b16 %v2780
        %v2845 = vunpack.c.l.b16 %v2781
        %v2846 = vunpack.c.l.b16 %v2782
        %v2847 = vunpack.c.l.b16 %v2783
        %v2848 = vunpack.c.l.b16 %v2784
        %v2849 = vunpack.c.l.b16 %v2785
        %v2850 = vunpack.c.l.b16 %v2786
        %v2851 = vunpack.c.l.b16 %v2787
        %v2852 = vunpack.c.l.b16 %v2788
        %v2853 = vunpack.c.l.b16 %v2789
        %v2854 = vpack.c.b16 %v2823, %v2822
        %v2855 = vpack.c.b16 %v2825, %v2824
        %v2856 = vpack.c.b16 %v2827, %v2826
        %v2857 = vpack.c.b16 %v2829, %v2828
        %v2858 = vpack.c.b16 %v2831, %v2830
        %v2859 = vpack.c.b16 %v2833, %v2832
        %v2860 = vpack.c.b16 %v2835, %v2834
        %v2861 = vpack.c.b16 %v2837, %v2836
        %v2862 = vpack.c.b16 %v2839, %v2838
        %v2863 = vpack.c.b16 %v2841, %v2840
        %v2864 = vpack.c.b16 %v2843, %v2842
        %v2865 = vpack.c.b16 %v2845, %v2844
        %v2866 = vpack.c.b16 %v2847, %v2846
        %v2867 = vpack.c.b16 %v2849, %v2848
        %v2868 = vpack.c.b16 %v2851, %v2850
        %v2869 = vpack.c.b16 %v2853, %v2852
        %2886 = vst [vmem:[#allocation3 + $0x30] sm:$0xff] %v2854
        %2887 = vst [vmem:[#allocation3 + $0x78] sm:$0xff] %v2855
        %2888 = vst [vmem:[#allocation3 + $0xc0] sm:$0xff] %v2856
        %2889 = vst [vmem:[#allocation3 + $0x108] sm:$0xff] %v2857
        %2890 = vst [vmem:[#allocation3 + $0x150] sm:$0xff] %v2858
        %2891 = vst [vmem:[#allocation3 + $0x198] sm:$0xff] %v2859
        %2892 = vst [vmem:[#allocation3 + $0x1e0] sm:$0xff] %v2860
        %2893 = vst [vmem:[#allocation3 + $0x228] sm:$0xff] %v2861
        %2894 = vst [vmem:[#allocation3 + $0x270] sm:$0xff] %v2862
        %2895 = vst [vmem:[#allocation3 + $0x2b8] sm:$0xff] %v2863
        %2896 = vst [vmem:[#allocation3 + $0x300] sm:$0xff] %v2864
        %2897 = vst [vmem:[#allocation3 + $0x348] sm:$0xff] %v2865
        %2898 = vst [vmem:[#allocation3 + $0x390] sm:$0xff] %v2866
        %2899 = vst [vmem:[#allocation3 + $0x3d8] sm:$0xff] %v2867
        %2900 = vst [vmem:[#allocation3 + $0x420] sm:$0xff] %v2868
        %2901 = vst [vmem:[#allocation3 + $0x468] sm:$0xff] %v2869
        %v2902 = vld [vmem:[%s2757] sm:$0xf]
        %v2903 = vld [vmem:[%s2757 + $0x4] sm:$0xf]
        %v2904 = vld [vmem:[%s2757 + $0x8] sm:$0x1]
        %v2905 = vld [vmem:[%s2757 + $0xc] sm:$0xf]
        %v2906 = vld [vmem:[%s2757 + $0x10] sm:$0xf]
        %v2907 = vld [vmem:[%s2757 + $0x14] sm:$0x1]
        %v2908 = vld [vmem:[%s2757 + $0x18] sm:$0xf]
        %v2909 = vld [vmem:[%s2757 + $0x1c] sm:$0xf]
        %v2910 = vld [vmem:[%s2757 + $0x20] sm:$0x1]
        %v2911 = vld [vmem:[%s2757 + $0x24] sm:$0xf]
        %v2912 = vld [vmem:[%s2757 + $0x28] sm:$0xf]
        %v2913 = vld [vmem:[%s2757 + $0x2c] sm:$0x1]
        %v2914 = vld [vmem:[%s2757 + $0x30] sm:$0xf]
        %v2915 = vld [vmem:[%s2757 + $0x34] sm:$0xf]
        %v2916 = vld [vmem:[%s2757 + $0x38] sm:$0x1]
        %v2917 = vld [vmem:[%s2757 + $0x3c] sm:$0xf]
        %v2918 = vld [vmem:[%s2757 + $0x40] sm:$0xf]
        %v2919 = vld [vmem:[%s2757 + $0x44] sm:$0x1]
        %v2920 = vld [vmem:[%s2757 + $0x48] sm:$0xf]
        %v2921 = vld [vmem:[%s2757 + $0x4c] sm:$0xf]
        %v2922 = vld [vmem:[%s2757 + $0x50] sm:$0x1]
        %v2923 = vld [vmem:[%s2757 + $0x54] sm:$0xf]
        %v2924 = vld [vmem:[%s2757 + $0x58] sm:$0xf]
        %v2925 = vld [vmem:[%s2757 + $0x5c] sm:$0x1]
        %v2926 = vld [vmem:[%s2757 + $0x60] sm:$0xf]
        %v2927 = vld [vmem:[%s2757 + $0x64] sm:$0xf]
        %v2928 = vld [vmem:[%s2757 + $0x68] sm:$0x1]
        %v2929 = vld [vmem:[%s2757 + $0x6c] sm:$0xf]
        %v2930 = vld [vmem:[%s2757 + $0x70] sm:$0xf]
        %v2931 = vld [vmem:[%s2757 + $0x74] sm:$0x1]
        %v2932 = vld [vmem:[%s2757 + $0x78] sm:$0xf]
        %v2933 = vld [vmem:[%s2757 + $0x7c] sm:$0xf]
        %v2934 = vld [vmem:[%s2757 + $0x80] sm:$0x1]
        %v2935 = vld [vmem:[%s2757 + $0x84] sm:$0xf]
        %v2936 = vld [vmem:[%s2757 + $0x88] sm:$0xf]
        %v2937 = vld [vmem:[%s2757 + $0x8c] sm:$0x1]
        %v2938 = vld [vmem:[%s2757 + $0x90] sm:$0xf]
        %v2939 = vld [vmem:[%s2757 + $0x94] sm:$0xf]
        %v2940 = vld [vmem:[%s2757 + $0x98] sm:$0x1]
        %v2941 = vld [vmem:[%s2757 + $0x9c] sm:$0xf]
        %v2942 = vld [vmem:[%s2757 + $0xa0] sm:$0xf]
        %v2943 = vld [vmem:[%s2757 + $0xa4] sm:$0x1]
        %v2944 = vld [vmem:[%s2757 + $0xa8] sm:$0xf]
        %v2945 = vld [vmem:[%s2757 + $0xac] sm:$0xf]
        %v2946 = vld [vmem:[%s2757 + $0xb0] sm:$0x1]
        %v2947 = vld [vmem:[%s2757 + $0xb4] sm:$0xf]
        %v2948 = vld [vmem:[%s2757 + $0xb8] sm:$0xf]
        %v2949 = vld [vmem:[%s2757 + $0xbc] sm:$0x1]
        %v2951 = vshrl.u32 %v2902, 16
        %v2953 = vrot.slane %v2951, 4
        %v2954 = vshll.u32 %v2902, 16
        %v2956 = vrot.slane %v2954, 5
        %v2957 = vor.u32 %v2953, %v2956
        %v2958 = vrot.slane %v2957, 4
        %v2960 = vshll.u32 %v2903, 16
        %v2962 = vrot.slane %v2960, 5
        %v2963 = vsel %vm1057, %v2958, %v2962
        %v2964 = vshrl.u32 %v2903, 16
        %v2966 = vrot.slane %v2964, 4
        %v2967 = vor.u32 %v2966, %v2962
        %v2968 = vrot.slane %v2967, 4
        %v2970 = vshll.u32 %v2904, 16
        %v2972 = vrot.slane %v2970, 5
        %v2973 = vsel %vm1057, %v2968, %v2972
        %v2975 = vshrl.u32 %v2905, 16
        %v2977 = vrot.slane %v2975, 4
        %v2978 = vshll.u32 %v2905, 16
        %v2980 = vrot.slane %v2978, 5
        %v2981 = vor.u32 %v2977, %v2980
        %v2982 = vrot.slane %v2981, 4
        %v2984 = vshll.u32 %v2906, 16
        %v2986 = vrot.slane %v2984, 5
        %v2987 = vsel %vm1057, %v2982, %v2986
        %v2988 = vshrl.u32 %v2906, 16
        %v2990 = vrot.slane %v2988, 4
        %v2991 = vor.u32 %v2990, %v2986
        %v2992 = vrot.slane %v2991, 4
        %v2994 = vshll.u32 %v2907, 16
        %v2996 = vrot.slane %v2994, 5
        %v2997 = vsel %vm1057, %v2992, %v2996
        %v2999 = vshrl.u32 %v2908, 16
        %v3001 = vrot.slane %v2999, 4
        %v3002 = vshll.u32 %v2908, 16
        %v3004 = vrot.slane %v3002, 5
        %v3005 = vor.u32 %v3001, %v3004
        %v3006 = vrot.slane %v3005, 4
        %v3008 = vshll.u32 %v2909, 16
        %v3010 = vrot.slane %v3008, 5
        %v3011 = vsel %vm1057, %v3006, %v3010
        %v3012 = vshrl.u32 %v2909, 16
        %v3014 = vrot.slane %v3012, 4
        %v3015 = vor.u32 %v3014, %v3010
        %v3016 = vrot.slane %v3015, 4
        %v3018 = vshll.u32 %v2910, 16
        %v3020 = vrot.slane %v3018, 5
        %v3021 = vsel %vm1057, %v3016, %v3020
        %v3023 = vshrl.u32 %v2911, 16
        %v3025 = vrot.slane %v3023, 4
        %v3026 = vshll.u32 %v2911, 16
        %v3028 = vrot.slane %v3026, 5
        %v3029 = vor.u32 %v3025, %v3028
        %v3030 = vrot.slane %v3029, 4
        %v3032 = vshll.u32 %v2912, 16
        %v3034 = vrot.slane %v3032, 5
        %v3035 = vsel %vm1057, %v3030, %v3034
        %v3036 = vshrl.u32 %v2912, 16
        %v3038 = vrot.slane %v3036, 4
        %v3039 = vor.u32 %v3038, %v3034
        %v3040 = vrot.slane %v3039, 4
        %v3042 = vshll.u32 %v2913, 16
        %v3044 = vrot.slane %v3042, 5
        %v3045 = vsel %vm1057, %v3040, %v3044
        %v3047 = vshrl.u32 %v2914, 16
        %v3049 = vrot.slane %v3047, 4
        %v3050 = vshll.u32 %v2914, 16
        %v3052 = vrot.slane %v3050, 5
        %v3053 = vor.u32 %v3049, %v3052
        %v3054 = vrot.slane %v3053, 4
        %v3056 = vshll.u32 %v2915, 16
        %v3058 = vrot.slane %v3056, 5
        %v3059 = vsel %vm1057, %v3054, %v3058
        %v3060 = vshrl.u32 %v2915, 16
        %v3062 = vrot.slane %v3060, 4
        %v3063 = vor.u32 %v3062, %v3058
        %v3064 = vrot.slane %v3063, 4
        %v3066 = vshll.u32 %v2916, 16
        %v3068 = vrot.slane %v3066, 5
        %v3069 = vsel %vm1057, %v3064, %v3068
        %v3071 = vshrl.u32 %v2917, 16
        %v3073 = vrot.slane %v3071, 4
        %v3074 = vshll.u32 %v2917, 16
        %v3076 = vrot.slane %v3074, 5
        %v3077 = vor.u32 %v3073, %v3076
        %v3078 = vrot.slane %v3077, 4
        %v3080 = vshll.u32 %v2918, 16
        %v3082 = vrot.slane %v3080, 5
        %v3083 = vsel %vm1057, %v3078, %v3082
        %v3084 = vshrl.u32 %v2918, 16
        %v3086 = vrot.slane %v3084, 4
        %v3087 = vor.u32 %v3086, %v3082
        %v3088 = vrot.slane %v3087, 4
        %v3090 = vshll.u32 %v2919, 16
        %v3092 = vrot.slane %v3090, 5
        %v3093 = vsel %vm1057, %v3088, %v3092
        %v3095 = vshrl.u32 %v2920, 16
        %v3097 = vrot.slane %v3095, 4
        %v3098 = vshll.u32 %v2920, 16
        %v3100 = vrot.slane %v3098, 5
        %v3101 = vor.u32 %v3097, %v3100
        %v3102 = vrot.slane %v3101, 4
        %v3104 = vshll.u32 %v2921, 16
        %v3106 = vrot.slane %v3104, 5
        %v3107 = vsel %vm1057, %v3102, %v3106
        %v3108 = vshrl.u32 %v2921, 16
        %v3110 = vrot.slane %v3108, 4
        %v3111 = vor.u32 %v3110, %v3106
        %v3112 = vrot.slane %v3111, 4
        %v3114 = vshll.u32 %v2922, 16
        %v3116 = vrot.slane %v3114, 5
        %v3117 = vsel %vm1057, %v3112, %v3116
        %v3119 = vshrl.u32 %v2923, 16
        %v3121 = vrot.slane %v3119, 4
        %v3122 = vshll.u32 %v2923, 16
        %v3124 = vrot.slane %v3122, 5
        %v3125 = vor.u32 %v3121, %v3124
        %v3126 = vrot.slane %v3125, 4
        %v3128 = vshll.u32 %v2924, 16
        %v3130 = vrot.slane %v3128, 5
        %v3131 = vsel %vm1057, %v3126, %v3130
        %v3132 = vshrl.u32 %v2924, 16
        %v3134 = vrot.slane %v3132, 4
        %v3135 = vor.u32 %v3134, %v3130
        %v3136 = vrot.slane %v3135, 4
        %v3138 = vshll.u32 %v2925, 16
        %v3140 = vrot.slane %v3138, 5
        %v3141 = vsel %vm1057, %v3136, %v3140
        %v3143 = vshrl.u32 %v2926, 16
        %v3145 = vrot.slane %v3143, 4
        %v3146 = vshll.u32 %v2926, 16
        %v3148 = vrot.slane %v3146, 5
        %v3149 = vor.u32 %v3145, %v3148
        %v3150 = vrot.slane %v3149, 4
        %v3152 = vshll.u32 %v2927, 16
        %v3154 = vrot.slane %v3152, 5
        %v3155 = vsel %vm1057, %v3150, %v3154
        %v3156 = vshrl.u32 %v2927, 16
        %v3158 = vrot.slane %v3156, 4
        %v3159 = vor.u32 %v3158, %v3154
        %v3160 = vrot.slane %v3159, 4
        %v3162 = vshll.u32 %v2928, 16
        %v3164 = vrot.slane %v3162, 5
        %v3165 = vsel %vm1057, %v3160, %v3164
        %v3167 = vshrl.u32 %v2929, 16
        %v3169 = vrot.slane %v3167, 4
        %v3170 = vshll.u32 %v2929, 16
        %v3172 = vrot.slane %v3170, 5
        %v3173 = vor.u32 %v3169, %v3172
        %v3174 = vrot.slane %v3173, 4
        %v3176 = vshll.u32 %v2930, 16
        %v3178 = vrot.slane %v3176, 5
        %v3179 = vsel %vm1057, %v3174, %v3178
        %v3180 = vshrl.u32 %v2930, 16
        %v3182 = vrot.slane %v3180, 4
        %v3183 = vor.u32 %v3182, %v3178
        %v3184 = vrot.slane %v3183, 4
        %v3186 = vshll.u32 %v2931, 16
        %v3188 = vrot.slane %v3186, 5
        %v3189 = vsel %vm1057, %v3184, %v3188
        %v3191 = vshrl.u32 %v2932, 16
        %v3193 = vrot.slane %v3191, 4
        %v3194 = vshll.u32 %v2932, 16
        %v3196 = vrot.slane %v3194, 5
        %v3197 = vor.u32 %v3193, %v3196
        %v3198 = vrot.slane %v3197, 4
        %v3200 = vshll.u32 %v2933, 16
        %v3202 = vrot.slane %v3200, 5
        %v3203 = vsel %vm1057, %v3198, %v3202
        %v3204 = vshrl.u32 %v2933, 16
        %v3206 = vrot.slane %v3204, 4
        %v3207 = vor.u32 %v3206, %v3202
        %v3208 = vrot.slane %v3207, 4
        %v3210 = vshll.u32 %v2934, 16
        %v3212 = vrot.slane %v3210, 5
        %v3213 = vsel %vm1057, %v3208, %v3212
        %v3215 = vshrl.u32 %v2935, 16
        %v3217 = vrot.slane %v3215, 4
        %v3218 = vshll.u32 %v2935, 16
        %v3220 = vrot.slane %v3218, 5
        %v3221 = vor.u32 %v3217, %v3220
        %v3222 = vrot.slane %v3221, 4
        %v3224 = vshll.u32 %v2936, 16
        %v3226 = vrot.slane %v3224, 5
        %v3227 = vsel %vm1057, %v3222, %v3226
        %v3228 = vshrl.u32 %v2936, 16
        %v3230 = vrot.slane %v3228, 4
        %v3231 = vor.u32 %v3230, %v3226
        %v3232 = vrot.slane %v3231, 4
        %v3234 = vshll.u32 %v2937, 16
        %v3236 = vrot.slane %v3234, 5
        %v3237 = vsel %vm1057, %v3232, %v3236
        %v3239 = vshrl.u32 %v2938, 16
        %v3241 = vrot.slane %v3239, 4
        %v3242 = vshll.u32 %v2938, 16
        %v3244 = vrot.slane %v3242, 5
        %v3245 = vor.u32 %v3241, %v3244
        %v3246 = vrot.slane %v3245, 4
        %v3248 = vshll.u32 %v2939, 16
        %v3250 = vrot.slane %v3248, 5
        %v3251 = vsel %vm1057, %v3246, %v3250
        %v3252 = vshrl.u32 %v2939, 16
        %v3254 = vrot.slane %v3252, 4
        %v3255 = vor.u32 %v3254, %v3250
        %v3256 = vrot.slane %v3255, 4
        %v3258 = vshll.u32 %v2940, 16
        %v3260 = vrot.slane %v3258, 5
        %v3261 = vsel %vm1057, %v3256, %v3260
        %v3263 = vshrl.u32 %v2941, 16
        %v3265 = vrot.slane %v3263, 4
        %v3266 = vshll.u32 %v2941, 16
        %v3268 = vrot.slane %v3266, 5
        %v3269 = vor.u32 %v3265, %v3268
        %v3270 = vrot.slane %v3269, 4
        %v3272 = vshll.u32 %v2942, 16
        %v3274 = vrot.slane %v3272, 5
        %v3275 = vsel %vm1057, %v3270, %v3274
        %v3276 = vshrl.u32 %v2942, 16
        %v3278 = vrot.slane %v3276, 4
        %v3279 = vor.u32 %v3278, %v3274
        %v3280 = vrot.slane %v3279, 4
        %v3282 = vshll.u32 %v2943, 16
        %v3284 = vrot.slane %v3282, 5
        %v3285 = vsel %vm1057, %v3280, %v3284
        %v3287 = vshrl.u32 %v2944, 16
        %v3289 = vrot.slane %v3287, 4
        %v3290 = vshll.u32 %v2944, 16
        %v3292 = vrot.slane %v3290, 5
        %v3293 = vor.u32 %v3289, %v3292
        %v3294 = vrot.slane %v3293, 4
        %v3296 = vshll.u32 %v2945, 16
        %v3298 = vrot.slane %v3296, 5
        %v3299 = vsel %vm1057, %v3294, %v3298
        %v3300 = vshrl.u32 %v2945, 16
        %v3302 = vrot.slane %v3300, 4
        %v3303 = vor.u32 %v3302, %v3298
        %v3304 = vrot.slane %v3303, 4
        %v3306 = vshll.u32 %v2946, 16
        %v3308 = vrot.slane %v3306, 5
        %v3309 = vsel %vm1057, %v3304, %v3308
        %v3311 = vshrl.u32 %v2947, 16
        %v3313 = vrot.slane %v3311, 4
        %v3314 = vshll.u32 %v2947, 16
        %v3316 = vrot.slane %v3314, 5
        %v3317 = vor.u32 %v3313, %v3316
        %v3318 = vrot.slane %v3317, 4
        %v3320 = vshll.u32 %v2948, 16
        %v3322 = vrot.slane %v3320, 5
        %v3323 = vsel %vm1057, %v3318, %v3322
        %v3324 = vshrl.u32 %v2948, 16
        %v3326 = vrot.slane %v3324, 4
        %v3327 = vor.u32 %v3326, %v3322
        %v3328 = vrot.slane %v3327, 4
        %v3330 = vshll.u32 %v2949, 16
        %v3332 = vrot.slane %v3330, 5
        %v3333 = vsel %vm1057, %v3328, %v3332
        %v3334 = vunpack.c.l.b16 %v2963
        %v3335 = vunpack.c.l.b16 %v2973
        %v3336 = vunpack.c.l.b16 %v2987
        %v3337 = vunpack.c.l.b16 %v2997
        %v3338 = vunpack.c.l.b16 %v3011
        %v3339 = vunpack.c.l.b16 %v3021
        %v3340 = vunpack.c.l.b16 %v3035
        %v3341 = vunpack.c.l.b16 %v3045
        %v3342 = vunpack.c.l.b16 %v3059
        %v3343 = vunpack.c.l.b16 %v3069
        %v3344 = vunpack.c.l.b16 %v3083
        %v3345 = vunpack.c.l.b16 %v3093
        %v3346 = vunpack.c.l.b16 %v3107
        %v3347 = vunpack.c.l.b16 %v3117
        %v3348 = vunpack.c.l.b16 %v3131
        %v3349 = vunpack.c.l.b16 %v3141
        %v3350 = vunpack.c.l.b16 %v3155
        %v3351 = vunpack.c.l.b16 %v3165
        %v3352 = vunpack.c.l.b16 %v3179
        %v3353 = vunpack.c.l.b16 %v3189
        %v3354 = vunpack.c.l.b16 %v3203
        %v3355 = vunpack.c.l.b16 %v3213
        %v3356 = vunpack.c.l.b16 %v3227
        %v3357 = vunpack.c.l.b16 %v3237
        %v3358 = vunpack.c.l.b16 %v3251
        %v3359 = vunpack.c.l.b16 %v3261
        %v3360 = vunpack.c.l.b16 %v3275
        %v3361 = vunpack.c.l.b16 %v3285
        %v3362 = vunpack.c.l.b16 %v3299
        %v3363 = vunpack.c.l.b16 %v3309
        %v3364 = vunpack.c.l.b16 %v3323
        %v3365 = vunpack.c.l.b16 %v3333
        %v3366 = vpack.c.b16 %v3335, %v3334
        %v3367 = vpack.c.b16 %v3337, %v3336
        %v3368 = vpack.c.b16 %v3339, %v3338
        %v3369 = vpack.c.b16 %v3341, %v3340
        %v3370 = vpack.c.b16 %v3343, %v3342
        %v3371 = vpack.c.b16 %v3345, %v3344
        %v3372 = vpack.c.b16 %v3347, %v3346
        %v3373 = vpack.c.b16 %v3349, %v3348
        %v3374 = vpack.c.b16 %v3351, %v3350
        %v3375 = vpack.c.b16 %v3353, %v3352
        %v3376 = vpack.c.b16 %v3355, %v3354
        %v3377 = vpack.c.b16 %v3357, %v3356
        %v3378 = vpack.c.b16 %v3359, %v3358
        %v3379 = vpack.c.b16 %v3361, %v3360
        %v3380 = vpack.c.b16 %v3363, %v3362
        %v3381 = vpack.c.b16 %v3365, %v3364
        %3398 = vst [vmem:[#allocation3 + $0x38] sm:$0xff] %v3366
        %3399 = vst [vmem:[#allocation3 + $0x80] sm:$0xff] %v3367
        %3400 = vst [vmem:[#allocation3 + $0xc8] sm:$0xff] %v3368
        %3401 = vst [vmem:[#allocation3 + $0x110] sm:$0xff] %v3369
        %3402 = vst [vmem:[#allocation3 + $0x158] sm:$0xff] %v3370
        %3403 = vst [vmem:[#allocation3 + $0x1a0] sm:$0xff] %v3371
        %3404 = vst [vmem:[#allocation3 + $0x1e8] sm:$0xff] %v3372
        %3405 = vst [vmem:[#allocation3 + $0x230] sm:$0xff] %v3373
        %3406 = vst [vmem:[#allocation3 + $0x278] sm:$0xff] %v3374
        %3407 = vst [vmem:[#allocation3 + $0x2c0] sm:$0xff] %v3375
        %3408 = vst [vmem:[#allocation3 + $0x308] sm:$0xff] %v3376
        %3409 = vst [vmem:[#allocation3 + $0x350] sm:$0xff] %v3377
        %3410 = vst [vmem:[#allocation3 + $0x398] sm:$0xff] %v3378
        %3411 = vst [vmem:[#allocation3 + $0x3e0] sm:$0xff] %v3379
        %3412 = vst [vmem:[#allocation3 + $0x428] sm:$0xff] %v3380
        %3413 = vst [vmem:[#allocation3 + $0x470] sm:$0xff] %v3381
        %v3414 = vld [vmem:[%s2757] sm:$0xe]
        %v3415 = vld [vmem:[%s2757 + $0x4] sm:$0xf]
        %v3416 = vld [vmem:[%s2757 + $0x8] sm:$0x1]
        %v3417 = vld [vmem:[%s2757 + $0xc] sm:$0xe]
        %v3418 = vld [vmem:[%s2757 + $0x10] sm:$0xf]
        %v3419 = vld [vmem:[%s2757 + $0x14] sm:$0x1]
        %v3420 = vld [vmem:[%s2757 + $0x18] sm:$0xe]
        %v3421 = vld [vmem:[%s2757 + $0x1c] sm:$0xf]
        %v3422 = vld [vmem:[%s2757 + $0x20] sm:$0x1]
        %v3423 = vld [vmem:[%s2757 + $0x24] sm:$0xe]
        %v3424 = vld [vmem:[%s2757 + $0x28] sm:$0xf]
        %v3425 = vld [vmem:[%s2757 + $0x2c] sm:$0x1]
        %v3426 = vld [vmem:[%s2757 + $0x30] sm:$0xe]
        %v3427 = vld [vmem:[%s2757 + $0x34] sm:$0xf]
        %v3428 = vld [vmem:[%s2757 + $0x38] sm:$0x1]
        %v3429 = vld [vmem:[%s2757 + $0x3c] sm:$0xe]
        %v3430 = vld [vmem:[%s2757 + $0x40] sm:$0xf]
        %v3431 = vld [vmem:[%s2757 + $0x44] sm:$0x1]
        %v3432 = vld [vmem:[%s2757 + $0x48] sm:$0xe]
        %v3433 = vld [vmem:[%s2757 + $0x4c] sm:$0xf]
        %v3434 = vld [vmem:[%s2757 + $0x50] sm:$0x1]
        %v3435 = vld [vmem:[%s2757 + $0x54] sm:$0xe]
        %v3436 = vld [vmem:[%s2757 + $0x58] sm:$0xf]
        %v3437 = vld [vmem:[%s2757 + $0x5c] sm:$0x1]
        %v3438 = vld [vmem:[%s2757 + $0x60] sm:$0xe]
        %v3439 = vld [vmem:[%s2757 + $0x64] sm:$0xf]
        %v3440 = vld [vmem:[%s2757 + $0x68] sm:$0x1]
        %v3441 = vld [vmem:[%s2757 + $0x6c] sm:$0xe]
        %v3442 = vld [vmem:[%s2757 + $0x70] sm:$0xf]
        %v3443 = vld [vmem:[%s2757 + $0x74] sm:$0x1]
        %v3444 = vld [vmem:[%s2757 + $0x78] sm:$0xe]
        %v3445 = vld [vmem:[%s2757 + $0x7c] sm:$0xf]
        %v3446 = vld [vmem:[%s2757 + $0x80] sm:$0x1]
        %v3447 = vld [vmem:[%s2757 + $0x84] sm:$0xe]
        %v3448 = vld [vmem:[%s2757 + $0x88] sm:$0xf]
        %v3449 = vld [vmem:[%s2757 + $0x8c] sm:$0x1]
        %v3450 = vld [vmem:[%s2757 + $0x90] sm:$0xe]
        %v3451 = vld [vmem:[%s2757 + $0x94] sm:$0xf]
        %v3452 = vld [vmem:[%s2757 + $0x98] sm:$0x1]
        %v3453 = vld [vmem:[%s2757 + $0x9c] sm:$0xe]
        %v3454 = vld [vmem:[%s2757 + $0xa0] sm:$0xf]
        %v3455 = vld [vmem:[%s2757 + $0xa4] sm:$0x1]
        %v3456 = vld [vmem:[%s2757 + $0xa8] sm:$0xe]
        %v3457 = vld [vmem:[%s2757 + $0xac] sm:$0xf]
        %v3458 = vld [vmem:[%s2757 + $0xb0] sm:$0x1]
        %v3459 = vld [vmem:[%s2757 + $0xb4] sm:$0xe]
        %v3460 = vld [vmem:[%s2757 + $0xb8] sm:$0xf]
        %v3461 = vld [vmem:[%s2757 + $0xbc] sm:$0x1]
        %v3510 = vrot.slane %v3414, 5
        %v3511 = vrot.slane %v3510, 4
        %v3512 = vrot.slane %v3415, 5
        %v3513 = vsel %vm1620, %v3511, %v3512
        %v3514 = vrot.slane %v3512, 4
        %v3515 = vrot.slane %v3416, 5
        %v3516 = vsel %vm1620, %v3514, %v3515
        %v3517 = vrot.slane %v3417, 5
        %v3518 = vrot.slane %v3517, 4
        %v3519 = vrot.slane %v3418, 5
        %v3520 = vsel %vm1620, %v3518, %v3519
        %v3521 = vrot.slane %v3519, 4
        %v3522 = vrot.slane %v3419, 5
        %v3523 = vsel %vm1620, %v3521, %v3522
        %v3524 = vrot.slane %v3420, 5
        %v3525 = vrot.slane %v3524, 4
        %v3526 = vrot.slane %v3421, 5
        %v3527 = vsel %vm1620, %v3525, %v3526
        %v3528 = vrot.slane %v3526, 4
        %v3529 = vrot.slane %v3422, 5
        %v3530 = vsel %vm1620, %v3528, %v3529
        %v3531 = vrot.slane %v3423, 5
        %v3532 = vrot.slane %v3531, 4
        %v3533 = vrot.slane %v3424, 5
        %v3534 = vsel %vm1620, %v3532, %v3533
        %v3535 = vrot.slane %v3533, 4
        %v3536 = vrot.slane %v3425, 5
        %v3537 = vsel %vm1620, %v3535, %v3536
        %v3538 = vrot.slane %v3426, 5
        %v3539 = vrot.slane %v3538, 4
        %v3540 = vrot.slane %v3427, 5
        %v3541 = vsel %vm1620, %v3539, %v3540
        %v3542 = vrot.slane %v3540, 4
        %v3543 = vrot.slane %v3428, 5
        %v3544 = vsel %vm1620, %v3542, %v3543
        %v3545 = vrot.slane %v3429, 5
        %v3546 = vrot.slane %v3545, 4
        %v3547 = vrot.slane %v3430, 5
        %v3548 = vsel %vm1620, %v3546, %v3547
        %v3549 = vrot.slane %v3547, 4
        %v3550 = vrot.slane %v3431, 5
        %v3551 = vsel %vm1620, %v3549, %v3550
        %v3552 = vrot.slane %v3432, 5
        %v3553 = vrot.slane %v3552, 4
        %v3554 = vrot.slane %v3433, 5
        %v3555 = vsel %vm1620, %v3553, %v3554
        %v3556 = vrot.slane %v3554, 4
        %v3557 = vrot.slane %v3434, 5
        %v3558 = vsel %vm1620, %v3556, %v3557
        %v3559 = vrot.slane %v3435, 5
        %v3560 = vrot.slane %v3559, 4
        %v3561 = vrot.slane %v3436, 5
        %v3562 = vsel %vm1620, %v3560, %v3561
        %v3563 = vrot.slane %v3561, 4
        %v3564 = vrot.slane %v3437, 5
        %v3565 = vsel %vm1620, %v3563, %v3564
        %v3566 = vrot.slane %v3438, 5
        %v3567 = vrot.slane %v3566, 4
        %v3568 = vrot.slane %v3439, 5
        %v3569 = vsel %vm1620, %v3567, %v3568
        %v3570 = vrot.slane %v3568, 4
        %v3571 = vrot.slane %v3440, 5
        %v3572 = vsel %vm1620, %v3570, %v3571
        %v3573 = vrot.slane %v3441, 5
        %v3574 = vrot.slane %v3573, 4
        %v3575 = vrot.slane %v3442, 5
        %v3576 = vsel %vm1620, %v3574, %v3575
        %v3577 = vrot.slane %v3575, 4
        %v3578 = vrot.slane %v3443, 5
        %v3579 = vsel %vm1620, %v3577, %v3578
        %v3580 = vrot.slane %v3444, 5
        %v3581 = vrot.slane %v3580, 4
        %v3582 = vrot.slane %v3445, 5
        %v3583 = vsel %vm1620, %v3581, %v3582
        %v3584 = vrot.slane %v3582, 4
        %v3585 = vrot.slane %v3446, 5
        %v3586 = vsel %vm1620, %v3584, %v3585
        %v3587 = vrot.slane %v3447, 5
        %v3588 = vrot.slane %v3587, 4
        %v3589 = vrot.slane %v3448, 5
        %v3590 = vsel %vm1620, %v3588, %v3589
        %v3591 = vrot.slane %v3589, 4
        %v3592 = vrot.slane %v3449, 5
        %v3593 = vsel %vm1620, %v3591, %v3592
        %v3594 = vrot.slane %v3450, 5
        %v3595 = vrot.slane %v3594, 4
        %v3596 = vrot.slane %v3451, 5
        %v3597 = vsel %vm1620, %v3595, %v3596
        %v3598 = vrot.slane %v3596, 4
        %v3599 = vrot.slane %v3452, 5
        %v3600 = vsel %vm1620, %v3598, %v3599
        %v3601 = vrot.slane %v3453, 5
        %v3602 = vrot.slane %v3601, 4
        %v3603 = vrot.slane %v3454, 5
        %v3604 = vsel %vm1620, %v3602, %v3603
        %v3605 = vrot.slane %v3603, 4
        %v3606 = vrot.slane %v3455, 5
        %v3607 = vsel %vm1620, %v3605, %v3606
        %v3608 = vrot.slane %v3456, 5
        %v3609 = vrot.slane %v3608, 4
        %v3610 = vrot.slane %v3457, 5
        %v3611 = vsel %vm1620, %v3609, %v3610
        %v3612 = vrot.slane %v3610, 4
        %v3613 = vrot.slane %v3458, 5
        %v3614 = vsel %vm1620, %v3612, %v3613
        %v3615 = vrot.slane %v3459, 5
        %v3616 = vrot.slane %v3615, 4
        %v3617 = vrot.slane %v3460, 5
        %v3618 = vsel %vm1620, %v3616, %v3617
        %v3619 = vrot.slane %v3617, 4
        %v3620 = vrot.slane %v3461, 5
        %v3621 = vsel %vm1620, %v3619, %v3620
        %v3622 = vunpack.c.l.b16 %v3513
        %v3623 = vunpack.c.l.b16 %v3516
        %v3624 = vunpack.c.l.b16 %v3520
        %v3625 = vunpack.c.l.b16 %v3523
        %v3626 = vunpack.c.l.b16 %v3527
        %v3627 = vunpack.c.l.b16 %v3530
        %v3628 = vunpack.c.l.b16 %v3534
        %v3629 = vunpack.c.l.b16 %v3537
        %v3630 = vunpack.c.l.b16 %v3541
        %v3631 = vunpack.c.l.b16 %v3544
        %v3632 = vunpack.c.l.b16 %v3548
        %v3633 = vunpack.c.l.b16 %v3551
        %v3634 = vunpack.c.l.b16 %v3555
        %v3635 = vunpack.c.l.b16 %v3558
        %v3636 = vunpack.c.l.b16 %v3562
        %v3637 = vunpack.c.l.b16 %v3565
        %v3638 = vunpack.c.l.b16 %v3569
        %v3639 = vunpack.c.l.b16 %v3572
        %v3640 = vunpack.c.l.b16 %v3576
        %v3641 = vunpack.c.l.b16 %v3579
        %v3642 = vunpack.c.l.b16 %v3583
        %v3643 = vunpack.c.l.b16 %v3586
        %v3644 = vunpack.c.l.b16 %v3590
        %v3645 = vunpack.c.l.b16 %v3593
        %v3646 = vunpack.c.l.b16 %v3597
        %v3647 = vunpack.c.l.b16 %v3600
        %v3648 = vunpack.c.l.b16 %v3604
        %v3649 = vunpack.c.l.b16 %v3607
        %v3650 = vunpack.c.l.b16 %v3611
        %v3651 = vunpack.c.l.b16 %v3614
        %v3652 = vunpack.c.l.b16 %v3618
        %v3653 = vunpack.c.l.b16 %v3621
        %v3654 = vpack.c.b16 %v3623, %v3622
        %v3655 = vpack.c.b16 %v3625, %v3624
        %v3656 = vpack.c.b16 %v3627, %v3626
        %v3657 = vpack.c.b16 %v3629, %v3628
        %v3658 = vpack.c.b16 %v3631, %v3630
        %v3659 = vpack.c.b16 %v3633, %v3632
        %v3660 = vpack.c.b16 %v3635, %v3634
        %v3661 = vpack.c.b16 %v3637, %v3636
        %v3662 = vpack.c.b16 %v3639, %v3638
        %v3663 = vpack.c.b16 %v3641, %v3640
        %v3664 = vpack.c.b16 %v3643, %v3642
        %v3665 = vpack.c.b16 %v3645, %v3644
        %v3666 = vpack.c.b16 %v3647, %v3646
        %v3667 = vpack.c.b16 %v3649, %v3648
        %v3668 = vpack.c.b16 %v3651, %v3650
        %v3669 = vpack.c.b16 %v3653, %v3652
        %3686 = vst [vmem:[#allocation3 + $0x40] sm:$0xff] %v3654
        %3687 = vst [vmem:[#allocation3 + $0x88] sm:$0xff] %v3655
        %3688 = vst [vmem:[#allocation3 + $0xd0] sm:$0xff] %v3656
        %3689 = vst [vmem:[#allocation3 + $0x118] sm:$0xff] %v3657
        %3690 = vst [vmem:[#allocation3 + $0x160] sm:$0xff] %v3658
        %3691 = vst [vmem:[#allocation3 + $0x1a8] sm:$0xff] %v3659
        %3692 = vst [vmem:[#allocation3 + $0x1f0] sm:$0xff] %v3660
        %3693 = vst [vmem:[#allocation3 + $0x238] sm:$0xff] %v3661
        %3694 = vst [vmem:[#allocation3 + $0x280] sm:$0xff] %v3662
        %3695 = vst [vmem:[#allocation3 + $0x2c8] sm:$0xff] %v3663
        %3696 = vst [vmem:[#allocation3 + $0x310] sm:$0xff] %v3664
        %3697 = vst [vmem:[#allocation3 + $0x358] sm:$0xff] %v3665
        %3698 = vst [vmem:[#allocation3 + $0x3a0] sm:$0xff] %v3666
        %3699 = vst [vmem:[#allocation3 + $0x3e8] sm:$0xff] %v3667
        %3700 = vst [vmem:[#allocation3 + $0x430] sm:$0xff] %v3668
        %3701 = vst [vmem:[#allocation3 + $0x478] sm:$0xff] %v3669
        %v3702 = vld [vmem:[#allocation3] sm:$0xff]
        %v3703 = vld [vmem:[#allocation3 + $0x8] sm:$0xff]
        %v3704 = vld [vmem:[#allocation3 + $0x10] sm:$0xff]
        %v3705 = vld [vmem:[#allocation3 + $0x18] sm:$0xff]
        %v3706 = vld [vmem:[#allocation3 + $0x20] sm:$0xff]
        %v3707 = vld [vmem:[#allocation3 + $0x28] sm:$0xff]
        %v3708 = vld [vmem:[#allocation3 + $0x30] sm:$0xff]
        %v3709 = vld [vmem:[#allocation3 + $0x38] sm:$0xff]
        %v3710 = vld [vmem:[#allocation3 + $0x40] sm:$0xff]
        %v3711 = vld [vmem:[#allocation3 + $0x48] sm:$0xff]
        %v3712 = vld [vmem:[#allocation3 + $0x50] sm:$0xff]
        %v3713 = vld [vmem:[#allocation3 + $0x58] sm:$0xff]
        %v3714 = vld [vmem:[#allocation3 + $0x60] sm:$0xff]
        %v3715 = vld [vmem:[#allocation3 + $0x68] sm:$0xff]
        %v3716 = vld [vmem:[#allocation3 + $0x70] sm:$0xff]
        %v3717 = vld [vmem:[#allocation3 + $0x78] sm:$0xff]
        %v3718 = vld [vmem:[#allocation3 + $0x80] sm:$0xff]
        %v3719 = vld [vmem:[#allocation3 + $0x88] sm:$0xff]
        %v3720 = vld [vmem:[#allocation3 + $0x90] sm:$0xff]
        %v3721 = vld [vmem:[#allocation3 + $0x98] sm:$0xff]
        %v3722 = vld [vmem:[#allocation3 + $0xa0] sm:$0xff]
        %v3723 = vld [vmem:[#allocation3 + $0xa8] sm:$0xff]
        %v3724 = vld [vmem:[#allocation3 + $0xb0] sm:$0xff]
        %v3725 = vld [vmem:[#allocation3 + $0xb8] sm:$0xff]
        %v3726 = vld [vmem:[#allocation3 + $0xc0] sm:$0xff]
        %v3727 = vld [vmem:[#allocation3 + $0xc8] sm:$0xff]
        %v3728 = vld [vmem:[#allocation3 + $0xd0] sm:$0xff]
        %v3729 = vld [vmem:[#allocation3 + $0xd8] sm:$0xff]
        %v3730 = vld [vmem:[#allocation3 + $0xe0] sm:$0xff]
        %v3731 = vld [vmem:[#allocation3 + $0xe8] sm:$0xff]
        %v3732 = vld [vmem:[#allocation3 + $0xf0] sm:$0xff]
        %v3733 = vld [vmem:[#allocation3 + $0xf8] sm:$0xff]
        %v3734 = vld [vmem:[#allocation3 + $0x100] sm:$0xff]
        %v3735 = vld [vmem:[#allocation3 + $0x108] sm:$0xff]
        %v3736 = vld [vmem:[#allocation3 + $0x110] sm:$0xff]
        %v3737 = vld [vmem:[#allocation3 + $0x118] sm:$0xff]
        %v3738 = vld [vmem:[#allocation3 + $0x120] sm:$0xff]
        %v3739 = vld [vmem:[#allocation3 + $0x128] sm:$0xff]
        %v3740 = vld [vmem:[#allocation3 + $0x130] sm:$0xff]
        %v3741 = vld [vmem:[#allocation3 + $0x138] sm:$0xff]
        %v3742 = vld [vmem:[#allocation3 + $0x140] sm:$0xff]
        %v3743 = vld [vmem:[#allocation3 + $0x148] sm:$0xff]
        %v3744 = vld [vmem:[#allocation3 + $0x150] sm:$0xff]
        %v3745 = vld [vmem:[#allocation3 + $0x158] sm:$0xff]
        %v3746 = vld [vmem:[#allocation3 + $0x160] sm:$0xff]
        %v3747 = vld [vmem:[#allocation3 + $0x168] sm:$0xff]
        %v3748 = vld [vmem:[#allocation3 + $0x170] sm:$0xff]
        %v3749 = vld [vmem:[#allocation3 + $0x178] sm:$0xff]
        %v3750 = vld [vmem:[#allocation3 + $0x180] sm:$0xff]
        %v3751 = vld [vmem:[#allocation3 + $0x188] sm:$0xff]
        %v3752 = vld [vmem:[#allocation3 + $0x190] sm:$0xff]
        %v3753 = vld [vmem:[#allocation3 + $0x198] sm:$0xff]
        %v3754 = vld [vmem:[#allocation3 + $0x1a0] sm:$0xff]
        %v3755 = vld [vmem:[#allocation3 + $0x1a8] sm:$0xff]
        %v3756 = vld [vmem:[#allocation3 + $0x1b0] sm:$0xff]
        %v3757 = vld [vmem:[#allocation3 + $0x1b8] sm:$0xff]
        %v3758 = vld [vmem:[#allocation3 + $0x1c0] sm:$0xff]
        %v3759 = vld [vmem:[#allocation3 + $0x1c8] sm:$0xff]
        %v3760 = vld [vmem:[#allocation3 + $0x1d0] sm:$0xff]
        %v3761 = vld [vmem:[#allocation3 + $0x1d8] sm:$0xff]
        %v3762 = vld [vmem:[#allocation3 + $0x1e0] sm:$0xff]
        %v3763 = vld [vmem:[#allocation3 + $0x1e8] sm:$0xff]
        %v3764 = vld [vmem:[#allocation3 + $0x1f0] sm:$0xff]
        %v3765 = vld [vmem:[#allocation3 + $0x1f8] sm:$0xff]
        %v3766 = vld [vmem:[#allocation3 + $0x200] sm:$0xff]
        %v3767 = vld [vmem:[#allocation3 + $0x208] sm:$0xff]
        %v3768 = vld [vmem:[#allocation3 + $0x210] sm:$0xff]
        %v3769 = vld [vmem:[#allocation3 + $0x218] sm:$0xff]
        %v3770 = vld [vmem:[#allocation3 + $0x220] sm:$0xff]
        %v3771 = vld [vmem:[#allocation3 + $0x228] sm:$0xff]
        %v3772 = vld [vmem:[#allocation3 + $0x230] sm:$0xff]
        %v3773 = vld [vmem:[#allocation3 + $0x238] sm:$0xff]
        %v3774 = vld [vmem:[#allocation3 + $0x240] sm:$0xff]
        %v3775 = vld [vmem:[#allocation3 + $0x248] sm:$0xff]
        %v3776 = vld [vmem:[#allocation3 + $0x250] sm:$0xff]
        %v3777 = vld [vmem:[#allocation3 + $0x258] sm:$0xff]
        %v3778 = vld [vmem:[#allocation3 + $0x260] sm:$0xff]
        %v3779 = vld [vmem:[#allocation3 + $0x268] sm:$0xff]
        %v3780 = vld [vmem:[#allocation3 + $0x270] sm:$0xff]
        %v3781 = vld [vmem:[#allocation3 + $0x278] sm:$0xff]
        %v3782 = vld [vmem:[#allocation3 + $0x280] sm:$0xff]
        %v3783 = vld [vmem:[#allocation3 + $0x288] sm:$0xff]
        %v3784 = vld [vmem:[#allocation3 + $0x290] sm:$0xff]
        %v3785 = vld [vmem:[#allocation3 + $0x298] sm:$0xff]
        %v3786 = vld [vmem:[#allocation3 + $0x2a0] sm:$0xff]
        %v3787 = vld [vmem:[#allocation3 + $0x2a8] sm:$0xff]
        %v3788 = vld [vmem:[#allocation3 + $0x2b0] sm:$0xff]
        %v3789 = vld [vmem:[#allocation3 + $0x2b8] sm:$0xff]
        %v3790 = vld [vmem:[#allocation3 + $0x2c0] sm:$0xff]
        %v3791 = vld [vmem:[#allocation3 + $0x2c8] sm:$0xff]
        %v3792 = vld [vmem:[#allocation3 + $0x2d0] sm:$0xff]
        %v3793 = vld [vmem:[#allocation3 + $0x2d8] sm:$0xff]
        %v3794 = vld [vmem:[#allocation3 + $0x2e0] sm:$0xff]
        %v3795 = vld [vmem:[#allocation3 + $0x2e8] sm:$0xff]
        %v3796 = vld [vmem:[#allocation3 + $0x2f0] sm:$0xff]
        %v3797 = vld [vmem:[#allocation3 + $0x2f8] sm:$0xff]
        %v3798 = vld [vmem:[#allocation3 + $0x300] sm:$0xff]
        %v3799 = vld [vmem:[#allocation3 + $0x308] sm:$0xff]
        %v3800 = vld [vmem:[#allocation3 + $0x310] sm:$0xff]
        %v3801 = vld [vmem:[#allocation3 + $0x318] sm:$0xff]
        %v3802 = vld [vmem:[#allocation3 + $0x320] sm:$0xff]
        %v3803 = vld [vmem:[#allocation3 + $0x328] sm:$0xff]
        %v3804 = vld [vmem:[#allocation3 + $0x330] sm:$0xff]
        %v3805 = vld [vmem:[#allocation3 + $0x338] sm:$0xff]
        %v3806 = vld [vmem:[#allocation3 + $0x340] sm:$0xff]
        %v3807 = vld [vmem:[#allocation3 + $0x348] sm:$0xff]
        %v3808 = vld [vmem:[#allocation3 + $0x350] sm:$0xff]
        %v3809 = vld [vmem:[#allocation3 + $0x358] sm:$0xff]
        %v3810 = vld [vmem:[#allocation3 + $0x360] sm:$0xff]
        %v3811 = vld [vmem:[#allocation3 + $0x368] sm:$0xff]
        %v3812 = vld [vmem:[#allocation3 + $0x370] sm:$0xff]
        %v3813 = vld [vmem:[#allocation3 + $0x378] sm:$0xff]
        %v3814 = vld [vmem:[#allocation3 + $0x380] sm:$0xff]
        %v3815 = vld [vmem:[#allocation3 + $0x388] sm:$0xff]
        %v3816 = vld [vmem:[#allocation3 + $0x390] sm:$0xff]
        %v3817 = vld [vmem:[#allocation3 + $0x398] sm:$0xff]
        %v3818 = vld [vmem:[#allocation3 + $0x3a0] sm:$0xff]
        %v3819 = vld [vmem:[#allocation3 + $0x3a8] sm:$0xff]
        %v3820 = vld [vmem:[#allocation3 + $0x3b0] sm:$0xff]
        %v3821 = vld [vmem:[#allocation3 + $0x3b8] sm:$0xff]
        %v3822 = vld [vmem:[#allocation3 + $0x3c0] sm:$0xff]
        %v3823 = vld [vmem:[#allocation3 + $0x3c8] sm:$0xff]
        %v3824 = vld [vmem:[#allocation3 + $0x3d0] sm:$0xff]
        %v3825 = vld [vmem:[#allocation3 + $0x3d8] sm:$0xff]
        %v3826 = vld [vmem:[#allocation3 + $0x3e0] sm:$0xff]
        %v3827 = vld [vmem:[#allocation3 + $0x3e8] sm:$0xff]
        %v3828 = vld [vmem:[#allocation3 + $0x3f0] sm:$0xff]
        %v3829 = vld [vmem:[#allocation3 + $0x3f8] sm:$0xff]
        %v3830 = vld [vmem:[#allocation3 + $0x400] sm:$0xff]
        %v3831 = vld [vmem:[#allocation3 + $0x408] sm:$0xff]
        %v3832 = vld [vmem:[#allocation3 + $0x410] sm:$0xff]
        %v3833 = vld [vmem:[#allocation3 + $0x418] sm:$0xff]
        %v3834 = vld [vmem:[#allocation3 + $0x420] sm:$0xff]
        %v3835 = vld [vmem:[#allocation3 + $0x428] sm:$0xff]
        %v3836 = vld [vmem:[#allocation3 + $0x430] sm:$0xff]
        %v3837 = vld [vmem:[#allocation3 + $0x438] sm:$0xff]
        %v3838 = vld [vmem:[#allocation3 + $0x440] sm:$0xff]
        %v3839 = vld [vmem:[#allocation3 + $0x448] sm:$0xff]
        %v3840 = vld [vmem:[#allocation3 + $0x450] sm:$0xff]
        %v3841 = vld [vmem:[#allocation3 + $0x458] sm:$0xff]
        %v3842 = vld [vmem:[#allocation3 + $0x460] sm:$0xff]
        %v3843 = vld [vmem:[#allocation3 + $0x468] sm:$0xff]
        %v3844 = vld [vmem:[#allocation3 + $0x470] sm:$0xff]
        %v3845 = vld [vmem:[#allocation3 + $0x478] sm:$0xff]
        %v3846 = vld [vmem:[%s1] sm:$0xf]
        %v3847 = vld [vmem:[%s1 + $0x4] sm:$0xf]
        %v3848 = vld [vmem:[%s1 + $0x8] sm:$0xf]
        %v3849 = vld [vmem:[%s1 + $0xc] sm:$0xf]
        %v3850 = vld [vmem:[%s1 + $0x10] sm:$0xf]
        %v3851 = vld [vmem:[%s1 + $0x14] sm:$0xf]
        %v3852 = vld [vmem:[%s1 + $0x18] sm:$0xf]
        %v3853 = vld [vmem:[%s1 + $0x1c] sm:$0xf]
        %v3854 = vld [vmem:[%s1 + $0x20] sm:$0xf]
        %v3855 = vld [vmem:[%s1 + $0x24] sm:$0xf]
        %v3856 = vld [vmem:[%s1 + $0x28] sm:$0xf]
        %v3857 = vld [vmem:[%s1 + $0x2c] sm:$0xf]
        %v3858 = vld [vmem:[%s1 + $0x30] sm:$0xf]
        %v3859 = vld [vmem:[%s1 + $0x34] sm:$0xf]
        %v3860 = vld [vmem:[%s1 + $0x38] sm:$0xf]
        %v3861 = vld [vmem:[%s1 + $0x3c] sm:$0xf]
        %v3862 = vld [vmem:[%s1 + $0x40] sm:$0xf]
        %v3863 = vld [vmem:[%s1 + $0x44] sm:$0xf]
        %v3864 = vld [vmem:[%s1 + $0x48] sm:$0xf]
        %v3865 = vld [vmem:[%s1 + $0x4c] sm:$0xf]
        %v3866 = vld [vmem:[%s1 + $0x50] sm:$0xf]
        %v3867 = vld [vmem:[%s1 + $0x54] sm:$0xf]
        %v3868 = vld [vmem:[%s1 + $0x58] sm:$0xf]
        %v3869 = vld [vmem:[%s1 + $0x5c] sm:$0xf]
        %v3870 = vld [vmem:[%s1 + $0x60] sm:$0xf]
        %v3871 = vld [vmem:[%s1 + $0x64] sm:$0xf]
        %v3872 = vld [vmem:[%s1 + $0x68] sm:$0xf]
        %v3873 = vld [vmem:[%s1 + $0x6c] sm:$0xf]
        %v3874 = vld [vmem:[%s1 + $0x70] sm:$0xf]
        %v3875 = vld [vmem:[%s1 + $0x74] sm:$0xf]
        %v3876 = vld [vmem:[%s1 + $0x78] sm:$0xf]
        %v3877 = vld [vmem:[%s1 + $0x7c] sm:$0xf]
        %v3878 = vld [vmem:[%s1 + $0x80] sm:$0xf]
        %v3879 = vld [vmem:[%s1 + $0x84] sm:$0xf]
        %v3880 = vld [vmem:[%s1 + $0x88] sm:$0xf]
        %v3881 = vld [vmem:[%s1 + $0x8c] sm:$0xf]
        %v3882 = vld [vmem:[%s1 + $0x90] sm:$0xf]
        %v3883 = vld [vmem:[%s1 + $0x94] sm:$0xf]
        %v3884 = vld [vmem:[%s1 + $0x98] sm:$0xf]
        %v3885 = vld [vmem:[%s1 + $0x9c] sm:$0xf]
        %v3886 = vld [vmem:[%s1 + $0xa0] sm:$0xf]
        %v3887 = vld [vmem:[%s1 + $0xa4] sm:$0xf]
        %v3888 = vld [vmem:[%s1 + $0xa8] sm:$0xf]
        %v3889 = vld [vmem:[%s1 + $0xac] sm:$0xf]
        %v3890 = vld [vmem:[%s1 + $0xb0] sm:$0xf]
        %v3891 = vld [vmem:[%s1 + $0xb4] sm:$0xf]
        %v3892 = vld [vmem:[%s1 + $0xb8] sm:$0xf]
        %v3893 = vld [vmem:[%s1 + $0xbc] sm:$0xf]
        %v3894 = vld [vmem:[%s1 + $0xc0] sm:$0xf]
        %v3895 = vld [vmem:[%s1 + $0xc4] sm:$0xf]
        %v3896 = vld [vmem:[%s1 + $0xc8] sm:$0xf]
        %v3897 = vld [vmem:[%s1 + $0xcc] sm:$0xf]
        %v3898 = vld [vmem:[%s1 + $0xd0] sm:$0xf]
        %v3899 = vld [vmem:[%s1 + $0xd4] sm:$0xf]
        %v3900 = vld [vmem:[%s1 + $0xd8] sm:$0xf]
        %v3901 = vld [vmem:[%s1 + $0xdc] sm:$0xf]
        %v3902 = vld [vmem:[%s1 + $0xe0] sm:$0xf]
        %v3903 = vld [vmem:[%s1 + $0xe4] sm:$0xf]
        %v3904 = vld [vmem:[%s1 + $0xe8] sm:$0xf]
        %v3905 = vld [vmem:[%s1 + $0xec] sm:$0xf]
        %v3906 = vld [vmem:[%s1 + $0xf0] sm:$0xf]
        %v3907 = vld [vmem:[%s1 + $0xf4] sm:$0xf]
        %v3908 = vld [vmem:[%s1 + $0xf8] sm:$0xf]
        %v3909 = vld [vmem:[%s1 + $0xfc] sm:$0xf]
        %v3910 = vld [vmem:[%s1 + $0x100] sm:$0xf]
        %v3911 = vld [vmem:[%s1 + $0x104] sm:$0xf]
        %v3912 = vld [vmem:[%s1 + $0x108] sm:$0xf]
        %v3913 = vld [vmem:[%s1 + $0x10c] sm:$0xf]
        %v3914 = vld [vmem:[%s1 + $0x110] sm:$0xf]
        %v3915 = vld [vmem:[%s1 + $0x114] sm:$0xf]
        %v3916 = vld [vmem:[%s1 + $0x118] sm:$0xf]
        %v3917 = vld [vmem:[%s1 + $0x11c] sm:$0xf]
        %v3918 = vld [vmem:[%s1 + $0x120] sm:$0xf]
        %v3919 = vld [vmem:[%s1 + $0x124] sm:$0xf]
        %v3920 = vld [vmem:[%s1 + $0x128] sm:$0xf]
        %v3921 = vld [vmem:[%s1 + $0x12c] sm:$0xf]
        %v3922 = vld [vmem:[%s1 + $0x130] sm:$0xf]
        %v3923 = vld [vmem:[%s1 + $0x134] sm:$0xf]
        %v3924 = vld [vmem:[%s1 + $0x138] sm:$0xf]
        %v3925 = vld [vmem:[%s1 + $0x13c] sm:$0xf]
        %v3926 = vld [vmem:[%s1 + $0x140] sm:$0xf]
        %v3927 = vld [vmem:[%s1 + $0x144] sm:$0xf]
        %v3928 = vld [vmem:[%s1 + $0x148] sm:$0xf]
        %v3929 = vld [vmem:[%s1 + $0x14c] sm:$0xf]
        %v3930 = vld [vmem:[%s1 + $0x150] sm:$0xf]
        %v3931 = vld [vmem:[%s1 + $0x154] sm:$0xf]
        %v3932 = vld [vmem:[%s1 + $0x158] sm:$0xf]
        %v3933 = vld [vmem:[%s1 + $0x15c] sm:$0xf]
        %v3934 = vld [vmem:[%s1 + $0x160] sm:$0xf]
        %v3935 = vld [vmem:[%s1 + $0x164] sm:$0xf]
        %v3936 = vld [vmem:[%s1 + $0x168] sm:$0xf]
        %v3937 = vld [vmem:[%s1 + $0x16c] sm:$0xf]
        %v3938 = vld [vmem:[%s1 + $0x170] sm:$0xf]
        %v3939 = vld [vmem:[%s1 + $0x174] sm:$0xf]
        %v3940 = vld [vmem:[%s1 + $0x178] sm:$0xf]
        %v3941 = vld [vmem:[%s1 + $0x17c] sm:$0xf]
        %v3942 = vld [vmem:[%s1 + $0x180] sm:$0xf]
        %v3943 = vld [vmem:[%s1 + $0x184] sm:$0xf]
        %v3944 = vld [vmem:[%s1 + $0x188] sm:$0xf]
        %v3945 = vld [vmem:[%s1 + $0x18c] sm:$0xf]
        %v3946 = vld [vmem:[%s1 + $0x190] sm:$0xf]
        %v3947 = vld [vmem:[%s1 + $0x194] sm:$0xf]
        %v3948 = vld [vmem:[%s1 + $0x198] sm:$0xf]
        %v3949 = vld [vmem:[%s1 + $0x19c] sm:$0xf]
        %v3950 = vld [vmem:[%s1 + $0x1a0] sm:$0xf]
        %v3951 = vld [vmem:[%s1 + $0x1a4] sm:$0xf]
        %v3952 = vld [vmem:[%s1 + $0x1a8] sm:$0xf]
        %v3953 = vld [vmem:[%s1 + $0x1ac] sm:$0xf]
        %v3954 = vld [vmem:[%s1 + $0x1b0] sm:$0xf]
        %v3955 = vld [vmem:[%s1 + $0x1b4] sm:$0xf]
        %v3956 = vld [vmem:[%s1 + $0x1b8] sm:$0xf]
        %v3957 = vld [vmem:[%s1 + $0x1bc] sm:$0xf]
        %v3958 = vld [vmem:[%s1 + $0x1c0] sm:$0xf]
        %v3959 = vld [vmem:[%s1 + $0x1c4] sm:$0xf]
        %v3960 = vld [vmem:[%s1 + $0x1c8] sm:$0xf]
        %v3961 = vld [vmem:[%s1 + $0x1cc] sm:$0xf]
        %v3962 = vld [vmem:[%s1 + $0x1d0] sm:$0xf]
        %v3963 = vld [vmem:[%s1 + $0x1d4] sm:$0xf]
        %v3964 = vld [vmem:[%s1 + $0x1d8] sm:$0xf]
        %v3965 = vld [vmem:[%s1 + $0x1dc] sm:$0xf]
        %v3966 = vld [vmem:[%s1 + $0x1e0] sm:$0xf]
        %v3967 = vld [vmem:[%s1 + $0x1e4] sm:$0xf]
        %v3968 = vld [vmem:[%s1 + $0x1e8] sm:$0xf]
        %v3969 = vld [vmem:[%s1 + $0x1ec] sm:$0xf]
        %v3970 = vld [vmem:[%s1 + $0x1f0] sm:$0xf]
        %v3971 = vld [vmem:[%s1 + $0x1f4] sm:$0xf]
        %v3972 = vld [vmem:[%s1 + $0x1f8] sm:$0xf]
        %v3973 = vld [vmem:[%s1 + $0x1fc] sm:$0xf]
        %v3974 = vld [vmem:[%s1 + $0x200] sm:$0xf]
        %v3975 = vld [vmem:[%s1 + $0x204] sm:$0xf]
        %v3976 = vld [vmem:[%s1 + $0x208] sm:$0xf]
        %v3977 = vld [vmem:[%s1 + $0x20c] sm:$0xf]
        %v3978 = vld [vmem:[%s1 + $0x210] sm:$0xf]
        %v3979 = vld [vmem:[%s1 + $0x214] sm:$0xf]
        %v3980 = vld [vmem:[%s1 + $0x218] sm:$0xf]
        %v3981 = vld [vmem:[%s1 + $0x21c] sm:$0xf]
        %v3982 = vld [vmem:[%s1 + $0x220] sm:$0xf]
        %v3983 = vld [vmem:[%s1 + $0x224] sm:$0xf]
        %v3984 = vld [vmem:[%s1 + $0x228] sm:$0xf]
        %v3985 = vld [vmem:[%s1 + $0x22c] sm:$0xf]
        %v3986 = vld [vmem:[%s1 + $0x230] sm:$0xf]
        %v3987 = vld [vmem:[%s1 + $0x234] sm:$0xf]
        %v3988 = vld [vmem:[%s1 + $0x238] sm:$0xf]
        %v3989 = vld [vmem:[%s1 + $0x23c] sm:$0xf]
        %v3990 = vld [vmem:[%s2] sm:$0x1]
        %v3992 = vlaneseq
        %v3993 = vshrl.u32 %v3992, 7
        %v3994 = vsub.s32 0, %v3993
        %v3995 = vrot.slane %v3990, %v3994
        %v4141 = vunpack.c.l.b16 %v3846
        %v4142 = vunpack.c.l.b16 %v3847
        %v4143 = vunpack.c.l.b16 %v3848
        %v4144 = vunpack.c.l.b16 %v3849
        %v4145 = vunpack.c.l.b16 %v3850
        %v4146 = vunpack.c.l.b16 %v3851
        %v4147 = vunpack.c.l.b16 %v3852
        %v4148 = vunpack.c.l.b16 %v3853
        %v4149 = vunpack.c.l.b16 %v3854
        %v4150 = vunpack.c.l.b16 %v3855
        %v4151 = vunpack.c.l.b16 %v3856
        %v4152 = vunpack.c.l.b16 %v3857
        %v4153 = vunpack.c.l.b16 %v3858
        %v4154 = vunpack.c.l.b16 %v3859
        %v4155 = vunpack.c.l.b16 %v3860
        %v4156 = vunpack.c.l.b16 %v3861
        %v4157 = vunpack.c.l.b16 %v3862
        %v4158 = vunpack.c.l.b16 %v3863
        %v4159 = vunpack.c.l.b16 %v3864
        %v4160 = vunpack.c.l.b16 %v3865
        %v4161 = vunpack.c.l.b16 %v3866
        %v4162 = vunpack.c.l.b16 %v3867
        %v4163 = vunpack.c.l.b16 %v3868
        %v4164 = vunpack.c.l.b16 %v3869
        %v4165 = vunpack.c.l.b16 %v3870
        %v4166 = vunpack.c.l.b16 %v3871
        %v4167 = vunpack.c.l.b16 %v3872
        %v4168 = vunpack.c.l.b16 %v3873
        %v4169 = vunpack.c.l.b16 %v3874
        %v4170 = vunpack.c.l.b16 %v3875
        %v4171 = vunpack.c.l.b16 %v3876
        %v4172 = vunpack.c.l.b16 %v3877
        %v4173 = vunpack.c.l.b16 %v3878
        %v4174 = vunpack.c.l.b16 %v3879
        %v4175 = vunpack.c.l.b16 %v3880
        %v4176 = vunpack.c.l.b16 %v3881
        %v4177 = vunpack.c.l.b16 %v3882
        %v4178 = vunpack.c.l.b16 %v3883
        %v4179 = vunpack.c.l.b16 %v3884
        %v4180 = vunpack.c.l.b16 %v3885
        %v4181 = vunpack.c.l.b16 %v3886
        %v4182 = vunpack.c.l.b16 %v3887
        %v4183 = vunpack.c.l.b16 %v3888
        %v4184 = vunpack.c.l.b16 %v3889
        %v4185 = vunpack.c.l.b16 %v3890
        %v4186 = vunpack.c.l.b16 %v3891
        %v4187 = vunpack.c.l.b16 %v3892
        %v4188 = vunpack.c.l.b16 %v3893
        %v4189 = vunpack.c.l.b16 %v3894
        %v4190 = vunpack.c.l.b16 %v3895
        %v4191 = vunpack.c.l.b16 %v3896
        %v4192 = vunpack.c.l.b16 %v3897
        %v4193 = vunpack.c.l.b16 %v3898
        %v4194 = vunpack.c.l.b16 %v3899
        %v4195 = vunpack.c.l.b16 %v3900
        %v4196 = vunpack.c.l.b16 %v3901
        %v4197 = vunpack.c.l.b16 %v3902
        %v4198 = vunpack.c.l.b16 %v3903
        %v4199 = vunpack.c.l.b16 %v3904
        %v4200 = vunpack.c.l.b16 %v3905
        %v4201 = vunpack.c.l.b16 %v3906
        %v4202 = vunpack.c.l.b16 %v3907
        %v4203 = vunpack.c.l.b16 %v3908
        %v4204 = vunpack.c.l.b16 %v3909
        %v4205 = vunpack.c.l.b16 %v3910
        %v4206 = vunpack.c.l.b16 %v3911
        %v4207 = vunpack.c.l.b16 %v3912
        %v4208 = vunpack.c.l.b16 %v3913
        %v4209 = vunpack.c.l.b16 %v3914
        %v4210 = vunpack.c.l.b16 %v3915
        %v4211 = vunpack.c.l.b16 %v3916
        %v4212 = vunpack.c.l.b16 %v3917
        %v4213 = vunpack.c.l.b16 %v3918
        %v4214 = vunpack.c.l.b16 %v3919
        %v4215 = vunpack.c.l.b16 %v3920
        %v4216 = vunpack.c.l.b16 %v3921
        %v4217 = vunpack.c.l.b16 %v3922
        %v4218 = vunpack.c.l.b16 %v3923
        %v4219 = vunpack.c.l.b16 %v3924
        %v4220 = vunpack.c.l.b16 %v3925
        %v4221 = vunpack.c.l.b16 %v3926
        %v4222 = vunpack.c.l.b16 %v3927
        %v4223 = vunpack.c.l.b16 %v3928
        %v4224 = vunpack.c.l.b16 %v3929
        %v4225 = vunpack.c.l.b16 %v3930
        %v4226 = vunpack.c.l.b16 %v3931
        %v4227 = vunpack.c.l.b16 %v3932
        %v4228 = vunpack.c.l.b16 %v3933
        %v4229 = vunpack.c.l.b16 %v3934
        %v4230 = vunpack.c.l.b16 %v3935
        %v4231 = vunpack.c.l.b16 %v3936
        %v4232 = vunpack.c.l.b16 %v3937
        %v4233 = vunpack.c.l.b16 %v3938
        %v4234 = vunpack.c.l.b16 %v3939
        %v4235 = vunpack.c.l.b16 %v3940
        %v4236 = vunpack.c.l.b16 %v3941
        %v4237 = vunpack.c.l.b16 %v3942
        %v4238 = vunpack.c.l.b16 %v3943
        %v4239 = vunpack.c.l.b16 %v3944
        %v4240 = vunpack.c.l.b16 %v3945
        %v4241 = vunpack.c.l.b16 %v3946
        %v4242 = vunpack.c.l.b16 %v3947
        %v4243 = vunpack.c.l.b16 %v3948
        %v4244 = vunpack.c.l.b16 %v3949
        %v4245 = vunpack.c.l.b16 %v3950
        %v4246 = vunpack.c.l.b16 %v3951
        %v4247 = vunpack.c.l.b16 %v3952
        %v4248 = vunpack.c.l.b16 %v3953
        %v4249 = vunpack.c.l.b16 %v3954
        %v4250 = vunpack.c.l.b16 %v3955
        %v4251 = vunpack.c.l.b16 %v3956
        %v4252 = vunpack.c.l.b16 %v3957
        %v4253 = vunpack.c.l.b16 %v3958
        %v4254 = vunpack.c.l.b16 %v3959
        %v4255 = vunpack.c.l.b16 %v3960
        %v4256 = vunpack.c.l.b16 %v3961
        %v4257 = vunpack.c.l.b16 %v3962
        %v4258 = vunpack.c.l.b16 %v3963
        %v4259 = vunpack.c.l.b16 %v3964
        %v4260 = vunpack.c.l.b16 %v3965
        %v4261 = vunpack.c.l.b16 %v3966
        %v4262 = vunpack.c.l.b16 %v3967
        %v4263 = vunpack.c.l.b16 %v3968
        %v4264 = vunpack.c.l.b16 %v3969
        %v4265 = vunpack.c.l.b16 %v3970
        %v4266 = vunpack.c.l.b16 %v3971
        %v4267 = vunpack.c.l.b16 %v3972
        %v4268 = vunpack.c.l.b16 %v3973
        %v4269 = vunpack.c.l.b16 %v3974
        %v4270 = vunpack.c.l.b16 %v3975
        %v4271 = vunpack.c.l.b16 %v3976
        %v4272 = vunpack.c.l.b16 %v3977
        %v4273 = vunpack.c.l.b16 %v3978
        %v4274 = vunpack.c.l.b16 %v3979
        %v4275 = vunpack.c.l.b16 %v3980
        %v4276 = vunpack.c.l.b16 %v3981
        %v4277 = vunpack.c.l.b16 %v3982
        %v4278 = vunpack.c.l.b16 %v3983
        %v4279 = vunpack.c.l.b16 %v3984
        %v4280 = vunpack.c.l.b16 %v3985
        %v4281 = vunpack.c.l.b16 %v3986
        %v4282 = vunpack.c.l.b16 %v3987
        %v4283 = vunpack.c.l.b16 %v3988
        %v4284 = vunpack.c.l.b16 %v3989
        %v4285 = vpack.c.b16 %v4142, %v4141
        %v4286 = vpack.c.b16 %v4144, %v4143
        %v4287 = vpack.c.b16 %v4146, %v4145
        %v4288 = vpack.c.b16 %v4148, %v4147
        %v4289 = vpack.c.b16 %v4150, %v4149
        %v4290 = vpack.c.b16 %v4152, %v4151
        %v4291 = vpack.c.b16 %v4154, %v4153
        %v4292 = vpack.c.b16 %v4156, %v4155
        %v4293 = vpack.c.b16 %v4158, %v4157
        %v4294 = vpack.c.b16 %v4160, %v4159
        %v4295 = vpack.c.b16 %v4162, %v4161
        %v4296 = vpack.c.b16 %v4164, %v4163
        %v4297 = vpack.c.b16 %v4166, %v4165
        %v4298 = vpack.c.b16 %v4168, %v4167
        %v4299 = vpack.c.b16 %v4170, %v4169
        %v4300 = vpack.c.b16 %v4172, %v4171
        %v4301 = vpack.c.b16 %v4174, %v4173
        %v4302 = vpack.c.b16 %v4176, %v4175
        %v4303 = vpack.c.b16 %v4178, %v4177
        %v4304 = vpack.c.b16 %v4180, %v4179
        %v4305 = vpack.c.b16 %v4182, %v4181
        %v4306 = vpack.c.b16 %v4184, %v4183
        %v4307 = vpack.c.b16 %v4186, %v4185
        %v4308 = vpack.c.b16 %v4188, %v4187
        %v4309 = vpack.c.b16 %v4190, %v4189
        %v4310 = vpack.c.b16 %v4192, %v4191
        %v4311 = vpack.c.b16 %v4194, %v4193
        %v4312 = vpack.c.b16 %v4196, %v4195
        %v4313 = vpack.c.b16 %v4198, %v4197
        %v4314 = vpack.c.b16 %v4200, %v4199
        %v4315 = vpack.c.b16 %v4202, %v4201
        %v4316 = vpack.c.b16 %v4204, %v4203
        %v4317 = vpack.c.b16 %v4206, %v4205
        %v4318 = vpack.c.b16 %v4208, %v4207
        %v4319 = vpack.c.b16 %v4210, %v4209
        %v4320 = vpack.c.b16 %v4212, %v4211
        %v4321 = vpack.c.b16 %v4214, %v4213
        %v4322 = vpack.c.b16 %v4216, %v4215
        %v4323 = vpack.c.b16 %v4218, %v4217
        %v4324 = vpack.c.b16 %v4220, %v4219
        %v4325 = vpack.c.b16 %v4222, %v4221
        %v4326 = vpack.c.b16 %v4224, %v4223
        %v4327 = vpack.c.b16 %v4226, %v4225
        %v4328 = vpack.c.b16 %v4228, %v4227
        %v4329 = vpack.c.b16 %v4230, %v4229
        %v4330 = vpack.c.b16 %v4232, %v4231
        %v4331 = vpack.c.b16 %v4234, %v4233
        %v4332 = vpack.c.b16 %v4236, %v4235
        %v4333 = vpack.c.b16 %v4238, %v4237
        %v4334 = vpack.c.b16 %v4240, %v4239
        %v4335 = vpack.c.b16 %v4242, %v4241
        %v4336 = vpack.c.b16 %v4244, %v4243
        %v4337 = vpack.c.b16 %v4246, %v4245
        %v4338 = vpack.c.b16 %v4248, %v4247
        %v4339 = vpack.c.b16 %v4250, %v4249
        %v4340 = vpack.c.b16 %v4252, %v4251
        %v4341 = vpack.c.b16 %v4254, %v4253
        %v4342 = vpack.c.b16 %v4256, %v4255
        %v4343 = vpack.c.b16 %v4258, %v4257
        %v4344 = vpack.c.b16 %v4260, %v4259
        %v4345 = vpack.c.b16 %v4262, %v4261
        %v4346 = vpack.c.b16 %v4264, %v4263
        %v4347 = vpack.c.b16 %v4266, %v4265
        %v4348 = vpack.c.b16 %v4268, %v4267
        %v4349 = vpack.c.b16 %v4270, %v4269
        %v4350 = vpack.c.b16 %v4272, %v4271
        %v4351 = vpack.c.b16 %v4274, %v4273
        %v4352 = vpack.c.b16 %v4276, %v4275
        %v4353 = vpack.c.b16 %v4278, %v4277
        %v4354 = vpack.c.b16 %v4280, %v4279
        %v4355 = vpack.c.b16 %v4282, %v4281
        %v4356 = vpack.c.b16 %v4284, %v4283
        %4429 = vmatprep.subr.bf16.mxu0 0
        %4430 = vmatpush1.bf16.msra.mxu0 %v4285
        %4431 = vmatprep.subr.bf16.mxu0 0
        %4432 = vmatpush1.bf16.msra.mxu0 %v4286
        %4433 = vmatprep.subr.bf16.mxu0 0
        %4434 = vmatpush1.bf16.msra.mxu0 %v4287
        %4435 = vmatprep.subr.bf16.mxu0 0
        %4436 = vmatpush1.bf16.msra.mxu0 %v4288
        %4437 = vmatprep.subr.bf16.mxu0 0
        %4438 = vmatpush1.bf16.msra.mxu0 %v4289
        %4439 = vmatprep.subr.bf16.mxu0 0
        %4440 = vmatpush1.bf16.msra.mxu0 %v4290
        %4441 = vmatprep.subr.bf16.mxu0 0
        %4442 = vmatpush1.bf16.msra.mxu0 %v4291
        %4443 = vmatprep.subr.bf16.mxu0 0
        %4444 = vmatpush1.bf16.msra.mxu0 %v4292
        %4445 = vmatprep.subr.bf16.mxu0 0
        %4446 = vmatpush1.bf16.msra.mxu0 %v4293
        %4447 = vmatprep.subr.bf16.mxu0 0
        %4448 = vmatpush1.bf16.msra.mxu0 %v4294
        %4449 = vmatprep.subr.bf16.mxu0 0
        %4450 = vmatpush1.bf16.msra.mxu0 %v4295
        %4451 = vmatprep.subr.bf16.mxu0 0
        %4452 = vmatpush1.bf16.msra.mxu0 %v4296
        %4453 = vmatprep.subr.bf16.mxu0 0
        %4454 = vmatpush1.bf16.msra.mxu0 %v4297
        %4455 = vmatprep.subr.bf16.mxu0 0
        %4456 = vmatpush1.bf16.msra.mxu0 %v4298
        %4457 = vmatprep.subr.bf16.mxu0 0
        %4458 = vmatpush1.bf16.msra.mxu0 %v4299
        %4459 = vmatprep.subr.bf16.mxu0 0
        %4460 = vmatpush1.bf16.msra.mxu0 %v4300
        %4461 = vmatprep.mubr.bf16.mxu0 %v3703
        %4462 = vmatmul.mubr.bf16.gmra.mrb[0].mxu0 %v3702
        %v4463 = vpop.f32.mrb[0].mxu0
        %v4464 = vadd.f32 %v3995, %v4463
        %v4465 = vpop.f32.mrb[0].mxu0
        %v4466 = vpop.f32.mrb[0].mxu0
        %v4467 = vadd.f32 %v3995, %v4466
        %v4468 = vpop.f32.mrb[0].mxu0
        %4469 = vmatprep.mubr.bf16.mxu0 %v3712
        %4470 = vmatmul.mubr.bf16.gmra.mrb[0].mxu0 %v3711
        %v4471 = vpop.f32.mrb[0].mxu0
        %v4472 = vadd.f32 %v3995, %v4471
        %v4473 = vpop.f32.mrb[0].mxu0
        %v4474 = vpop.f32.mrb[0].mxu0
        %v4475 = vadd.f32 %v3995, %v4474
        %v4476 = vpop.f32.mrb[0].mxu0
        %4477 = vmatprep.mubr.bf16.mxu0 %v3721
        %4478 = vmatmul.mubr.bf16.gmra.mrb[0].mxu0 %v3720
        %v4479 = vpop.f32.mrb[0].mxu0
        %v4480 = vadd.f32 %v3995, %v4479
        %v4481 = vpop.f32.mrb[0].mxu0
        %v4482 = vpop.f32.mrb[0].mxu0
        %v4483 = vadd.f32 %v3995, %v4482
        %v4484 = vpop.f32.mrb[0].mxu0
        %4485 = vmatprep.mubr.bf16.mxu0 %v3730
        %4486 = vmatmul.mubr.bf16.gmra.mrb[0].mxu0 %v3729
        %v4487 = vpop.f32.mrb[0].mxu0
        %v4488 = vadd.f32 %v3995, %v4487
        %v4489 = vpop.f32.mrb[0].mxu0
        %v4490 = vpop.f32.mrb[0].mxu0
        %v4491 = vadd.f32 %v3995, %v4490
        %v4492 = vpop.f32.mrb[0].mxu0
        %4493 = vmatprep.mubr.bf16.mxu0 %v3739
        %4494 = vmatmul.mubr.bf16.gmra.mrb[0].mxu0 %v3738
        %v4495 = vpop.f32.mrb[0].mxu0
        %v4496 = vadd.f32 %v3995, %v4495
        %v4497 = vpop.f32.mrb[0].mxu0
        %v4498 = vpop.f32.mrb[0].mxu0
        %v4499 = vadd.f32 %v3995, %v4498
        %v4500 = vpop.f32.mrb[0].mxu0
        %4501 = vmatprep.mubr.bf16.mxu0 %v3748
        %4502 = vmatmul.mubr.bf16.gmra.mrb[0].mxu0 %v3747
        %v4503 = vpop.f32.mrb[0].mxu0
        %v4504 = vadd.f32 %v3995, %v4503
        %v4505 = vpop.f32.mrb[0].mxu0
        %v4506 = vpop.f32.mrb[0].mxu0
        %v4507 = vadd.f32 %v3995, %v4506
        %v4508 = vpop.f32.mrb[0].mxu0
        %4509 = vmatprep.mubr.bf16.mxu0 %v3757
        %4510 = vmatmul.mubr.bf16.gmra.mrb[0].mxu0 %v3756
        %v4511 = vpop.f32.mrb[0].mxu0
        %v4512 = vadd.f32 %v3995, %v4511
        %v4513 = vpop.f32.mrb[0].mxu0
        %v4514 = vpop.f32.mrb[0].mxu0
        %v4515 = vadd.f32 %v3995, %v4514
        %v4516 = vpop.f32.mrb[0].mxu0
        %4517 = vmatprep.mubr.bf16.mxu0 %v3766
        %4518 = vmatmul.mubr.bf16.gmra.mrb[0].mxu0 %v3765
        %v4519 = vpop.f32.mrb[0].mxu0
        %v4520 = vadd.f32 %v3995, %v4519
        %v4521 = vpop.f32.mrb[0].mxu0
        %v4522 = vpop.f32.mrb[0].mxu0
        %v4523 = vadd.f32 %v3995, %v4522
        %v4524 = vpop.f32.mrb[0].mxu0
        %4525 = vmatprep.mubr.bf16.mxu0 %v3775
        %4526 = vmatmul.mubr.bf16.gmra.mrb[0].mxu0 %v3774
        %v4527 = vpop.f32.mrb[0].mxu0
        %v4528 = vadd.f32 %v3995, %v4527
        %v4529 = vpop.f32.mrb[0].mxu0
        %v4530 = vpop.f32.mrb[0].mxu0
        %v4531 = vadd.f32 %v3995, %v4530
        %v4532 = vpop.f32.mrb[0].mxu0
        %4533 = vmatprep.mubr.bf16.mxu0 %v3784
        %4534 = vmatmul.mubr.bf16.gmra.mrb[0].mxu0 %v3783
        %v4535 = vpop.f32.mrb[0].mxu0
        %v4536 = vadd.f32 %v3995, %v4535
        %v4537 = vpop.f32.mrb[0].mxu0
        %v4538 = vpop.f32.mrb[0].mxu0
        %v4539 = vadd.f32 %v3995, %v4538
        %v4540 = vpop.f32.mrb[0].mxu0
        %4541 = vmatprep.mubr.bf16.mxu0 %v3793
        %4542 = vmatmul.mubr.bf16.gmra.mrb[0].mxu0 %v3792
        %v4543 = vpop.f32.mrb[0].mxu0
        %v4544 = vadd.f32 %v3995, %v4543
        %v4545 = vpop.f32.mrb[0].mxu0
        %v4546 = vpop.f32.mrb[0].mxu0
        %v4547 = vadd.f32 %v3995, %v4546
        %v4548 = vpop.f32.mrb[0].mxu0
        %4549 = vmatprep.mubr.bf16.mxu0 %v3802
        %4550 = vmatmul.mubr.bf16.gmra.mrb[0].mxu0 %v3801
        %v4551 = vpop.f32.mrb[0].mxu0
        %v4552 = vadd.f32 %v3995, %v4551
        %v4553 = vpop.f32.mrb[0].mxu0
        %v4554 = vpop.f32.mrb[0].mxu0
        %v4555 = vadd.f32 %v3995, %v4554
        %v4556 = vpop.f32.mrb[0].mxu0
        %4557 = vmatprep.mubr.bf16.mxu0 %v3811
        %4558 = vmatmul.mubr.bf16.gmra.mrb[0].mxu0 %v3810
        %v4559 = vpop.f32.mrb[0].mxu0
        %v4560 = vadd.f32 %v3995, %v4559
        %v4561 = vpop.f32.mrb[0].mxu0
        %v4562 = vpop.f32.mrb[0].mxu0
        %v4563 = vadd.f32 %v3995, %v4562
        %v4564 = vpop.f32.mrb[0].mxu0
        %4565 = vmatprep.mubr.bf16.mxu0 %v3820
        %4566 = vmatmul.mubr.bf16.gmra.mrb[0].mxu0 %v3819
        %v4567 = vpop.f32.mrb[0].mxu0
        %v4568 = vadd.f32 %v3995, %v4567
        %v4569 = vpop.f32.mrb[0].mxu0
        %v4570 = vpop.f32.mrb[0].mxu0
        %v4571 = vadd.f32 %v3995, %v4570
        %v4572 = vpop.f32.mrb[0].mxu0
        %4573 = vmatprep.mubr.bf16.mxu0 %v3829
        %4574 = vmatmul.mubr.bf16.gmra.mrb[0].mxu0 %v3828
        %v4575 = vpop.f32.mrb[0].mxu0
        %v4576 = vadd.f32 %v3995, %v4575
        %v4577 = vpop.f32.mrb[0].mxu0
        %v4578 = vpop.f32.mrb[0].mxu0
        %v4579 = vadd.f32 %v3995, %v4578
        %v4580 = vpop.f32.mrb[0].mxu0
        %4581 = vmatprep.mubr.bf16.mxu0 %v3838
        %4582 = vmatmul.mubr.bf16.gmra.mrb[0].mxu0 %v3837
        %v4583 = vpop.f32.mrb[0].mxu0
        %v4584 = vadd.f32 %v3995, %v4583
        %v4585 = vpop.f32.mrb[0].mxu0
        %v4586 = vpop.f32.mrb[0].mxu0
        %v4587 = vadd.f32 %v3995, %v4586
        %v4588 = vpop.f32.mrb[0].mxu0
        %4589 = vdwg.mxu0
        %4590 = vmatprep.subr.bf16.mxu0 0
        %4591 = vmatpush1.bf16.msra.mxu0 %v4301
        %4592 = vmatprep.subr.bf16.mxu0 0
        %4593 = vmatpush1.bf16.msra.mxu0 %v4302
        %4594 = vmatprep.subr.bf16.mxu0 0
        %4595 = vmatpush1.bf16.msra.mxu0 %v4303
        %4596 = vmatprep.subr.bf16.mxu0 0
        %4597 = vmatpush1.bf16.msra.mxu0 %v4304
        %4598 = vmatprep.subr.bf16.mxu0 0
        %4599 = vmatpush1.bf16.msra.mxu0 %v4305
        %4600 = vmatprep.subr.bf16.mxu0 0
        %4601 = vmatpush1.bf16.msra.mxu0 %v4306
        %4602 = vmatprep.subr.bf16.mxu0 0
        %4603 = vmatpush1.bf16.msra.mxu0 %v4307
        %4604 = vmatprep.subr.bf16.mxu0 0
        %4605 = vmatpush1.bf16.msra.mxu0 %v4308
        %4606 = vmatprep.subr.bf16.mxu0 0
        %4607 = vmatpush1.bf16.msra.mxu0 %v4309
        %4608 = vmatprep.subr.bf16.mxu0 0
        %4609 = vmatpush1.bf16.msra.mxu0 %v4310
        %4610 = vmatprep.subr.bf16.mxu0 0
        %4611 = vmatpush1.bf16.msra.mxu0 %v4311
        %4612 = vmatprep.subr.bf16.mxu0 0
        %4613 = vmatpush1.bf16.msra.mxu0 %v4312
        %4614 = vmatprep.subr.bf16.mxu0 0
        %4615 = vmatpush1.bf16.msra.mxu0 %v4313
        %4616 = vmatprep.subr.bf16.mxu0 0
        %4617 = vmatpush1.bf16.msra.mxu0 %v4314
        %4618 = vmatprep.subr.bf16.mxu0 0
        %4619 = vmatpush1.bf16.msra.mxu0 %v4315
        %4620 = vmatprep.subr.bf16.mxu0 0
        %4621 = vmatpush1.bf16.msra.mxu0 %v4316
        %4622 = vmatprep.mubr.bf16.mxu0 %v3705
        %4623 = vmatmul.mubr.bf16.gmra.mrb[0].mxu0 %v3704
        %v4624 = vpop.f32.mrb[0].mxu0
        %v4625 = vadd.f32 %v4464, %v4624
        %v4626 = vpop.f32.mrb[0].mxu0
        %v4627 = vpop.f32.mrb[0].mxu0
        %v4628 = vadd.f32 %v4467, %v4627
        %v4629 = vpop.f32.mrb[0].mxu0
        %4630 = vmatprep.mubr.bf16.mxu0 %v3714
        %4631 = vmatmul.mubr.bf16.gmra.mrb[0].mxu0 %v3713
        %v4632 = vpop.f32.mrb[0].mxu0
        %v4633 = vadd.f32 %v4472, %v4632
        %v4634 = vpop.f32.mrb[0].mxu0
        %v4635 = vpop.f32.mrb[0].mxu0
        %v4636 = vadd.f32 %v4475, %v4635
        %v4637 = vpop.f32.mrb[0].mxu0
        %4638 = vmatprep.mubr.bf16.mxu0 %v3723
        %4639 = vmatmul.mubr.bf16.gmra.mrb[0].mxu0 %v3722
        %v4640 = vpop.f32.mrb[0].mxu0
        %v4641 = vadd.f32 %v4480, %v4640
        %v4642 = vpop.f32.mrb[0].mxu0
        %v4643 = vpop.f32.mrb[0].mxu0
        %v4644 = vadd.f32 %v4483, %v4643
        %v4645 = vpop.f32.mrb[0].mxu0
        %4646 = vmatprep.mubr.bf16.mxu0 %v3732
        %4647 = vmatmul.mubr.bf16.gmra.mrb[0].mxu0 %v3731
        %v4648 = vpop.f32.mrb[0].mxu0
        %v4649 = vadd.f32 %v4488, %v4648
        %v4650 = vpop.f32.mrb[0].mxu0
        %v4651 = vpop.f32.mrb[0].mxu0
        %v4652 = vadd.f32 %v4491, %v4651
        %v4653 = vpop.f32.mrb[0].mxu0
        %4654 = vmatprep.mubr.bf16.mxu0 %v3741
        %4655 = vmatmul.mubr.bf16.gmra.mrb[0].mxu0 %v3740
        %v4656 = vpop.f32.mrb[0].mxu0
        %v4657 = vadd.f32 %v4496, %v4656
        %v4658 = vpop.f32.mrb[0].mxu0
        %v4659 = vpop.f32.mrb[0].mxu0
        %v4660 = vadd.f32 %v4499, %v4659
        %v4661 = vpop.f32.mrb[0].mxu0
        %4662 = vmatprep.mubr.bf16.mxu0 %v3750
        %4663 = vmatmul.mubr.bf16.gmra.mrb[0].mxu0 %v3749
        %v4664 = vpop.f32.mrb[0].mxu0
        %v4665 = vadd.f32 %v4504, %v4664
        %v4666 = vpop.f32.mrb[0].mxu0
        %v4667 = vpop.f32.mrb[0].mxu0
        %v4668 = vadd.f32 %v4507, %v4667
        %v4669 = vpop.f32.mrb[0].mxu0
        %4670 = vmatprep.mubr.bf16.mxu0 %v3759
        %4671 = vmatmul.mubr.bf16.gmra.mrb[0].mxu0 %v3758
        %v4672 = vpop.f32.mrb[0].mxu0
        %v4673 = vadd.f32 %v4512, %v4672
        %v4674 = vpop.f32.mrb[0].mxu0
        %v4675 = vpop.f32.mrb[0].mxu0
        %v4676 = vadd.f32 %v4515, %v4675
        %v4677 = vpop.f32.mrb[0].mxu0
        %4678 = vmatprep.mubr.bf16.mxu0 %v3768
        %4679 = vmatmul.mubr.bf16.gmra.mrb[0].mxu0 %v3767
        %v4680 = vpop.f32.mrb[0].mxu0
        %v4681 = vadd.f32 %v4520, %v4680
        %v4682 = vpop.f32.mrb[0].mxu0
        %v4683 = vpop.f32.mrb[0].mxu0
        %v4684 = vadd.f32 %v4523, %v4683
        %v4685 = vpop.f32.mrb[0].mxu0
        %4686 = vmatprep.mubr.bf16.mxu0 %v3777
        %4687 = vmatmul.mubr.bf16.gmra.mrb[0].mxu0 %v3776
        %v4688 = vpop.f32.mrb[0].mxu0
        %v4689 = vadd.f32 %v4528, %v4688
        %v4690 = vpop.f32.mrb[0].mxu0
        %v4691 = vpop.f32.mrb[0].mxu0
        %v4692 = vadd.f32 %v4531, %v4691
        %v4693 = vpop.f32.mrb[0].mxu0
        %4694 = vmatprep.mubr.bf16.mxu0 %v3786
        %4695 = vmatmul.mubr.bf16.gmra.mrb[0].mxu0 %v3785
        %v4696 = vpop.f32.mrb[0].mxu0
        %v4697 = vadd.f32 %v4536, %v4696
        %v4698 = vpop.f32.mrb[0].mxu0
        %v4699 = vpop.f32.mrb[0].mxu0
        %v4700 = vadd.f32 %v4539, %v4699
        %v4701 = vpop.f32.mrb[0].mxu0
        %4702 = vmatprep.mubr.bf16.mxu0 %v3795
        %4703 = vmatmul.mubr.bf16.gmra.mrb[0].mxu0 %v3794
        %v4704 = vpop.f32.mrb[0].mxu0
        %v4705 = vadd.f32 %v4544, %v4704
        %v4706 = vpop.f32.mrb[0].mxu0
        %v4707 = vpop.f32.mrb[0].mxu0
        %v4708 = vadd.f32 %v4547, %v4707
        %v4709 = vpop.f32.mrb[0].mxu0
        %4710 = vmatprep.mubr.bf16.mxu0 %v3804
        %4711 = vmatmul.mubr.bf16.gmra.mrb[0].mxu0 %v3803
        %v4712 = vpop.f32.mrb[0].mxu0
        %v4713 = vadd.f32 %v4552, %v4712
        %v4714 = vpop.f32.mrb[0].mxu0
        %v4715 = vpop.f32.mrb[0].mxu0
        %v4716 = vadd.f32 %v4555, %v4715
        %v4717 = vpop.f32.mrb[0].mxu0
        %4718 = vmatprep.mubr.bf16.mxu0 %v3813
        %4719 = vmatmul.mubr.bf16.gmra.mrb[0].mxu0 %v3812
        %v4720 = vpop.f32.mrb[0].mxu0
        %v4721 = vadd.f32 %v4560, %v4720
        %v4722 = vpop.f32.mrb[0].mxu0
        %v4723 = vpop.f32.mrb[0].mxu0
        %v4724 = vadd.f32 %v4563, %v4723
        %v4725 = vpop.f32.mrb[0].mxu0
        %4726 = vmatprep.mubr.bf16.mxu0 %v3822
        %4727 = vmatmul.mubr.bf16.gmra.mrb[0].mxu0 %v3821
        %v4728 = vpop.f32.mrb[0].mxu0
        %v4729 = vadd.f32 %v4568, %v4728
        %v4730 = vpop.f32.mrb[0].mxu0
        %v4731 = vpop.f32.mrb[0].mxu0
        %v4732 = vadd.f32 %v4571, %v4731
        %v4733 = vpop.f32.mrb[0].mxu0
        %4734 = vmatprep.mubr.bf16.mxu0 %v3831
        %4735 = vmatmul.mubr.bf16.gmra.mrb[0].mxu0 %v3830
        %v4736 = vpop.f32.mrb[0].mxu0
        %v4737 = vadd.f32 %v4576, %v4736
        %v4738 = vpop.f32.mrb[0].mxu0
        %v4739 = vpop.f32.mrb[0].mxu0
        %v4740 = vadd.f32 %v4579, %v4739
        %v4741 = vpop.f32.mrb[0].mxu0
        %4742 = vmatprep.mubr.bf16.mxu0 %v3840
        %4743 = vmatmul.mubr.bf16.gmra.mrb[0].mxu0 %v3839
        %v4744 = vpop.f32.mrb[0].mxu0
        %v4745 = vadd.f32 %v4584, %v4744
        %v4746 = vpop.f32.mrb[0].mxu0
        %v4747 = vpop.f32.mrb[0].mxu0
        %v4748 = vadd.f32 %v4587, %v4747
        %v4749 = vpop.f32.mrb[0].mxu0
        %4750 = vdwg.mxu0
        %4751 = vmatprep.subr.bf16.mxu0 0
        %4752 = vmatpush1.bf16.msra.mxu0 %v4317
        %4753 = vmatprep.subr.bf16.mxu0 0
        %4754 = vmatpush1.bf16.msra.mxu0 %v4318
        %4755 = vmatprep.subr.bf16.mxu0 0
        %4756 = vmatpush1.bf16.msra.mxu0 %v4319
        %4757 = vmatprep.subr.bf16.mxu0 0
        %4758 = vmatpush1.bf16.msra.mxu0 %v4320
        %4759 = vmatprep.subr.bf16.mxu0 0
        %4760 = vmatpush1.bf16.msra.mxu0 %v4321
        %4761 = vmatprep.subr.bf16.mxu0 0
        %4762 = vmatpush1.bf16.msra.mxu0 %v4322
        %4763 = vmatprep.subr.bf16.mxu0 0
        %4764 = vmatpush1.bf16.msra.mxu0 %v4323
        %4765 = vmatprep.subr.bf16.mxu0 0
        %4766 = vmatpush1.bf16.msra.mxu0 %v4324
        %4767 = vmatprep.subr.bf16.mxu0 0
        %4768 = vmatpush1.bf16.msra.mxu0 %v4325
        %4769 = vmatprep.subr.bf16.mxu0 0
        %4770 = vmatpush1.bf16.msra.mxu0 %v4326
        %4771 = vmatprep.subr.bf16.mxu0 0
        %4772 = vmatpush1.bf16.msra.mxu0 %v4327
        %4773 = vmatprep.subr.bf16.mxu0 0
        %4774 = vmatpush1.bf16.msra.mxu0 %v4328
        %4775 = vmatprep.subr.bf16.mxu0 0
        %4776 = vmatpush1.bf16.msra.mxu0 %v4329
        %4777 = vmatprep.subr.bf16.mxu0 0
        %4778 = vmatpush1.bf16.msra.mxu0 %v4330
        %4779 = vmatprep.subr.bf16.mxu0 0
        %4780 = vmatpush1.bf16.msra.mxu0 %v4331
        %4781 = vmatprep.subr.bf16.mxu0 0
        %4782 = vmatpush1.bf16.msra.mxu0 %v4332
        %4783 = vmatprep.mubr.bf16.mxu0 %v3707
        %4784 = vmatmul.mubr.bf16.gmra.mrb[0].mxu0 %v3706
        %v4785 = vpop.f32.mrb[0].mxu0
        %v4786 = vadd.f32 %v4625, %v4785
        %v4787 = vpop.f32.mrb[0].mxu0
        %v4788 = vpop.f32.mrb[0].mxu0
        %v4789 = vadd.f32 %v4628, %v4788
        %v4790 = vpop.f32.mrb[0].mxu0
        %4791 = vmatprep.mubr.bf16.mxu0 %v3716
        %4792 = vmatmul.mubr.bf16.gmra.mrb[0].mxu0 %v3715
        %v4793 = vpop.f32.mrb[0].mxu0
        %v4794 = vadd.f32 %v4633, %v4793
        %v4795 = vpop.f32.mrb[0].mxu0
        %v4796 = vpop.f32.mrb[0].mxu0
        %v4797 = vadd.f32 %v4636, %v4796
        %v4798 = vpop.f32.mrb[0].mxu0
        %4799 = vmatprep.mubr.bf16.mxu0 %v3725
        %4800 = vmatmul.mubr.bf16.gmra.mrb[0].mxu0 %v3724
        %v4801 = vpop.f32.mrb[0].mxu0
        %v4802 = vadd.f32 %v4641, %v4801
        %v4803 = vpop.f32.mrb[0].mxu0
        %v4804 = vpop.f32.mrb[0].mxu0
        %v4805 = vadd.f32 %v4644, %v4804
        %v4806 = vpop.f32.mrb[0].mxu0
        %4807 = vmatprep.mubr.bf16.mxu0 %v3734
        %4808 = vmatmul.mubr.bf16.gmra.mrb[0].mxu0 %v3733
        %v4809 = vpop.f32.mrb[0].mxu0
        %v4810 = vadd.f32 %v4649, %v4809
        %v4811 = vpop.f32.mrb[0].mxu0
        %v4812 = vpop.f32.mrb[0].mxu0
        %v4813 = vadd.f32 %v4652, %v4812
        %v4814 = vpop.f32.mrb[0].mxu0
        %4815 = vmatprep.mubr.bf16.mxu0 %v3743
        %4816 = vmatmul.mubr.bf16.gmra.mrb[0].mxu0 %v3742
        %v4817 = vpop.f32.mrb[0].mxu0
        %v4818 = vadd.f32 %v4657, %v4817
        %v4819 = vpop.f32.mrb[0].mxu0
        %v4820 = vpop.f32.mrb[0].mxu0
        %v4821 = vadd.f32 %v4660, %v4820
        %v4822 = vpop.f32.mrb[0].mxu0
        %4823 = vmatprep.mubr.bf16.mxu0 %v3752
        %4824 = vmatmul.mubr.bf16.gmra.mrb[0].mxu0 %v3751
        %v4825 = vpop.f32.mrb[0].mxu0
        %v4826 = vadd.f32 %v4665, %v4825
        %v4827 = vpop.f32.mrb[0].mxu0
        %v4828 = vpop.f32.mrb[0].mxu0
        %v4829 = vadd.f32 %v4668, %v4828
        %v4830 = vpop.f32.mrb[0].mxu0
        %4831 = vmatprep.mubr.bf16.mxu0 %v3761
        %4832 = vmatmul.mubr.bf16.gmra.mrb[0].mxu0 %v3760
        %v4833 = vpop.f32.mrb[0].mxu0
        %v4834 = vadd.f32 %v4673, %v4833
        %v4835 = vpop.f32.mrb[0].mxu0
        %v4836 = vpop.f32.mrb[0].mxu0
        %v4837 = vadd.f32 %v4676, %v4836
        %v4838 = vpop.f32.mrb[0].mxu0
        %4839 = vmatprep.mubr.bf16.mxu0 %v3770
        %4840 = vmatmul.mubr.bf16.gmra.mrb[0].mxu0 %v3769
        %v4841 = vpop.f32.mrb[0].mxu0
        %v4842 = vadd.f32 %v4681, %v4841
        %v4843 = vpop.f32.mrb[0].mxu0
        %v4844 = vpop.f32.mrb[0].mxu0
        %v4845 = vadd.f32 %v4684, %v4844
        %v4846 = vpop.f32.mrb[0].mxu0
        %4847 = vmatprep.mubr.bf16.mxu0 %v3779
        %4848 = vmatmul.mubr.bf16.gmra.mrb[0].mxu0 %v3778
        %v4849 = vpop.f32.mrb[0].mxu0
        %v4850 = vadd.f32 %v4689, %v4849
        %v4851 = vpop.f32.mrb[0].mxu0
        %v4852 = vpop.f32.mrb[0].mxu0
        %v4853 = vadd.f32 %v4692, %v4852
        %v4854 = vpop.f32.mrb[0].mxu0
        %4855 = vmatprep.mubr.bf16.mxu0 %v3788
        %4856 = vmatmul.mubr.bf16.gmra.mrb[0].mxu0 %v3787
        %v4857 = vpop.f32.mrb[0].mxu0
        %v4858 = vadd.f32 %v4697, %v4857
        %v4859 = vpop.f32.mrb[0].mxu0
        %v4860 = vpop.f32.mrb[0].mxu0
        %v4861 = vadd.f32 %v4700, %v4860
        %v4862 = vpop.f32.mrb[0].mxu0
        %4863 = vmatprep.mubr.bf16.mxu0 %v3797
        %4864 = vmatmul.mubr.bf16.gmra.mrb[0].mxu0 %v3796
        %v4865 = vpop.f32.mrb[0].mxu0
        %v4866 = vadd.f32 %v4705, %v4865
        %v4867 = vpop.f32.mrb[0].mxu0
        %v4868 = vpop.f32.mrb[0].mxu0
        %v4869 = vadd.f32 %v4708, %v4868
        %v4870 = vpop.f32.mrb[0].mxu0
        %4871 = vmatprep.mubr.bf16.mxu0 %v3806
        %4872 = vmatmul.mubr.bf16.gmra.mrb[0].mxu0 %v3805
        %v4873 = vpop.f32.mrb[0].mxu0
        %v4874 = vadd.f32 %v4713, %v4873
        %v4875 = vpop.f32.mrb[0].mxu0
        %v4876 = vpop.f32.mrb[0].mxu0
        %v4877 = vadd.f32 %v4716, %v4876
        %v4878 = vpop.f32.mrb[0].mxu0
        %4879 = vmatprep.mubr.bf16.mxu0 %v3815
        %4880 = vmatmul.mubr.bf16.gmra.mrb[0].mxu0 %v3814
        %v4881 = vpop.f32.mrb[0].mxu0
        %v4882 = vadd.f32 %v4721, %v4881
        %v4883 = vpop.f32.mrb[0].mxu0
        %v4884 = vpop.f32.mrb[0].mxu0
        %v4885 = vadd.f32 %v4724, %v4884
        %v4886 = vpop.f32.mrb[0].mxu0
        %4887 = vmatprep.mubr.bf16.mxu0 %v3824
        %4888 = vmatmul.mubr.bf16.gmra.mrb[0].mxu0 %v3823
        %v4889 = vpop.f32.mrb[0].mxu0
        %v4890 = vadd.f32 %v4729, %v4889
        %v4891 = vpop.f32.mrb[0].mxu0
        %v4892 = vpop.f32.mrb[0].mxu0
        %v4893 = vadd.f32 %v4732, %v4892
        %v4894 = vpop.f32.mrb[0].mxu0
        %4895 = vmatprep.mubr.bf16.mxu0 %v3833
        %4896 = vmatmul.mubr.bf16.gmra.mrb[0].mxu0 %v3832
        %v4897 = vpop.f32.mrb[0].mxu0
        %v4898 = vadd.f32 %v4737, %v4897
        %v4899 = vpop.f32.mrb[0].mxu0
        %v4900 = vpop.f32.mrb[0].mxu0
        %v4901 = vadd.f32 %v4740, %v4900
        %v4902 = vpop.f32.mrb[0].mxu0
        %4903 = vmatprep.mubr.bf16.mxu0 %v3842
        %4904 = vmatmul.mubr.bf16.gmra.mrb[0].mxu0 %v3841
        %v4905 = vpop.f32.mrb[0].mxu0
        %v4906 = vadd.f32 %v4745, %v4905
        %v4907 = vpop.f32.mrb[0].mxu0
        %v4908 = vpop.f32.mrb[0].mxu0
        %v4909 = vadd.f32 %v4748, %v4908
        %v4910 = vpop.f32.mrb[0].mxu0
        %4911 = vdwg.mxu0
        %4912 = vmatprep.subr.bf16.mxu0 0
        %4913 = vmatpush1.bf16.msra.mxu0 %v4333
        %4914 = vmatprep.subr.bf16.mxu0 0
        %4915 = vmatpush1.bf16.msra.mxu0 %v4334
        %4916 = vmatprep.subr.bf16.mxu0 0
        %4917 = vmatpush1.bf16.msra.mxu0 %v4335
        %4918 = vmatprep.subr.bf16.mxu0 0
        %4919 = vmatpush1.bf16.msra.mxu0 %v4336
        %4920 = vmatprep.subr.bf16.mxu0 0
        %4921 = vmatpush1.bf16.msra.mxu0 %v4337
        %4922 = vmatprep.subr.bf16.mxu0 0
        %4923 = vmatpush1.bf16.msra.mxu0 %v4338
        %4924 = vmatprep.subr.bf16.mxu0 0
        %4925 = vmatpush1.bf16.msra.mxu0 %v4339
        %4926 = vmatprep.subr.bf16.mxu0 0
        %4927 = vmatpush1.bf16.msra.mxu0 %v4340
        %4928 = vmatprep.subr.bf16.mxu0 0
        %4929 = vmatpush1.bf16.msra.mxu0 %v4341
        %4930 = vmatprep.subr.bf16.mxu0 0
        %4931 = vmatpush1.bf16.msra.mxu0 %v4342
        %4932 = vmatprep.subr.bf16.mxu0 0
        %4933 = vmatpush1.bf16.msra.mxu0 %v4343
        %4934 = vmatprep.subr.bf16.mxu0 0
        %4935 = vmatpush1.bf16.msra.mxu0 %v4344
        %4936 = vmatprep.subr.bf16.mxu0 0
        %4937 = vmatpush1.bf16.msra.mxu0 %v4345
        %4938 = vmatprep.subr.bf16.mxu0 0
        %4939 = vmatpush1.bf16.msra.mxu0 %v4346
        %4940 = vmatprep.subr.bf16.mxu0 0
        %4941 = vmatpush1.bf16.msra.mxu0 %v4347
        %4942 = vmatprep.subr.bf16.mxu0 0
        %4943 = vmatpush1.bf16.msra.mxu0 %v4348
        %4944 = vmatprep.mubr.bf16.mxu0 %v3709
        %4945 = vmatmul.mubr.bf16.gmra.mrb[0].mxu0 %v3708
        %v4946 = vpop.f32.mrb[0].mxu0
        %v4947 = vadd.f32 %v4786, %v4946
        %v4948 = vpop.f32.mrb[0].mxu0
        %v4949 = vpop.f32.mrb[0].mxu0
        %v4950 = vadd.f32 %v4789, %v4949
        %v4951 = vpop.f32.mrb[0].mxu0
        %4952 = vmatprep.mubr.bf16.mxu0 %v3718
        %4953 = vmatmul.mubr.bf16.gmra.mrb[0].mxu0 %v3717
        %v4954 = vpop.f32.mrb[0].mxu0
        %v4955 = vadd.f32 %v4794, %v4954
        %v4956 = vpop.f32.mrb[0].mxu0
        %v4957 = vpop.f32.mrb[0].mxu0
        %v4958 = vadd.f32 %v4797, %v4957
        %v4959 = vpop.f32.mrb[0].mxu0
        %4960 = vmatprep.mubr.bf16.mxu0 %v3727
        %4961 = vmatmul.mubr.bf16.gmra.mrb[0].mxu0 %v3726
        %v4962 = vpop.f32.mrb[0].mxu0
        %v4963 = vadd.f32 %v4802, %v4962
        %v4964 = vpop.f32.mrb[0].mxu0
        %v4965 = vpop.f32.mrb[0].mxu0
        %v4966 = vadd.f32 %v4805, %v4965
        %v4967 = vpop.f32.mrb[0].mxu0
        %4968 = vmatprep.mubr.bf16.mxu0 %v3736
        %4969 = vmatmul.mubr.bf16.gmra.mrb[0].mxu0 %v3735
        %v4970 = vpop.f32.mrb[0].mxu0
        %v4971 = vadd.f32 %v4810, %v4970
        %v4972 = vpop.f32.mrb[0].mxu0
        %v4973 = vpop.f32.mrb[0].mxu0
        %v4974 = vadd.f32 %v4813, %v4973
        %v4975 = vpop.f32.mrb[0].mxu0
        %4976 = vmatprep.mubr.bf16.mxu0 %v3745
        %4977 = vmatmul.mubr.bf16.gmra.mrb[0].mxu0 %v3744
        %v4978 = vpop.f32.mrb[0].mxu0
        %v4979 = vadd.f32 %v4818, %v4978
        %v4980 = vpop.f32.mrb[0].mxu0
        %v4981 = vpop.f32.mrb[0].mxu0
        %v4982 = vadd.f32 %v4821, %v4981
        %v4983 = vpop.f32.mrb[0].mxu0
        %4984 = vmatprep.mubr.bf16.mxu0 %v3754
        %4985 = vmatmul.mubr.bf16.gmra.mrb[0].mxu0 %v3753
        %v4986 = vpop.f32.mrb[0].mxu0
        %v4987 = vadd.f32 %v4826, %v4986
        %v4988 = vpop.f32.mrb[0].mxu0
        %v4989 = vpop.f32.mrb[0].mxu0
        %v4990 = vadd.f32 %v4829, %v4989
        %v4991 = vpop.f32.mrb[0].mxu0
        %4992 = vmatprep.mubr.bf16.mxu0 %v3763
        %4993 = vmatmul.mubr.bf16.gmra.mrb[0].mxu0 %v3762
        %v4994 = vpop.f32.mrb[0].mxu0
        %v4995 = vadd.f32 %v4834, %v4994
        %v4996 = vpop.f32.mrb[0].mxu0
        %v4997 = vpop.f32.mrb[0].mxu0
        %v4998 = vadd.f32 %v4837, %v4997
        %v4999 = vpop.f32.mrb[0].mxu0
        %5000 = vmatprep.mubr.bf16.mxu0 %v3772
        %5001 = vmatmul.mubr.bf16.gmra.mrb[0].mxu0 %v3771
        %v5002 = vpop.f32.mrb[0].mxu0
        %v5003 = vadd.f32 %v4842, %v5002
        %v5004 = vpop.f32.mrb[0].mxu0
        %v5005 = vpop.f32.mrb[0].mxu0
        %v5006 = vadd.f32 %v4845, %v5005
        %v5007 = vpop.f32.mrb[0].mxu0
        %5008 = vmatprep.mubr.bf16.mxu0 %v3781
        %5009 = vmatmul.mubr.bf16.gmra.mrb[0].mxu0 %v3780
        %v5010 = vpop.f32.mrb[0].mxu0
        %v5011 = vadd.f32 %v4850, %v5010
        %v5012 = vpop.f32.mrb[0].mxu0
        %v5013 = vpop.f32.mrb[0].mxu0
        %v5014 = vadd.f32 %v4853, %v5013
        %v5015 = vpop.f32.mrb[0].mxu0
        %5016 = vmatprep.mubr.bf16.mxu0 %v3790
        %5017 = vmatmul.mubr.bf16.gmra.mrb[0].mxu0 %v3789
        %v5018 = vpop.f32.mrb[0].mxu0
        %v5019 = vadd.f32 %v4858, %v5018
        %v5020 = vpop.f32.mrb[0].mxu0
        %v5021 = vpop.f32.mrb[0].mxu0
        %v5022 = vadd.f32 %v4861, %v5021
        %v5023 = vpop.f32.mrb[0].mxu0
        %5024 = vmatprep.mubr.bf16.mxu0 %v3799
        %5025 = vmatmul.mubr.bf16.gmra.mrb[0].mxu0 %v3798
        %v5026 = vpop.f32.mrb[0].mxu0
        %v5027 = vadd.f32 %v4866, %v5026
        %v5028 = vpop.f32.mrb[0].mxu0
        %v5029 = vpop.f32.mrb[0].mxu0
        %v5030 = vadd.f32 %v4869, %v5029
        %v5031 = vpop.f32.mrb[0].mxu0
        %5032 = vmatprep.mubr.bf16.mxu0 %v3808
        %5033 = vmatmul.mubr.bf16.gmra.mrb[0].mxu0 %v3807
        %v5034 = vpop.f32.mrb[0].mxu0
        %v5035 = vadd.f32 %v4874, %v5034
        %v5036 = vpop.f32.mrb[0].mxu0
        %v5037 = vpop.f32.mrb[0].mxu0
        %v5038 = vadd.f32 %v4877, %v5037
        %v5039 = vpop.f32.mrb[0].mxu0
        %5040 = vmatprep.mubr.bf16.mxu0 %v3817
        %5041 = vmatmul.mubr.bf16.gmra.mrb[0].mxu0 %v3816
        %v5042 = vpop.f32.mrb[0].mxu0
        %v5043 = vadd.f32 %v4882, %v5042
        %v5044 = vpop.f32.mrb[0].mxu0
        %v5045 = vpop.f32.mrb[0].mxu0
        %v5046 = vadd.f32 %v4885, %v5045
        %v5047 = vpop.f32.mrb[0].mxu0
        %5048 = vmatprep.mubr.bf16.mxu0 %v3826
        %5049 = vmatmul.mubr.bf16.gmra.mrb[0].mxu0 %v3825
        %v5050 = vpop.f32.mrb[0].mxu0
        %v5051 = vadd.f32 %v4890, %v5050
        %v5052 = vpop.f32.mrb[0].mxu0
        %v5053 = vpop.f32.mrb[0].mxu0
        %v5054 = vadd.f32 %v4893, %v5053
        %v5055 = vpop.f32.mrb[0].mxu0
        %5056 = vmatprep.mubr.bf16.mxu0 %v3835
        %5057 = vmatmul.mubr.bf16.gmra.mrb[0].mxu0 %v3834
        %v5058 = vpop.f32.mrb[0].mxu0
        %v5059 = vadd.f32 %v4898, %v5058
        %v5060 = vpop.f32.mrb[0].mxu0
        %v5061 = vpop.f32.mrb[0].mxu0
        %v5062 = vadd.f32 %v4901, %v5061
        %v5063 = vpop.f32.mrb[0].mxu0
        %5064 = vmatprep.mubr.bf16.mxu0 %v3844
        %5065 = vmatmul.mubr.bf16.gmra.mrb[0].mxu0 %v3843
        %v5066 = vpop.f32.mrb[0].mxu0
        %v5067 = vadd.f32 %v4906, %v5066
        %v5068 = vpop.f32.mrb[0].mxu0
        %v5069 = vpop.f32.mrb[0].mxu0
        %v5070 = vadd.f32 %v4909, %v5069
        %v5071 = vpop.f32.mrb[0].mxu0
        %5072 = vdwg.mxu0
        %5073 = vmatprep.subr.bf16.mxu0 0
        %5074 = vmatpush1.bf16.msra.mxu0 %v4349
        %5075 = vmatprep.subr.bf16.mxu0 0
        %5076 = vmatpush1.bf16.msra.mxu0 %v4350
        %5077 = vmatprep.subr.bf16.mxu0 0
        %5078 = vmatpush1.bf16.msra.mxu0 %v4351
        %5079 = vmatprep.subr.bf16.mxu0 0
        %5080 = vmatpush1.bf16.msra.mxu0 %v4352
        %5081 = vmatprep.subr.bf16.mxu0 0
        %5082 = vmatpush1.bf16.msra.mxu0 %v4353
        %5083 = vmatprep.subr.bf16.mxu0 0
        %5084 = vmatpush1.bf16.msra.mxu0 %v4354
        %5085 = vmatprep.subr.bf16.mxu0 0
        %5086 = vmatpush1.bf16.msra.mxu0 %v4355
        %5087 = vmatprep.subr.bf16.mxu0 0
        %5088 = vmatpush1.bf16.msra.mxu0 %v4356
        %5089 = vmatprep.subr.bf16.mxu0 0
        %5090 = vmatpush1.bf16.msra.mxu0 0
        %5091 = vmatprep.subr.bf16.mxu0 0
        %5092 = vmatpush1.bf16.msra.mxu0 0
        %5093 = vmatprep.subr.bf16.mxu0 0
        %5094 = vmatpush1.bf16.msra.mxu0 0
        %5095 = vmatprep.subr.bf16.mxu0 0
        %5096 = vmatpush1.bf16.msra.mxu0 0
        %5097 = vmatprep.subr.bf16.mxu0 0
        %5098 = vmatpush1.bf16.msra.mxu0 0
        %5099 = vmatprep.subr.bf16.mxu0 0
        %5100 = vmatpush1.bf16.msra.mxu0 0
        %5101 = vmatprep.subr.bf16.mxu0 0
        %5102 = vmatpush1.bf16.msra.mxu0 0
        %5103 = vmatprep.subr.bf16.mxu0 0
        %5104 = vmatpush1.bf16.msra.mxu0 0
        %5105 = vmatprep.mubr.bf16.mxu0 0
        %5106 = vmatmul.mubr.bf16.gmra.mrb[0].mxu0 %v3710
        %v5107 = vpop.f32.mrb[0].mxu0
        %v5108 = vadd.f32 %v4947, %v5107
        %v5109 = vpop.f32.mrb[0].mxu0
        %v5110 = vpop.f32.mrb[0].mxu0
        %v5111 = vadd.f32 %v4950, %v5110
        %v5112 = vpop.f32.mrb[0].mxu0
        %5113 = vmatprep.mubr.bf16.mxu0 0
        %5114 = vmatmul.mubr.bf16.gmra.mrb[0].mxu0 %v3719
        %v5115 = vpop.f32.mrb[0].mxu0
        %v5116 = vadd.f32 %v4955, %v5115
        %v5117 = vpop.f32.mrb[0].mxu0
        %v5118 = vpop.f32.mrb[0].mxu0
        %v5119 = vadd.f32 %v4958, %v5118
        %v5120 = vpop.f32.mrb[0].mxu0
        %5121 = vmatprep.mubr.bf16.mxu0 0
        %5122 = vmatmul.mubr.bf16.gmra.mrb[0].mxu0 %v3728
        %v5123 = vpop.f32.mrb[0].mxu0
        %v5124 = vadd.f32 %v4963, %v5123
        %v5125 = vpop.f32.mrb[0].mxu0
        %v5126 = vpop.f32.mrb[0].mxu0
        %v5127 = vadd.f32 %v4966, %v5126
        %v5128 = vpop.f32.mrb[0].mxu0
        %5129 = vmatprep.mubr.bf16.mxu0 0
        %5130 = vmatmul.mubr.bf16.gmra.mrb[0].mxu0 %v3737
        %v5131 = vpop.f32.mrb[0].mxu0
        %v5132 = vadd.f32 %v4971, %v5131
        %v5133 = vpop.f32.mrb[0].mxu0
        %v5134 = vpop.f32.mrb[0].mxu0
        %v5135 = vadd.f32 %v4974, %v5134
        %v5136 = vpop.f32.mrb[0].mxu0
        %5137 = vmatprep.mubr.bf16.mxu0 0
        %5138 = vmatmul.mubr.bf16.gmra.mrb[0].mxu0 %v3746
        %v5139 = vpop.f32.mrb[0].mxu0
        %v5140 = vadd.f32 %v4979, %v5139
        %v5141 = vpop.f32.mrb[0].mxu0
        %v5142 = vpop.f32.mrb[0].mxu0
        %v5143 = vadd.f32 %v4982, %v5142
        %v5144 = vpop.f32.mrb[0].mxu0
        %5145 = vmatprep.mubr.bf16.mxu0 0
        %5146 = vmatmul.mubr.bf16.gmra.mrb[0].mxu0 %v3755
        %v5147 = vpop.f32.mrb[0].mxu0
        %v5148 = vadd.f32 %v4987, %v5147
        %v5149 = vpop.f32.mrb[0].mxu0
        %v5150 = vpop.f32.mrb[0].mxu0
        %v5151 = vadd.f32 %v4990, %v5150
        %v5152 = vpop.f32.mrb[0].mxu0
        %5153 = vmatprep.mubr.bf16.mxu0 0
        %5154 = vmatmul.mubr.bf16.gmra.mrb[0].mxu0 %v3764
        %v5155 = vpop.f32.mrb[0].mxu0
        %v5156 = vadd.f32 %v4995, %v5155
        %v5157 = vpop.f32.mrb[0].mxu0
        %v5158 = vpop.f32.mrb[0].mxu0
        %v5159 = vadd.f32 %v4998, %v5158
        %v5160 = vpop.f32.mrb[0].mxu0
        %5161 = vmatprep.mubr.bf16.mxu0 0
        %5162 = vmatmul.mubr.bf16.gmra.mrb[0].mxu0 %v3773
        %v5163 = vpop.f32.mrb[0].mxu0
        %v5164 = vadd.f32 %v5003, %v5163
        %v5165 = vpop.f32.mrb[0].mxu0
        %v5166 = vpop.f32.mrb[0].mxu0
        %v5167 = vadd.f32 %v5006, %v5166
        %v5168 = vpop.f32.mrb[0].mxu0
        %5169 = vmatprep.mubr.bf16.mxu0 0
        %5170 = vmatmul.mubr.bf16.gmra.mrb[0].mxu0 %v3782
        %v5171 = vpop.f32.mrb[0].mxu0
        %v5172 = vadd.f32 %v5011, %v5171
        %v5173 = vpop.f32.mrb[0].mxu0
        %v5174 = vpop.f32.mrb[0].mxu0
        %v5175 = vadd.f32 %v5014, %v5174
        %v5176 = vpop.f32.mrb[0].mxu0
        %5177 = vmatprep.mubr.bf16.mxu0 0
        %5178 = vmatmul.mubr.bf16.gmra.mrb[0].mxu0 %v3791
        %v5179 = vpop.f32.mrb[0].mxu0
        %v5180 = vadd.f32 %v5019, %v5179
        %v5181 = vpop.f32.mrb[0].mxu0
        %v5182 = vpop.f32.mrb[0].mxu0
        %v5183 = vadd.f32 %v5022, %v5182
        %v5184 = vpop.f32.mrb[0].mxu0
        %5185 = vmatprep.mubr.bf16.mxu0 0
        %5186 = vmatmul.mubr.bf16.gmra.mrb[0].mxu0 %v3800
        %v5187 = vpop.f32.mrb[0].mxu0
        %v5188 = vadd.f32 %v5027, %v5187
        %v5189 = vpop.f32.mrb[0].mxu0
        %v5190 = vpop.f32.mrb[0].mxu0
        %v5191 = vadd.f32 %v5030, %v5190
        %v5192 = vpop.f32.mrb[0].mxu0
        %5193 = vmatprep.mubr.bf16.mxu0 0
        %5194 = vmatmul.mubr.bf16.gmra.mrb[0].mxu0 %v3809
        %v5195 = vpop.f32.mrb[0].mxu0
        %v5196 = vadd.f32 %v5035, %v5195
        %v5197 = vpop.f32.mrb[0].mxu0
        %v5198 = vpop.f32.mrb[0].mxu0
        %v5199 = vadd.f32 %v5038, %v5198
        %v5200 = vpop.f32.mrb[0].mxu0
        %5201 = vmatprep.mubr.bf16.mxu0 0
        %5202 = vmatmul.mubr.bf16.gmra.mrb[0].mxu0 %v3818
        %v5203 = vpop.f32.mrb[0].mxu0
        %v5204 = vadd.f32 %v5043, %v5203
        %v5205 = vpop.f32.mrb[0].mxu0
        %v5206 = vpop.f32.mrb[0].mxu0
        %v5207 = vadd.f32 %v5046, %v5206
        %v5208 = vpop.f32.mrb[0].mxu0
        %5209 = vmatprep.mubr.bf16.mxu0 0
        %5210 = vmatmul.mubr.bf16.gmra.mrb[0].mxu0 %v3827
        %v5211 = vpop.f32.mrb[0].mxu0
        %v5212 = vadd.f32 %v5051, %v5211
        %v5213 = vpop.f32.mrb[0].mxu0
        %v5214 = vpop.f32.mrb[0].mxu0
        %v5215 = vadd.f32 %v5054, %v5214
        %v5216 = vpop.f32.mrb[0].mxu0
        %5217 = vmatprep.mubr.bf16.mxu0 0
        %5218 = vmatmul.mubr.bf16.gmra.mrb[0].mxu0 %v3836
        %v5219 = vpop.f32.mrb[0].mxu0
        %v5220 = vadd.f32 %v5059, %v5219
        %v5221 = vpop.f32.mrb[0].mxu0
        %v5222 = vpop.f32.mrb[0].mxu0
        %v5223 = vadd.f32 %v5062, %v5222
        %v5224 = vpop.f32.mrb[0].mxu0
        %5225 = vmatprep.mubr.bf16.mxu0 0
        %5226 = vmatmul.mubr.bf16.gmra.mrb[0].mxu0 %v3845
        %v5227 = vpop.f32.mrb[0].mxu0
        %v5228 = vadd.f32 %v5067, %v5227
        %v5229 = vpop.f32.mrb[0].mxu0
        %v5230 = vpop.f32.mrb[0].mxu0
        %v5231 = vadd.f32 %v5070, %v5230
        %v5232 = vpop.f32.mrb[0].mxu0
        %5233 = vdwg.mxu0
        %v5234 = vmax.f32 %v5108, 0.0
        %v5235 = vmax.f32 %v5111, 0.0
        %v5236 = vmax.f32 %v5116, 0.0
        %v5237 = vmax.f32 %v5119, 0.0
        %v5238 = vmax.f32 %v5124, 0.0
        %v5239 = vmax.f32 %v5127, 0.0
        %v5240 = vmax.f32 %v5132, 0.0
        %v5241 = vmax.f32 %v5135, 0.0
        %v5242 = vmax.f32 %v5140, 0.0
        %v5243 = vmax.f32 %v5143, 0.0
        %v5244 = vmax.f32 %v5148, 0.0
        %v5245 = vmax.f32 %v5151, 0.0
        %v5246 = vmax.f32 %v5156, 0.0
        %v5247 = vmax.f32 %v5159, 0.0
        %v5248 = vmax.f32 %v5164, 0.0
        %v5249 = vmax.f32 %v5167, 0.0
        %v5250 = vmax.f32 %v5172, 0.0
        %v5251 = vmax.f32 %v5175, 0.0
        %v5252 = vmax.f32 %v5180, 0.0
        %v5253 = vmax.f32 %v5183, 0.0
        %v5254 = vmax.f32 %v5188, 0.0
        %v5255 = vmax.f32 %v5191, 0.0
        %v5256 = vmax.f32 %v5196, 0.0
        %v5257 = vmax.f32 %v5199, 0.0
        %v5258 = vmax.f32 %v5204, 0.0
        %v5259 = vmax.f32 %v5207, 0.0
        %v5260 = vmax.f32 %v5212, 0.0
        %v5261 = vmax.f32 %v5215, 0.0
        %v5262 = vmax.f32 %v5220, 0.0
        %v5263 = vmax.f32 %v5223, 0.0
        %v5264 = vmax.f32 %v5228, 0.0
        %v5265 = vmax.f32 %v5231, 0.0
        %v5266 = vpack.c.bf16 %v5235, %v5234
        %v5267 = vpack.c.bf16 %v5237, %v5236
        %v5268 = vpack.c.bf16 %v5239, %v5238
        %v5269 = vpack.c.bf16 %v5241, %v5240
        %v5270 = vpack.c.bf16 %v5243, %v5242
        %v5271 = vpack.c.bf16 %v5245, %v5244
        %v5272 = vpack.c.bf16 %v5247, %v5246
        %v5273 = vpack.c.bf16 %v5249, %v5248
        %v5274 = vpack.c.bf16 %v5251, %v5250
        %v5275 = vpack.c.bf16 %v5253, %v5252
        %v5276 = vpack.c.bf16 %v5255, %v5254
        %v5277 = vpack.c.bf16 %v5257, %v5256
        %v5278 = vpack.c.bf16 %v5259, %v5258
        %v5279 = vpack.c.bf16 %v5261, %v5260
        %v5280 = vpack.c.bf16 %v5263, %v5262
        %v5281 = vpack.c.bf16 %v5265, %v5264
        %v5298 = vunpack.c.l.b16 %v5266
        %v5299 = vunpack.c.h.b16 %v5266
        %v5300 = vunpack.c.l.b16 %v5267
        %v5301 = vunpack.c.h.b16 %v5267
        %v5302 = vunpack.c.l.b16 %v5268
        %v5303 = vunpack.c.h.b16 %v5268
        %v5304 = vunpack.c.l.b16 %v5269
        %v5305 = vunpack.c.h.b16 %v5269
        %v5306 = vunpack.c.l.b16 %v5270
        %v5307 = vunpack.c.h.b16 %v5270
        %v5308 = vunpack.c.l.b16 %v5271
        %v5309 = vunpack.c.h.b16 %v5271
        %v5310 = vunpack.c.l.b16 %v5272
        %v5311 = vunpack.c.h.b16 %v5272
        %v5312 = vunpack.c.l.b16 %v5273
        %v5313 = vunpack.c.h.b16 %v5273
        %v5314 = vunpack.c.l.b16 %v5274
        %v5315 = vunpack.c.h.b16 %v5274
        %v5316 = vunpack.c.l.b16 %v5275
        %v5317 = vunpack.c.h.b16 %v5275
        %v5318 = vunpack.c.l.b16 %v5276
        %v5319 = vunpack.c.h.b16 %v5276
        %v5320 = vunpack.c.l.b16 %v5277
        %v5321 = vunpack.c.h.b16 %v5277
        %v5322 = vunpack.c.l.b16 %v5278
        %v5323 = vunpack.c.h.b16 %v5278
        %v5324 = vunpack.c.l.b16 %v5279
        %v5325 = vunpack.c.h.b16 %v5279
        %v5326 = vunpack.c.l.b16 %v5280
        %v5327 = vunpack.c.h.b16 %v5280
        %v5328 = vunpack.c.l.b16 %v5281
        %v5329 = vunpack.c.h.b16 %v5281
        %v5330 = vpack.c.b16 %v5298, %v5298
        %v5331 = vpack.c.b16 %v5299, %v5299
        %v5332 = vpack.c.b16 %v5300, %v5300
        %v5333 = vpack.c.b16 %v5301, %v5301
        %v5334 = vpack.c.b16 %v5302, %v5302
        %v5335 = vpack.c.b16 %v5303, %v5303
        %v5336 = vpack.c.b16 %v5304, %v5304
        %v5337 = vpack.c.b16 %v5305, %v5305
        %v5338 = vpack.c.b16 %v5306, %v5306
        %v5339 = vpack.c.b16 %v5307, %v5307
        %v5340 = vpack.c.b16 %v5308, %v5308
        %v5341 = vpack.c.b16 %v5309, %v5309
        %v5342 = vpack.c.b16 %v5310, %v5310
        %v5343 = vpack.c.b16 %v5311, %v5311
        %v5344 = vpack.c.b16 %v5312, %v5312
        %v5345 = vpack.c.b16 %v5313, %v5313
        %v5346 = vpack.c.b16 %v5314, %v5314
        %v5347 = vpack.c.b16 %v5315, %v5315
        %v5348 = vpack.c.b16 %v5316, %v5316
        %v5349 = vpack.c.b16 %v5317, %v5317
        %v5350 = vpack.c.b16 %v5318, %v5318
        %v5351 = vpack.c.b16 %v5319, %v5319
        %v5352 = vpack.c.b16 %v5320, %v5320
        %v5353 = vpack.c.b16 %v5321, %v5321
        %v5354 = vpack.c.b16 %v5322, %v5322
        %v5355 = vpack.c.b16 %v5323, %v5323
        %v5356 = vpack.c.b16 %v5324, %v5324
        %v5357 = vpack.c.b16 %v5325, %v5325
        %v5358 = vpack.c.b16 %v5326, %v5326
        %v5359 = vpack.c.b16 %v5327, %v5327
        %v5360 = vpack.c.b16 %v5328, %v5328
        %v5361 = vpack.c.b16 %v5329, %v5329
        %v5363 = vshrl.u32 %v5330, 16
        %v5365 = vrot.slane %v5363, 7
        %v5366 = vshll.u32 %v5330, 16
        %v5368 = vor.u32 %v5365, %v5366
        %v5369 = vrot.slane %v5365, 4
        %v5371 = vshrl.u32 %v5331, 16
        %v5373 = vrot.slane %v5371, 7
        %v5374 = vshll.u32 %v5331, 16
        %v5376 = vor.u32 %v5373, %v5374
        %v5377 = vsel %vm423, %v5369, %v5376
        %v5378 = vrot.slane %v5373, 4
        %v5380 = vshrl.u32 %v5332, 16
        %v5382 = vrot.slane %v5380, 7
        %v5383 = vshll.u32 %v5332, 16
        %v5385 = vor.u32 %v5382, %v5383
        %v5386 = vrot.slane %v5382, 4
        %v5388 = vshrl.u32 %v5333, 16
        %v5390 = vrot.slane %v5388, 7
        %v5391 = vshll.u32 %v5333, 16
        %v5393 = vor.u32 %v5390, %v5391
        %v5394 = vsel %vm423, %v5386, %v5393
        %v5395 = vrot.slane %v5390, 4
        %v5397 = vshrl.u32 %v5334, 16
        %v5399 = vrot.slane %v5397, 7
        %v5400 = vshll.u32 %v5334, 16
        %v5402 = vor.u32 %v5399, %v5400
        %v5403 = vrot.slane %v5399, 4
        %v5405 = vshrl.u32 %v5335, 16
        %v5407 = vrot.slane %v5405, 7
        %v5408 = vshll.u32 %v5335, 16
        %v5410 = vor.u32 %v5407, %v5408
        %v5411 = vsel %vm423, %v5403, %v5410
        %v5412 = vrot.slane %v5407, 4
        %v5414 = vshrl.u32 %v5336, 16
        %v5416 = vrot.slane %v5414, 7
        %v5417 = vshll.u32 %v5336, 16
        %v5419 = vor.u32 %v5416, %v5417
        %v5420 = vrot.slane %v5416, 4
        %v5422 = vshrl.u32 %v5337, 16
        %v5424 = vrot.slane %v5422, 7
        %v5425 = vshll.u32 %v5337, 16
        %v5427 = vor.u32 %v5424, %v5425
        %v5428 = vsel %vm423, %v5420, %v5427
        %v5429 = vrot.slane %v5424, 4
        %v5431 = vshrl.u32 %v5338, 16
        %v5433 = vrot.slane %v5431, 7
        %v5434 = vshll.u32 %v5338, 16
        %v5436 = vor.u32 %v5433, %v5434
        %v5437 = vrot.slane %v5433, 4
        %v5439 = vshrl.u32 %v5339, 16
        %v5441 = vrot.slane %v5439, 7
        %v5442 = vshll.u32 %v5339, 16
        %v5444 = vor.u32 %v5441, %v5442
        %v5445 = vsel %vm423, %v5437, %v5444
        %v5446 = vrot.slane %v5441, 4
        %v5448 = vshrl.u32 %v5340, 16
        %v5450 = vrot.slane %v5448, 7
        %v5451 = vshll.u32 %v5340, 16
        %v5453 = vor.u32 %v5450, %v5451
        %v5454 = vrot.slane %v5450, 4
        %v5456 = vshrl.u32 %v5341, 16
        %v5458 = vrot.slane %v5456, 7
        %v5459 = vshll.u32 %v5341, 16
        %v5461 = vor.u32 %v5458, %v5459
        %v5462 = vsel %vm423, %v5454, %v5461
        %v5463 = vrot.slane %v5458, 4
        %v5465 = vshrl.u32 %v5342, 16
        %v5467 = vrot.slane %v5465, 7
        %v5468 = vshll.u32 %v5342, 16
        %v5470 = vor.u32 %v5467, %v5468
        %v5471 = vrot.slane %v5467, 4
        %v5473 = vshrl.u32 %v5343, 16
        %v5475 = vrot.slane %v5473, 7
        %v5476 = vshll.u32 %v5343, 16
        %v5478 = vor.u32 %v5475, %v5476
        %v5479 = vsel %vm423, %v5471, %v5478
        %v5480 = vrot.slane %v5475, 4
        %v5482 = vshrl.u32 %v5344, 16
        %v5484 = vrot.slane %v5482, 7
        %v5485 = vshll.u32 %v5344, 16
        %v5487 = vor.u32 %v5484, %v5485
        %v5488 = vrot.slane %v5484, 4
        %v5490 = vshrl.u32 %v5345, 16
        %v5492 = vrot.slane %v5490, 7
        %v5493 = vshll.u32 %v5345, 16
        %v5495 = vor.u32 %v5492, %v5493
        %v5496 = vsel %vm423, %v5488, %v5495
        %v5497 = vrot.slane %v5492, 4
        %v5499 = vshrl.u32 %v5346, 16
        %v5501 = vrot.slane %v5499, 7
        %v5502 = vshll.u32 %v5346, 16
        %v5504 = vor.u32 %v5501, %v5502
        %v5505 = vrot.slane %v5501, 4
        %v5507 = vshrl.u32 %v5347, 16
        %v5509 = vrot.slane %v5507, 7
        %v5510 = vshll.u32 %v5347, 16
        %v5512 = vor.u32 %v5509, %v5510
        %v5513 = vsel %vm423, %v5505, %v5512
        %v5514 = vrot.slane %v5509, 4
        %v5516 = vshrl.u32 %v5348, 16
        %v5518 = vrot.slane %v5516, 7
        %v5519 = vshll.u32 %v5348, 16
        %v5521 = vor.u32 %v5518, %v5519
        %v5522 = vrot.slane %v5518, 4
        %v5524 = vshrl.u32 %v5349, 16
        %v5526 = vrot.slane %v5524, 7
        %v5527 = vshll.u32 %v5349, 16
        %v5529 = vor.u32 %v5526, %v5527
        %v5530 = vsel %vm423, %v5522, %v5529
        %v5531 = vrot.slane %v5526, 4
        %v5533 = vshrl.u32 %v5350, 16
        %v5535 = vrot.slane %v5533, 7
        %v5536 = vshll.u32 %v5350, 16
        %v5538 = vor.u32 %v5535, %v5536
        %v5539 = vrot.slane %v5535, 4
        %v5541 = vshrl.u32 %v5351, 16
        %v5543 = vrot.slane %v5541, 7
        %v5544 = vshll.u32 %v5351, 16
        %v5546 = vor.u32 %v5543, %v5544
        %v5547 = vsel %vm423, %v5539, %v5546
        %v5548 = vrot.slane %v5543, 4
        %v5550 = vshrl.u32 %v5352, 16
        %v5552 = vrot.slane %v5550, 7
        %v5553 = vshll.u32 %v5352, 16
        %v5555 = vor.u32 %v5552, %v5553
        %v5556 = vrot.slane %v5552, 4
        %v5558 = vshrl.u32 %v5353, 16
        %v5560 = vrot.slane %v5558, 7
        %v5561 = vshll.u32 %v5353, 16
        %v5563 = vor.u32 %v5560, %v5561
        %v5564 = vsel %vm423, %v5556, %v5563
        %v5565 = vrot.slane %v5560, 4
        %v5567 = vshrl.u32 %v5354, 16
        %v5569 = vrot.slane %v5567, 7
        %v5570 = vshll.u32 %v5354, 16
        %v5572 = vor.u32 %v5569, %v5570
        %v5573 = vrot.slane %v5569, 4
        %v5575 = vshrl.u32 %v5355, 16
        %v5577 = vrot.slane %v5575, 7
        %v5578 = vshll.u32 %v5355, 16
        %v5580 = vor.u32 %v5577, %v5578
        %v5581 = vsel %vm423, %v5573, %v5580
        %v5582 = vrot.slane %v5577, 4
        %v5584 = vshrl.u32 %v5356, 16
        %v5586 = vrot.slane %v5584, 7
        %v5587 = vshll.u32 %v5356, 16
        %v5589 = vor.u32 %v5586, %v5587
        %v5590 = vrot.slane %v5586, 4
        %v5592 = vshrl.u32 %v5357, 16
        %v5594 = vrot.slane %v5592, 7
        %v5595 = vshll.u32 %v5357, 16
        %v5597 = vor.u32 %v5594, %v5595
        %v5598 = vsel %vm423, %v5590, %v5597
        %v5599 = vrot.slane %v5594, 4
        %v5601 = vshrl.u32 %v5358, 16
        %v5603 = vrot.slane %v5601, 7
        %v5604 = vshll.u32 %v5358, 16
        %v5606 = vor.u32 %v5603, %v5604
        %v5607 = vrot.slane %v5603, 4
        %v5609 = vshrl.u32 %v5359, 16
        %v5611 = vrot.slane %v5609, 7
        %v5612 = vshll.u32 %v5359, 16
        %v5614 = vor.u32 %v5611, %v5612
        %v5615 = vsel %vm423, %v5607, %v5614
        %v5616 = vrot.slane %v5611, 4
        %v5618 = vshrl.u32 %v5360, 16
        %v5620 = vrot.slane %v5618, 7
        %v5621 = vshll.u32 %v5360, 16
        %v5623 = vor.u32 %v5620, %v5621
        %v5624 = vrot.slane %v5620, 4
        %v5626 = vshrl.u32 %v5361, 16
        %v5628 = vrot.slane %v5626, 7
        %v5629 = vshll.u32 %v5361, 16
        %v5631 = vor.u32 %v5628, %v5629
        %v5632 = vsel %vm423, %v5624, %v5631
        %v5633 = vrot.slane %v5628, 4
        %vm5682 = vcmask 1043456
        %vm5683 = vmand %vm5682, %vm746
        %v5684 = vld [vmem:[%s744] sm:$0xf]
        %v5685 = vsel %vm5683, %v5368, %v5684
        %5686 = vst [vmem:[%s744] sm:$0xf] %v5685
        %5687 = vst [vmem:[%s744 + $0x4] sm:$0xf] %v5377
        %vm5688 = vcmask 1040384
        %vm5689 = vmand %vm5688, %vm421
        %v5690 = vld [vmem:[%s744 + $0x8] sm:$0x1]
        %v5691 = vsel %vm5689, %v5378, %v5690
        %5692 = vst [vmem:[%s744 + $0x8] sm:$0x1] %v5691
        %v5693 = vld [vmem:[%s744 + $0xc] sm:$0xf]
        %v5694 = vsel %vm5683, %v5385, %v5693
        %5695 = vst [vmem:[%s744 + $0xc] sm:$0xf] %v5694
        %5696 = vst [vmem:[%s744 + $0x10] sm:$0xf] %v5394
        %v5697 = vld [vmem:[%s744 + $0x14] sm:$0x1]
        %v5698 = vsel %vm5689, %v5395, %v5697
        %5699 = vst [vmem:[%s744 + $0x14] sm:$0x1] %v5698
        %v5700 = vld [vmem:[%s744 + $0x18] sm:$0xf]
        %v5701 = vsel %vm5683, %v5402, %v5700
        %5702 = vst [vmem:[%s744 + $0x18] sm:$0xf] %v5701
        %5703 = vst [vmem:[%s744 + $0x1c] sm:$0xf] %v5411
        %v5704 = vld [vmem:[%s744 + $0x20] sm:$0x1]
        %v5705 = vsel %vm5689, %v5412, %v5704
        %5706 = vst [vmem:[%s744 + $0x20] sm:$0x1] %v5705
        %v5707 = vld [vmem:[%s744 + $0x24] sm:$0xf]
        %v5708 = vsel %vm5683, %v5419, %v5707
        %5709 = vst [vmem:[%s744 + $0x24] sm:$0xf] %v5708
        %5710 = vst [vmem:[%s744 + $0x28] sm:$0xf] %v5428
        %v5711 = vld [vmem:[%s744 + $0x2c] sm:$0x1]
        %v5712 = vsel %vm5689, %v5429, %v5711
        %5713 = vst [vmem:[%s744 + $0x2c] sm:$0x1] %v5712
        %v5714 = vld [vmem:[%s744 + $0x30] sm:$0xf]
        %v5715 = vsel %vm5683, %v5436, %v5714
        %5716 = vst [vmem:[%s744 + $0x30] sm:$0xf] %v5715
        %5717 = vst [vmem:[%s744 + $0x34] sm:$0xf] %v5445
        %v5718 = vld [vmem:[%s744 + $0x38] sm:$0x1]
        %v5719 = vsel %vm5689, %v5446, %v5718
        %5720 = vst [vmem:[%s744 + $0x38] sm:$0x1] %v5719
        %v5721 = vld [vmem:[%s744 + $0x3c] sm:$0xf]
        %v5722 = vsel %vm5683, %v5453, %v5721
        %5723 = vst [vmem:[%s744 + $0x3c] sm:$0xf] %v5722
        %5724 = vst [vmem:[%s744 + $0x40] sm:$0xf] %v5462
        %v5725 = vld [vmem:[%s744 + $0x44] sm:$0x1]
        %v5726 = vsel %vm5689, %v5463, %v5725
        %5727 = vst [vmem:[%s744 + $0x44] sm:$0x1] %v5726
        %v5728 = vld [vmem:[%s744 + $0x48] sm:$0xf]
        %v5729 = vsel %vm5683, %v5470, %v5728
        %5730 = vst [vmem:[%s744 + $0x48] sm:$0xf] %v5729
        %5731 = vst [vmem:[%s744 + $0x4c] sm:$0xf] %v5479
        %v5732 = vld [vmem:[%s744 + $0x50] sm:$0x1]
        %v5733 = vsel %vm5689, %v5480, %v5732
        %5734 = vst [vmem:[%s744 + $0x50] sm:$0x1] %v5733
        %v5735 = vld [vmem:[%s744 + $0x54] sm:$0xf]
        %v5736 = vsel %vm5683, %v5487, %v5735
        %5737 = vst [vmem:[%s744 + $0x54] sm:$0xf] %v5736
        %5738 = vst [vmem:[%s744 + $0x58] sm:$0xf] %v5496
        %v5739 = vld [vmem:[%s744 + $0x5c] sm:$0x1]
        %v5740 = vsel %vm5689, %v5497, %v5739
        %5741 = vst [vmem:[%s744 + $0x5c] sm:$0x1] %v5740
        %v5742 = vld [vmem:[%s744 + $0x60] sm:$0xf]
        %v5743 = vsel %vm5683, %v5504, %v5742
        %5744 = vst [vmem:[%s744 + $0x60] sm:$0xf] %v5743
        %5745 = vst [vmem:[%s744 + $0x64] sm:$0xf] %v5513
        %v5746 = vld [vmem:[%s744 + $0x68] sm:$0x1]
        %v5747 = vsel %vm5689, %v5514, %v5746
        %5748 = vst [vmem:[%s744 + $0x68] sm:$0x1] %v5747
        %v5749 = vld [vmem:[%s744 + $0x6c] sm:$0xf]
        %v5750 = vsel %vm5683, %v5521, %v5749
        %5751 = vst [vmem:[%s744 + $0x6c] sm:$0xf] %v5750
        %5752 = vst [vmem:[%s744 + $0x70] sm:$0xf] %v5530
        %v5753 = vld [vmem:[%s744 + $0x74] sm:$0x1]
        %v5754 = vsel %vm5689, %v5531, %v5753
        %5755 = vst [vmem:[%s744 + $0x74] sm:$0x1] %v5754
        %v5756 = vld [vmem:[%s744 + $0x78] sm:$0xf]
        %v5757 = vsel %vm5683, %v5538, %v5756
        %5758 = vst [vmem:[%s744 + $0x78] sm:$0xf] %v5757
        %5759 = vst [vmem:[%s744 + $0x7c] sm:$0xf] %v5547
        %v5760 = vld [vmem:[%s744 + $0x80] sm:$0x1]
        %v5761 = vsel %vm5689, %v5548, %v5760
        %5762 = vst [vmem:[%s744 + $0x80] sm:$0x1] %v5761
        %v5763 = vld [vmem:[%s744 + $0x84] sm:$0xf]
        %v5764 = vsel %vm5683, %v5555, %v5763
        %5765 = vst [vmem:[%s744 + $0x84] sm:$0xf] %v5764
        %5766 = vst [vmem:[%s744 + $0x88] sm:$0xf] %v5564
        %v5767 = vld [vmem:[%s744 + $0x8c] sm:$0x1]
        %v5768 = vsel %vm5689, %v5565, %v5767
        %5769 = vst [vmem:[%s744 + $0x8c] sm:$0x1] %v5768
        %v5770 = vld [vmem:[%s744 + $0x90] sm:$0xf]
        %v5771 = vsel %vm5683, %v5572, %v5770
        %5772 = vst [vmem:[%s744 + $0x90] sm:$0xf] %v5771
        %5773 = vst [vmem:[%s744 + $0x94] sm:$0xf] %v5581
        %v5774 = vld [vmem:[%s744 + $0x98] sm:$0x1]
        %v5775 = vsel %vm5689, %v5582, %v5774
        %5776 = vst [vmem:[%s744 + $0x98] sm:$0x1] %v5775
        %v5777 = vld [vmem:[%s744 + $0x9c] sm:$0xf]
        %v5778 = vsel %vm5683, %v5589, %v5777
        %5779 = vst [vmem:[%s744 + $0x9c] sm:$0xf] %v5778
        %5780 = vst [vmem:[%s744 + $0xa0] sm:$0xf] %v5598
        %v5781 = vld [vmem:[%s744 + $0xa4] sm:$0x1]
        %v5782 = vsel %vm5689, %v5599, %v5781
        %5783 = vst [vmem:[%s744 + $0xa4] sm:$0x1] %v5782
        %v5784 = vld [vmem:[%s744 + $0xa8] sm:$0xf]
        %v5785 = vsel %vm5683, %v5606, %v5784
        %5786 = vst [vmem:[%s744 + $0xa8] sm:$0xf] %v5785
        %5787 = vst [vmem:[%s744 + $0xac] sm:$0xf] %v5615
        %v5788 = vld [vmem:[%s744 + $0xb0] sm:$0x1]
        %v5789 = vsel %vm5689, %v5616, %v5788
        %5790 = vst [vmem:[%s744 + $0xb0] sm:$0x1] %v5789
        %v5791 = vld [vmem:[%s744 + $0xb4] sm:$0xf]
        %v5792 = vsel %vm5683, %v5623, %v5791
        %5793 = vst [vmem:[%s744 + $0xb4] sm:$0xf] %v5792
        %5794 = vst [vmem:[%s744 + $0xb8] sm:$0xf] %v5632
        %v5795 = vld [vmem:[%s744 + $0xbc] sm:$0x1]
        %v5796 = vsel %vm5689, %v5633, %v5795
        %5797 = vst [vmem:[%s744 + $0xbc] sm:$0x1] %v5796
        %v5798 = vld [vmem:[#allocation2] sm:$0xf]
        %v5799 = vld [vmem:[#allocation2 + $0x4] sm:$0xf]
        %v5800 = vld [vmem:[#allocation2 + $0xc] sm:$0xf]
        %v5801 = vld [vmem:[#allocation2 + $0x10] sm:$0xf]
        %v5802 = vld [vmem:[#allocation2 + $0x18] sm:$0xf]
        %v5803 = vld [vmem:[#allocation2 + $0x1c] sm:$0xf]
        %v5804 = vld [vmem:[#allocation2 + $0x24] sm:$0xf]
        %v5805 = vld [vmem:[#allocation2 + $0x28] sm:$0xf]
        %v5806 = vld [vmem:[#allocation2 + $0x30] sm:$0xf]
        %v5807 = vld [vmem:[#allocation2 + $0x34] sm:$0xf]
        %v5808 = vld [vmem:[#allocation2 + $0x3c] sm:$0xf]
        %v5809 = vld [vmem:[#allocation2 + $0x40] sm:$0xf]
        %v5810 = vld [vmem:[#allocation2 + $0x48] sm:$0xf]
        %v5811 = vld [vmem:[#allocation2 + $0x4c] sm:$0xf]
        %v5812 = vld [vmem:[#allocation2 + $0x54] sm:$0xf]
        %v5813 = vld [vmem:[#allocation2 + $0x58] sm:$0xf]
        %v5814 = vld [vmem:[#allocation2 + $0x60] sm:$0xf]
        %v5815 = vld [vmem:[#allocation2 + $0x64] sm:$0xf]
        %v5816 = vld [vmem:[#allocation2 + $0x6c] sm:$0xf]
        %v5817 = vld [vmem:[#allocation2 + $0x70] sm:$0xf]
        %v5818 = vld [vmem:[#allocation2 + $0x78] sm:$0xf]
        %v5819 = vld [vmem:[#allocation2 + $0x7c] sm:$0xf]
        %v5820 = vld [vmem:[#allocation2 + $0x84] sm:$0xf]
        %v5821 = vld [vmem:[#allocation2 + $0x88] sm:$0xf]
        %v5822 = vld [vmem:[#allocation2 + $0x90] sm:$0xf]
        %v5823 = vld [vmem:[#allocation2 + $0x94] sm:$0xf]
        %v5824 = vld [vmem:[#allocation2 + $0x9c] sm:$0xf]
        %v5825 = vld [vmem:[#allocation2 + $0xa0] sm:$0xf]
        %v5826 = vld [vmem:[#allocation2 + $0xa8] sm:$0xf]
        %v5827 = vld [vmem:[#allocation2 + $0xac] sm:$0xf]
        %v5828 = vld [vmem:[#allocation2 + $0xb4] sm:$0xf]
        %v5829 = vld [vmem:[#allocation2 + $0xb8] sm:$0xf]
        %v5862 = vunpack.c.l.b16 %v5798
        %v5863 = vunpack.c.l.b16 %v5799
        %v5864 = vunpack.c.l.b16 %v5800
        %v5865 = vunpack.c.l.b16 %v5801
        %v5866 = vunpack.c.l.b16 %v5802
        %v5867 = vunpack.c.l.b16 %v5803
        %v5868 = vunpack.c.l.b16 %v5804
        %v5869 = vunpack.c.l.b16 %v5805
        %v5870 = vunpack.c.l.b16 %v5806
        %v5871 = vunpack.c.l.b16 %v5807
        %v5872 = vunpack.c.l.b16 %v5808
        %v5873 = vunpack.c.l.b16 %v5809
        %v5874 = vunpack.c.l.b16 %v5810
        %v5875 = vunpack.c.l.b16 %v5811
        %v5876 = vunpack.c.l.b16 %v5812
        %v5877 = vunpack.c.l.b16 %v5813
        %v5878 = vunpack.c.l.b16 %v5814
        %v5879 = vunpack.c.l.b16 %v5815
        %v5880 = vunpack.c.l.b16 %v5816
        %v5881 = vunpack.c.l.b16 %v5817
        %v5882 = vunpack.c.l.b16 %v5818
        %v5883 = vunpack.c.l.b16 %v5819
        %v5884 = vunpack.c.l.b16 %v5820
        %v5885 = vunpack.c.l.b16 %v5821
        %v5886 = vunpack.c.l.b16 %v5822
        %v5887 = vunpack.c.l.b16 %v5823
        %v5888 = vunpack.c.l.b16 %v5824
        %v5889 = vunpack.c.l.b16 %v5825
        %v5890 = vunpack.c.l.b16 %v5826
        %v5891 = vunpack.c.l.b16 %v5827
        %v5892 = vunpack.c.l.b16 %v5828
        %v5893 = vunpack.c.l.b16 %v5829
        %v5894 = vpack.c.b16 %v5863, %v5862
        %v5895 = vpack.c.b16 %v5865, %v5864
        %v5896 = vpack.c.b16 %v5867, %v5866
        %v5897 = vpack.c.b16 %v5869, %v5868
        %v5898 = vpack.c.b16 %v5871, %v5870
        %v5899 = vpack.c.b16 %v5873, %v5872
        %v5900 = vpack.c.b16 %v5875, %v5874
        %v5901 = vpack.c.b16 %v5877, %v5876
        %v5902 = vpack.c.b16 %v5879, %v5878
        %v5903 = vpack.c.b16 %v5881, %v5880
        %v5904 = vpack.c.b16 %v5883, %v5882
        %v5905 = vpack.c.b16 %v5885, %v5884
        %v5906 = vpack.c.b16 %v5887, %v5886
        %v5907 = vpack.c.b16 %v5889, %v5888
        %v5908 = vpack.c.b16 %v5891, %v5890
        %v5909 = vpack.c.b16 %v5893, %v5892
        %5926 = vst [vmem:[#allocation3] sm:$0xff] %v5894
        %5927 = vst [vmem:[#allocation3 + $0x48] sm:$0xff] %v5895
        %5928 = vst [vmem:[#allocation3 + $0x90] sm:$0xff] %v5896
        %5929 = vst [vmem:[#allocation3 + $0xd8] sm:$0xff] %v5897
        %5930 = vst [vmem:[#allocation3 + $0x120] sm:$0xff] %v5898
        %5931 = vst [vmem:[#allocation3 + $0x168] sm:$0xff] %v5899
        %5932 = vst [vmem:[#allocation3 + $0x1b0] sm:$0xff] %v5900
        %5933 = vst [vmem:[#allocation3 + $0x1f8] sm:$0xff] %v5901
        %5934 = vst [vmem:[#allocation3 + $0x240] sm:$0xff] %v5902
        %5935 = vst [vmem:[#allocation3 + $0x288] sm:$0xff] %v5903
        %5936 = vst [vmem:[#allocation3 + $0x2d0] sm:$0xff] %v5904
        %5937 = vst [vmem:[#allocation3 + $0x318] sm:$0xff] %v5905
        %5938 = vst [vmem:[#allocation3 + $0x360] sm:$0xff] %v5906
        %5939 = vst [vmem:[#allocation3 + $0x3a8] sm:$0xff] %v5907
        %5940 = vst [vmem:[#allocation3 + $0x3f0] sm:$0xff] %v5908
        %5941 = vst [vmem:[#allocation3 + $0x438] sm:$0xff] %v5909
        %v5942 = vld [vmem:[#allocation2] sm:$0xf]
        %v5943 = vld [vmem:[#allocation2 + $0x4] sm:$0xf]
        %v5944 = vld [vmem:[#allocation2 + $0x8] sm:$0x1]
        %v5945 = vld [vmem:[#allocation2 + $0xc] sm:$0xf]
        %v5946 = vld [vmem:[#allocation2 + $0x10] sm:$0xf]
        %v5947 = vld [vmem:[#allocation2 + $0x14] sm:$0x1]
        %v5948 = vld [vmem:[#allocation2 + $0x18] sm:$0xf]
        %v5949 = vld [vmem:[#allocation2 + $0x1c] sm:$0xf]
        %v5950 = vld [vmem:[#allocation2 + $0x20] sm:$0x1]
        %v5951 = vld [vmem:[#allocation2 + $0x24] sm:$0xf]
        %v5952 = vld [vmem:[#allocation2 + $0x28] sm:$0xf]
        %v5953 = vld [vmem:[#allocation2 + $0x2c] sm:$0x1]
        %v5954 = vld [vmem:[#allocation2 + $0x30] sm:$0xf]
        %v5955 = vld [vmem:[#allocation2 + $0x34] sm:$0xf]
        %v5956 = vld [vmem:[#allocation2 + $0x38] sm:$0x1]
        %v5957 = vld [vmem:[#allocation2 + $0x3c] sm:$0xf]
        %v5958 = vld [vmem:[#allocation2 + $0x40] sm:$0xf]
        %v5959 = vld [vmem:[#allocation2 + $0x44] sm:$0x1]
        %v5960 = vld [vmem:[#allocation2 + $0x48] sm:$0xf]
        %v5961 = vld [vmem:[#allocation2 + $0x4c] sm:$0xf]
        %v5962 = vld [vmem:[#allocation2 + $0x50] sm:$0x1]
        %v5963 = vld [vmem:[#allocation2 + $0x54] sm:$0xf]
        %v5964 = vld [vmem:[#allocation2 + $0x58] sm:$0xf]
        %v5965 = vld [vmem:[#allocation2 + $0x5c] sm:$0x1]
        %v5966 = vld [vmem:[#allocation2 + $0x60] sm:$0xf]
        %v5967 = vld [vmem:[#allocation2 + $0x64] sm:$0xf]
        %v5968 = vld [vmem:[#allocation2 + $0x68] sm:$0x1]
        %v5969 = vld [vmem:[#allocation2 + $0x6c] sm:$0xf]
        %v5970 = vld [vmem:[#allocation2 + $0x70] sm:$0xf]
        %v5971 = vld [vmem:[#allocation2 + $0x74] sm:$0x1]
        %v5972 = vld [vmem:[#allocation2 + $0x78] sm:$0xf]
        %v5973 = vld [vmem:[#allocation2 + $0x7c] sm:$0xf]
        %v5974 = vld [vmem:[#allocation2 + $0x80] sm:$0x1]
        %v5975 = vld [vmem:[#allocation2 + $0x84] sm:$0xf]
        %v5976 = vld [vmem:[#allocation2 + $0x88] sm:$0xf]
        %v5977 = vld [vmem:[#allocation2 + $0x8c] sm:$0x1]
        %v5978 = vld [vmem:[#allocation2 + $0x90] sm:$0xf]
        %v5979 = vld [vmem:[#allocation2 + $0x94] sm:$0xf]
        %v5980 = vld [vmem:[#allocation2 + $0x98] sm:$0x1]
        %v5981 = vld [vmem:[#allocation2 + $0x9c] sm:$0xf]
        %v5982 = vld [vmem:[#allocation2 + $0xa0] sm:$0xf]
        %v5983 = vld [vmem:[#allocation2 + $0xa4] sm:$0x1]
        %v5984 = vld [vmem:[#allocation2 + $0xa8] sm:$0xf]
        %v5985 = vld [vmem:[#allocation2 + $0xac] sm:$0xf]
        %v5986 = vld [vmem:[#allocation2 + $0xb0] sm:$0x1]
        %v5987 = vld [vmem:[#allocation2 + $0xb4] sm:$0xf]
        %v5988 = vld [vmem:[#allocation2 + $0xb8] sm:$0xf]
        %v5989 = vld [vmem:[#allocation2 + $0xbc] sm:$0x1]
        %v5991 = vshrl.u32 %v5942, 16
        %v5993 = vrot.slane %v5991, 4
        %v5994 = vshll.u32 %v5942, 16
        %v5996 = vrot.slane %v5994, 5
        %v5997 = vor.u32 %v5993, %v5996
        %v5998 = vrot.slane %v5997, 4
        %v6000 = vshll.u32 %v5943, 16
        %v6002 = vrot.slane %v6000, 5
        %v6003 = vsel %vm1057, %v5998, %v6002
        %v6004 = vshrl.u32 %v5943, 16
        %v6006 = vrot.slane %v6004, 4
        %v6007 = vor.u32 %v6006, %v6002
        %v6008 = vrot.slane %v6007, 4
        %v6010 = vshll.u32 %v5944, 16
        %v6012 = vrot.slane %v6010, 5
        %v6013 = vsel %vm1057, %v6008, %v6012
        %v6015 = vshrl.u32 %v5945, 16
        %v6017 = vrot.slane %v6015, 4
        %v6018 = vshll.u32 %v5945, 16
        %v6020 = vrot.slane %v6018, 5
        %v6021 = vor.u32 %v6017, %v6020
        %v6022 = vrot.slane %v6021, 4
        %v6024 = vshll.u32 %v5946, 16
        %v6026 = vrot.slane %v6024, 5
        %v6027 = vsel %vm1057, %v6022, %v6026
        %v6028 = vshrl.u32 %v5946, 16
        %v6030 = vrot.slane %v6028, 4
        %v6031 = vor.u32 %v6030, %v6026
        %v6032 = vrot.slane %v6031, 4
        %v6034 = vshll.u32 %v5947, 16
        %v6036 = vrot.slane %v6034, 5
        %v6037 = vsel %vm1057, %v6032, %v6036
        %v6039 = vshrl.u32 %v5948, 16
        %v6041 = vrot.slane %v6039, 4
        %v6042 = vshll.u32 %v5948, 16
        %v6044 = vrot.slane %v6042, 5
        %v6045 = vor.u32 %v6041, %v6044
        %v6046 = vrot.slane %v6045, 4
        %v6048 = vshll.u32 %v5949, 16
        %v6050 = vrot.slane %v6048, 5
        %v6051 = vsel %vm1057, %v6046, %v6050
        %v6052 = vshrl.u32 %v5949, 16
        %v6054 = vrot.slane %v6052, 4
        %v6055 = vor.u32 %v6054, %v6050
        %v6056 = vrot.slane %v6055, 4
        %v6058 = vshll.u32 %v5950, 16
        %v6060 = vrot.slane %v6058, 5
        %v6061 = vsel %vm1057, %v6056, %v6060
        %v6063 = vshrl.u32 %v5951, 16
        %v6065 = vrot.slane %v6063, 4
        %v6066 = vshll.u32 %v5951, 16
        %v6068 = vrot.slane %v6066, 5
        %v6069 = vor.u32 %v6065, %v6068
        %v6070 = vrot.slane %v6069, 4
        %v6072 = vshll.u32 %v5952, 16
        %v6074 = vrot.slane %v6072, 5
        %v6075 = vsel %vm1057, %v6070, %v6074
        %v6076 = vshrl.u32 %v5952, 16
        %v6078 = vrot.slane %v6076, 4
        %v6079 = vor.u32 %v6078, %v6074
        %v6080 = vrot.slane %v6079, 4
        %v6082 = vshll.u32 %v5953, 16
        %v6084 = vrot.slane %v6082, 5
        %v6085 = vsel %vm1057, %v6080, %v6084
        %v6087 = vshrl.u32 %v5954, 16
        %v6089 = vrot.slane %v6087, 4
        %v6090 = vshll.u32 %v5954, 16
        %v6092 = vrot.slane %v6090, 5
        %v6093 = vor.u32 %v6089, %v6092
        %v6094 = vrot.slane %v6093, 4
        %v6096 = vshll.u32 %v5955, 16
        %v6098 = vrot.slane %v6096, 5
        %v6099 = vsel %vm1057, %v6094, %v6098
        %v6100 = vshrl.u32 %v5955, 16
        %v6102 = vrot.slane %v6100, 4
        %v6103 = vor.u32 %v6102, %v6098
        %v6104 = vrot.slane %v6103, 4
        %v6106 = vshll.u32 %v5956, 16
        %v6108 = vrot.slane %v6106, 5
        %v6109 = vsel %vm1057, %v6104, %v6108
        %v6111 = vshrl.u32 %v5957, 16
        %v6113 = vrot.slane %v6111, 4
        %v6114 = vshll.u32 %v5957, 16
        %v6116 = vrot.slane %v6114, 5
        %v6117 = vor.u32 %v6113, %v6116
        %v6118 = vrot.slane %v6117, 4
        %v6120 = vshll.u32 %v5958, 16
        %v6122 = vrot.slane %v6120, 5
        %v6123 = vsel %vm1057, %v6118, %v6122
        %v6124 = vshrl.u32 %v5958, 16
        %v6126 = vrot.slane %v6124, 4
        %v6127 = vor.u32 %v6126, %v6122
        %v6128 = vrot.slane %v6127, 4
        %v6130 = vshll.u32 %v5959, 16
        %v6132 = vrot.slane %v6130, 5
        %v6133 = vsel %vm1057, %v6128, %v6132
        %v6135 = vshrl.u32 %v5960, 16
        %v6137 = vrot.slane %v6135, 4
        %v6138 = vshll.u32 %v5960, 16
        %v6140 = vrot.slane %v6138, 5
        %v6141 = vor.u32 %v6137, %v6140
        %v6142 = vrot.slane %v6141, 4
        %v6144 = vshll.u32 %v5961, 16
        %v6146 = vrot.slane %v6144, 5
        %v6147 = vsel %vm1057, %v6142, %v6146
        %v6148 = vshrl.u32 %v5961, 16
        %v6150 = vrot.slane %v6148, 4
        %v6151 = vor.u32 %v6150, %v6146
        %v6152 = vrot.slane %v6151, 4
        %v6154 = vshll.u32 %v5962, 16
        %v6156 = vrot.slane %v6154, 5
        %v6157 = vsel %vm1057, %v6152, %v6156
        %v6159 = vshrl.u32 %v5963, 16
        %v6161 = vrot.slane %v6159, 4
        %v6162 = vshll.u32 %v5963, 16
        %v6164 = vrot.slane %v6162, 5
        %v6165 = vor.u32 %v6161, %v6164
        %v6166 = vrot.slane %v6165, 4
        %v6168 = vshll.u32 %v5964, 16
        %v6170 = vrot.slane %v6168, 5
        %v6171 = vsel %vm1057, %v6166, %v6170
        %v6172 = vshrl.u32 %v5964, 16
        %v6174 = vrot.slane %v6172, 4
        %v6175 = vor.u32 %v6174, %v6170
        %v6176 = vrot.slane %v6175, 4
        %v6178 = vshll.u32 %v5965, 16
        %v6180 = vrot.slane %v6178, 5
        %v6181 = vsel %vm1057, %v6176, %v6180
        %v6183 = vshrl.u32 %v5966, 16
        %v6185 = vrot.slane %v6183, 4
        %v6186 = vshll.u32 %v5966, 16
        %v6188 = vrot.slane %v6186, 5
        %v6189 = vor.u32 %v6185, %v6188
        %v6190 = vrot.slane %v6189, 4
        %v6192 = vshll.u32 %v5967, 16
        %v6194 = vrot.slane %v6192, 5
        %v6195 = vsel %vm1057, %v6190, %v6194
        %v6196 = vshrl.u32 %v5967, 16
        %v6198 = vrot.slane %v6196, 4
        %v6199 = vor.u32 %v6198, %v6194
        %v6200 = vrot.slane %v6199, 4
        %v6202 = vshll.u32 %v5968, 16
        %v6204 = vrot.slane %v6202, 5
        %v6205 = vsel %vm1057, %v6200, %v6204
        %v6207 = vshrl.u32 %v5969, 16
        %v6209 = vrot.slane %v6207, 4
        %v6210 = vshll.u32 %v5969, 16
        %v6212 = vrot.slane %v6210, 5
        %v6213 = vor.u32 %v6209, %v6212
        %v6214 = vrot.slane %v6213, 4
        %v6216 = vshll.u32 %v5970, 16
        %v6218 = vrot.slane %v6216, 5
        %v6219 = vsel %vm1057, %v6214, %v6218
        %v6220 = vshrl.u32 %v5970, 16
        %v6222 = vrot.slane %v6220, 4
        %v6223 = vor.u32 %v6222, %v6218
        %v6224 = vrot.slane %v6223, 4
        %v6226 = vshll.u32 %v5971, 16
        %v6228 = vrot.slane %v6226, 5
        %v6229 = vsel %vm1057, %v6224, %v6228
        %v6231 = vshrl.u32 %v5972, 16
        %v6233 = vrot.slane %v6231, 4
        %v6234 = vshll.u32 %v5972, 16
        %v6236 = vrot.slane %v6234, 5
        %v6237 = vor.u32 %v6233, %v6236
        %v6238 = vrot.slane %v6237, 4
        %v6240 = vshll.u32 %v5973, 16
        %v6242 = vrot.slane %v6240, 5
        %v6243 = vsel %vm1057, %v6238, %v6242
        %v6244 = vshrl.u32 %v5973, 16
        %v6246 = vrot.slane %v6244, 4
        %v6247 = vor.u32 %v6246, %v6242
        %v6248 = vrot.slane %v6247, 4
        %v6250 = vshll.u32 %v5974, 16
        %v6252 = vrot.slane %v6250, 5
        %v6253 = vsel %vm1057, %v6248, %v6252
        %v6255 = vshrl.u32 %v5975, 16
        %v6257 = vrot.slane %v6255, 4
        %v6258 = vshll.u32 %v5975, 16
        %v6260 = vrot.slane %v6258, 5
        %v6261 = vor.u32 %v6257, %v6260
        %v6262 = vrot.slane %v6261, 4
        %v6264 = vshll.u32 %v5976, 16
        %v6266 = vrot.slane %v6264, 5
        %v6267 = vsel %vm1057, %v6262, %v6266
        %v6268 = vshrl.u32 %v5976, 16
        %v6270 = vrot.slane %v6268, 4
        %v6271 = vor.u32 %v6270, %v6266
        %v6272 = vrot.slane %v6271, 4
        %v6274 = vshll.u32 %v5977, 16
        %v6276 = vrot.slane %v6274, 5
        %v6277 = vsel %vm1057, %v6272, %v6276
        %v6279 = vshrl.u32 %v5978, 16
        %v6281 = vrot.slane %v6279, 4
        %v6282 = vshll.u32 %v5978, 16
        %v6284 = vrot.slane %v6282, 5
        %v6285 = vor.u32 %v6281, %v6284
        %v6286 = vrot.slane %v6285, 4
        %v6288 = vshll.u32 %v5979, 16
        %v6290 = vrot.slane %v6288, 5
        %v6291 = vsel %vm1057, %v6286, %v6290
        %v6292 = vshrl.u32 %v5979, 16
        %v6294 = vrot.slane %v6292, 4
        %v6295 = vor.u32 %v6294, %v6290
        %v6296 = vrot.slane %v6295, 4
        %v6298 = vshll.u32 %v5980, 16
        %v6300 = vrot.slane %v6298, 5
        %v6301 = vsel %vm1057, %v6296, %v6300
        %v6303 = vshrl.u32 %v5981, 16
        %v6305 = vrot.slane %v6303, 4
        %v6306 = vshll.u32 %v5981, 16
        %v6308 = vrot.slane %v6306, 5
        %v6309 = vor.u32 %v6305, %v6308
        %v6310 = vrot.slane %v6309, 4
        %v6312 = vshll.u32 %v5982, 16
        %v6314 = vrot.slane %v6312, 5
        %v6315 = vsel %vm1057, %v6310, %v6314
        %v6316 = vshrl.u32 %v5982, 16
        %v6318 = vrot.slane %v6316, 4
        %v6319 = vor.u32 %v6318, %v6314
        %v6320 = vrot.slane %v6319, 4
        %v6322 = vshll.u32 %v5983, 16
        %v6324 = vrot.slane %v6322, 5
        %v6325 = vsel %vm1057, %v6320, %v6324
        %v6327 = vshrl.u32 %v5984, 16
        %v6329 = vrot.slane %v6327, 4
        %v6330 = vshll.u32 %v5984, 16
        %v6332 = vrot.slane %v6330, 5
        %v6333 = vor.u32 %v6329, %v6332
        %v6334 = vrot.slane %v6333, 4
        %v6336 = vshll.u32 %v5985, 16
        %v6338 = vrot.slane %v6336, 5
        %v6339 = vsel %vm1057, %v6334, %v6338
        %v6340 = vshrl.u32 %v5985, 16
        %v6342 = vrot.slane %v6340, 4
        %v6343 = vor.u32 %v6342, %v6338
        %v6344 = vrot.slane %v6343, 4
        %v6346 = vshll.u32 %v5986, 16
        %v6348 = vrot.slane %v6346, 5
        %v6349 = vsel %vm1057, %v6344, %v6348
        %v6351 = vshrl.u32 %v5987, 16
        %v6353 = vrot.slane %v6351, 4
        %v6354 = vshll.u32 %v5987, 16
        %v6356 = vrot.slane %v6354, 5
        %v6357 = vor.u32 %v6353, %v6356
        %v6358 = vrot.slane %v6357, 4
        %v6360 = vshll.u32 %v5988, 16
        %v6362 = vrot.slane %v6360, 5
        %v6363 = vsel %vm1057, %v6358, %v6362
        %v6364 = vshrl.u32 %v5988, 16
        %v6366 = vrot.slane %v6364, 4
        %v6367 = vor.u32 %v6366, %v6362
        %v6368 = vrot.slane %v6367, 4
        %v6370 = vshll.u32 %v5989, 16
        %v6372 = vrot.slane %v6370, 5
        %v6373 = vsel %vm1057, %v6368, %v6372
        %v6374 = vunpack.c.l.b16 %v6003
        %v6375 = vunpack.c.l.b16 %v6013
        %v6376 = vunpack.c.l.b16 %v6027
        %v6377 = vunpack.c.l.b16 %v6037
        %v6378 = vunpack.c.l.b16 %v6051
        %v6379 = vunpack.c.l.b16 %v6061
        %v6380 = vunpack.c.l.b16 %v6075
        %v6381 = vunpack.c.l.b16 %v6085
        %v6382 = vunpack.c.l.b16 %v6099
        %v6383 = vunpack.c.l.b16 %v6109
        %v6384 = vunpack.c.l.b16 %v6123
        %v6385 = vunpack.c.l.b16 %v6133
        %v6386 = vunpack.c.l.b16 %v6147
        %v6387 = vunpack.c.l.b16 %v6157
        %v6388 = vunpack.c.l.b16 %v6171
        %v6389 = vunpack.c.l.b16 %v6181
        %v6390 = vunpack.c.l.b16 %v6195
        %v6391 = vunpack.c.l.b16 %v6205
        %v6392 = vunpack.c.l.b16 %v6219
        %v6393 = vunpack.c.l.b16 %v6229
        %v6394 = vunpack.c.l.b16 %v6243
        %v6395 = vunpack.c.l.b16 %v6253
        %v6396 = vunpack.c.l.b16 %v6267
        %v6397 = vunpack.c.l.b16 %v6277
        %v6398 = vunpack.c.l.b16 %v6291
        %v6399 = vunpack.c.l.b16 %v6301
        %v6400 = vunpack.c.l.b16 %v6315
        %v6401 = vunpack.c.l.b16 %v6325
        %v6402 = vunpack.c.l.b16 %v6339
        %v6403 = vunpack.c.l.b16 %v6349
        %v6404 = vunpack.c.l.b16 %v6363
        %v6405 = vunpack.c.l.b16 %v6373
        %v6406 = vpack.c.b16 %v6375, %v6374
        %v6407 = vpack.c.b16 %v6377, %v6376
        %v6408 = vpack.c.b16 %v6379, %v6378
        %v6409 = vpack.c.b16 %v6381, %v6380
        %v6410 = vpack.c.b16 %v6383, %v6382
        %v6411 = vpack.c.b16 %v6385, %v6384
        %v6412 = vpack.c.b16 %v6387, %v6386
        %v6413 = vpack.c.b16 %v6389, %v6388
        %v6414 = vpack.c.b16 %v6391, %v6390
        %v6415 = vpack.c.b16 %v6393, %v6392
        %v6416 = vpack.c.b16 %v6395, %v6394
        %v6417 = vpack.c.b16 %v6397, %v6396
        %v6418 = vpack.c.b16 %v6399, %v6398
        %v6419 = vpack.c.b16 %v6401, %v6400
        %v6420 = vpack.c.b16 %v6403, %v6402
        %v6421 = vpack.c.b16 %v6405, %v6404
        %6438 = vst [vmem:[#allocation3 + $0x8] sm:$0xff] %v6406
        %6439 = vst [vmem:[#allocation3 + $0x50] sm:$0xff] %v6407
        %6440 = vst [vmem:[#allocation3 + $0x98] sm:$0xff] %v6408
        %6441 = vst [vmem:[#allocation3 + $0xe0] sm:$0xff] %v6409
        %6442 = vst [vmem:[#allocation3 + $0x128] sm:$0xff] %v6410
        %6443 = vst [vmem:[#allocation3 + $0x170] sm:$0xff] %v6411
        %6444 = vst [vmem:[#allocation3 + $0x1b8] sm:$0xff] %v6412
        %6445 = vst [vmem:[#allocation3 + $0x200] sm:$0xff] %v6413
        %6446 = vst [vmem:[#allocation3 + $0x248] sm:$0xff] %v6414
        %6447 = vst [vmem:[#allocation3 + $0x290] sm:$0xff] %v6415
        %6448 = vst [vmem:[#allocation3 + $0x2d8] sm:$0xff] %v6416
        %6449 = vst [vmem:[#allocation3 + $0x320] sm:$0xff] %v6417
        %6450 = vst [vmem:[#allocation3 + $0x368] sm:$0xff] %v6418
        %6451 = vst [vmem:[#allocation3 + $0x3b0] sm:$0xff] %v6419
        %6452 = vst [vmem:[#allocation3 + $0x3f8] sm:$0xff] %v6420
        %6453 = vst [vmem:[#allocation3 + $0x440] sm:$0xff] %v6421
        %v6454 = vld [vmem:[#allocation2] sm:$0xe]
        %v6455 = vld [vmem:[#allocation2 + $0x4] sm:$0xf]
        %v6456 = vld [vmem:[#allocation2 + $0x8] sm:$0x1]
        %v6457 = vld [vmem:[#allocation2 + $0xc] sm:$0xe]
        %v6458 = vld [vmem:[#allocation2 + $0x10] sm:$0xf]
        %v6459 = vld [vmem:[#allocation2 + $0x14] sm:$0x1]
        %v6460 = vld [vmem:[#allocation2 + $0x18] sm:$0xe]
        %v6461 = vld [vmem:[#allocation2 + $0x1c] sm:$0xf]
        %v6462 = vld [vmem:[#allocation2 + $0x20] sm:$0x1]
        %v6463 = vld [vmem:[#allocation2 + $0x24] sm:$0xe]
        %v6464 = vld [vmem:[#allocation2 + $0x28] sm:$0xf]
        %v6465 = vld [vmem:[#allocation2 + $0x2c] sm:$0x1]
        %v6466 = vld [vmem:[#allocation2 + $0x30] sm:$0xe]
        %v6467 = vld [vmem:[#allocation2 + $0x34] sm:$0xf]
        %v6468 = vld [vmem:[#allocation2 + $0x38] sm:$0x1]
        %v6469 = vld [vmem:[#allocation2 + $0x3c] sm:$0xe]
        %v6470 = vld [vmem:[#allocation2 + $0x40] sm:$0xf]
        %v6471 = vld [vmem:[#allocation2 + $0x44] sm:$0x1]
        %v6472 = vld [vmem:[#allocation2 + $0x48] sm:$0xe]
        %v6473 = vld [vmem:[#allocation2 + $0x4c] sm:$0xf]
        %v6474 = vld [vmem:[#allocation2 + $0x50] sm:$0x1]
        %v6475 = vld [vmem:[#allocation2 + $0x54] sm:$0xe]
        %v6476 = vld [vmem:[#allocation2 + $0x58] sm:$0xf]
        %v6477 = vld [vmem:[#allocation2 + $0x5c] sm:$0x1]
        %v6478 = vld [vmem:[#allocation2 + $0x60] sm:$0xe]
        %v6479 = vld [vmem:[#allocation2 + $0x64] sm:$0xf]
        %v6480 = vld [vmem:[#allocation2 + $0x68] sm:$0x1]
        %v6481 = vld [vmem:[#allocation2 + $0x6c] sm:$0xe]
        %v6482 = vld [vmem:[#allocation2 + $0x70] sm:$0xf]
        %v6483 = vld [vmem:[#allocation2 + $0x74] sm:$0x1]
        %v6484 = vld [vmem:[#allocation2 + $0x78] sm:$0xe]
        %v6485 = vld [vmem:[#allocation2 + $0x7c] sm:$0xf]
        %v6486 = vld [vmem:[#allocation2 + $0x80] sm:$0x1]
        %v6487 = vld [vmem:[#allocation2 + $0x84] sm:$0xe]
        %v6488 = vld [vmem:[#allocation2 + $0x88] sm:$0xf]
        %v6489 = vld [vmem:[#allocation2 + $0x8c] sm:$0x1]
        %v6490 = vld [vmem:[#allocation2 + $0x90] sm:$0xe]
        %v6491 = vld [vmem:[#allocation2 + $0x94] sm:$0xf]
        %v6492 = vld [vmem:[#allocation2 + $0x98] sm:$0x1]
        %v6493 = vld [vmem:[#allocation2 + $0x9c] sm:$0xe]
        %v6494 = vld [vmem:[#allocation2 + $0xa0] sm:$0xf]
        %v6495 = vld [vmem:[#allocation2 + $0xa4] sm:$0x1]
        %v6496 = vld [vmem:[#allocation2 + $0xa8] sm:$0xe]
        %v6497 = vld [vmem:[#allocation2 + $0xac] sm:$0xf]
        %v6498 = vld [vmem:[#allocation2 + $0xb0] sm:$0x1]
        %v6499 = vld [vmem:[#allocation2 + $0xb4] sm:$0xe]
        %v6500 = vld [vmem:[#allocation2 + $0xb8] sm:$0xf]
        %v6501 = vld [vmem:[#allocation2 + $0xbc] sm:$0x1]
        %v6550 = vrot.slane %v6454, 5
        %v6551 = vrot.slane %v6550, 4
        %v6552 = vrot.slane %v6455, 5
        %v6553 = vsel %vm1620, %v6551, %v6552
        %v6554 = vrot.slane %v6552, 4
        %v6555 = vrot.slane %v6456, 5
        %v6556 = vsel %vm1620, %v6554, %v6555
        %v6557 = vrot.slane %v6457, 5
        %v6558 = vrot.slane %v6557, 4
        %v6559 = vrot.slane %v6458, 5
        %v6560 = vsel %vm1620, %v6558, %v6559
        %v6561 = vrot.slane %v6559, 4
        %v6562 = vrot.slane %v6459, 5
        %v6563 = vsel %vm1620, %v6561, %v6562
        %v6564 = vrot.slane %v6460, 5
        %v6565 = vrot.slane %v6564, 4
        %v6566 = vrot.slane %v6461, 5
        %v6567 = vsel %vm1620, %v6565, %v6566
        %v6568 = vrot.slane %v6566, 4
        %v6569 = vrot.slane %v6462, 5
        %v6570 = vsel %vm1620, %v6568, %v6569
        %v6571 = vrot.slane %v6463, 5
        %v6572 = vrot.slane %v6571, 4
        %v6573 = vrot.slane %v6464, 5
        %v6574 = vsel %vm1620, %v6572, %v6573
        %v6575 = vrot.slane %v6573, 4
        %v6576 = vrot.slane %v6465, 5
        %v6577 = vsel %vm1620, %v6575, %v6576
        %v6578 = vrot.slane %v6466, 5
        %v6579 = vrot.slane %v6578, 4
        %v6580 = vrot.slane %v6467, 5
        %v6581 = vsel %vm1620, %v6579, %v6580
        %v6582 = vrot.slane %v6580, 4
        %v6583 = vrot.slane %v6468, 5
        %v6584 = vsel %vm1620, %v6582, %v6583
        %v6585 = vrot.slane %v6469, 5
        %v6586 = vrot.slane %v6585, 4
        %v6587 = vrot.slane %v6470, 5
        %v6588 = vsel %vm1620, %v6586, %v6587
        %v6589 = vrot.slane %v6587, 4
        %v6590 = vrot.slane %v6471, 5
        %v6591 = vsel %vm1620, %v6589, %v6590
        %v6592 = vrot.slane %v6472, 5
        %v6593 = vrot.slane %v6592, 4
        %v6594 = vrot.slane %v6473, 5
        %v6595 = vsel %vm1620, %v6593, %v6594
        %v6596 = vrot.slane %v6594, 4
        %v6597 = vrot.slane %v6474, 5
        %v6598 = vsel %vm1620, %v6596, %v6597
        %v6599 = vrot.slane %v6475, 5
        %v6600 = vrot.slane %v6599, 4
        %v6601 = vrot.slane %v6476, 5
        %v6602 = vsel %vm1620, %v6600, %v6601
        %v6603 = vrot.slane %v6601, 4
        %v6604 = vrot.slane %v6477, 5
        %v6605 = vsel %vm1620, %v6603, %v6604
        %v6606 = vrot.slane %v6478, 5
        %v6607 = vrot.slane %v6606, 4
        %v6608 = vrot.slane %v6479, 5
        %v6609 = vsel %vm1620, %v6607, %v6608
        %v6610 = vrot.slane %v6608, 4
        %v6611 = vrot.slane %v6480, 5
        %v6612 = vsel %vm1620, %v6610, %v6611
        %v6613 = vrot.slane %v6481, 5
        %v6614 = vrot.slane %v6613, 4
        %v6615 = vrot.slane %v6482, 5
        %v6616 = vsel %vm1620, %v6614, %v6615
        %v6617 = vrot.slane %v6615, 4
        %v6618 = vrot.slane %v6483, 5
        %v6619 = vsel %vm1620, %v6617, %v6618
        %v6620 = vrot.slane %v6484, 5
        %v6621 = vrot.slane %v6620, 4
        %v6622 = vrot.slane %v6485, 5
        %v6623 = vsel %vm1620, %v6621, %v6622
        %v6624 = vrot.slane %v6622, 4
        %v6625 = vrot.slane %v6486, 5
        %v6626 = vsel %vm1620, %v6624, %v6625
        %v6627 = vrot.slane %v6487, 5
        %v6628 = vrot.slane %v6627, 4
        %v6629 = vrot.slane %v6488, 5
        %v6630 = vsel %vm1620, %v6628, %v6629
        %v6631 = vrot.slane %v6629, 4
        %v6632 = vrot.slane %v6489, 5
        %v6633 = vsel %vm1620, %v6631, %v6632
        %v6634 = vrot.slane %v6490, 5
        %v6635 = vrot.slane %v6634, 4
        %v6636 = vrot.slane %v6491, 5
        %v6637 = vsel %vm1620, %v6635, %v6636
        %v6638 = vrot.slane %v6636, 4
        %v6639 = vrot.slane %v6492, 5
        %v6640 = vsel %vm1620, %v6638, %v6639
        %v6641 = vrot.slane %v6493, 5
        %v6642 = vrot.slane %v6641, 4
        %v6643 = vrot.slane %v6494, 5
        %v6644 = vsel %vm1620, %v6642, %v6643
        %v6645 = vrot.slane %v6643, 4
        %v6646 = vrot.slane %v6495, 5
        %v6647 = vsel %vm1620, %v6645, %v6646
        %v6648 = vrot.slane %v6496, 5
        %v6649 = vrot.slane %v6648, 4
        %v6650 = vrot.slane %v6497, 5
        %v6651 = vsel %vm1620, %v6649, %v6650
        %v6652 = vrot.slane %v6650, 4
        %v6653 = vrot.slane %v6498, 5
        %v6654 = vsel %vm1620, %v6652, %v6653
        %v6655 = vrot.slane %v6499, 5
        %v6656 = vrot.slane %v6655, 4
        %v6657 = vrot.slane %v6500, 5
        %v6658 = vsel %vm1620, %v6656, %v6657
        %v6659 = vrot.slane %v6657, 4
        %v6660 = vrot.slane %v6501, 5
        %v6661 = vsel %vm1620, %v6659, %v6660
        %v6662 = vunpack.c.l.b16 %v6553
        %v6663 = vunpack.c.l.b16 %v6556
        %v6664 = vunpack.c.l.b16 %v6560
        %v6665 = vunpack.c.l.b16 %v6563
        %v6666 = vunpack.c.l.b16 %v6567
        %v6667 = vunpack.c.l.b16 %v6570
        %v6668 = vunpack.c.l.b16 %v6574
        %v6669 = vunpack.c.l.b16 %v6577
        %v6670 = vunpack.c.l.b16 %v6581
        %v6671 = vunpack.c.l.b16 %v6584
        %v6672 = vunpack.c.l.b16 %v6588
        %v6673 = vunpack.c.l.b16 %v6591
        %v6674 = vunpack.c.l.b16 %v6595
        %v6675 = vunpack.c.l.b16 %v6598
        %v6676 = vunpack.c.l.b16 %v6602
        %v6677 = vunpack.c.l.b16 %v6605
        %v6678 = vunpack.c.l.b16 %v6609
        %v6679 = vunpack.c.l.b16 %v6612
        %v6680 = vunpack.c.l.b16 %v6616
        %v6681 = vunpack.c.l.b16 %v6619
        %v6682 = vunpack.c.l.b16 %v6623
        %v6683 = vunpack.c.l.b16 %v6626
        %v6684 = vunpack.c.l.b16 %v6630
        %v6685 = vunpack.c.l.b16 %v6633
        %v6686 = vunpack.c.l.b16 %v6637
        %v6687 = vunpack.c.l.b16 %v6640
        %v6688 = vunpack.c.l.b16 %v6644
        %v6689 = vunpack.c.l.b16 %v6647
        %v6690 = vunpack.c.l.b16 %v6651
        %v6691 = vunpack.c.l.b16 %v6654
        %v6692 = vunpack.c.l.b16 %v6658
        %v6693 = vunpack.c.l.b16 %v6661
        %v6694 = vpack.c.b16 %v6663, %v6662
        %v6695 = vpack.c.b16 %v6665, %v6664
        %v6696 = vpack.c.b16 %v6667, %v6666
        %v6697 = vpack.c.b16 %v6669, %v6668
        %v6698 = vpack.c.b16 %v6671, %v6670
        %v6699 = vpack.c.b16 %v6673, %v6672
        %v6700 = vpack.c.b16 %v6675, %v6674
        %v6701 = vpack.c.b16 %v6677, %v6676
        %v6702 = vpack.c.b16 %v6679, %v6678
        %v6703 = vpack.c.b16 %v6681, %v6680
        %v6704 = vpack.c.b16 %v6683, %v6682
        %v6705 = vpack.c.b16 %v6685, %v6684
        %v6706 = vpack.c.b16 %v6687, %v6686
        %v6707 = vpack.c.b16 %v6689, %v6688
        %v6708 = vpack.c.b16 %v6691, %v6690
        %v6709 = vpack.c.b16 %v6693, %v6692
        %6726 = vst [vmem:[#allocation3 + $0x10] sm:$0xff] %v6694
        %6727 = vst [vmem:[#allocation3 + $0x58] sm:$0xff] %v6695
        %6728 = vst [vmem:[#allocation3 + $0xa0] sm:$0xff] %v6696
        %6729 = vst [vmem:[#allocation3 + $0xe8] sm:$0xff] %v6697
        %6730 = vst [vmem:[#allocation3 + $0x130] sm:$0xff] %v6698
        %6731 = vst [vmem:[#allocation3 + $0x178] sm:$0xff] %v6699
        %6732 = vst [vmem:[#allocation3 + $0x1c0] sm:$0xff] %v6700
        %6733 = vst [vmem:[#allocation3 + $0x208] sm:$0xff] %v6701
        %6734 = vst [vmem:[#allocation3 + $0x250] sm:$0xff] %v6702
        %6735 = vst [vmem:[#allocation3 + $0x298] sm:$0xff] %v6703
        %6736 = vst [vmem:[#allocation3 + $0x2e0] sm:$0xff] %v6704
        %6737 = vst [vmem:[#allocation3 + $0x328] sm:$0xff] %v6705
        %6738 = vst [vmem:[#allocation3 + $0x370] sm:$0xff] %v6706
        %6739 = vst [vmem:[#allocation3 + $0x3b8] sm:$0xff] %v6707
        %6740 = vst [vmem:[#allocation3 + $0x400] sm:$0xff] %v6708
        %6741 = vst [vmem:[#allocation3 + $0x448] sm:$0xff] %v6709
        %v6742 = vld [vmem:[%s744] sm:$0xf]
        %v6743 = vld [vmem:[%s744 + $0x4] sm:$0xf]
        %v6744 = vld [vmem:[%s744 + $0xc] sm:$0xf]
        %v6745 = vld [vmem:[%s744 + $0x10] sm:$0xf]
        %v6746 = vld [vmem:[%s744 + $0x18] sm:$0xf]
        %v6747 = vld [vmem:[%s744 + $0x1c] sm:$0xf]
        %v6748 = vld [vmem:[%s744 + $0x24] sm:$0xf]
        %v6749 = vld [vmem:[%s744 + $0x28] sm:$0xf]
        %v6750 = vld [vmem:[%s744 + $0x30] sm:$0xf]
        %v6751 = vld [vmem:[%s744 + $0x34] sm:$0xf]
        %v6752 = vld [vmem:[%s744 + $0x3c] sm:$0xf]
        %v6753 = vld [vmem:[%s744 + $0x40] sm:$0xf]
        %v6754 = vld [vmem:[%s744 + $0x48] sm:$0xf]
        %v6755 = vld [vmem:[%s744 + $0x4c] sm:$0xf]
        %v6756 = vld [vmem:[%s744 + $0x54] sm:$0xf]
        %v6757 = vld [vmem:[%s744 + $0x58] sm:$0xf]
        %v6758 = vld [vmem:[%s744 + $0x60] sm:$0xf]
        %v6759 = vld [vmem:[%s744 + $0x64] sm:$0xf]
        %v6760 = vld [vmem:[%s744 + $0x6c] sm:$0xf]
        %v6761 = vld [vmem:[%s744 + $0x70] sm:$0xf]
        %v6762 = vld [vmem:[%s744 + $0x78] sm:$0xf]
        %v6763 = vld [vmem:[%s744 + $0x7c] sm:$0xf]
        %v6764 = vld [vmem:[%s744 + $0x84] sm:$0xf]
        %v6765 = vld [vmem:[%s744 + $0x88] sm:$0xf]
        %v6766 = vld [vmem:[%s744 + $0x90] sm:$0xf]
        %v6767 = vld [vmem:[%s744 + $0x94] sm:$0xf]
        %v6768 = vld [vmem:[%s744 + $0x9c] sm:$0xf]
        %v6769 = vld [vmem:[%s744 + $0xa0] sm:$0xf]
        %v6770 = vld [vmem:[%s744 + $0xa8] sm:$0xf]
        %v6771 = vld [vmem:[%s744 + $0xac] sm:$0xf]
        %v6772 = vld [vmem:[%s744 + $0xb4] sm:$0xf]
        %v6773 = vld [vmem:[%s744 + $0xb8] sm:$0xf]
        %v6806 = vunpack.c.l.b16 %v6742
        %v6807 = vunpack.c.l.b16 %v6743
        %v6808 = vunpack.c.l.b16 %v6744
        %v6809 = vunpack.c.l.b16 %v6745
        %v6810 = vunpack.c.l.b16 %v6746
        %v6811 = vunpack.c.l.b16 %v6747
        %v6812 = vunpack.c.l.b16 %v6748
        %v6813 = vunpack.c.l.b16 %v6749
        %v6814 = vunpack.c.l.b16 %v6750
        %v6815 = vunpack.c.l.b16 %v6751
        %v6816 = vunpack.c.l.b16 %v6752
        %v6817 = vunpack.c.l.b16 %v6753
        %v6818 = vunpack.c.l.b16 %v6754
        %v6819 = vunpack.c.l.b16 %v6755
        %v6820 = vunpack.c.l.b16 %v6756
        %v6821 = vunpack.c.l.b16 %v6757
        %v6822 = vunpack.c.l.b16 %v6758
        %v6823 = vunpack.c.l.b16 %v6759
        %v6824 = vunpack.c.l.b16 %v6760
        %v6825 = vunpack.c.l.b16 %v6761
        %v6826 = vunpack.c.l.b16 %v6762
        %v6827 = vunpack.c.l.b16 %v6763
        %v6828 = vunpack.c.l.b16 %v6764
        %v6829 = vunpack.c.l.b16 %v6765
        %v6830 = vunpack.c.l.b16 %v6766
        %v6831 = vunpack.c.l.b16 %v6767
        %v6832 = vunpack.c.l.b16 %v6768
        %v6833 = vunpack.c.l.b16 %v6769
        %v6834 = vunpack.c.l.b16 %v6770
        %v6835 = vunpack.c.l.b16 %v6771
        %v6836 = vunpack.c.l.b16 %v6772
        %v6837 = vunpack.c.l.b16 %v6773
        %v6838 = vpack.c.b16 %v6807, %v6806
        %v6839 = vpack.c.b16 %v6809, %v6808
        %v6840 = vpack.c.b16 %v6811, %v6810
        %v6841 = vpack.c.b16 %v6813, %v6812
        %v6842 = vpack.c.b16 %v6815, %v6814
        %v6843 = vpack.c.b16 %v6817, %v6816
        %v6844 = vpack.c.b16 %v6819, %v6818
        %v6845 = vpack.c.b16 %v6821, %v6820
        %v6846 = vpack.c.b16 %v6823, %v6822
        %v6847 = vpack.c.b16 %v6825, %v6824
        %v6848 = vpack.c.b16 %v6827, %v6826
        %v6849 = vpack.c.b16 %v6829, %v6828
        %v6850 = vpack.c.b16 %v6831, %v6830
        %v6851 = vpack.c.b16 %v6833, %v6832
        %v6852 = vpack.c.b16 %v6835, %v6834
        %v6853 = vpack.c.b16 %v6837, %v6836
        %6870 = vst [vmem:[#allocation3 + $0x18] sm:$0xff] %v6838
        %6871 = vst [vmem:[#allocation3 + $0x60] sm:$0xff] %v6839
        %6872 = vst [vmem:[#allocation3 + $0xa8] sm:$0xff] %v6840
        %6873 = vst [vmem:[#allocation3 + $0xf0] sm:$0xff] %v6841
        %6874 = vst [vmem:[#allocation3 + $0x138] sm:$0xff] %v6842
        %6875 = vst [vmem:[#allocation3 + $0x180] sm:$0xff] %v6843
        %6876 = vst [vmem:[#allocation3 + $0x1c8] sm:$0xff] %v6844
        %6877 = vst [vmem:[#allocation3 + $0x210] sm:$0xff] %v6845
        %6878 = vst [vmem:[#allocation3 + $0x258] sm:$0xff] %v6846
        %6879 = vst [vmem:[#allocation3 + $0x2a0] sm:$0xff] %v6847
        %6880 = vst [vmem:[#allocation3 + $0x2e8] sm:$0xff] %v6848
        %6881 = vst [vmem:[#allocation3 + $0x330] sm:$0xff] %v6849
        %6882 = vst [vmem:[#allocation3 + $0x378] sm:$0xff] %v6850
        %6883 = vst [vmem:[#allocation3 + $0x3c0] sm:$0xff] %v6851
        %6884 = vst [vmem:[#allocation3 + $0x408] sm:$0xff] %v6852
        %6885 = vst [vmem:[#allocation3 + $0x450] sm:$0xff] %v6853
        %v6886 = vld [vmem:[%s744] sm:$0xf]
        %v6887 = vld [vmem:[%s744 + $0x4] sm:$0xf]
        %v6888 = vld [vmem:[%s744 + $0x8] sm:$0x1]
        %v6889 = vld [vmem:[%s744 + $0xc] sm:$0xf]
        %v6890 = vld [vmem:[%s744 + $0x10] sm:$0xf]
        %v6891 = vld [vmem:[%s744 + $0x14] sm:$0x1]
        %v6892 = vld [vmem:[%s744 + $0x18] sm:$0xf]
        %v6893 = vld [vmem:[%s744 + $0x1c] sm:$0xf]
        %v6894 = vld [vmem:[%s744 + $0x20] sm:$0x1]
        %v6895 = vld [vmem:[%s744 + $0x24] sm:$0xf]
        %v6896 = vld [vmem:[%s744 + $0x28] sm:$0xf]
        %v6897 = vld [vmem:[%s744 + $0x2c] sm:$0x1]
        %v6898 = vld [vmem:[%s744 + $0x30] sm:$0xf]
        %v6899 = vld [vmem:[%s744 + $0x34] sm:$0xf]
        %v6900 = vld [vmem:[%s744 + $0x38] sm:$0x1]
        %v6901 = vld [vmem:[%s744 + $0x3c] sm:$0xf]
        %v6902 = vld [vmem:[%s744 + $0x40] sm:$0xf]
        %v6903 = vld [vmem:[%s744 + $0x44] sm:$0x1]
        %v6904 = vld [vmem:[%s744 + $0x48] sm:$0xf]
        %v6905 = vld [vmem:[%s744 + $0x4c] sm:$0xf]
        %v6906 = vld [vmem:[%s744 + $0x50] sm:$0x1]
        %v6907 = vld [vmem:[%s744 + $0x54] sm:$0xf]
        %v6908 = vld [vmem:[%s744 + $0x58] sm:$0xf]
        %v6909 = vld [vmem:[%s744 + $0x5c] sm:$0x1]
        %v6910 = vld [vmem:[%s744 + $0x60] sm:$0xf]
        %v6911 = vld [vmem:[%s744 + $0x64] sm:$0xf]
        %v6912 = vld [vmem:[%s744 + $0x68] sm:$0x1]
        %v6913 = vld [vmem:[%s744 + $0x6c] sm:$0xf]
        %v6914 = vld [vmem:[%s744 + $0x70] sm:$0xf]
        %v6915 = vld [vmem:[%s744 + $0x74] sm:$0x1]
        %v6916 = vld [vmem:[%s744 + $0x78] sm:$0xf]
        %v6917 = vld [vmem:[%s744 + $0x7c] sm:$0xf]
        %v6918 = vld [vmem:[%s744 + $0x80] sm:$0x1]
        %v6919 = vld [vmem:[%s744 + $0x84] sm:$0xf]
        %v6920 = vld [vmem:[%s744 + $0x88] sm:$0xf]
        %v6921 = vld [vmem:[%s744 + $0x8c] sm:$0x1]
        %v6922 = vld [vmem:[%s744 + $0x90] sm:$0xf]
        %v6923 = vld [vmem:[%s744 + $0x94] sm:$0xf]
        %v6924 = vld [vmem:[%s744 + $0x98] sm:$0x1]
        %v6925 = vld [vmem:[%s744 + $0x9c] sm:$0xf]
        %v6926 = vld [vmem:[%s744 + $0xa0] sm:$0xf]
        %v6927 = vld [vmem:[%s744 + $0xa4] sm:$0x1]
        %v6928 = vld [vmem:[%s744 + $0xa8] sm:$0xf]
        %v6929 = vld [vmem:[%s744 + $0xac] sm:$0xf]
        %v6930 = vld [vmem:[%s744 + $0xb0] sm:$0x1]
        %v6931 = vld [vmem:[%s744 + $0xb4] sm:$0xf]
        %v6932 = vld [vmem:[%s744 + $0xb8] sm:$0xf]
        %v6933 = vld [vmem:[%s744 + $0xbc] sm:$0x1]
        %v6935 = vshrl.u32 %v6886, 16
        %v6937 = vrot.slane %v6935, 4
        %v6938 = vshll.u32 %v6886, 16
        %v6940 = vrot.slane %v6938, 5
        %v6941 = vor.u32 %v6937, %v6940
        %v6942 = vrot.slane %v6941, 4
        %v6944 = vshll.u32 %v6887, 16
        %v6946 = vrot.slane %v6944, 5
        %v6947 = vsel %vm1057, %v6942, %v6946
        %v6948 = vshrl.u32 %v6887, 16
        %v6950 = vrot.slane %v6948, 4
        %v6951 = vor.u32 %v6950, %v6946
        %v6952 = vrot.slane %v6951, 4
        %v6954 = vshll.u32 %v6888, 16
        %v6956 = vrot.slane %v6954, 5
        %v6957 = vsel %vm1057, %v6952, %v6956
        %v6959 = vshrl.u32 %v6889, 16
        %v6961 = vrot.slane %v6959, 4
        %v6962 = vshll.u32 %v6889, 16
        %v6964 = vrot.slane %v6962, 5
        %v6965 = vor.u32 %v6961, %v6964
        %v6966 = vrot.slane %v6965, 4
        %v6968 = vshll.u32 %v6890, 16
        %v6970 = vrot.slane %v6968, 5
        %v6971 = vsel %vm1057, %v6966, %v6970
        %v6972 = vshrl.u32 %v6890, 16
        %v6974 = vrot.slane %v6972, 4
        %v6975 = vor.u32 %v6974, %v6970
        %v6976 = vrot.slane %v6975, 4
        %v6978 = vshll.u32 %v6891, 16
        %v6980 = vrot.slane %v6978, 5
        %v6981 = vsel %vm1057, %v6976, %v6980
        %v6983 = vshrl.u32 %v6892, 16
        %v6985 = vrot.slane %v6983, 4
        %v6986 = vshll.u32 %v6892, 16
        %v6988 = vrot.slane %v6986, 5
        %v6989 = vor.u32 %v6985, %v6988
        %v6990 = vrot.slane %v6989, 4
        %v6992 = vshll.u32 %v6893, 16
        %v6994 = vrot.slane %v6992, 5
        %v6995 = vsel %vm1057, %v6990, %v6994
        %v6996 = vshrl.u32 %v6893, 16
        %v6998 = vrot.slane %v6996, 4
        %v6999 = vor.u32 %v6998, %v6994
        %v7000 = vrot.slane %v6999, 4
        %v7002 = vshll.u32 %v6894, 16
        %v7004 = vrot.slane %v7002, 5
        %v7005 = vsel %vm1057, %v7000, %v7004
        %v7007 = vshrl.u32 %v6895, 16
        %v7009 = vrot.slane %v7007, 4
        %v7010 = vshll.u32 %v6895, 16
        %v7012 = vrot.slane %v7010, 5
        %v7013 = vor.u32 %v7009, %v7012
        %v7014 = vrot.slane %v7013, 4
        %v7016 = vshll.u32 %v6896, 16
        %v7018 = vrot.slane %v7016, 5
        %v7019 = vsel %vm1057, %v7014, %v7018
        %v7020 = vshrl.u32 %v6896, 16
        %v7022 = vrot.slane %v7020, 4
        %v7023 = vor.u32 %v7022, %v7018
        %v7024 = vrot.slane %v7023, 4
        %v7026 = vshll.u32 %v6897, 16
        %v7028 = vrot.slane %v7026, 5
        %v7029 = vsel %vm1057, %v7024, %v7028
        %v7031 = vshrl.u32 %v6898, 16
        %v7033 = vrot.slane %v7031, 4
        %v7034 = vshll.u32 %v6898, 16
        %v7036 = vrot.slane %v7034, 5
        %v7037 = vor.u32 %v7033, %v7036
        %v7038 = vrot.slane %v7037, 4
        %v7040 = vshll.u32 %v6899, 16
        %v7042 = vrot.slane %v7040, 5
        %v7043 = vsel %vm1057, %v7038, %v7042
        %v7044 = vshrl.u32 %v6899, 16
        %v7046 = vrot.slane %v7044, 4
        %v7047 = vor.u32 %v7046, %v7042
        %v7048 = vrot.slane %v7047, 4
        %v7050 = vshll.u32 %v6900, 16
        %v7052 = vrot.slane %v7050, 5
        %v7053 = vsel %vm1057, %v7048, %v7052
        %v7055 = vshrl.u32 %v6901, 16
        %v7057 = vrot.slane %v7055, 4
        %v7058 = vshll.u32 %v6901, 16
        %v7060 = vrot.slane %v7058, 5
        %v7061 = vor.u32 %v7057, %v7060
        %v7062 = vrot.slane %v7061, 4
        %v7064 = vshll.u32 %v6902, 16
        %v7066 = vrot.slane %v7064, 5
        %v7067 = vsel %vm1057, %v7062, %v7066
        %v7068 = vshrl.u32 %v6902, 16
        %v7070 = vrot.slane %v7068, 4
        %v7071 = vor.u32 %v7070, %v7066
        %v7072 = vrot.slane %v7071, 4
        %v7074 = vshll.u32 %v6903, 16
        %v7076 = vrot.slane %v7074, 5
        %v7077 = vsel %vm1057, %v7072, %v7076
        %v7079 = vshrl.u32 %v6904, 16
        %v7081 = vrot.slane %v7079, 4
        %v7082 = vshll.u32 %v6904, 16
        %v7084 = vrot.slane %v7082, 5
        %v7085 = vor.u32 %v7081, %v7084
        %v7086 = vrot.slane %v7085, 4
        %v7088 = vshll.u32 %v6905, 16
        %v7090 = vrot.slane %v7088, 5
        %v7091 = vsel %vm1057, %v7086, %v7090
        %v7092 = vshrl.u32 %v6905, 16
        %v7094 = vrot.slane %v7092, 4
        %v7095 = vor.u32 %v7094, %v7090
        %v7096 = vrot.slane %v7095, 4
        %v7098 = vshll.u32 %v6906, 16
        %v7100 = vrot.slane %v7098, 5
        %v7101 = vsel %vm1057, %v7096, %v7100
        %v7103 = vshrl.u32 %v6907, 16
        %v7105 = vrot.slane %v7103, 4
        %v7106 = vshll.u32 %v6907, 16
        %v7108 = vrot.slane %v7106, 5
        %v7109 = vor.u32 %v7105, %v7108
        %v7110 = vrot.slane %v7109, 4
        %v7112 = vshll.u32 %v6908, 16
        %v7114 = vrot.slane %v7112, 5
        %v7115 = vsel %vm1057, %v7110, %v7114
        %v7116 = vshrl.u32 %v6908, 16
        %v7118 = vrot.slane %v7116, 4
        %v7119 = vor.u32 %v7118, %v7114
        %v7120 = vrot.slane %v7119, 4
        %v7122 = vshll.u32 %v6909, 16
        %v7124 = vrot.slane %v7122, 5
        %v7125 = vsel %vm1057, %v7120, %v7124
        %v7127 = vshrl.u32 %v6910, 16
        %v7129 = vrot.slane %v7127, 4
        %v7130 = vshll.u32 %v6910, 16
        %v7132 = vrot.slane %v7130, 5
        %v7133 = vor.u32 %v7129, %v7132
        %v7134 = vrot.slane %v7133, 4
        %v7136 = vshll.u32 %v6911, 16
        %v7138 = vrot.slane %v7136, 5
        %v7139 = vsel %vm1057, %v7134, %v7138
        %v7140 = vshrl.u32 %v6911, 16
        %v7142 = vrot.slane %v7140, 4
        %v7143 = vor.u32 %v7142, %v7138
        %v7144 = vrot.slane %v7143, 4
        %v7146 = vshll.u32 %v6912, 16
        %v7148 = vrot.slane %v7146, 5
        %v7149 = vsel %vm1057, %v7144, %v7148
        %v7151 = vshrl.u32 %v6913, 16
        %v7153 = vrot.slane %v7151, 4
        %v7154 = vshll.u32 %v6913, 16
        %v7156 = vrot.slane %v7154, 5
        %v7157 = vor.u32 %v7153, %v7156
        %v7158 = vrot.slane %v7157, 4
        %v7160 = vshll.u32 %v6914, 16
        %v7162 = vrot.slane %v7160, 5
        %v7163 = vsel %vm1057, %v7158, %v7162
        %v7164 = vshrl.u32 %v6914, 16
        %v7166 = vrot.slane %v7164, 4
        %v7167 = vor.u32 %v7166, %v7162
        %v7168 = vrot.slane %v7167, 4
        %v7170 = vshll.u32 %v6915, 16
        %v7172 = vrot.slane %v7170, 5
        %v7173 = vsel %vm1057, %v7168, %v7172
        %v7175 = vshrl.u32 %v6916, 16
        %v7177 = vrot.slane %v7175, 4
        %v7178 = vshll.u32 %v6916, 16
        %v7180 = vrot.slane %v7178, 5
        %v7181 = vor.u32 %v7177, %v7180
        %v7182 = vrot.slane %v7181, 4
        %v7184 = vshll.u32 %v6917, 16
        %v7186 = vrot.slane %v7184, 5
        %v7187 = vsel %vm1057, %v7182, %v7186
        %v7188 = vshrl.u32 %v6917, 16
        %v7190 = vrot.slane %v7188, 4
        %v7191 = vor.u32 %v7190, %v7186
        %v7192 = vrot.slane %v7191, 4
        %v7194 = vshll.u32 %v6918, 16
        %v7196 = vrot.slane %v7194, 5
        %v7197 = vsel %vm1057, %v7192, %v7196
        %v7199 = vshrl.u32 %v6919, 16
        %v7201 = vrot.slane %v7199, 4
        %v7202 = vshll.u32 %v6919, 16
        %v7204 = vrot.slane %v7202, 5
        %v7205 = vor.u32 %v7201, %v7204
        %v7206 = vrot.slane %v7205, 4
        %v7208 = vshll.u32 %v6920, 16
        %v7210 = vrot.slane %v7208, 5
        %v7211 = vsel %vm1057, %v7206, %v7210
        %v7212 = vshrl.u32 %v6920, 16
        %v7214 = vrot.slane %v7212, 4
        %v7215 = vor.u32 %v7214, %v7210
        %v7216 = vrot.slane %v7215, 4
        %v7218 = vshll.u32 %v6921, 16
        %v7220 = vrot.slane %v7218, 5
        %v7221 = vsel %vm1057, %v7216, %v7220
        %v7223 = vshrl.u32 %v6922, 16
        %v7225 = vrot.slane %v7223, 4
        %v7226 = vshll.u32 %v6922, 16
        %v7228 = vrot.slane %v7226, 5
        %v7229 = vor.u32 %v7225, %v7228
        %v7230 = vrot.slane %v7229, 4
        %v7232 = vshll.u32 %v6923, 16
        %v7234 = vrot.slane %v7232, 5
        %v7235 = vsel %vm1057, %v7230, %v7234
        %v7236 = vshrl.u32 %v6923, 16
        %v7238 = vrot.slane %v7236, 4
        %v7239 = vor.u32 %v7238, %v7234
        %v7240 = vrot.slane %v7239, 4
        %v7242 = vshll.u32 %v6924, 16
        %v7244 = vrot.slane %v7242, 5
        %v7245 = vsel %vm1057, %v7240, %v7244
        %v7247 = vshrl.u32 %v6925, 16
        %v7249 = vrot.slane %v7247, 4
        %v7250 = vshll.u32 %v6925, 16
        %v7252 = vrot.slane %v7250, 5
        %v7253 = vor.u32 %v7249, %v7252
        %v7254 = vrot.slane %v7253, 4
        %v7256 = vshll.u32 %v6926, 16
        %v7258 = vrot.slane %v7256, 5
        %v7259 = vsel %vm1057, %v7254, %v7258
        %v7260 = vshrl.u32 %v6926, 16
        %v7262 = vrot.slane %v7260, 4
        %v7263 = vor.u32 %v7262, %v7258
        %v7264 = vrot.slane %v7263, 4
        %v7266 = vshll.u32 %v6927, 16
        %v7268 = vrot.slane %v7266, 5
        %v7269 = vsel %vm1057, %v7264, %v7268
        %v7271 = vshrl.u32 %v6928, 16
        %v7273 = vrot.slane %v7271, 4
        %v7274 = vshll.u32 %v6928, 16
        %v7276 = vrot.slane %v7274, 5
        %v7277 = vor.u32 %v7273, %v7276
        %v7278 = vrot.slane %v7277, 4
        %v7280 = vshll.u32 %v6929, 16
        %v7282 = vrot.slane %v7280, 5
        %v7283 = vsel %vm1057, %v7278, %v7282
        %v7284 = vshrl.u32 %v6929, 16
        %v7286 = vrot.slane %v7284, 4
        %v7287 = vor.u32 %v7286, %v7282
        %v7288 = vrot.slane %v7287, 4
        %v7290 = vshll.u32 %v6930, 16
        %v7292 = vrot.slane %v7290, 5
        %v7293 = vsel %vm1057, %v7288, %v7292
        %v7295 = vshrl.u32 %v6931, 16
        %v7297 = vrot.slane %v7295, 4
        %v7298 = vshll.u32 %v6931, 16
        %v7300 = vrot.slane %v7298, 5
        %v7301 = vor.u32 %v7297, %v7300
        %v7302 = vrot.slane %v7301, 4
        %v7304 = vshll.u32 %v6932, 16
        %v7306 = vrot.slane %v7304, 5
        %v7307 = vsel %vm1057, %v7302, %v7306
        %v7308 = vshrl.u32 %v6932, 16
        %v7310 = vrot.slane %v7308, 4
        %v7311 = vor.u32 %v7310, %v7306
        %v7312 = vrot.slane %v7311, 4
        %v7314 = vshll.u32 %v6933, 16
        %v7316 = vrot.slane %v7314, 5
        %v7317 = vsel %vm1057, %v7312, %v7316
        %v7318 = vunpack.c.l.b16 %v6947
        %v7319 = vunpack.c.l.b16 %v6957
        %v7320 = vunpack.c.l.b16 %v6971
        %v7321 = vunpack.c.l.b16 %v6981
        %v7322 = vunpack.c.l.b16 %v6995
        %v7323 = vunpack.c.l.b16 %v7005
        %v7324 = vunpack.c.l.b16 %v7019
        %v7325 = vunpack.c.l.b16 %v7029
        %v7326 = vunpack.c.l.b16 %v7043
        %v7327 = vunpack.c.l.b16 %v7053
        %v7328 = vunpack.c.l.b16 %v7067
        %v7329 = vunpack.c.l.b16 %v7077
        %v7330 = vunpack.c.l.b16 %v7091
        %v7331 = vunpack.c.l.b16 %v7101
        %v7332 = vunpack.c.l.b16 %v7115
        %v7333 = vunpack.c.l.b16 %v7125
        %v7334 = vunpack.c.l.b16 %v7139
        %v7335 = vunpack.c.l.b16 %v7149
        %v7336 = vunpack.c.l.b16 %v7163
        %v7337 = vunpack.c.l.b16 %v7173
        %v7338 = vunpack.c.l.b16 %v7187
        %v7339 = vunpack.c.l.b16 %v7197
        %v7340 = vunpack.c.l.b16 %v7211
        %v7341 = vunpack.c.l.b16 %v7221
        %v7342 = vunpack.c.l.b16 %v7235
        %v7343 = vunpack.c.l.b16 %v7245
        %v7344 = vunpack.c.l.b16 %v7259
        %v7345 = vunpack.c.l.b16 %v7269
        %v7346 = vunpack.c.l.b16 %v7283
        %v7347 = vunpack.c.l.b16 %v7293
        %v7348 = vunpack.c.l.b16 %v7307
        %v7349 = vunpack.c.l.b16 %v7317
        %v7350 = vpack.c.b16 %v7319, %v7318
        %v7351 = vpack.c.b16 %v7321, %v7320
        %v7352 = vpack.c.b16 %v7323, %v7322
        %v7353 = vpack.c.b16 %v7325, %v7324
        %v7354 = vpack.c.b16 %v7327, %v7326
        %v7355 = vpack.c.b16 %v7329, %v7328
        %v7356 = vpack.c.b16 %v7331, %v7330
        %v7357 = vpack.c.b16 %v7333, %v7332
        %v7358 = vpack.c.b16 %v7335, %v7334
        %v7359 = vpack.c.b16 %v7337, %v7336
        %v7360 = vpack.c.b16 %v7339, %v7338
        %v7361 = vpack.c.b16 %v7341, %v7340
        %v7362 = vpack.c.b16 %v7343, %v7342
        %v7363 = vpack.c.b16 %v7345, %v7344
        %v7364 = vpack.c.b16 %v7347, %v7346
        %v7365 = vpack.c.b16 %v7349, %v7348
        %7382 = vst [vmem:[#allocation3 + $0x20] sm:$0xff] %v7350
        %7383 = vst [vmem:[#allocation3 + $0x68] sm:$0xff] %v7351
        %7384 = vst [vmem:[#allocation3 + $0xb0] sm:$0xff] %v7352
        %7385 = vst [vmem:[#allocation3 + $0xf8] sm:$0xff] %v7353
        %7386 = vst [vmem:[#allocation3 + $0x140] sm:$0xff] %v7354
        %7387 = vst [vmem:[#allocation3 + $0x188] sm:$0xff] %v7355
        %7388 = vst [vmem:[#allocation3 + $0x1d0] sm:$0xff] %v7356
        %7389 = vst [vmem:[#allocation3 + $0x218] sm:$0xff] %v7357
        %7390 = vst [vmem:[#allocation3 + $0x260] sm:$0xff] %v7358
        %7391 = vst [vmem:[#allocation3 + $0x2a8] sm:$0xff] %v7359
        %7392 = vst [vmem:[#allocation3 + $0x2f0] sm:$0xff] %v7360
        %7393 = vst [vmem:[#allocation3 + $0x338] sm:$0xff] %v7361
        %7394 = vst [vmem:[#allocation3 + $0x380] sm:$0xff] %v7362
        %7395 = vst [vmem:[#allocation3 + $0x3c8] sm:$0xff] %v7363
        %7396 = vst [vmem:[#allocation3 + $0x410] sm:$0xff] %v7364
        %7397 = vst [vmem:[#allocation3 + $0x458] sm:$0xff] %v7365
        %v7398 = vld [vmem:[%s744] sm:$0xe]
        %v7399 = vld [vmem:[%s744 + $0x4] sm:$0xf]
        %v7400 = vld [vmem:[%s744 + $0x8] sm:$0x1]
        %v7401 = vld [vmem:[%s744 + $0xc] sm:$0xe]
        %v7402 = vld [vmem:[%s744 + $0x10] sm:$0xf]
        %v7403 = vld [vmem:[%s744 + $0x14] sm:$0x1]
        %v7404 = vld [vmem:[%s744 + $0x18] sm:$0xe]
        %v7405 = vld [vmem:[%s744 + $0x1c] sm:$0xf]
        %v7406 = vld [vmem:[%s744 + $0x20] sm:$0x1]
        %v7407 = vld [vmem:[%s744 + $0x24] sm:$0xe]
        %v7408 = vld [vmem:[%s744 + $0x28] sm:$0xf]
        %v7409 = vld [vmem:[%s744 + $0x2c] sm:$0x1]
        %v7410 = vld [vmem:[%s744 + $0x30] sm:$0xe]
        %v7411 = vld [vmem:[%s744 + $0x34] sm:$0xf]
        %v7412 = vld [vmem:[%s744 + $0x38] sm:$0x1]
        %v7413 = vld [vmem:[%s744 + $0x3c] sm:$0xe]
        %v7414 = vld [vmem:[%s744 + $0x40] sm:$0xf]
        %v7415 = vld [vmem:[%s744 + $0x44] sm:$0x1]
        %v7416 = vld [vmem:[%s744 + $0x48] sm:$0xe]
        %v7417 = vld [vmem:[%s744 + $0x4c] sm:$0xf]
        %v7418 = vld [vmem:[%s744 + $0x50] sm:$0x1]
        %v7419 = vld [vmem:[%s744 + $0x54] sm:$0xe]
        %v7420 = vld [vmem:[%s744 + $0x58] sm:$0xf]
        %v7421 = vld [vmem:[%s744 + $0x5c] sm:$0x1]
        %v7422 = vld [vmem:[%s744 + $0x60] sm:$0xe]
        %v7423 = vld [vmem:[%s744 + $0x64] sm:$0xf]
        %v7424 = vld [vmem:[%s744 + $0x68] sm:$0x1]
        %v7425 = vld [vmem:[%s744 + $0x6c] sm:$0xe]
        %v7426 = vld [vmem:[%s744 + $0x70] sm:$0xf]
        %v7427 = vld [vmem:[%s744 + $0x74] sm:$0x1]
        %v7428 = vld [vmem:[%s744 + $0x78] sm:$0xe]
        %v7429 = vld [vmem:[%s744 + $0x7c] sm:$0xf]
        %v7430 = vld [vmem:[%s744 + $0x80] sm:$0x1]
        %v7431 = vld [vmem:[%s744 + $0x84] sm:$0xe]
        %v7432 = vld [vmem:[%s744 + $0x88] sm:$0xf]
        %v7433 = vld [vmem:[%s744 + $0x8c] sm:$0x1]
        %v7434 = vld [vmem:[%s744 + $0x90] sm:$0xe]
        %v7435 = vld [vmem:[%s744 + $0x94] sm:$0xf]
        %v7436 = vld [vmem:[%s744 + $0x98] sm:$0x1]
        %v7437 = vld [vmem:[%s744 + $0x9c] sm:$0xe]
        %v7438 = vld [vmem:[%s744 + $0xa0] sm:$0xf]
        %v7439 = vld [vmem:[%s744 + $0xa4] sm:$0x1]
        %v7440 = vld [vmem:[%s744 + $0xa8] sm:$0xe]
        %v7441 = vld [vmem:[%s744 + $0xac] sm:$0xf]
        %v7442 = vld [vmem:[%s744 + $0xb0] sm:$0x1]
        %v7443 = vld [vmem:[%s744 + $0xb4] sm:$0xe]
        %v7444 = vld [vmem:[%s744 + $0xb8] sm:$0xf]
        %v7445 = vld [vmem:[%s744 + $0xbc] sm:$0x1]
        %v7494 = vrot.slane %v7398, 5
        %v7495 = vrot.slane %v7494, 4
        %v7496 = vrot.slane %v7399, 5
        %v7497 = vsel %vm1620, %v7495, %v7496
        %v7498 = vrot.slane %v7496, 4
        %v7499 = vrot.slane %v7400, 5
        %v7500 = vsel %vm1620, %v7498, %v7499
        %v7501 = vrot.slane %v7401, 5
        %v7502 = vrot.slane %v7501, 4
        %v7503 = vrot.slane %v7402, 5
        %v7504 = vsel %vm1620, %v7502, %v7503
        %v7505 = vrot.slane %v7503, 4
        %v7506 = vrot.slane %v7403, 5
        %v7507 = vsel %vm1620, %v7505, %v7506
        %v7508 = vrot.slane %v7404, 5
        %v7509 = vrot.slane %v7508, 4
        %v7510 = vrot.slane %v7405, 5
        %v7511 = vsel %vm1620, %v7509, %v7510
        %v7512 = vrot.slane %v7510, 4
        %v7513 = vrot.slane %v7406, 5
        %v7514 = vsel %vm1620, %v7512, %v7513
        %v7515 = vrot.slane %v7407, 5
        %v7516 = vrot.slane %v7515, 4
        %v7517 = vrot.slane %v7408, 5
        %v7518 = vsel %vm1620, %v7516, %v7517
        %v7519 = vrot.slane %v7517, 4
        %v7520 = vrot.slane %v7409, 5
        %v7521 = vsel %vm1620, %v7519, %v7520
        %v7522 = vrot.slane %v7410, 5
        %v7523 = vrot.slane %v7522, 4
        %v7524 = vrot.slane %v7411, 5
        %v7525 = vsel %vm1620, %v7523, %v7524
        %v7526 = vrot.slane %v7524, 4
        %v7527 = vrot.slane %v7412, 5
        %v7528 = vsel %vm1620, %v7526, %v7527
        %v7529 = vrot.slane %v7413, 5
        %v7530 = vrot.slane %v7529, 4
        %v7531 = vrot.slane %v7414, 5
        %v7532 = vsel %vm1620, %v7530, %v7531
        %v7533 = vrot.slane %v7531, 4
        %v7534 = vrot.slane %v7415, 5
        %v7535 = vsel %vm1620, %v7533, %v7534
        %v7536 = vrot.slane %v7416, 5
        %v7537 = vrot.slane %v7536, 4
        %v7538 = vrot.slane %v7417, 5
        %v7539 = vsel %vm1620, %v7537, %v7538
        %v7540 = vrot.slane %v7538, 4
        %v7541 = vrot.slane %v7418, 5
        %v7542 = vsel %vm1620, %v7540, %v7541
        %v7543 = vrot.slane %v7419, 5
        %v7544 = vrot.slane %v7543, 4
        %v7545 = vrot.slane %v7420, 5
        %v7546 = vsel %vm1620, %v7544, %v7545
        %v7547 = vrot.slane %v7545, 4
        %v7548 = vrot.slane %v7421, 5
        %v7549 = vsel %vm1620, %v7547, %v7548
        %v7550 = vrot.slane %v7422, 5
        %v7551 = vrot.slane %v7550, 4
        %v7552 = vrot.slane %v7423, 5
        %v7553 = vsel %vm1620, %v7551, %v7552
        %v7554 = vrot.slane %v7552, 4
        %v7555 = vrot.slane %v7424, 5
        %v7556 = vsel %vm1620, %v7554, %v7555
        %v7557 = vrot.slane %v7425, 5
        %v7558 = vrot.slane %v7557, 4
        %v7559 = vrot.slane %v7426, 5
        %v7560 = vsel %vm1620, %v7558, %v7559
        %v7561 = vrot.slane %v7559, 4
        %v7562 = vrot.slane %v7427, 5
        %v7563 = vsel %vm1620, %v7561, %v7562
        %v7564 = vrot.slane %v7428, 5
        %v7565 = vrot.slane %v7564, 4
        %v7566 = vrot.slane %v7429, 5
        %v7567 = vsel %vm1620, %v7565, %v7566
        %v7568 = vrot.slane %v7566, 4
        %v7569 = vrot.slane %v7430, 5
        %v7570 = vsel %vm1620, %v7568, %v7569
        %v7571 = vrot.slane %v7431, 5
        %v7572 = vrot.slane %v7571, 4
        %v7573 = vrot.slane %v7432, 5
        %v7574 = vsel %vm1620, %v7572, %v7573
        %v7575 = vrot.slane %v7573, 4
        %v7576 = vrot.slane %v7433, 5
        %v7577 = vsel %vm1620, %v7575, %v7576
        %v7578 = vrot.slane %v7434, 5
        %v7579 = vrot.slane %v7578, 4
        %v7580 = vrot.slane %v7435, 5
        %v7581 = vsel %vm1620, %v7579, %v7580
        %v7582 = vrot.slane %v7580, 4
        %v7583 = vrot.slane %v7436, 5
        %v7584 = vsel %vm1620, %v7582, %v7583
        %v7585 = vrot.slane %v7437, 5
        %v7586 = vrot.slane %v7585, 4
        %v7587 = vrot.slane %v7438, 5
        %v7588 = vsel %vm1620, %v7586, %v7587
        %v7589 = vrot.slane %v7587, 4
        %v7590 = vrot.slane %v7439, 5
        %v7591 = vsel %vm1620, %v7589, %v7590
        %v7592 = vrot.slane %v7440, 5
        %v7593 = vrot.slane %v7592, 4
        %v7594 = vrot.slane %v7441, 5
        %v7595 = vsel %vm1620, %v7593, %v7594
        %v7596 = vrot.slane %v7594, 4
        %v7597 = vrot.slane %v7442, 5
        %v7598 = vsel %vm1620, %v7596, %v7597
        %v7599 = vrot.slane %v7443, 5
        %v7600 = vrot.slane %v7599, 4
        %v7601 = vrot.slane %v7444, 5
        %v7602 = vsel %vm1620, %v7600, %v7601
        %v7603 = vrot.slane %v7601, 4
        %v7604 = vrot.slane %v7445, 5
        %v7605 = vsel %vm1620, %v7603, %v7604
        %v7606 = vunpack.c.l.b16 %v7497
        %v7607 = vunpack.c.l.b16 %v7500
        %v7608 = vunpack.c.l.b16 %v7504
        %v7609 = vunpack.c.l.b16 %v7507
        %v7610 = vunpack.c.l.b16 %v7511
        %v7611 = vunpack.c.l.b16 %v7514
        %v7612 = vunpack.c.l.b16 %v7518
        %v7613 = vunpack.c.l.b16 %v7521
        %v7614 = vunpack.c.l.b16 %v7525
        %v7615 = vunpack.c.l.b16 %v7528
        %v7616 = vunpack.c.l.b16 %v7532
        %v7617 = vunpack.c.l.b16 %v7535
        %v7618 = vunpack.c.l.b16 %v7539
        %v7619 = vunpack.c.l.b16 %v7542
        %v7620 = vunpack.c.l.b16 %v7546
        %v7621 = vunpack.c.l.b16 %v7549
        %v7622 = vunpack.c.l.b16 %v7553
        %v7623 = vunpack.c.l.b16 %v7556
        %v7624 = vunpack.c.l.b16 %v7560
        %v7625 = vunpack.c.l.b16 %v7563
        %v7626 = vunpack.c.l.b16 %v7567
        %v7627 = vunpack.c.l.b16 %v7570
        %v7628 = vunpack.c.l.b16 %v7574
        %v7629 = vunpack.c.l.b16 %v7577
        %v7630 = vunpack.c.l.b16 %v7581
        %v7631 = vunpack.c.l.b16 %v7584
        %v7632 = vunpack.c.l.b16 %v7588
        %v7633 = vunpack.c.l.b16 %v7591
        %v7634 = vunpack.c.l.b16 %v7595
        %v7635 = vunpack.c.l.b16 %v7598
        %v7636 = vunpack.c.l.b16 %v7602
        %v7637 = vunpack.c.l.b16 %v7605
        %v7638 = vpack.c.b16 %v7607, %v7606
        %v7639 = vpack.c.b16 %v7609, %v7608
        %v7640 = vpack.c.b16 %v7611, %v7610
        %v7641 = vpack.c.b16 %v7613, %v7612
        %v7642 = vpack.c.b16 %v7615, %v7614
        %v7643 = vpack.c.b16 %v7617, %v7616
        %v7644 = vpack.c.b16 %v7619, %v7618
        %v7645 = vpack.c.b16 %v7621, %v7620
        %v7646 = vpack.c.b16 %v7623, %v7622
        %v7647 = vpack.c.b16 %v7625, %v7624
        %v7648 = vpack.c.b16 %v7627, %v7626
        %v7649 = vpack.c.b16 %v7629, %v7628
        %v7650 = vpack.c.b16 %v7631, %v7630
        %v7651 = vpack.c.b16 %v7633, %v7632
        %v7652 = vpack.c.b16 %v7635, %v7634
        %v7653 = vpack.c.b16 %v7637, %v7636
        %7670 = vst [vmem:[#allocation3 + $0x28] sm:$0xff] %v7638
        %7671 = vst [vmem:[#allocation3 + $0x70] sm:$0xff] %v7639
        %7672 = vst [vmem:[#allocation3 + $0xb8] sm:$0xff] %v7640
        %7673 = vst [vmem:[#allocation3 + $0x100] sm:$0xff] %v7641
        %7674 = vst [vmem:[#allocation3 + $0x148] sm:$0xff] %v7642
        %7675 = vst [vmem:[#allocation3 + $0x190] sm:$0xff] %v7643
        %7676 = vst [vmem:[#allocation3 + $0x1d8] sm:$0xff] %v7644
        %7677 = vst [vmem:[#allocation3 + $0x220] sm:$0xff] %v7645
        %7678 = vst [vmem:[#allocation3 + $0x268] sm:$0xff] %v7646
        %7679 = vst [vmem:[#allocation3 + $0x2b0] sm:$0xff] %v7647
        %7680 = vst [vmem:[#allocation3 + $0x2f8] sm:$0xff] %v7648
        %7681 = vst [vmem:[#allocation3 + $0x340] sm:$0xff] %v7649
        %7682 = vst [vmem:[#allocation3 + $0x388] sm:$0xff] %v7650
        %7683 = vst [vmem:[#allocation3 + $0x3d0] sm:$0xff] %v7651
        %7684 = vst [vmem:[#allocation3 + $0x418] sm:$0xff] %v7652
        %7685 = vst [vmem:[#allocation3 + $0x460] sm:$0xff] %v7653
        %v7686 = vld [vmem:[%s2757] sm:$0xf]
        %v7687 = vld [vmem:[%s2757 + $0x4] sm:$0xf]
        %v7688 = vld [vmem:[%s2757 + $0xc] sm:$0xf]
        %v7689 = vld [vmem:[%s2757 + $0x10] sm:$0xf]
        %v7690 = vld [vmem:[%s2757 + $0x18] sm:$0xf]
        %v7691 = vld [vmem:[%s2757 + $0x1c] sm:$0xf]
        %v7692 = vld [vmem:[%s2757 + $0x24] sm:$0xf]
        %v7693 = vld [vmem:[%s2757 + $0x28] sm:$0xf]
        %v7694 = vld [vmem:[%s2757 + $0x30] sm:$0xf]
        %v7695 = vld [vmem:[%s2757 + $0x34] sm:$0xf]
        %v7696 = vld [vmem:[%s2757 + $0x3c] sm:$0xf]
        %v7697 = vld [vmem:[%s2757 + $0x40] sm:$0xf]
        %v7698 = vld [vmem:[%s2757 + $0x48] sm:$0xf]
        %v7699 = vld [vmem:[%s2757 + $0x4c] sm:$0xf]
        %v7700 = vld [vmem:[%s2757 + $0x54] sm:$0xf]
        %v7701 = vld [vmem:[%s2757 + $0x58] sm:$0xf]
        %v7702 = vld [vmem:[%s2757 + $0x60] sm:$0xf]
        %v7703 = vld [vmem:[%s2757 + $0x64] sm:$0xf]
        %v7704 = vld [vmem:[%s2757 + $0x6c] sm:$0xf]
        %v7705 = vld [vmem:[%s2757 + $0x70] sm:$0xf]
        %v7706 = vld [vmem:[%s2757 + $0x78] sm:$0xf]
        %v7707 = vld [vmem:[%s2757 + $0x7c] sm:$0xf]
        %v7708 = vld [vmem:[%s2757 + $0x84] sm:$0xf]
        %v7709 = vld [vmem:[%s2757 + $0x88] sm:$0xf]
        %v7710 = vld [vmem:[%s2757 + $0x90] sm:$0xf]
        %v7711 = vld [vmem:[%s2757 + $0x94] sm:$0xf]
        %v7712 = vld [vmem:[%s2757 + $0x9c] sm:$0xf]
        %v7713 = vld [vmem:[%s2757 + $0xa0] sm:$0xf]
        %v7714 = vld [vmem:[%s2757 + $0xa8] sm:$0xf]
        %v7715 = vld [vmem:[%s2757 + $0xac] sm:$0xf]
        %v7716 = vld [vmem:[%s2757 + $0xb4] sm:$0xf]
        %v7717 = vld [vmem:[%s2757 + $0xb8] sm:$0xf]
        %v7750 = vunpack.c.l.b16 %v7686
        %v7751 = vunpack.c.l.b16 %v7687
        %v7752 = vunpack.c.l.b16 %v7688
        %v7753 = vunpack.c.l.b16 %v7689
        %v7754 = vunpack.c.l.b16 %v7690
        %v7755 = vunpack.c.l.b16 %v7691
        %v7756 = vunpack.c.l.b16 %v7692
        %v7757 = vunpack.c.l.b16 %v7693
        %v7758 = vunpack.c.l.b16 %v7694
        %v7759 = vunpack.c.l.b16 %v7695
        %v7760 = vunpack.c.l.b16 %v7696
        %v7761 = vunpack.c.l.b16 %v7697
        %v7762 = vunpack.c.l.b16 %v7698
        %v7763 = vunpack.c.l.b16 %v7699
        %v7764 = vunpack.c.l.b16 %v7700
        %v7765 = vunpack.c.l.b16 %v7701
        %v7766 = vunpack.c.l.b16 %v7702
        %v7767 = vunpack.c.l.b16 %v7703
        %v7768 = vunpack.c.l.b16 %v7704
        %v7769 = vunpack.c.l.b16 %v7705
        %v7770 = vunpack.c.l.b16 %v7706
        %v7771 = vunpack.c.l.b16 %v7707
        %v7772 = vunpack.c.l.b16 %v7708
        %v7773 = vunpack.c.l.b16 %v7709
        %v7774 = vunpack.c.l.b16 %v7710
        %v7775 = vunpack.c.l.b16 %v7711
        %v7776 = vunpack.c.l.b16 %v7712
        %v7777 = vunpack.c.l.b16 %v7713
        %v7778 = vunpack.c.l.b16 %v7714
        %v7779 = vunpack.c.l.b16 %v7715
        %v7780 = vunpack.c.l.b16 %v7716
        %v7781 = vunpack.c.l.b16 %v7717
        %v7782 = vpack.c.b16 %v7751, %v7750
        %v7783 = vpack.c.b16 %v7753, %v7752
        %v7784 = vpack.c.b16 %v7755, %v7754
        %v7785 = vpack.c.b16 %v7757, %v7756
        %v7786 = vpack.c.b16 %v7759, %v7758
        %v7787 = vpack.c.b16 %v7761, %v7760
        %v7788 = vpack.c.b16 %v7763, %v7762
        %v7789 = vpack.c.b16 %v7765, %v7764
        %v7790 = vpack.c.b16 %v7767, %v7766
        %v7791 = vpack.c.b16 %v7769, %v7768
        %v7792 = vpack.c.b16 %v7771, %v7770
        %v7793 = vpack.c.b16 %v7773, %v7772
        %v7794 = vpack.c.b16 %v7775, %v7774
        %v7795 = vpack.c.b16 %v7777, %v7776
        %v7796 = vpack.c.b16 %v7779, %v7778
        %v7797 = vpack.c.b16 %v7781, %v7780
        %7814 = vst [vmem:[#allocation3 + $0x30] sm:$0xff] %v7782
        %7815 = vst [vmem:[#allocation3 + $0x78] sm:$0xff] %v7783
        %7816 = vst [vmem:[#allocation3 + $0xc0] sm:$0xff] %v7784
        %7817 = vst [vmem:[#allocation3 + $0x108] sm:$0xff] %v7785
        %7818 = vst [vmem:[#allocation3 + $0x150] sm:$0xff] %v7786
        %7819 = vst [vmem:[#allocation3 + $0x198] sm:$0xff] %v7787
        %7820 = vst [vmem:[#allocation3 + $0x1e0] sm:$0xff] %v7788
        %7821 = vst [vmem:[#allocation3 + $0x228] sm:$0xff] %v7789
        %7822 = vst [vmem:[#allocation3 + $0x270] sm:$0xff] %v7790
        %7823 = vst [vmem:[#allocation3 + $0x2b8] sm:$0xff] %v7791
        %7824 = vst [vmem:[#allocation3 + $0x300] sm:$0xff] %v7792
        %7825 = vst [vmem:[#allocation3 + $0x348] sm:$0xff] %v7793
        %7826 = vst [vmem:[#allocation3 + $0x390] sm:$0xff] %v7794
        %7827 = vst [vmem:[#allocation3 + $0x3d8] sm:$0xff] %v7795
        %7828 = vst [vmem:[#allocation3 + $0x420] sm:$0xff] %v7796
        %7829 = vst [vmem:[#allocation3 + $0x468] sm:$0xff] %v7797
        %v7830 = vld [vmem:[%s2757] sm:$0xf]
        %v7831 = vld [vmem:[%s2757 + $0x4] sm:$0xf]
        %v7832 = vld [vmem:[%s2757 + $0x8] sm:$0x1]
        %v7833 = vld [vmem:[%s2757 + $0xc] sm:$0xf]
        %v7834 = vld [vmem:[%s2757 + $0x10] sm:$0xf]
        %v7835 = vld [vmem:[%s2757 + $0x14] sm:$0x1]
        %v7836 = vld [vmem:[%s2757 + $0x18] sm:$0xf]
        %v7837 = vld [vmem:[%s2757 + $0x1c] sm:$0xf]
        %v7838 = vld [vmem:[%s2757 + $0x20] sm:$0x1]
        %v7839 = vld [vmem:[%s2757 + $0x24] sm:$0xf]
        %v7840 = vld [vmem:[%s2757 + $0x28] sm:$0xf]
        %v7841 = vld [vmem:[%s2757 + $0x2c] sm:$0x1]
        %v7842 = vld [vmem:[%s2757 + $0x30] sm:$0xf]
        %v7843 = vld [vmem:[%s2757 + $0x34] sm:$0xf]
        %v7844 = vld [vmem:[%s2757 + $0x38] sm:$0x1]
        %v7845 = vld [vmem:[%s2757 + $0x3c] sm:$0xf]
        %v7846 = vld [vmem:[%s2757 + $0x40] sm:$0xf]
        %v7847 = vld [vmem:[%s2757 + $0x44] sm:$0x1]
        %v7848 = vld [vmem:[%s2757 + $0x48] sm:$0xf]
        %v7849 = vld [vmem:[%s2757 + $0x4c] sm:$0xf]
        %v7850 = vld [vmem:[%s2757 + $0x50] sm:$0x1]
        %v7851 = vld [vmem:[%s2757 + $0x54] sm:$0xf]
        %v7852 = vld [vmem:[%s2757 + $0x58] sm:$0xf]
        %v7853 = vld [vmem:[%s2757 + $0x5c] sm:$0x1]
        %v7854 = vld [vmem:[%s2757 + $0x60] sm:$0xf]
        %v7855 = vld [vmem:[%s2757 + $0x64] sm:$0xf]
        %v7856 = vld [vmem:[%s2757 + $0x68] sm:$0x1]
        %v7857 = vld [vmem:[%s2757 + $0x6c] sm:$0xf]
        %v7858 = vld [vmem:[%s2757 + $0x70] sm:$0xf]
        %v7859 = vld [vmem:[%s2757 + $0x74] sm:$0x1]
        %v7860 = vld [vmem:[%s2757 + $0x78] sm:$0xf]
        %v7861 = vld [vmem:[%s2757 + $0x7c] sm:$0xf]
        %v7862 = vld [vmem:[%s2757 + $0x80] sm:$0x1]
        %v7863 = vld [vmem:[%s2757 + $0x84] sm:$0xf]
        %v7864 = vld [vmem:[%s2757 + $0x88] sm:$0xf]
        %v7865 = vld [vmem:[%s2757 + $0x8c] sm:$0x1]
        %v7866 = vld [vmem:[%s2757 + $0x90] sm:$0xf]
        %v7867 = vld [vmem:[%s2757 + $0x94] sm:$0xf]
        %v7868 = vld [vmem:[%s2757 + $0x98] sm:$0x1]
        %v7869 = vld [vmem:[%s2757 + $0x9c] sm:$0xf]
        %v7870 = vld [vmem:[%s2757 + $0xa0] sm:$0xf]
        %v7871 = vld [vmem:[%s2757 + $0xa4] sm:$0x1]
        %v7872 = vld [vmem:[%s2757 + $0xa8] sm:$0xf]
        %v7873 = vld [vmem:[%s2757 + $0xac] sm:$0xf]
        %v7874 = vld [vmem:[%s2757 + $0xb0] sm:$0x1]
        %v7875 = vld [vmem:[%s2757 + $0xb4] sm:$0xf]
        %v7876 = vld [vmem:[%s2757 + $0xb8] sm:$0xf]
        %v7877 = vld [vmem:[%s2757 + $0xbc] sm:$0x1]
        %v7879 = vshrl.u32 %v7830, 16
        %v7881 = vrot.slane %v7879, 4
        %v7882 = vshll.u32 %v7830, 16
        %v7884 = vrot.slane %v7882, 5
        %v7885 = vor.u32 %v7881, %v7884
        %v7886 = vrot.slane %v7885, 4
        %v7888 = vshll.u32 %v7831, 16
        %v7890 = vrot.slane %v7888, 5
        %v7891 = vsel %vm1057, %v7886, %v7890
        %v7892 = vshrl.u32 %v7831, 16
        %v7894 = vrot.slane %v7892, 4
        %v7895 = vor.u32 %v7894, %v7890
        %v7896 = vrot.slane %v7895, 4
        %v7898 = vshll.u32 %v7832, 16
        %v7900 = vrot.slane %v7898, 5
        %v7901 = vsel %vm1057, %v7896, %v7900
        %v7903 = vshrl.u32 %v7833, 16
        %v7905 = vrot.slane %v7903, 4
        %v7906 = vshll.u32 %v7833, 16
        %v7908 = vrot.slane %v7906, 5
        %v7909 = vor.u32 %v7905, %v7908
        %v7910 = vrot.slane %v7909, 4
        %v7912 = vshll.u32 %v7834, 16
        %v7914 = vrot.slane %v7912, 5
        %v7915 = vsel %vm1057, %v7910, %v7914
        %v7916 = vshrl.u32 %v7834, 16
        %v7918 = vrot.slane %v7916, 4
        %v7919 = vor.u32 %v7918, %v7914
        %v7920 = vrot.slane %v7919, 4
        %v7922 = vshll.u32 %v7835, 16
        %v7924 = vrot.slane %v7922, 5
        %v7925 = vsel %vm1057, %v7920, %v7924
        %v7927 = vshrl.u32 %v7836, 16
        %v7929 = vrot.slane %v7927, 4
        %v7930 = vshll.u32 %v7836, 16
        %v7932 = vrot.slane %v7930, 5
        %v7933 = vor.u32 %v7929, %v7932
        %v7934 = vrot.slane %v7933, 4
        %v7936 = vshll.u32 %v7837, 16
        %v7938 = vrot.slane %v7936, 5
        %v7939 = vsel %vm1057, %v7934, %v7938
        %v7940 = vshrl.u32 %v7837, 16
        %v7942 = vrot.slane %v7940, 4
        %v7943 = vor.u32 %v7942, %v7938
        %v7944 = vrot.slane %v7943, 4
        %v7946 = vshll.u32 %v7838, 16
        %v7948 = vrot.slane %v7946, 5
        %v7949 = vsel %vm1057, %v7944, %v7948
        %v7951 = vshrl.u32 %v7839, 16
        %v7953 = vrot.slane %v7951, 4
        %v7954 = vshll.u32 %v7839, 16
        %v7956 = vrot.slane %v7954, 5
        %v7957 = vor.u32 %v7953, %v7956
        %v7958 = vrot.slane %v7957, 4
        %v7960 = vshll.u32 %v7840, 16
        %v7962 = vrot.slane %v7960, 5
        %v7963 = vsel %vm1057, %v7958, %v7962
        %v7964 = vshrl.u32 %v7840, 16
        %v7966 = vrot.slane %v7964, 4
        %v7967 = vor.u32 %v7966, %v7962
        %v7968 = vrot.slane %v7967, 4
        %v7970 = vshll.u32 %v7841, 16
        %v7972 = vrot.slane %v7970, 5
        %v7973 = vsel %vm1057, %v7968, %v7972
        %v7975 = vshrl.u32 %v7842, 16
        %v7977 = vrot.slane %v7975, 4
        %v7978 = vshll.u32 %v7842, 16
        %v7980 = vrot.slane %v7978, 5
        %v7981 = vor.u32 %v7977, %v7980
        %v7982 = vrot.slane %v7981, 4
        %v7984 = vshll.u32 %v7843, 16
        %v7986 = vrot.slane %v7984, 5
        %v7987 = vsel %vm1057, %v7982, %v7986
        %v7988 = vshrl.u32 %v7843, 16
        %v7990 = vrot.slane %v7988, 4
        %v7991 = vor.u32 %v7990, %v7986
        %v7992 = vrot.slane %v7991, 4
        %v7994 = vshll.u32 %v7844, 16
        %v7996 = vrot.slane %v7994, 5
        %v7997 = vsel %vm1057, %v7992, %v7996
        %v7999 = vshrl.u32 %v7845, 16
        %v8001 = vrot.slane %v7999, 4
        %v8002 = vshll.u32 %v7845, 16
        %v8004 = vrot.slane %v8002, 5
        %v8005 = vor.u32 %v8001, %v8004
        %v8006 = vrot.slane %v8005, 4
        %v8008 = vshll.u32 %v7846, 16
        %v8010 = vrot.slane %v8008, 5
        %v8011 = vsel %vm1057, %v8006, %v8010
        %v8012 = vshrl.u32 %v7846, 16
        %v8014 = vrot.slane %v8012, 4
        %v8015 = vor.u32 %v8014, %v8010
        %v8016 = vrot.slane %v8015, 4
        %v8018 = vshll.u32 %v7847, 16
        %v8020 = vrot.slane %v8018, 5
        %v8021 = vsel %vm1057, %v8016, %v8020
        %v8023 = vshrl.u32 %v7848, 16
        %v8025 = vrot.slane %v8023, 4
        %v8026 = vshll.u32 %v7848, 16
        %v8028 = vrot.slane %v8026, 5
        %v8029 = vor.u32 %v8025, %v8028
        %v8030 = vrot.slane %v8029, 4
        %v8032 = vshll.u32 %v7849, 16
        %v8034 = vrot.slane %v8032, 5
        %v8035 = vsel %vm1057, %v8030, %v8034
        %v8036 = vshrl.u32 %v7849, 16
        %v8038 = vrot.slane %v8036, 4
        %v8039 = vor.u32 %v8038, %v8034
        %v8040 = vrot.slane %v8039, 4
        %v8042 = vshll.u32 %v7850, 16
        %v8044 = vrot.slane %v8042, 5
        %v8045 = vsel %vm1057, %v8040, %v8044
        %v8047 = vshrl.u32 %v7851, 16
        %v8049 = vrot.slane %v8047, 4
        %v8050 = vshll.u32 %v7851, 16
        %v8052 = vrot.slane %v8050, 5
        %v8053 = vor.u32 %v8049, %v8052
        %v8054 = vrot.slane %v8053, 4
        %v8056 = vshll.u32 %v7852, 16
        %v8058 = vrot.slane %v8056, 5
        %v8059 = vsel %vm1057, %v8054, %v8058
        %v8060 = vshrl.u32 %v7852, 16
        %v8062 = vrot.slane %v8060, 4
        %v8063 = vor.u32 %v8062, %v8058
        %v8064 = vrot.slane %v8063, 4
        %v8066 = vshll.u32 %v7853, 16
        %v8068 = vrot.slane %v8066, 5
        %v8069 = vsel %vm1057, %v8064, %v8068
        %v8071 = vshrl.u32 %v7854, 16
        %v8073 = vrot.slane %v8071, 4
        %v8074 = vshll.u32 %v7854, 16
        %v8076 = vrot.slane %v8074, 5
        %v8077 = vor.u32 %v8073, %v8076
        %v8078 = vrot.slane %v8077, 4
        %v8080 = vshll.u32 %v7855, 16
        %v8082 = vrot.slane %v8080, 5
        %v8083 = vsel %vm1057, %v8078, %v8082
        %v8084 = vshrl.u32 %v7855, 16
        %v8086 = vrot.slane %v8084, 4
        %v8087 = vor.u32 %v8086, %v8082
        %v8088 = vrot.slane %v8087, 4
        %v8090 = vshll.u32 %v7856, 16
        %v8092 = vrot.slane %v8090, 5
        %v8093 = vsel %vm1057, %v8088, %v8092
        %v8095 = vshrl.u32 %v7857, 16
        %v8097 = vrot.slane %v8095, 4
        %v8098 = vshll.u32 %v7857, 16
        %v8100 = vrot.slane %v8098, 5
        %v8101 = vor.u32 %v8097, %v8100
        %v8102 = vrot.slane %v8101, 4
        %v8104 = vshll.u32 %v7858, 16
        %v8106 = vrot.slane %v8104, 5
        %v8107 = vsel %vm1057, %v8102, %v8106
        %v8108 = vshrl.u32 %v7858, 16
        %v8110 = vrot.slane %v8108, 4
        %v8111 = vor.u32 %v8110, %v8106
        %v8112 = vrot.slane %v8111, 4
        %v8114 = vshll.u32 %v7859, 16
        %v8116 = vrot.slane %v8114, 5
        %v8117 = vsel %vm1057, %v8112, %v8116
        %v8119 = vshrl.u32 %v7860, 16
        %v8121 = vrot.slane %v8119, 4
        %v8122 = vshll.u32 %v7860, 16
        %v8124 = vrot.slane %v8122, 5
        %v8125 = vor.u32 %v8121, %v8124
        %v8126 = vrot.slane %v8125, 4
        %v8128 = vshll.u32 %v7861, 16
        %v8130 = vrot.slane %v8128, 5
        %v8131 = vsel %vm1057, %v8126, %v8130
        %v8132 = vshrl.u32 %v7861, 16
        %v8134 = vrot.slane %v8132, 4
        %v8135 = vor.u32 %v8134, %v8130
        %v8136 = vrot.slane %v8135, 4
        %v8138 = vshll.u32 %v7862, 16
        %v8140 = vrot.slane %v8138, 5
        %v8141 = vsel %vm1057, %v8136, %v8140
        %v8143 = vshrl.u32 %v7863, 16
        %v8145 = vrot.slane %v8143, 4
        %v8146 = vshll.u32 %v7863, 16
        %v8148 = vrot.slane %v8146, 5
        %v8149 = vor.u32 %v8145, %v8148
        %v8150 = vrot.slane %v8149, 4
        %v8152 = vshll.u32 %v7864, 16
        %v8154 = vrot.slane %v8152, 5
        %v8155 = vsel %vm1057, %v8150, %v8154
        %v8156 = vshrl.u32 %v7864, 16
        %v8158 = vrot.slane %v8156, 4
        %v8159 = vor.u32 %v8158, %v8154
        %v8160 = vrot.slane %v8159, 4
        %v8162 = vshll.u32 %v7865, 16
        %v8164 = vrot.slane %v8162, 5
        %v8165 = vsel %vm1057, %v8160, %v8164
        %v8167 = vshrl.u32 %v7866, 16
        %v8169 = vrot.slane %v8167, 4
        %v8170 = vshll.u32 %v7866, 16
        %v8172 = vrot.slane %v8170, 5
        %v8173 = vor.u32 %v8169, %v8172
        %v8174 = vrot.slane %v8173, 4
        %v8176 = vshll.u32 %v7867, 16
        %v8178 = vrot.slane %v8176, 5
        %v8179 = vsel %vm1057, %v8174, %v8178
        %v8180 = vshrl.u32 %v7867, 16
        %v8182 = vrot.slane %v8180, 4
        %v8183 = vor.u32 %v8182, %v8178
        %v8184 = vrot.slane %v8183, 4
        %v8186 = vshll.u32 %v7868, 16
        %v8188 = vrot.slane %v8186, 5
        %v8189 = vsel %vm1057, %v8184, %v8188
        %v8191 = vshrl.u32 %v7869, 16
        %v8193 = vrot.slane %v8191, 4
        %v8194 = vshll.u32 %v7869, 16
        %v8196 = vrot.slane %v8194, 5
        %v8197 = vor.u32 %v8193, %v8196
        %v8198 = vrot.slane %v8197, 4
        %v8200 = vshll.u32 %v7870, 16
        %v8202 = vrot.slane %v8200, 5
        %v8203 = vsel %vm1057, %v8198, %v8202
        %v8204 = vshrl.u32 %v7870, 16
        %v8206 = vrot.slane %v8204, 4
        %v8207 = vor.u32 %v8206, %v8202
        %v8208 = vrot.slane %v8207, 4
        %v8210 = vshll.u32 %v7871, 16
        %v8212 = vrot.slane %v8210, 5
        %v8213 = vsel %vm1057, %v8208, %v8212
        %v8215 = vshrl.u32 %v7872, 16
        %v8217 = vrot.slane %v8215, 4
        %v8218 = vshll.u32 %v7872, 16
        %v8220 = vrot.slane %v8218, 5
        %v8221 = vor.u32 %v8217, %v8220
        %v8222 = vrot.slane %v8221, 4
        %v8224 = vshll.u32 %v7873, 16
        %v8226 = vrot.slane %v8224, 5
        %v8227 = vsel %vm1057, %v8222, %v8226
        %v8228 = vshrl.u32 %v7873, 16
        %v8230 = vrot.slane %v8228, 4
        %v8231 = vor.u32 %v8230, %v8226
        %v8232 = vrot.slane %v8231, 4
        %v8234 = vshll.u32 %v7874, 16
        %v8236 = vrot.slane %v8234, 5
        %v8237 = vsel %vm1057, %v8232, %v8236
        %v8239 = vshrl.u32 %v7875, 16
        %v8241 = vrot.slane %v8239, 4
        %v8242 = vshll.u32 %v7875, 16
        %v8244 = vrot.slane %v8242, 5
        %v8245 = vor.u32 %v8241, %v8244
        %v8246 = vrot.slane %v8245, 4
        %v8248 = vshll.u32 %v7876, 16
        %v8250 = vrot.slane %v8248, 5
        %v8251 = vsel %vm1057, %v8246, %v8250
        %v8252 = vshrl.u32 %v7876, 16
        %v8254 = vrot.slane %v8252, 4
        %v8255 = vor.u32 %v8254, %v8250
        %v8256 = vrot.slane %v8255, 4
        %v8258 = vshll.u32 %v7877, 16
        %v8260 = vrot.slane %v8258, 5
        %v8261 = vsel %vm1057, %v8256, %v8260
        %v8262 = vunpack.c.l.b16 %v7891
        %v8263 = vunpack.c.l.b16 %v7901
        %v8264 = vunpack.c.l.b16 %v7915
        %v8265 = vunpack.c.l.b16 %v7925
        %v8266 = vunpack.c.l.b16 %v7939
        %v8267 = vunpack.c.l.b16 %v7949
        %v8268 = vunpack.c.l.b16 %v7963
        %v8269 = vunpack.c.l.b16 %v7973
        %v8270 = vunpack.c.l.b16 %v7987
        %v8271 = vunpack.c.l.b16 %v7997
        %v8272 = vunpack.c.l.b16 %v8011
        %v8273 = vunpack.c.l.b16 %v8021
        %v8274 = vunpack.c.l.b16 %v8035
        %v8275 = vunpack.c.l.b16 %v8045
        %v8276 = vunpack.c.l.b16 %v8059
        %v8277 = vunpack.c.l.b16 %v8069
        %v8278 = vunpack.c.l.b16 %v8083
        %v8279 = vunpack.c.l.b16 %v8093
        %v8280 = vunpack.c.l.b16 %v8107
        %v8281 = vunpack.c.l.b16 %v8117
        %v8282 = vunpack.c.l.b16 %v8131
        %v8283 = vunpack.c.l.b16 %v8141
        %v8284 = vunpack.c.l.b16 %v8155
        %v8285 = vunpack.c.l.b16 %v8165
        %v8286 = vunpack.c.l.b16 %v8179
        %v8287 = vunpack.c.l.b16 %v8189
        %v8288 = vunpack.c.l.b16 %v8203
        %v8289 = vunpack.c.l.b16 %v8213
        %v8290 = vunpack.c.l.b16 %v8227
        %v8291 = vunpack.c.l.b16 %v8237
        %v8292 = vunpack.c.l.b16 %v8251
        %v8293 = vunpack.c.l.b16 %v8261
        %v8294 = vpack.c.b16 %v8263, %v8262
        %v8295 = vpack.c.b16 %v8265, %v8264
        %v8296 = vpack.c.b16 %v8267, %v8266
        %v8297 = vpack.c.b16 %v8269, %v8268
        %v8298 = vpack.c.b16 %v8271, %v8270
        %v8299 = vpack.c.b16 %v8273, %v8272
        %v8300 = vpack.c.b16 %v8275, %v8274
        %v8301 = vpack.c.b16 %v8277, %v8276
        %v8302 = vpack.c.b16 %v8279, %v8278
        %v8303 = vpack.c.b16 %v8281, %v8280
        %v8304 = vpack.c.b16 %v8283, %v8282
        %v8305 = vpack.c.b16 %v8285, %v8284
        %v8306 = vpack.c.b16 %v8287, %v8286
        %v8307 = vpack.c.b16 %v8289, %v8288
        %v8308 = vpack.c.b16 %v8291, %v8290
        %v8309 = vpack.c.b16 %v8293, %v8292
        %8326 = vst [vmem:[#allocation3 + $0x38] sm:$0xff] %v8294
        %8327 = vst [vmem:[#allocation3 + $0x80] sm:$0xff] %v8295
        %8328 = vst [vmem:[#allocation3 + $0xc8] sm:$0xff] %v8296
        %8329 = vst [vmem:[#allocation3 + $0x110] sm:$0xff] %v8297
        %8330 = vst [vmem:[#allocation3 + $0x158] sm:$0xff] %v8298
        %8331 = vst [vmem:[#allocation3 + $0x1a0] sm:$0xff] %v8299
        %8332 = vst [vmem:[#allocation3 + $0x1e8] sm:$0xff] %v8300
        %8333 = vst [vmem:[#allocation3 + $0x230] sm:$0xff] %v8301
        %8334 = vst [vmem:[#allocation3 + $0x278] sm:$0xff] %v8302
        %8335 = vst [vmem:[#allocation3 + $0x2c0] sm:$0xff] %v8303
        %8336 = vst [vmem:[#allocation3 + $0x308] sm:$0xff] %v8304
        %8337 = vst [vmem:[#allocation3 + $0x350] sm:$0xff] %v8305
        %8338 = vst [vmem:[#allocation3 + $0x398] sm:$0xff] %v8306
        %8339 = vst [vmem:[#allocation3 + $0x3e0] sm:$0xff] %v8307
        %8340 = vst [vmem:[#allocation3 + $0x428] sm:$0xff] %v8308
        %8341 = vst [vmem:[#allocation3 + $0x470] sm:$0xff] %v8309
        %v8342 = vld [vmem:[%s2757] sm:$0xe]
        %v8343 = vld [vmem:[%s2757 + $0x4] sm:$0xf]
        %v8344 = vld [vmem:[%s2757 + $0x8] sm:$0x1]
        %v8345 = vld [vmem:[%s2757 + $0xc] sm:$0xe]
        %v8346 = vld [vmem:[%s2757 + $0x10] sm:$0xf]
        %v8347 = vld [vmem:[%s2757 + $0x14] sm:$0x1]
        %v8348 = vld [vmem:[%s2757 + $0x18] sm:$0xe]
        %v8349 = vld [vmem:[%s2757 + $0x1c] sm:$0xf]
        %v8350 = vld [vmem:[%s2757 + $0x20] sm:$0x1]
        %v8351 = vld [vmem:[%s2757 + $0x24] sm:$0xe]
        %v8352 = vld [vmem:[%s2757 + $0x28] sm:$0xf]
        %v8353 = vld [vmem:[%s2757 + $0x2c] sm:$0x1]
        %v8354 = vld [vmem:[%s2757 + $0x30] sm:$0xe]
        %v8355 = vld [vmem:[%s2757 + $0x34] sm:$0xf]
        %v8356 = vld [vmem:[%s2757 + $0x38] sm:$0x1]
        %v8357 = vld [vmem:[%s2757 + $0x3c] sm:$0xe]
        %v8358 = vld [vmem:[%s2757 + $0x40] sm:$0xf]
        %v8359 = vld [vmem:[%s2757 + $0x44] sm:$0x1]
        %v8360 = vld [vmem:[%s2757 + $0x48] sm:$0xe]
        %v8361 = vld [vmem:[%s2757 + $0x4c] sm:$0xf]
        %v8362 = vld [vmem:[%s2757 + $0x50] sm:$0x1]
        %v8363 = vld [vmem:[%s2757 + $0x54] sm:$0xe]
        %v8364 = vld [vmem:[%s2757 + $0x58] sm:$0xf]
        %v8365 = vld [vmem:[%s2757 + $0x5c] sm:$0x1]
        %v8366 = vld [vmem:[%s2757 + $0x60] sm:$0xe]
        %v8367 = vld [vmem:[%s2757 + $0x64] sm:$0xf]
        %v8368 = vld [vmem:[%s2757 + $0x68] sm:$0x1]
        %v8369 = vld [vmem:[%s2757 + $0x6c] sm:$0xe]
        %v8370 = vld [vmem:[%s2757 + $0x70] sm:$0xf]
        %v8371 = vld [vmem:[%s2757 + $0x74] sm:$0x1]
        %v8372 = vld [vmem:[%s2757 + $0x78] sm:$0xe]
        %v8373 = vld [vmem:[%s2757 + $0x7c] sm:$0xf]
        %v8374 = vld [vmem:[%s2757 + $0x80] sm:$0x1]
        %v8375 = vld [vmem:[%s2757 + $0x84] sm:$0xe]
        %v8376 = vld [vmem:[%s2757 + $0x88] sm:$0xf]
        %v8377 = vld [vmem:[%s2757 + $0x8c] sm:$0x1]
        %v8378 = vld [vmem:[%s2757 + $0x90] sm:$0xe]
        %v8379 = vld [vmem:[%s2757 + $0x94] sm:$0xf]
        %v8380 = vld [vmem:[%s2757 + $0x98] sm:$0x1]
        %v8381 = vld [vmem:[%s2757 + $0x9c] sm:$0xe]
        %v8382 = vld [vmem:[%s2757 + $0xa0] sm:$0xf]
        %v8383 = vld [vmem:[%s2757 + $0xa4] sm:$0x1]
        %v8384 = vld [vmem:[%s2757 + $0xa8] sm:$0xe]
        %v8385 = vld [vmem:[%s2757 + $0xac] sm:$0xf]
        %v8386 = vld [vmem:[%s2757 + $0xb0] sm:$0x1]
        %v8387 = vld [vmem:[%s2757 + $0xb4] sm:$0xe]
        %v8388 = vld [vmem:[%s2757 + $0xb8] sm:$0xf]
        %v8389 = vld [vmem:[%s2757 + $0xbc] sm:$0x1]
        %v8438 = vrot.slane %v8342, 5
        %v8439 = vrot.slane %v8438, 4
        %v8440 = vrot.slane %v8343, 5
        %v8441 = vsel %vm1620, %v8439, %v8440
        %v8442 = vrot.slane %v8440, 4
        %v8443 = vrot.slane %v8344, 5
        %v8444 = vsel %vm1620, %v8442, %v8443
        %v8445 = vrot.slane %v8345, 5
        %v8446 = vrot.slane %v8445, 4
        %v8447 = vrot.slane %v8346, 5
        %v8448 = vsel %vm1620, %v8446, %v8447
        %v8449 = vrot.slane %v8447, 4
        %v8450 = vrot.slane %v8347, 5
        %v8451 = vsel %vm1620, %v8449, %v8450
        %v8452 = vrot.slane %v8348, 5
        %v8453 = vrot.slane %v8452, 4
        %v8454 = vrot.slane %v8349, 5
        %v8455 = vsel %vm1620, %v8453, %v8454
        %v8456 = vrot.slane %v8454, 4
        %v8457 = vrot.slane %v8350, 5
        %v8458 = vsel %vm1620, %v8456, %v8457
        %v8459 = vrot.slane %v8351, 5
        %v8460 = vrot.slane %v8459, 4
        %v8461 = vrot.slane %v8352, 5
        %v8462 = vsel %vm1620, %v8460, %v8461
        %v8463 = vrot.slane %v8461, 4
        %v8464 = vrot.slane %v8353, 5
        %v8465 = vsel %vm1620, %v8463, %v8464
        %v8466 = vrot.slane %v8354, 5
        %v8467 = vrot.slane %v8466, 4
        %v8468 = vrot.slane %v8355, 5
        %v8469 = vsel %vm1620, %v8467, %v8468
        %v8470 = vrot.slane %v8468, 4
        %v8471 = vrot.slane %v8356, 5
        %v8472 = vsel %vm1620, %v8470, %v8471
        %v8473 = vrot.slane %v8357, 5
        %v8474 = vrot.slane %v8473, 4
        %v8475 = vrot.slane %v8358, 5
        %v8476 = vsel %vm1620, %v8474, %v8475
        %v8477 = vrot.slane %v8475, 4
        %v8478 = vrot.slane %v8359, 5
        %v8479 = vsel %vm1620, %v8477, %v8478
        %v8480 = vrot.slane %v8360, 5
        %v8481 = vrot.slane %v8480, 4
        %v8482 = vrot.slane %v8361, 5
        %v8483 = vsel %vm1620, %v8481, %v8482
        %v8484 = vrot.slane %v8482, 4
        %v8485 = vrot.slane %v8362, 5
        %v8486 = vsel %vm1620, %v8484, %v8485
        %v8487 = vrot.slane %v8363, 5
        %v8488 = vrot.slane %v8487, 4
        %v8489 = vrot.slane %v8364, 5
        %v8490 = vsel %vm1620, %v8488, %v8489
        %v8491 = vrot.slane %v8489, 4
        %v8492 = vrot.slane %v8365, 5
        %v8493 = vsel %vm1620, %v8491, %v8492
        %v8494 = vrot.slane %v8366, 5
        %v8495 = vrot.slane %v8494, 4
        %v8496 = vrot.slane %v8367, 5
        %v8497 = vsel %vm1620, %v8495, %v8496
        %v8498 = vrot.slane %v8496, 4
        %v8499 = vrot.slane %v8368, 5
        %v8500 = vsel %vm1620, %v8498, %v8499
        %v8501 = vrot.slane %v8369, 5
        %v8502 = vrot.slane %v8501, 4
        %v8503 = vrot.slane %v8370, 5
        %v8504 = vsel %vm1620, %v8502, %v8503
        %v8505 = vrot.slane %v8503, 4
        %v8506 = vrot.slane %v8371, 5
        %v8507 = vsel %vm1620, %v8505, %v8506
        %v8508 = vrot.slane %v8372, 5
        %v8509 = vrot.slane %v8508, 4
        %v8510 = vrot.slane %v8373, 5
        %v8511 = vsel %vm1620, %v8509, %v8510
        %v8512 = vrot.slane %v8510, 4
        %v8513 = vrot.slane %v8374, 5
        %v8514 = vsel %vm1620, %v8512, %v8513
        %v8515 = vrot.slane %v8375, 5
        %v8516 = vrot.slane %v8515, 4
        %v8517 = vrot.slane %v8376, 5
        %v8518 = vsel %vm1620, %v8516, %v8517
        %v8519 = vrot.slane %v8517, 4
        %v8520 = vrot.slane %v8377, 5
        %v8521 = vsel %vm1620, %v8519, %v8520
        %v8522 = vrot.slane %v8378, 5
        %v8523 = vrot.slane %v8522, 4
        %v8524 = vrot.slane %v8379, 5
        %v8525 = vsel %vm1620, %v8523, %v8524
        %v8526 = vrot.slane %v8524, 4
        %v8527 = vrot.slane %v8380, 5
        %v8528 = vsel %vm1620, %v8526, %v8527
        %v8529 = vrot.slane %v8381, 5
        %v8530 = vrot.slane %v8529, 4
        %v8531 = vrot.slane %v8382, 5
        %v8532 = vsel %vm1620, %v8530, %v8531
        %v8533 = vrot.slane %v8531, 4
        %v8534 = vrot.slane %v8383, 5
        %v8535 = vsel %vm1620, %v8533, %v8534
        %v8536 = vrot.slane %v8384, 5
        %v8537 = vrot.slane %v8536, 4
        %v8538 = vrot.slane %v8385, 5
        %v8539 = vsel %vm1620, %v8537, %v8538
        %v8540 = vrot.slane %v8538, 4
        %v8541 = vrot.slane %v8386, 5
        %v8542 = vsel %vm1620, %v8540, %v8541
        %v8543 = vrot.slane %v8387, 5
        %v8544 = vrot.slane %v8543, 4
        %v8545 = vrot.slane %v8388, 5
        %v8546 = vsel %vm1620, %v8544, %v8545
        %v8547 = vrot.slane %v8545, 4
        %v8548 = vrot.slane %v8389, 5
        %v8549 = vsel %vm1620, %v8547, %v8548
        %v8550 = vunpack.c.l.b16 %v8441
        %v8551 = vunpack.c.l.b16 %v8444
        %v8552 = vunpack.c.l.b16 %v8448
        %v8553 = vunpack.c.l.b16 %v8451
        %v8554 = vunpack.c.l.b16 %v8455
        %v8555 = vunpack.c.l.b16 %v8458
        %v8556 = vunpack.c.l.b16 %v8462
        %v8557 = vunpack.c.l.b16 %v8465
        %v8558 = vunpack.c.l.b16 %v8469
        %v8559 = vunpack.c.l.b16 %v8472
        %v8560 = vunpack.c.l.b16 %v8476
        %v8561 = vunpack.c.l.b16 %v8479
        %v8562 = vunpack.c.l.b16 %v8483
        %v8563 = vunpack.c.l.b16 %v8486
        %v8564 = vunpack.c.l.b16 %v8490
        %v8565 = vunpack.c.l.b16 %v8493
        %v8566 = vunpack.c.l.b16 %v8497
        %v8567 = vunpack.c.l.b16 %v8500
        %v8568 = vunpack.c.l.b16 %v8504
        %v8569 = vunpack.c.l.b16 %v8507
        %v8570 = vunpack.c.l.b16 %v8511
        %v8571 = vunpack.c.l.b16 %v8514
        %v8572 = vunpack.c.l.b16 %v8518
        %v8573 = vunpack.c.l.b16 %v8521
        %v8574 = vunpack.c.l.b16 %v8525
        %v8575 = vunpack.c.l.b16 %v8528
        %v8576 = vunpack.c.l.b16 %v8532
        %v8577 = vunpack.c.l.b16 %v8535
        %v8578 = vunpack.c.l.b16 %v8539
        %v8579 = vunpack.c.l.b16 %v8542
        %v8580 = vunpack.c.l.b16 %v8546
        %v8581 = vunpack.c.l.b16 %v8549
        %v8582 = vpack.c.b16 %v8551, %v8550
        %v8583 = vpack.c.b16 %v8553, %v8552
        %v8584 = vpack.c.b16 %v8555, %v8554
        %v8585 = vpack.c.b16 %v8557, %v8556
        %v8586 = vpack.c.b16 %v8559, %v8558
        %v8587 = vpack.c.b16 %v8561, %v8560
        %v8588 = vpack.c.b16 %v8563, %v8562
        %v8589 = vpack.c.b16 %v8565, %v8564
        %v8590 = vpack.c.b16 %v8567, %v8566
        %v8591 = vpack.c.b16 %v8569, %v8568
        %v8592 = vpack.c.b16 %v8571, %v8570
        %v8593 = vpack.c.b16 %v8573, %v8572
        %v8594 = vpack.c.b16 %v8575, %v8574
        %v8595 = vpack.c.b16 %v8577, %v8576
        %v8596 = vpack.c.b16 %v8579, %v8578
        %v8597 = vpack.c.b16 %v8581, %v8580
        %8614 = vst [vmem:[#allocation3 + $0x40] sm:$0xff] %v8582
        %8615 = vst [vmem:[#allocation3 + $0x88] sm:$0xff] %v8583
        %8616 = vst [vmem:[#allocation3 + $0xd0] sm:$0xff] %v8584
        %8617 = vst [vmem:[#allocation3 + $0x118] sm:$0xff] %v8585
        %8618 = vst [vmem:[#allocation3 + $0x160] sm:$0xff] %v8586
        %8619 = vst [vmem:[#allocation3 + $0x1a8] sm:$0xff] %v8587
        %8620 = vst [vmem:[#allocation3 + $0x1f0] sm:$0xff] %v8588
        %8621 = vst [vmem:[#allocation3 + $0x238] sm:$0xff] %v8589
        %8622 = vst [vmem:[#allocation3 + $0x280] sm:$0xff] %v8590
        %8623 = vst [vmem:[#allocation3 + $0x2c8] sm:$0xff] %v8591
        %8624 = vst [vmem:[#allocation3 + $0x310] sm:$0xff] %v8592
        %8625 = vst [vmem:[#allocation3 + $0x358] sm:$0xff] %v8593
        %8626 = vst [vmem:[#allocation3 + $0x3a0] sm:$0xff] %v8594
        %8627 = vst [vmem:[#allocation3 + $0x3e8] sm:$0xff] %v8595
        %8628 = vst [vmem:[#allocation3 + $0x430] sm:$0xff] %v8596
        %8629 = vst [vmem:[#allocation3 + $0x478] sm:$0xff] %v8597
        %v8630 = vld [vmem:[#allocation3] sm:$0xff]
        %v8631 = vld [vmem:[#allocation3 + $0x8] sm:$0xff]
        %v8632 = vld [vmem:[#allocation3 + $0x10] sm:$0xff]
        %v8633 = vld [vmem:[#allocation3 + $0x18] sm:$0xff]
        %v8634 = vld [vmem:[#allocation3 + $0x20] sm:$0xff]
        %v8635 = vld [vmem:[#allocation3 + $0x28] sm:$0xff]
        %v8636 = vld [vmem:[#allocation3 + $0x30] sm:$0xff]
        %v8637 = vld [vmem:[#allocation3 + $0x38] sm:$0xff]
        %v8638 = vld [vmem:[#allocation3 + $0x40] sm:$0xff]
        %v8639 = vld [vmem:[#allocation3 + $0x48] sm:$0xff]
        %v8640 = vld [vmem:[#allocation3 + $0x50] sm:$0xff]
        %v8641 = vld [vmem:[#allocation3 + $0x58] sm:$0xff]
        %v8642 = vld [vmem:[#allocation3 + $0x60] sm:$0xff]
        %v8643 = vld [vmem:[#allocation3 + $0x68] sm:$0xff]
        %v8644 = vld [vmem:[#allocation3 + $0x70] sm:$0xff]
        %v8645 = vld [vmem:[#allocation3 + $0x78] sm:$0xff]
        %v8646 = vld [vmem:[#allocation3 + $0x80] sm:$0xff]
        %v8647 = vld [vmem:[#allocation3 + $0x88] sm:$0xff]
        %v8648 = vld [vmem:[#allocation3 + $0x90] sm:$0xff]
        %v8649 = vld [vmem:[#allocation3 + $0x98] sm:$0xff]
        %v8650 = vld [vmem:[#allocation3 + $0xa0] sm:$0xff]
        %v8651 = vld [vmem:[#allocation3 + $0xa8] sm:$0xff]
        %v8652 = vld [vmem:[#allocation3 + $0xb0] sm:$0xff]
        %v8653 = vld [vmem:[#allocation3 + $0xb8] sm:$0xff]
        %v8654 = vld [vmem:[#allocation3 + $0xc0] sm:$0xff]
        %v8655 = vld [vmem:[#allocation3 + $0xc8] sm:$0xff]
        %v8656 = vld [vmem:[#allocation3 + $0xd0] sm:$0xff]
        %v8657 = vld [vmem:[#allocation3 + $0xd8] sm:$0xff]
        %v8658 = vld [vmem:[#allocation3 + $0xe0] sm:$0xff]
        %v8659 = vld [vmem:[#allocation3 + $0xe8] sm:$0xff]
        %v8660 = vld [vmem:[#allocation3 + $0xf0] sm:$0xff]
        %v8661 = vld [vmem:[#allocation3 + $0xf8] sm:$0xff]
        %v8662 = vld [vmem:[#allocation3 + $0x100] sm:$0xff]
        %v8663 = vld [vmem:[#allocation3 + $0x108] sm:$0xff]
        %v8664 = vld [vmem:[#allocation3 + $0x110] sm:$0xff]
        %v8665 = vld [vmem:[#allocation3 + $0x118] sm:$0xff]
        %v8666 = vld [vmem:[#allocation3 + $0x120] sm:$0xff]
        %v8667 = vld [vmem:[#allocation3 + $0x128] sm:$0xff]
        %v8668 = vld [vmem:[#allocation3 + $0x130] sm:$0xff]
        %v8669 = vld [vmem:[#allocation3 + $0x138] sm:$0xff]
        %v8670 = vld [vmem:[#allocation3 + $0x140] sm:$0xff]
        %v8671 = vld [vmem:[#allocation3 + $0x148] sm:$0xff]
        %v8672 = vld [vmem:[#allocation3 + $0x150] sm:$0xff]
        %v8673 = vld [vmem:[#allocation3 + $0x158] sm:$0xff]
        %v8674 = vld [vmem:[#allocation3 + $0x160] sm:$0xff]
        %v8675 = vld [vmem:[#allocation3 + $0x168] sm:$0xff]
        %v8676 = vld [vmem:[#allocation3 + $0x170] sm:$0xff]
        %v8677 = vld [vmem:[#allocation3 + $0x178] sm:$0xff]
        %v8678 = vld [vmem:[#allocation3 + $0x180] sm:$0xff]
        %v8679 = vld [vmem:[#allocation3 + $0x188] sm:$0xff]
        %v8680 = vld [vmem:[#allocation3 + $0x190] sm:$0xff]
        %v8681 = vld [vmem:[#allocation3 + $0x198] sm:$0xff]
        %v8682 = vld [vmem:[#allocation3 + $0x1a0] sm:$0xff]
        %v8683 = vld [vmem:[#allocation3 + $0x1a8] sm:$0xff]
        %v8684 = vld [vmem:[#allocation3 + $0x1b0] sm:$0xff]
        %v8685 = vld [vmem:[#allocation3 + $0x1b8] sm:$0xff]
        %v8686 = vld [vmem:[#allocation3 + $0x1c0] sm:$0xff]
        %v8687 = vld [vmem:[#allocation3 + $0x1c8] sm:$0xff]
        %v8688 = vld [vmem:[#allocation3 + $0x1d0] sm:$0xff]
        %v8689 = vld [vmem:[#allocation3 + $0x1d8] sm:$0xff]
        %v8690 = vld [vmem:[#allocation3 + $0x1e0] sm:$0xff]
        %v8691 = vld [vmem:[#allocation3 + $0x1e8] sm:$0xff]
        %v8692 = vld [vmem:[#allocation3 + $0x1f0] sm:$0xff]
        %v8693 = vld [vmem:[#allocation3 + $0x1f8] sm:$0xff]
        %v8694 = vld [vmem:[#allocation3 + $0x200] sm:$0xff]
        %v8695 = vld [vmem:[#allocation3 + $0x208] sm:$0xff]
        %v8696 = vld [vmem:[#allocation3 + $0x210] sm:$0xff]
        %v8697 = vld [vmem:[#allocation3 + $0x218] sm:$0xff]
        %v8698 = vld [vmem:[#allocation3 + $0x220] sm:$0xff]
        %v8699 = vld [vmem:[#allocation3 + $0x228] sm:$0xff]
        %v8700 = vld [vmem:[#allocation3 + $0x230] sm:$0xff]
        %v8701 = vld [vmem:[#allocation3 + $0x238] sm:$0xff]
        %v8702 = vld [vmem:[#allocation3 + $0x240] sm:$0xff]
        %v8703 = vld [vmem:[#allocation3 + $0x248] sm:$0xff]
        %v8704 = vld [vmem:[#allocation3 + $0x250] sm:$0xff]
        %v8705 = vld [vmem:[#allocation3 + $0x258] sm:$0xff]
        %v8706 = vld [vmem:[#allocation3 + $0x260] sm:$0xff]
        %v8707 = vld [vmem:[#allocation3 + $0x268] sm:$0xff]
        %v8708 = vld [vmem:[#allocation3 + $0x270] sm:$0xff]
        %v8709 = vld [vmem:[#allocation3 + $0x278] sm:$0xff]
        %v8710 = vld [vmem:[#allocation3 + $0x280] sm:$0xff]
        %v8711 = vld [vmem:[#allocation3 + $0x288] sm:$0xff]
        %v8712 = vld [vmem:[#allocation3 + $0x290] sm:$0xff]
        %v8713 = vld [vmem:[#allocation3 + $0x298] sm:$0xff]
        %v8714 = vld [vmem:[#allocation3 + $0x2a0] sm:$0xff]
        %v8715 = vld [vmem:[#allocation3 + $0x2a8] sm:$0xff]
        %v8716 = vld [vmem:[#allocation3 + $0x2b0] sm:$0xff]
        %v8717 = vld [vmem:[#allocation3 + $0x2b8] sm:$0xff]
        %v8718 = vld [vmem:[#allocation3 + $0x2c0] sm:$0xff]
        %v8719 = vld [vmem:[#allocation3 + $0x2c8] sm:$0xff]
        %v8720 = vld [vmem:[#allocation3 + $0x2d0] sm:$0xff]
        %v8721 = vld [vmem:[#allocation3 + $0x2d8] sm:$0xff]
        %v8722 = vld [vmem:[#allocation3 + $0x2e0] sm:$0xff]
        %v8723 = vld [vmem:[#allocation3 + $0x2e8] sm:$0xff]
        %v8724 = vld [vmem:[#allocation3 + $0x2f0] sm:$0xff]
        %v8725 = vld [vmem:[#allocation3 + $0x2f8] sm:$0xff]
        %v8726 = vld [vmem:[#allocation3 + $0x300] sm:$0xff]
        %v8727 = vld [vmem:[#allocation3 + $0x308] sm:$0xff]
        %v8728 = vld [vmem:[#allocation3 + $0x310] sm:$0xff]
        %v8729 = vld [vmem:[#allocation3 + $0x318] sm:$0xff]
        %v8730 = vld [vmem:[#allocation3 + $0x320] sm:$0xff]
        %v8731 = vld [vmem:[#allocation3 + $0x328] sm:$0xff]
        %v8732 = vld [vmem:[#allocation3 + $0x330] sm:$0xff]
        %v8733 = vld [vmem:[#allocation3 + $0x338] sm:$0xff]
        %v8734 = vld [vmem:[#allocation3 + $0x340] sm:$0xff]
        %v8735 = vld [vmem:[#allocation3 + $0x348] sm:$0xff]
        %v8736 = vld [vmem:[#allocation3 + $0x350] sm:$0xff]
        %v8737 = vld [vmem:[#allocation3 + $0x358] sm:$0xff]
        %v8738 = vld [vmem:[#allocation3 + $0x360] sm:$0xff]
        %v8739 = vld [vmem:[#allocation3 + $0x368] sm:$0xff]
        %v8740 = vld [vmem:[#allocation3 + $0x370] sm:$0xff]
        %v8741 = vld [vmem:[#allocation3 + $0x378] sm:$0xff]
        %v8742 = vld [vmem:[#allocation3 + $0x380] sm:$0xff]
        %v8743 = vld [vmem:[#allocation3 + $0x388] sm:$0xff]
        %v8744 = vld [vmem:[#allocation3 + $0x390] sm:$0xff]
        %v8745 = vld [vmem:[#allocation3 + $0x398] sm:$0xff]
        %v8746 = vld [vmem:[#allocation3 + $0x3a0] sm:$0xff]
        %v8747 = vld [vmem:[#allocation3 + $0x3a8] sm:$0xff]
        %v8748 = vld [vmem:[#allocation3 + $0x3b0] sm:$0xff]
        %v8749 = vld [vmem:[#allocation3 + $0x3b8] sm:$0xff]
        %v8750 = vld [vmem:[#allocation3 + $0x3c0] sm:$0xff]
        %v8751 = vld [vmem:[#allocation3 + $0x3c8] sm:$0xff]
        %v8752 = vld [vmem:[#allocation3 + $0x3d0] sm:$0xff]
        %v8753 = vld [vmem:[#allocation3 + $0x3d8] sm:$0xff]
        %v8754 = vld [vmem:[#allocation3 + $0x3e0] sm:$0xff]
        %v8755 = vld [vmem:[#allocation3 + $0x3e8] sm:$0xff]
        %v8756 = vld [vmem:[#allocation3 + $0x3f0] sm:$0xff]
        %v8757 = vld [vmem:[#allocation3 + $0x3f8] sm:$0xff]
        %v8758 = vld [vmem:[#allocation3 + $0x400] sm:$0xff]
        %v8759 = vld [vmem:[#allocation3 + $0x408] sm:$0xff]
        %v8760 = vld [vmem:[#allocation3 + $0x410] sm:$0xff]
        %v8761 = vld [vmem:[#allocation3 + $0x418] sm:$0xff]
        %v8762 = vld [vmem:[#allocation3 + $0x420] sm:$0xff]
        %v8763 = vld [vmem:[#allocation3 + $0x428] sm:$0xff]
        %v8764 = vld [vmem:[#allocation3 + $0x430] sm:$0xff]
        %v8765 = vld [vmem:[#allocation3 + $0x438] sm:$0xff]
        %v8766 = vld [vmem:[#allocation3 + $0x440] sm:$0xff]
        %v8767 = vld [vmem:[#allocation3 + $0x448] sm:$0xff]
        %v8768 = vld [vmem:[#allocation3 + $0x450] sm:$0xff]
        %v8769 = vld [vmem:[#allocation3 + $0x458] sm:$0xff]
        %v8770 = vld [vmem:[#allocation3 + $0x460] sm:$0xff]
        %v8771 = vld [vmem:[#allocation3 + $0x468] sm:$0xff]
        %v8772 = vld [vmem:[#allocation3 + $0x470] sm:$0xff]
        %v8773 = vld [vmem:[#allocation3 + $0x478] sm:$0xff]
        %v8774 = vld [vmem:[#allocation4] sm:$0xf]
        %v8775 = vld [vmem:[#allocation4 + $0x4] sm:$0xf]
        %v8776 = vld [vmem:[#allocation4 + $0x8] sm:$0xf]
        %v8777 = vld [vmem:[#allocation4 + $0xc] sm:$0xf]
        %v8778 = vld [vmem:[#allocation4 + $0x10] sm:$0xf]
        %v8779 = vld [vmem:[#allocation4 + $0x14] sm:$0xf]
        %v8780 = vld [vmem:[#allocation4 + $0x18] sm:$0xf]
        %v8781 = vld [vmem:[#allocation4 + $0x1c] sm:$0xf]
        %v8782 = vld [vmem:[#allocation4 + $0x20] sm:$0xf]
        %v8783 = vld [vmem:[#allocation4 + $0x24] sm:$0xf]
        %v8784 = vld [vmem:[#allocation4 + $0x28] sm:$0xf]
        %v8785 = vld [vmem:[#allocation4 + $0x2c] sm:$0xf]
        %v8786 = vld [vmem:[#allocation4 + $0x30] sm:$0xf]
        %v8787 = vld [vmem:[#allocation4 + $0x34] sm:$0xf]
        %v8788 = vld [vmem:[#allocation4 + $0x38] sm:$0xf]
        %v8789 = vld [vmem:[#allocation4 + $0x3c] sm:$0xf]
        %v8790 = vld [vmem:[#allocation4 + $0x40] sm:$0xf]
        %v8791 = vld [vmem:[#allocation4 + $0x44] sm:$0xf]
        %v8792 = vld [vmem:[#allocation4 + $0x48] sm:$0xf]
        %v8793 = vld [vmem:[#allocation4 + $0x4c] sm:$0xf]
        %v8794 = vld [vmem:[#allocation4 + $0x50] sm:$0xf]
        %v8795 = vld [vmem:[#allocation4 + $0x54] sm:$0xf]
        %v8796 = vld [vmem:[#allocation4 + $0x58] sm:$0xf]
        %v8797 = vld [vmem:[#allocation4 + $0x5c] sm:$0xf]
        %v8798 = vld [vmem:[#allocation4 + $0x60] sm:$0xf]
        %v8799 = vld [vmem:[#allocation4 + $0x64] sm:$0xf]
        %v8800 = vld [vmem:[#allocation4 + $0x68] sm:$0xf]
        %v8801 = vld [vmem:[#allocation4 + $0x6c] sm:$0xf]
        %v8802 = vld [vmem:[#allocation4 + $0x70] sm:$0xf]
        %v8803 = vld [vmem:[#allocation4 + $0x74] sm:$0xf]
        %v8804 = vld [vmem:[#allocation4 + $0x78] sm:$0xf]
        %v8805 = vld [vmem:[#allocation4 + $0x7c] sm:$0xf]
        %v8806 = vld [vmem:[#allocation4 + $0x80] sm:$0xf]
        %v8807 = vld [vmem:[#allocation4 + $0x84] sm:$0xf]
        %v8808 = vld [vmem:[#allocation4 + $0x88] sm:$0xf]
        %v8809 = vld [vmem:[#allocation4 + $0x8c] sm:$0xf]
        %v8810 = vld [vmem:[#allocation4 + $0x90] sm:$0xf]
        %v8811 = vld [vmem:[#allocation4 + $0x94] sm:$0xf]
        %v8812 = vld [vmem:[#allocation4 + $0x98] sm:$0xf]
        %v8813 = vld [vmem:[#allocation4 + $0x9c] sm:$0xf]
        %v8814 = vld [vmem:[#allocation4 + $0xa0] sm:$0xf]
        %v8815 = vld [vmem:[#allocation4 + $0xa4] sm:$0xf]
        %v8816 = vld [vmem:[#allocation4 + $0xa8] sm:$0xf]
        %v8817 = vld [vmem:[#allocation4 + $0xac] sm:$0xf]
        %v8818 = vld [vmem:[#allocation4 + $0xb0] sm:$0xf]
        %v8819 = vld [vmem:[#allocation4 + $0xb4] sm:$0xf]
        %v8820 = vld [vmem:[#allocation4 + $0xb8] sm:$0xf]
        %v8821 = vld [vmem:[#allocation4 + $0xbc] sm:$0xf]
        %v8822 = vld [vmem:[#allocation4 + $0xc0] sm:$0xf]
        %v8823 = vld [vmem:[#allocation4 + $0xc4] sm:$0xf]
        %v8824 = vld [vmem:[#allocation4 + $0xc8] sm:$0xf]
        %v8825 = vld [vmem:[#allocation4 + $0xcc] sm:$0xf]
        %v8826 = vld [vmem:[#allocation4 + $0xd0] sm:$0xf]
        %v8827 = vld [vmem:[#allocation4 + $0xd4] sm:$0xf]
        %v8828 = vld [vmem:[#allocation4 + $0xd8] sm:$0xf]
        %v8829 = vld [vmem:[#allocation4 + $0xdc] sm:$0xf]
        %v8830 = vld [vmem:[#allocation4 + $0xe0] sm:$0xf]
        %v8831 = vld [vmem:[#allocation4 + $0xe4] sm:$0xf]
        %v8832 = vld [vmem:[#allocation4 + $0xe8] sm:$0xf]
        %v8833 = vld [vmem:[#allocation4 + $0xec] sm:$0xf]
        %v8834 = vld [vmem:[#allocation4 + $0xf0] sm:$0xf]
        %v8835 = vld [vmem:[#allocation4 + $0xf4] sm:$0xf]
        %v8836 = vld [vmem:[#allocation4 + $0xf8] sm:$0xf]
        %v8837 = vld [vmem:[#allocation4 + $0xfc] sm:$0xf]
        %v8838 = vld [vmem:[#allocation4 + $0x100] sm:$0xf]
        %v8839 = vld [vmem:[#allocation4 + $0x104] sm:$0xf]
        %v8840 = vld [vmem:[#allocation4 + $0x108] sm:$0xf]
        %v8841 = vld [vmem:[#allocation4 + $0x10c] sm:$0xf]
        %v8842 = vld [vmem:[#allocation4 + $0x110] sm:$0xf]
        %v8843 = vld [vmem:[#allocation4 + $0x114] sm:$0xf]
        %v8844 = vld [vmem:[#allocation4 + $0x118] sm:$0xf]
        %v8845 = vld [vmem:[#allocation4 + $0x11c] sm:$0xf]
        %v8846 = vld [vmem:[#allocation4 + $0x120] sm:$0xf]
        %v8847 = vld [vmem:[#allocation4 + $0x124] sm:$0xf]
        %v8848 = vld [vmem:[#allocation4 + $0x128] sm:$0xf]
        %v8849 = vld [vmem:[#allocation4 + $0x12c] sm:$0xf]
        %v8850 = vld [vmem:[#allocation4 + $0x130] sm:$0xf]
        %v8851 = vld [vmem:[#allocation4 + $0x134] sm:$0xf]
        %v8852 = vld [vmem:[#allocation4 + $0x138] sm:$0xf]
        %v8853 = vld [vmem:[#allocation4 + $0x13c] sm:$0xf]
        %v8854 = vld [vmem:[#allocation4 + $0x140] sm:$0xf]
        %v8855 = vld [vmem:[#allocation4 + $0x144] sm:$0xf]
        %v8856 = vld [vmem:[#allocation4 + $0x148] sm:$0xf]
        %v8857 = vld [vmem:[#allocation4 + $0x14c] sm:$0xf]
        %v8858 = vld [vmem:[#allocation4 + $0x150] sm:$0xf]
        %v8859 = vld [vmem:[#allocation4 + $0x154] sm:$0xf]
        %v8860 = vld [vmem:[#allocation4 + $0x158] sm:$0xf]
        %v8861 = vld [vmem:[#allocation4 + $0x15c] sm:$0xf]
        %v8862 = vld [vmem:[#allocation4 + $0x160] sm:$0xf]
        %v8863 = vld [vmem:[#allocation4 + $0x164] sm:$0xf]
        %v8864 = vld [vmem:[#allocation4 + $0x168] sm:$0xf]
        %v8865 = vld [vmem:[#allocation4 + $0x16c] sm:$0xf]
        %v8866 = vld [vmem:[#allocation4 + $0x170] sm:$0xf]
        %v8867 = vld [vmem:[#allocation4 + $0x174] sm:$0xf]
        %v8868 = vld [vmem:[#allocation4 + $0x178] sm:$0xf]
        %v8869 = vld [vmem:[#allocation4 + $0x17c] sm:$0xf]
        %v8870 = vld [vmem:[#allocation4 + $0x180] sm:$0xf]
        %v8871 = vld [vmem:[#allocation4 + $0x184] sm:$0xf]
        %v8872 = vld [vmem:[#allocation4 + $0x188] sm:$0xf]
        %v8873 = vld [vmem:[#allocation4 + $0x18c] sm:$0xf]
        %v8874 = vld [vmem:[#allocation4 + $0x190] sm:$0xf]
        %v8875 = vld [vmem:[#allocation4 + $0x194] sm:$0xf]
        %v8876 = vld [vmem:[#allocation4 + $0x198] sm:$0xf]
        %v8877 = vld [vmem:[#allocation4 + $0x19c] sm:$0xf]
        %v8878 = vld [vmem:[#allocation4 + $0x1a0] sm:$0xf]
        %v8879 = vld [vmem:[#allocation4 + $0x1a4] sm:$0xf]
        %v8880 = vld [vmem:[#allocation4 + $0x1a8] sm:$0xf]
        %v8881 = vld [vmem:[#allocation4 + $0x1ac] sm:$0xf]
        %v8882 = vld [vmem:[#allocation4 + $0x1b0] sm:$0xf]
        %v8883 = vld [vmem:[#allocation4 + $0x1b4] sm:$0xf]
        %v8884 = vld [vmem:[#allocation4 + $0x1b8] sm:$0xf]
        %v8885 = vld [vmem:[#allocation4 + $0x1bc] sm:$0xf]
        %v8886 = vld [vmem:[#allocation4 + $0x1c0] sm:$0xf]
        %v8887 = vld [vmem:[#allocation4 + $0x1c4] sm:$0xf]
        %v8888 = vld [vmem:[#allocation4 + $0x1c8] sm:$0xf]
        %v8889 = vld [vmem:[#allocation4 + $0x1cc] sm:$0xf]
        %v8890 = vld [vmem:[#allocation4 + $0x1d0] sm:$0xf]
        %v8891 = vld [vmem:[#allocation4 + $0x1d4] sm:$0xf]
        %v8892 = vld [vmem:[#allocation4 + $0x1d8] sm:$0xf]
        %v8893 = vld [vmem:[#allocation4 + $0x1dc] sm:$0xf]
        %v8894 = vld [vmem:[#allocation4 + $0x1e0] sm:$0xf]
        %v8895 = vld [vmem:[#allocation4 + $0x1e4] sm:$0xf]
        %v8896 = vld [vmem:[#allocation4 + $0x1e8] sm:$0xf]
        %v8897 = vld [vmem:[#allocation4 + $0x1ec] sm:$0xf]
        %v8898 = vld [vmem:[#allocation4 + $0x1f0] sm:$0xf]
        %v8899 = vld [vmem:[#allocation4 + $0x1f4] sm:$0xf]
        %v8900 = vld [vmem:[#allocation4 + $0x1f8] sm:$0xf]
        %v8901 = vld [vmem:[#allocation4 + $0x1fc] sm:$0xf]
        %v8902 = vld [vmem:[#allocation4 + $0x200] sm:$0xf]
        %v8903 = vld [vmem:[#allocation4 + $0x204] sm:$0xf]
        %v8904 = vld [vmem:[#allocation4 + $0x208] sm:$0xf]
        %v8905 = vld [vmem:[#allocation4 + $0x20c] sm:$0xf]
        %v8906 = vld [vmem:[#allocation4 + $0x210] sm:$0xf]
        %v8907 = vld [vmem:[#allocation4 + $0x214] sm:$0xf]
        %v8908 = vld [vmem:[#allocation4 + $0x218] sm:$0xf]
        %v8909 = vld [vmem:[#allocation4 + $0x21c] sm:$0xf]
        %v8910 = vld [vmem:[#allocation4 + $0x220] sm:$0xf]
        %v8911 = vld [vmem:[#allocation4 + $0x224] sm:$0xf]
        %v8912 = vld [vmem:[#allocation4 + $0x228] sm:$0xf]
        %v8913 = vld [vmem:[#allocation4 + $0x22c] sm:$0xf]
        %v8914 = vld [vmem:[#allocation4 + $0x230] sm:$0xf]
        %v8915 = vld [vmem:[#allocation4 + $0x234] sm:$0xf]
        %v8916 = vld [vmem:[#allocation4 + $0x238] sm:$0xf]
        %v8917 = vld [vmem:[#allocation4 + $0x23c] sm:$0xf]
        %v8918 = vld [vmem:[%s4] sm:$0x1]
        %v8920 = vlaneseq
        %v8921 = vshrl.u32 %v8920, 7
        %v8922 = vsub.s32 0, %v8921
        %v8923 = vrot.slane %v8918, %v8922
        %v9069 = vunpack.c.l.b16 %v8774
        %v9070 = vunpack.c.l.b16 %v8775
        %v9071 = vunpack.c.l.b16 %v8776
        %v9072 = vunpack.c.l.b16 %v8777
        %v9073 = vunpack.c.l.b16 %v8778
        %v9074 = vunpack.c.l.b16 %v8779
        %v9075 = vunpack.c.l.b16 %v8780
        %v9076 = vunpack.c.l.b16 %v8781
        %v9077 = vunpack.c.l.b16 %v8782
        %v9078 = vunpack.c.l.b16 %v8783
        %v9079 = vunpack.c.l.b16 %v8784
        %v9080 = vunpack.c.l.b16 %v8785
        %v9081 = vunpack.c.l.b16 %v8786
        %v9082 = vunpack.c.l.b16 %v8787
        %v9083 = vunpack.c.l.b16 %v8788
        %v9084 = vunpack.c.l.b16 %v8789
        %v9085 = vunpack.c.l.b16 %v8790
        %v9086 = vunpack.c.l.b16 %v8791
        %v9087 = vunpack.c.l.b16 %v8792
        %v9088 = vunpack.c.l.b16 %v8793
        %v9089 = vunpack.c.l.b16 %v8794
        %v9090 = vunpack.c.l.b16 %v8795
        %v9091 = vunpack.c.l.b16 %v8796
        %v9092 = vunpack.c.l.b16 %v8797
        %v9093 = vunpack.c.l.b16 %v8798
        %v9094 = vunpack.c.l.b16 %v8799
        %v9095 = vunpack.c.l.b16 %v8800
        %v9096 = vunpack.c.l.b16 %v8801
        %v9097 = vunpack.c.l.b16 %v8802
        %v9098 = vunpack.c.l.b16 %v8803
        %v9099 = vunpack.c.l.b16 %v8804
        %v9100 = vunpack.c.l.b16 %v8805
        %v9101 = vunpack.c.l.b16 %v8806
        %v9102 = vunpack.c.l.b16 %v8807
        %v9103 = vunpack.c.l.b16 %v8808
        %v9104 = vunpack.c.l.b16 %v8809
        %v9105 = vunpack.c.l.b16 %v8810
        %v9106 = vunpack.c.l.b16 %v8811
        %v9107 = vunpack.c.l.b16 %v8812
        %v9108 = vunpack.c.l.b16 %v8813
        %v9109 = vunpack.c.l.b16 %v8814
        %v9110 = vunpack.c.l.b16 %v8815
        %v9111 = vunpack.c.l.b16 %v8816
        %v9112 = vunpack.c.l.b16 %v8817
        %v9113 = vunpack.c.l.b16 %v8818
        %v9114 = vunpack.c.l.b16 %v8819
        %v9115 = vunpack.c.l.b16 %v8820
        %v9116 = vunpack.c.l.b16 %v8821
        %v9117 = vunpack.c.l.b16 %v8822
        %v9118 = vunpack.c.l.b16 %v8823
        %v9119 = vunpack.c.l.b16 %v8824
        %v9120 = vunpack.c.l.b16 %v8825
        %v9121 = vunpack.c.l.b16 %v8826
        %v9122 = vunpack.c.l.b16 %v8827
        %v9123 = vunpack.c.l.b16 %v8828
        %v9124 = vunpack.c.l.b16 %v8829
        %v9125 = vunpack.c.l.b16 %v8830
        %v9126 = vunpack.c.l.b16 %v8831
        %v9127 = vunpack.c.l.b16 %v8832
        %v9128 = vunpack.c.l.b16 %v8833
        %v9129 = vunpack.c.l.b16 %v8834
        %v9130 = vunpack.c.l.b16 %v8835
        %v9131 = vunpack.c.l.b16 %v8836
        %v9132 = vunpack.c.l.b16 %v8837
        %v9133 = vunpack.c.l.b16 %v8838
        %v9134 = vunpack.c.l.b16 %v8839
        %v9135 = vunpack.c.l.b16 %v8840
        %v9136 = vunpack.c.l.b16 %v8841
        %v9137 = vunpack.c.l.b16 %v8842
        %v9138 = vunpack.c.l.b16 %v8843
        %v9139 = vunpack.c.l.b16 %v8844
        %v9140 = vunpack.c.l.b16 %v8845
        %v9141 = vunpack.c.l.b16 %v8846
        %v9142 = vunpack.c.l.b16 %v8847
        %v9143 = vunpack.c.l.b16 %v8848
        %v9144 = vunpack.c.l.b16 %v8849
        %v9145 = vunpack.c.l.b16 %v8850
        %v9146 = vunpack.c.l.b16 %v8851
        %v9147 = vunpack.c.l.b16 %v8852
        %v9148 = vunpack.c.l.b16 %v8853
        %v9149 = vunpack.c.l.b16 %v8854
        %v9150 = vunpack.c.l.b16 %v8855
        %v9151 = vunpack.c.l.b16 %v8856
        %v9152 = vunpack.c.l.b16 %v8857
        %v9153 = vunpack.c.l.b16 %v8858
        %v9154 = vunpack.c.l.b16 %v8859
        %v9155 = vunpack.c.l.b16 %v8860
        %v9156 = vunpack.c.l.b16 %v8861
        %v9157 = vunpack.c.l.b16 %v8862
        %v9158 = vunpack.c.l.b16 %v8863
        %v9159 = vunpack.c.l.b16 %v8864
        %v9160 = vunpack.c.l.b16 %v8865
        %v9161 = vunpack.c.l.b16 %v8866
        %v9162 = vunpack.c.l.b16 %v8867
        %v9163 = vunpack.c.l.b16 %v8868
        %v9164 = vunpack.c.l.b16 %v8869
        %v9165 = vunpack.c.l.b16 %v8870
        %v9166 = vunpack.c.l.b16 %v8871
        %v9167 = vunpack.c.l.b16 %v8872
        %v9168 = vunpack.c.l.b16 %v8873
        %v9169 = vunpack.c.l.b16 %v8874
        %v9170 = vunpack.c.l.b16 %v8875
        %v9171 = vunpack.c.l.b16 %v8876
        %v9172 = vunpack.c.l.b16 %v8877
        %v9173 = vunpack.c.l.b16 %v8878
        %v9174 = vunpack.c.l.b16 %v8879
        %v9175 = vunpack.c.l.b16 %v8880
        %v9176 = vunpack.c.l.b16 %v8881
        %v9177 = vunpack.c.l.b16 %v8882
        %v9178 = vunpack.c.l.b16 %v8883
        %v9179 = vunpack.c.l.b16 %v8884
        %v9180 = vunpack.c.l.b16 %v8885
        %v9181 = vunpack.c.l.b16 %v8886
        %v9182 = vunpack.c.l.b16 %v8887
        %v9183 = vunpack.c.l.b16 %v8888
        %v9184 = vunpack.c.l.b16 %v8889
        %v9185 = vunpack.c.l.b16 %v8890
        %v9186 = vunpack.c.l.b16 %v8891
        %v9187 = vunpack.c.l.b16 %v8892
        %v9188 = vunpack.c.l.b16 %v8893
        %v9189 = vunpack.c.l.b16 %v8894
        %v9190 = vunpack.c.l.b16 %v8895
        %v9191 = vunpack.c.l.b16 %v8896
        %v9192 = vunpack.c.l.b16 %v8897
        %v9193 = vunpack.c.l.b16 %v8898
        %v9194 = vunpack.c.l.b16 %v8899
        %v9195 = vunpack.c.l.b16 %v8900
        %v9196 = vunpack.c.l.b16 %v8901
        %v9197 = vunpack.c.l.b16 %v8902
        %v9198 = vunpack.c.l.b16 %v8903
        %v9199 = vunpack.c.l.b16 %v8904
        %v9200 = vunpack.c.l.b16 %v8905
        %v9201 = vunpack.c.l.b16 %v8906
        %v9202 = vunpack.c.l.b16 %v8907
        %v9203 = vunpack.c.l.b16 %v8908
        %v9204 = vunpack.c.l.b16 %v8909
        %v9205 = vunpack.c.l.b16 %v8910
        %v9206 = vunpack.c.l.b16 %v8911
        %v9207 = vunpack.c.l.b16 %v8912
        %v9208 = vunpack.c.l.b16 %v8913
        %v9209 = vunpack.c.l.b16 %v8914
        %v9210 = vunpack.c.l.b16 %v8915
        %v9211 = vunpack.c.l.b16 %v8916
        %v9212 = vunpack.c.l.b16 %v8917
        %v9213 = vpack.c.b16 %v9070, %v9069
        %v9214 = vpack.c.b16 %v9072, %v9071
        %v9215 = vpack.c.b16 %v9074, %v9073
        %v9216 = vpack.c.b16 %v9076, %v9075
        %v9217 = vpack.c.b16 %v9078, %v9077
        %v9218 = vpack.c.b16 %v9080, %v9079
        %v9219 = vpack.c.b16 %v9082, %v9081
        %v9220 = vpack.c.b16 %v9084, %v9083
        %v9221 = vpack.c.b16 %v9086, %v9085
        %v9222 = vpack.c.b16 %v9088, %v9087
        %v9223 = vpack.c.b16 %v9090, %v9089
        %v9224 = vpack.c.b16 %v9092, %v9091
        %v9225 = vpack.c.b16 %v9094, %v9093
        %v9226 = vpack.c.b16 %v9096, %v9095
        %v9227 = vpack.c.b16 %v9098, %v9097
        %v9228 = vpack.c.b16 %v9100, %v9099
        %v9229 = vpack.c.b16 %v9102, %v9101
        %v9230 = vpack.c.b16 %v9104, %v9103
        %v9231 = vpack.c.b16 %v9106, %v9105
        %v9232 = vpack.c.b16 %v9108, %v9107
        %v9233 = vpack.c.b16 %v9110, %v9109
        %v9234 = vpack.c.b16 %v9112, %v9111
        %v9235 = vpack.c.b16 %v9114, %v9113
        %v9236 = vpack.c.b16 %v9116, %v9115
        %v9237 = vpack.c.b16 %v9118, %v9117
        %v9238 = vpack.c.b16 %v9120, %v9119
        %v9239 = vpack.c.b16 %v9122, %v9121
        %v9240 = vpack.c.b16 %v9124, %v9123
        %v9241 = vpack.c.b16 %v9126, %v9125
        %v9242 = vpack.c.b16 %v9128, %v9127
        %v9243 = vpack.c.b16 %v9130, %v9129
        %v9244 = vpack.c.b16 %v9132, %v9131
        %v9245 = vpack.c.b16 %v9134, %v9133
        %v9246 = vpack.c.b16 %v9136, %v9135
        %v9247 = vpack.c.b16 %v9138, %v9137
        %v9248 = vpack.c.b16 %v9140, %v9139
        %v9249 = vpack.c.b16 %v9142, %v9141
        %v9250 = vpack.c.b16 %v9144, %v9143
        %v9251 = vpack.c.b16 %v9146, %v9145
        %v9252 = vpack.c.b16 %v9148, %v9147
        %v9253 = vpack.c.b16 %v9150, %v9149
        %v9254 = vpack.c.b16 %v9152, %v9151
        %v9255 = vpack.c.b16 %v9154, %v9153
        %v9256 = vpack.c.b16 %v9156, %v9155
        %v9257 = vpack.c.b16 %v9158, %v9157
        %v9258 = vpack.c.b16 %v9160, %v9159
        %v9259 = vpack.c.b16 %v9162, %v9161
        %v9260 = vpack.c.b16 %v9164, %v9163
        %v9261 = vpack.c.b16 %v9166, %v9165
        %v9262 = vpack.c.b16 %v9168, %v9167
        %v9263 = vpack.c.b16 %v9170, %v9169
        %v9264 = vpack.c.b16 %v9172, %v9171
        %v9265 = vpack.c.b16 %v9174, %v9173
        %v9266 = vpack.c.b16 %v9176, %v9175
        %v9267 = vpack.c.b16 %v9178, %v9177
        %v9268 = vpack.c.b16 %v9180, %v9179
        %v9269 = vpack.c.b16 %v9182, %v9181
        %v9270 = vpack.c.b16 %v9184, %v9183
        %v9271 = vpack.c.b16 %v9186, %v9185
        %v9272 = vpack.c.b16 %v9188, %v9187
        %v9273 = vpack.c.b16 %v9190, %v9189
        %v9274 = vpack.c.b16 %v9192, %v9191
        %v9275 = vpack.c.b16 %v9194, %v9193
        %v9276 = vpack.c.b16 %v9196, %v9195
        %v9277 = vpack.c.b16 %v9198, %v9197
        %v9278 = vpack.c.b16 %v9200, %v9199
        %v9279 = vpack.c.b16 %v9202, %v9201
        %v9280 = vpack.c.b16 %v9204, %v9203
        %v9281 = vpack.c.b16 %v9206, %v9205
        %v9282 = vpack.c.b16 %v9208, %v9207
        %v9283 = vpack.c.b16 %v9210, %v9209
        %v9284 = vpack.c.b16 %v9212, %v9211
        %9357 = vmatprep.subr.bf16.mxu0 0
        %9358 = vmatpush1.bf16.msra.mxu0 %v9213
        %9359 = vmatprep.subr.bf16.mxu0 0
        %9360 = vmatpush1.bf16.msra.mxu0 %v9214
        %9361 = vmatprep.subr.bf16.mxu0 0
        %9362 = vmatpush1.bf16.msra.mxu0 %v9215
        %9363 = vmatprep.subr.bf16.mxu0 0
        %9364 = vmatpush1.bf16.msra.mxu0 %v9216
        %9365 = vmatprep.subr.bf16.mxu0 0
        %9366 = vmatpush1.bf16.msra.mxu0 %v9217
        %9367 = vmatprep.subr.bf16.mxu0 0
        %9368 = vmatpush1.bf16.msra.mxu0 %v9218
        %9369 = vmatprep.subr.bf16.mxu0 0
        %9370 = vmatpush1.bf16.msra.mxu0 %v9219
        %9371 = vmatprep.subr.bf16.mxu0 0
        %9372 = vmatpush1.bf16.msra.mxu0 %v9220
        %9373 = vmatprep.subr.bf16.mxu0 0
        %9374 = vmatpush1.bf16.msra.mxu0 %v9221
        %9375 = vmatprep.subr.bf16.mxu0 0
        %9376 = vmatpush1.bf16.msra.mxu0 %v9222
        %9377 = vmatprep.subr.bf16.mxu0 0
        %9378 = vmatpush1.bf16.msra.mxu0 %v9223
        %9379 = vmatprep.subr.bf16.mxu0 0
        %9380 = vmatpush1.bf16.msra.mxu0 %v9224
        %9381 = vmatprep.subr.bf16.mxu0 0
        %9382 = vmatpush1.bf16.msra.mxu0 %v9225
        %9383 = vmatprep.subr.bf16.mxu0 0
        %9384 = vmatpush1.bf16.msra.mxu0 %v9226
        %9385 = vmatprep.subr.bf16.mxu0 0
        %9386 = vmatpush1.bf16.msra.mxu0 %v9227
        %9387 = vmatprep.subr.bf16.mxu0 0
        %9388 = vmatpush1.bf16.msra.mxu0 %v9228
        %9389 = vmatprep.mubr.bf16.mxu0 %v8631
        %9390 = vmatmul.mubr.bf16.gmra.mrb[0].mxu0 %v8630
        %v9391 = vpop.f32.mrb[0].mxu0
        %v9392 = vadd.f32 %v8923, %v9391
        %v9393 = vpop.f32.mrb[0].mxu0
        %v9394 = vpop.f32.mrb[0].mxu0
        %v9395 = vadd.f32 %v8923, %v9394
        %v9396 = vpop.f32.mrb[0].mxu0
        %9397 = vmatprep.mubr.bf16.mxu0 %v8640
        %9398 = vmatmul.mubr.bf16.gmra.mrb[0].mxu0 %v8639
        %v9399 = vpop.f32.mrb[0].mxu0
        %v9400 = vadd.f32 %v8923, %v9399
        %v9401 = vpop.f32.mrb[0].mxu0
        %v9402 = vpop.f32.mrb[0].mxu0
        %v9403 = vadd.f32 %v8923, %v9402
        %v9404 = vpop.f32.mrb[0].mxu0
        %9405 = vmatprep.mubr.bf16.mxu0 %v8649
        %9406 = vmatmul.mubr.bf16.gmra.mrb[0].mxu0 %v8648
        %v9407 = vpop.f32.mrb[0].mxu0
        %v9408 = vadd.f32 %v8923, %v9407
        %v9409 = vpop.f32.mrb[0].mxu0
        %v9410 = vpop.f32.mrb[0].mxu0
        %v9411 = vadd.f32 %v8923, %v9410
        %v9412 = vpop.f32.mrb[0].mxu0
        %9413 = vmatprep.mubr.bf16.mxu0 %v8658
        %9414 = vmatmul.mubr.bf16.gmra.mrb[0].mxu0 %v8657
        %v9415 = vpop.f32.mrb[0].mxu0
        %v9416 = vadd.f32 %v8923, %v9415
        %v9417 = vpop.f32.mrb[0].mxu0
        %v9418 = vpop.f32.mrb[0].mxu0
        %v9419 = vadd.f32 %v8923, %v9418
        %v9420 = vpop.f32.mrb[0].mxu0
        %9421 = vmatprep.mubr.bf16.mxu0 %v8667
        %9422 = vmatmul.mubr.bf16.gmra.mrb[0].mxu0 %v8666
        %v9423 = vpop.f32.mrb[0].mxu0
        %v9424 = vadd.f32 %v8923, %v9423
        %v9425 = vpop.f32.mrb[0].mxu0
        %v9426 = vpop.f32.mrb[0].mxu0
        %v9427 = vadd.f32 %v8923, %v9426
        %v9428 = vpop.f32.mrb[0].mxu0
        %9429 = vmatprep.mubr.bf16.mxu0 %v8676
        %9430 = vmatmul.mubr.bf16.gmra.mrb[0].mxu0 %v8675
        %v9431 = vpop.f32.mrb[0].mxu0
        %v9432 = vadd.f32 %v8923, %v9431
        %v9433 = vpop.f32.mrb[0].mxu0
        %v9434 = vpop.f32.mrb[0].mxu0
        %v9435 = vadd.f32 %v8923, %v9434
        %v9436 = vpop.f32.mrb[0].mxu0
        %9437 = vmatprep.mubr.bf16.mxu0 %v8685
        %9438 = vmatmul.mubr.bf16.gmra.mrb[0].mxu0 %v8684
        %v9439 = vpop.f32.mrb[0].mxu0
        %v9440 = vadd.f32 %v8923, %v9439
        %v9441 = vpop.f32.mrb[0].mxu0
        %v9442 = vpop.f32.mrb[0].mxu0
        %v9443 = vadd.f32 %v8923, %v9442
        %v9444 = vpop.f32.mrb[0].mxu0
        %9445 = vmatprep.mubr.bf16.mxu0 %v8694
        %9446 = vmatmul.mubr.bf16.gmra.mrb[0].mxu0 %v8693
        %v9447 = vpop.f32.mrb[0].mxu0
        %v9448 = vadd.f32 %v8923, %v9447
        %v9449 = vpop.f32.mrb[0].mxu0
        %v9450 = vpop.f32.mrb[0].mxu0
        %v9451 = vadd.f32 %v8923, %v9450
        %v9452 = vpop.f32.mrb[0].mxu0
        %9453 = vmatprep.mubr.bf16.mxu0 %v8703
        %9454 = vmatmul.mubr.bf16.gmra.mrb[0].mxu0 %v8702
        %v9455 = vpop.f32.mrb[0].mxu0
        %v9456 = vadd.f32 %v8923, %v9455
        %v9457 = vpop.f32.mrb[0].mxu0
        %v9458 = vpop.f32.mrb[0].mxu0
        %v9459 = vadd.f32 %v8923, %v9458
        %v9460 = vpop.f32.mrb[0].mxu0
        %9461 = vmatprep.mubr.bf16.mxu0 %v8712
        %9462 = vmatmul.mubr.bf16.gmra.mrb[0].mxu0 %v8711
        %v9463 = vpop.f32.mrb[0].mxu0
        %v9464 = vadd.f32 %v8923, %v9463
        %v9465 = vpop.f32.mrb[0].mxu0
        %v9466 = vpop.f32.mrb[0].mxu0
        %v9467 = vadd.f32 %v8923, %v9466
        %v9468 = vpop.f32.mrb[0].mxu0
        %9469 = vmatprep.mubr.bf16.mxu0 %v8721
        %9470 = vmatmul.mubr.bf16.gmra.mrb[0].mxu0 %v8720
        %v9471 = vpop.f32.mrb[0].mxu0
        %v9472 = vadd.f32 %v8923, %v9471
        %v9473 = vpop.f32.mrb[0].mxu0
        %v9474 = vpop.f32.mrb[0].mxu0
        %v9475 = vadd.f32 %v8923, %v9474
        %v9476 = vpop.f32.mrb[0].mxu0
        %9477 = vmatprep.mubr.bf16.mxu0 %v8730
        %9478 = vmatmul.mubr.bf16.gmra.mrb[0].mxu0 %v8729
        %v9479 = vpop.f32.mrb[0].mxu0
        %v9480 = vadd.f32 %v8923, %v9479
        %v9481 = vpop.f32.mrb[0].mxu0
        %v9482 = vpop.f32.mrb[0].mxu0
        %v9483 = vadd.f32 %v8923, %v9482
        %v9484 = vpop.f32.mrb[0].mxu0
        %9485 = vmatprep.mubr.bf16.mxu0 %v8739
        %9486 = vmatmul.mubr.bf16.gmra.mrb[0].mxu0 %v8738
        %v9487 = vpop.f32.mrb[0].mxu0
        %v9488 = vadd.f32 %v8923, %v9487
        %v9489 = vpop.f32.mrb[0].mxu0
        %v9490 = vpop.f32.mrb[0].mxu0
        %v9491 = vadd.f32 %v8923, %v9490
        %v9492 = vpop.f32.mrb[0].mxu0
        %9493 = vmatprep.mubr.bf16.mxu0 %v8748
        %9494 = vmatmul.mubr.bf16.gmra.mrb[0].mxu0 %v8747
        %v9495 = vpop.f32.mrb[0].mxu0
        %v9496 = vadd.f32 %v8923, %v9495
        %v9497 = vpop.f32.mrb[0].mxu0
        %v9498 = vpop.f32.mrb[0].mxu0
        %v9499 = vadd.f32 %v8923, %v9498
        %v9500 = vpop.f32.mrb[0].mxu0
        %9501 = vmatprep.mubr.bf16.mxu0 %v8757
        %9502 = vmatmul.mubr.bf16.gmra.mrb[0].mxu0 %v8756
        %v9503 = vpop.f32.mrb[0].mxu0
        %v9504 = vadd.f32 %v8923, %v9503
        %v9505 = vpop.f32.mrb[0].mxu0
        %v9506 = vpop.f32.mrb[0].mxu0
        %v9507 = vadd.f32 %v8923, %v9506
        %v9508 = vpop.f32.mrb[0].mxu0
        %9509 = vmatprep.mubr.bf16.mxu0 %v8766
        %9510 = vmatmul.mubr.bf16.gmra.mrb[0].mxu0 %v8765
        %v9511 = vpop.f32.mrb[0].mxu0
        %v9512 = vadd.f32 %v8923, %v9511
        %v9513 = vpop.f32.mrb[0].mxu0
        %v9514 = vpop.f32.mrb[0].mxu0
        %v9515 = vadd.f32 %v8923, %v9514
        %v9516 = vpop.f32.mrb[0].mxu0
        %9517 = vdwg.mxu0
        %9518 = vmatprep.subr.bf16.mxu0 0
        %9519 = vmatpush1.bf16.msra.mxu0 %v9229
        %9520 = vmatprep.subr.bf16.mxu0 0
        %9521 = vmatpush1.bf16.msra.mxu0 %v9230
        %9522 = vmatprep.subr.bf16.mxu0 0
        %9523 = vmatpush1.bf16.msra.mxu0 %v9231
        %9524 = vmatprep.subr.bf16.mxu0 0
        %9525 = vmatpush1.bf16.msra.mxu0 %v9232
        %9526 = vmatprep.subr.bf16.mxu0 0
        %9527 = vmatpush1.bf16.msra.mxu0 %v9233
        %9528 = vmatprep.subr.bf16.mxu0 0
        %9529 = vmatpush1.bf16.msra.mxu0 %v9234
        %9530 = vmatprep.subr.bf16.mxu0 0
        %9531 = vmatpush1.bf16.msra.mxu0 %v9235
        %9532 = vmatprep.subr.bf16.mxu0 0
        %9533 = vmatpush1.bf16.msra.mxu0 %v9236
        %9534 = vmatprep.subr.bf16.mxu0 0
        %9535 = vmatpush1.bf16.msra.mxu0 %v9237
        %9536 = vmatprep.subr.bf16.mxu0 0
        %9537 = vmatpush1.bf16.msra.mxu0 %v9238
        %9538 = vmatprep.subr.bf16.mxu0 0
        %9539 = vmatpush1.bf16.msra.mxu0 %v9239
        %9540 = vmatprep.subr.bf16.mxu0 0
        %9541 = vmatpush1.bf16.msra.mxu0 %v9240
        %9542 = vmatprep.subr.bf16.mxu0 0
        %9543 = vmatpush1.bf16.msra.mxu0 %v9241
        %9544 = vmatprep.subr.bf16.mxu0 0
        %9545 = vmatpush1.bf16.msra.mxu0 %v9242
        %9546 = vmatprep.subr.bf16.mxu0 0
        %9547 = vmatpush1.bf16.msra.mxu0 %v9243
        %9548 = vmatprep.subr.bf16.mxu0 0
        %9549 = vmatpush1.bf16.msra.mxu0 %v9244
        %9550 = vmatprep.mubr.bf16.mxu0 %v8633
        %9551 = vmatmul.mubr.bf16.gmra.mrb[0].mxu0 %v8632
        %v9552 = vpop.f32.mrb[0].mxu0
        %v9553 = vadd.f32 %v9392, %v9552
        %v9554 = vpop.f32.mrb[0].mxu0
        %v9555 = vpop.f32.mrb[0].mxu0
        %v9556 = vadd.f32 %v9395, %v9555
        %v9557 = vpop.f32.mrb[0].mxu0
        %9558 = vmatprep.mubr.bf16.mxu0 %v8642
        %9559 = vmatmul.mubr.bf16.gmra.mrb[0].mxu0 %v8641
        %v9560 = vpop.f32.mrb[0].mxu0
        %v9561 = vadd.f32 %v9400, %v9560
        %v9562 = vpop.f32.mrb[0].mxu0
        %v9563 = vpop.f32.mrb[0].mxu0
        %v9564 = vadd.f32 %v9403, %v9563
        %v9565 = vpop.f32.mrb[0].mxu0
        %9566 = vmatprep.mubr.bf16.mxu0 %v8651
        %9567 = vmatmul.mubr.bf16.gmra.mrb[0].mxu0 %v8650
        %v9568 = vpop.f32.mrb[0].mxu0
        %v9569 = vadd.f32 %v9408, %v9568
        %v9570 = vpop.f32.mrb[0].mxu0
        %v9571 = vpop.f32.mrb[0].mxu0
        %v9572 = vadd.f32 %v9411, %v9571
        %v9573 = vpop.f32.mrb[0].mxu0
        %9574 = vmatprep.mubr.bf16.mxu0 %v8660
        %9575 = vmatmul.mubr.bf16.gmra.mrb[0].mxu0 %v8659
        %v9576 = vpop.f32.mrb[0].mxu0
        %v9577 = vadd.f32 %v9416, %v9576
        %v9578 = vpop.f32.mrb[0].mxu0
        %v9579 = vpop.f32.mrb[0].mxu0
        %v9580 = vadd.f32 %v9419, %v9579
        %v9581 = vpop.f32.mrb[0].mxu0
        %9582 = vmatprep.mubr.bf16.mxu0 %v8669
        %9583 = vmatmul.mubr.bf16.gmra.mrb[0].mxu0 %v8668
        %v9584 = vpop.f32.mrb[0].mxu0
        %v9585 = vadd.f32 %v9424, %v9584
        %v9586 = vpop.f32.mrb[0].mxu0
        %v9587 = vpop.f32.mrb[0].mxu0
        %v9588 = vadd.f32 %v9427, %v9587
        %v9589 = vpop.f32.mrb[0].mxu0
        %9590 = vmatprep.mubr.bf16.mxu0 %v8678
        %9591 = vmatmul.mubr.bf16.gmra.mrb[0].mxu0 %v8677
        %v9592 = vpop.f32.mrb[0].mxu0
        %v9593 = vadd.f32 %v9432, %v9592
        %v9594 = vpop.f32.mrb[0].mxu0
        %v9595 = vpop.f32.mrb[0].mxu0
        %v9596 = vadd.f32 %v9435, %v9595
        %v9597 = vpop.f32.mrb[0].mxu0
        %9598 = vmatprep.mubr.bf16.mxu0 %v8687
        %9599 = vmatmul.mubr.bf16.gmra.mrb[0].mxu0 %v8686
        %v9600 = vpop.f32.mrb[0].mxu0
        %v9601 = vadd.f32 %v9440, %v9600
        %v9602 = vpop.f32.mrb[0].mxu0
        %v9603 = vpop.f32.mrb[0].mxu0
        %v9604 = vadd.f32 %v9443, %v9603
        %v9605 = vpop.f32.mrb[0].mxu0
        %9606 = vmatprep.mubr.bf16.mxu0 %v8696
        %9607 = vmatmul.mubr.bf16.gmra.mrb[0].mxu0 %v8695
        %v9608 = vpop.f32.mrb[0].mxu0
        %v9609 = vadd.f32 %v9448, %v9608
        %v9610 = vpop.f32.mrb[0].mxu0
        %v9611 = vpop.f32.mrb[0].mxu0
        %v9612 = vadd.f32 %v9451, %v9611
        %v9613 = vpop.f32.mrb[0].mxu0
        %9614 = vmatprep.mubr.bf16.mxu0 %v8705
        %9615 = vmatmul.mubr.bf16.gmra.mrb[0].mxu0 %v8704
        %v9616 = vpop.f32.mrb[0].mxu0
        %v9617 = vadd.f32 %v9456, %v9616
        %v9618 = vpop.f32.mrb[0].mxu0
        %v9619 = vpop.f32.mrb[0].mxu0
        %v9620 = vadd.f32 %v9459, %v9619
        %v9621 = vpop.f32.mrb[0].mxu0
        %9622 = vmatprep.mubr.bf16.mxu0 %v8714
        %9623 = vmatmul.mubr.bf16.gmra.mrb[0].mxu0 %v8713
        %v9624 = vpop.f32.mrb[0].mxu0
        %v9625 = vadd.f32 %v9464, %v9624
        %v9626 = vpop.f32.mrb[0].mxu0
        %v9627 = vpop.f32.mrb[0].mxu0
        %v9628 = vadd.f32 %v9467, %v9627
        %v9629 = vpop.f32.mrb[0].mxu0
        %9630 = vmatprep.mubr.bf16.mxu0 %v8723
        %9631 = vmatmul.mubr.bf16.gmra.mrb[0].mxu0 %v8722
        %v9632 = vpop.f32.mrb[0].mxu0
        %v9633 = vadd.f32 %v9472, %v9632
        %v9634 = vpop.f32.mrb[0].mxu0
        %v9635 = vpop.f32.mrb[0].mxu0
        %v9636 = vadd.f32 %v9475, %v9635
        %v9637 = vpop.f32.mrb[0].mxu0
        %9638 = vmatprep.mubr.bf16.mxu0 %v8732
        %9639 = vmatmul.mubr.bf16.gmra.mrb[0].mxu0 %v8731
        %v9640 = vpop.f32.mrb[0].mxu0
        %v9641 = vadd.f32 %v9480, %v9640
        %v9642 = vpop.f32.mrb[0].mxu0
        %v9643 = vpop.f32.mrb[0].mxu0
        %v9644 = vadd.f32 %v9483, %v9643
        %v9645 = vpop.f32.mrb[0].mxu0
        %9646 = vmatprep.mubr.bf16.mxu0 %v8741
        %9647 = vmatmul.mubr.bf16.gmra.mrb[0].mxu0 %v8740
        %v9648 = vpop.f32.mrb[0].mxu0
        %v9649 = vadd.f32 %v9488, %v9648
        %v9650 = vpop.f32.mrb[0].mxu0
        %v9651 = vpop.f32.mrb[0].mxu0
        %v9652 = vadd.f32 %v9491, %v9651
        %v9653 = vpop.f32.mrb[0].mxu0
        %9654 = vmatprep.mubr.bf16.mxu0 %v8750
        %9655 = vmatmul.mubr.bf16.gmra.mrb[0].mxu0 %v8749
        %v9656 = vpop.f32.mrb[0].mxu0
        %v9657 = vadd.f32 %v9496, %v9656
        %v9658 = vpop.f32.mrb[0].mxu0
        %v9659 = vpop.f32.mrb[0].mxu0
        %v9660 = vadd.f32 %v9499, %v9659
        %v9661 = vpop.f32.mrb[0].mxu0
        %9662 = vmatprep.mubr.bf16.mxu0 %v8759
        %9663 = vmatmul.mubr.bf16.gmra.mrb[0].mxu0 %v8758
        %v9664 = vpop.f32.mrb[0].mxu0
        %v9665 = vadd.f32 %v9504, %v9664
        %v9666 = vpop.f32.mrb[0].mxu0
        %v9667 = vpop.f32.mrb[0].mxu0
        %v9668 = vadd.f32 %v9507, %v9667
        %v9669 = vpop.f32.mrb[0].mxu0
        %9670 = vmatprep.mubr.bf16.mxu0 %v8768
        %9671 = vmatmul.mubr.bf16.gmra.mrb[0].mxu0 %v8767
        %v9672 = vpop.f32.mrb[0].mxu0
        %v9673 = vadd.f32 %v9512, %v9672
        %v9674 = vpop.f32.mrb[0].mxu0
        %v9675 = vpop.f32.mrb[0].mxu0
        %v9676 = vadd.f32 %v9515, %v9675
        %v9677 = vpop.f32.mrb[0].mxu0
        %9678 = vdwg.mxu0
        %9679 = vmatprep.subr.bf16.mxu0 0
        %9680 = vmatpush1.bf16.msra.mxu0 %v9245
        %9681 = vmatprep.subr.bf16.mxu0 0
        %9682 = vmatpush1.bf16.msra.mxu0 %v9246
        %9683 = vmatprep.subr.bf16.mxu0 0
        %9684 = vmatpush1.bf16.msra.mxu0 %v9247
        %9685 = vmatprep.subr.bf16.mxu0 0
        %9686 = vmatpush1.bf16.msra.mxu0 %v9248
        %9687 = vmatprep.subr.bf16.mxu0 0
        %9688 = vmatpush1.bf16.msra.mxu0 %v9249
        %9689 = vmatprep.subr.bf16.mxu0 0
        %9690 = vmatpush1.bf16.msra.mxu0 %v9250
        %9691 = vmatprep.subr.bf16.mxu0 0
        %9692 = vmatpush1.bf16.msra.mxu0 %v9251
        %9693 = vmatprep.subr.bf16.mxu0 0
        %9694 = vmatpush1.bf16.msra.mxu0 %v9252
        %9695 = vmatprep.subr.bf16.mxu0 0
        %9696 = vmatpush1.bf16.msra.mxu0 %v9253
        %9697 = vmatprep.subr.bf16.mxu0 0
        %9698 = vmatpush1.bf16.msra.mxu0 %v9254
        %9699 = vmatprep.subr.bf16.mxu0 0
        %9700 = vmatpush1.bf16.msra.mxu0 %v9255
        %9701 = vmatprep.subr.bf16.mxu0 0
        %9702 = vmatpush1.bf16.msra.mxu0 %v9256
        %9703 = vmatprep.subr.bf16.mxu0 0
        %9704 = vmatpush1.bf16.msra.mxu0 %v9257
        %9705 = vmatprep.subr.bf16.mxu0 0
        %9706 = vmatpush1.bf16.msra.mxu0 %v9258
        %9707 = vmatprep.subr.bf16.mxu0 0
        %9708 = vmatpush1.bf16.msra.mxu0 %v9259
        %9709 = vmatprep.subr.bf16.mxu0 0
        %9710 = vmatpush1.bf16.msra.mxu0 %v9260
        %9711 = vmatprep.mubr.bf16.mxu0 %v8635
        %9712 = vmatmul.mubr.bf16.gmra.mrb[0].mxu0 %v8634
        %v9713 = vpop.f32.mrb[0].mxu0
        %v9714 = vadd.f32 %v9553, %v9713
        %v9715 = vpop.f32.mrb[0].mxu0
        %v9716 = vpop.f32.mrb[0].mxu0
        %v9717 = vadd.f32 %v9556, %v9716
        %v9718 = vpop.f32.mrb[0].mxu0
        %9719 = vmatprep.mubr.bf16.mxu0 %v8644
        %9720 = vmatmul.mubr.bf16.gmra.mrb[0].mxu0 %v8643
        %v9721 = vpop.f32.mrb[0].mxu0
        %v9722 = vadd.f32 %v9561, %v9721
        %v9723 = vpop.f32.mrb[0].mxu0
        %v9724 = vpop.f32.mrb[0].mxu0
        %v9725 = vadd.f32 %v9564, %v9724
        %v9726 = vpop.f32.mrb[0].mxu0
        %9727 = vmatprep.mubr.bf16.mxu0 %v8653
        %9728 = vmatmul.mubr.bf16.gmra.mrb[0].mxu0 %v8652
        %v9729 = vpop.f32.mrb[0].mxu0
        %v9730 = vadd.f32 %v9569, %v9729
        %v9731 = vpop.f32.mrb[0].mxu0
        %v9732 = vpop.f32.mrb[0].mxu0
        %v9733 = vadd.f32 %v9572, %v9732
        %v9734 = vpop.f32.mrb[0].mxu0
        %9735 = vmatprep.mubr.bf16.mxu0 %v8662
        %9736 = vmatmul.mubr.bf16.gmra.mrb[0].mxu0 %v8661
        %v9737 = vpop.f32.mrb[0].mxu0
        %v9738 = vadd.f32 %v9577, %v9737
        %v9739 = vpop.f32.mrb[0].mxu0
        %v9740 = vpop.f32.mrb[0].mxu0
        %v9741 = vadd.f32 %v9580, %v9740
        %v9742 = vpop.f32.mrb[0].mxu0
        %9743 = vmatprep.mubr.bf16.mxu0 %v8671
        %9744 = vmatmul.mubr.bf16.gmra.mrb[0].mxu0 %v8670
        %v9745 = vpop.f32.mrb[0].mxu0
        %v9746 = vadd.f32 %v9585, %v9745
        %v9747 = vpop.f32.mrb[0].mxu0
        %v9748 = vpop.f32.mrb[0].mxu0
        %v9749 = vadd.f32 %v9588, %v9748
        %v9750 = vpop.f32.mrb[0].mxu0
        %9751 = vmatprep.mubr.bf16.mxu0 %v8680
        %9752 = vmatmul.mubr.bf16.gmra.mrb[0].mxu0 %v8679
        %v9753 = vpop.f32.mrb[0].mxu0
        %v9754 = vadd.f32 %v9593, %v9753
        %v9755 = vpop.f32.mrb[0].mxu0
        %v9756 = vpop.f32.mrb[0].mxu0
        %v9757 = vadd.f32 %v9596, %v9756
        %v9758 = vpop.f32.mrb[0].mxu0
        %9759 = vmatprep.mubr.bf16.mxu0 %v8689
        %9760 = vmatmul.mubr.bf16.gmra.mrb[0].mxu0 %v8688
        %v9761 = vpop.f32.mrb[0].mxu0
        %v9762 = vadd.f32 %v9601, %v9761
        %v9763 = vpop.f32.mrb[0].mxu0
        %v9764 = vpop.f32.mrb[0].mxu0
        %v9765 = vadd.f32 %v9604, %v9764
        %v9766 = vpop.f32.mrb[0].mxu0
        %9767 = vmatprep.mubr.bf16.mxu0 %v8698
        %9768 = vmatmul.mubr.bf16.gmra.mrb[0].mxu0 %v8697
        %v9769 = vpop.f32.mrb[0].mxu0
        %v9770 = vadd.f32 %v9609, %v9769
        %v9771 = vpop.f32.mrb[0].mxu0
        %v9772 = vpop.f32.mrb[0].mxu0
        %v9773 = vadd.f32 %v9612, %v9772
        %v9774 = vpop.f32.mrb[0].mxu0
        %9775 = vmatprep.mubr.bf16.mxu0 %v8707
        %9776 = vmatmul.mubr.bf16.gmra.mrb[0].mxu0 %v8706
        %v9777 = vpop.f32.mrb[0].mxu0
        %v9778 = vadd.f32 %v9617, %v9777
        %v9779 = vpop.f32.mrb[0].mxu0
        %v9780 = vpop.f32.mrb[0].mxu0
        %v9781 = vadd.f32 %v9620, %v9780
        %v9782 = vpop.f32.mrb[0].mxu0
        %9783 = vmatprep.mubr.bf16.mxu0 %v8716
        %9784 = vmatmul.mubr.bf16.gmra.mrb[0].mxu0 %v8715
        %v9785 = vpop.f32.mrb[0].mxu0
        %v9786 = vadd.f32 %v9625, %v9785
        %v9787 = vpop.f32.mrb[0].mxu0
        %v9788 = vpop.f32.mrb[0].mxu0
        %v9789 = vadd.f32 %v9628, %v9788
        %v9790 = vpop.f32.mrb[0].mxu0
        %9791 = vmatprep.mubr.bf16.mxu0 %v8725
        %9792 = vmatmul.mubr.bf16.gmra.mrb[0].mxu0 %v8724
        %v9793 = vpop.f32.mrb[0].mxu0
        %v9794 = vadd.f32 %v9633, %v9793
        %v9795 = vpop.f32.mrb[0].mxu0
        %v9796 = vpop.f32.mrb[0].mxu0
        %v9797 = vadd.f32 %v9636, %v9796
        %v9798 = vpop.f32.mrb[0].mxu0
        %9799 = vmatprep.mubr.bf16.mxu0 %v8734
        %9800 = vmatmul.mubr.bf16.gmra.mrb[0].mxu0 %v8733
        %v9801 = vpop.f32.mrb[0].mxu0
        %v9802 = vadd.f32 %v9641, %v9801
        %v9803 = vpop.f32.mrb[0].mxu0
        %v9804 = vpop.f32.mrb[0].mxu0
        %v9805 = vadd.f32 %v9644, %v9804
        %v9806 = vpop.f32.mrb[0].mxu0
        %9807 = vmatprep.mubr.bf16.mxu0 %v8743
        %9808 = vmatmul.mubr.bf16.gmra.mrb[0].mxu0 %v8742
        %v9809 = vpop.f32.mrb[0].mxu0
        %v9810 = vadd.f32 %v9649, %v9809
        %v9811 = vpop.f32.mrb[0].mxu0
        %v9812 = vpop.f32.mrb[0].mxu0
        %v9813 = vadd.f32 %v9652, %v9812
        %v9814 = vpop.f32.mrb[0].mxu0
        %9815 = vmatprep.mubr.bf16.mxu0 %v8752
        %9816 = vmatmul.mubr.bf16.gmra.mrb[0].mxu0 %v8751
        %v9817 = vpop.f32.mrb[0].mxu0
        %v9818 = vadd.f32 %v9657, %v9817
        %v9819 = vpop.f32.mrb[0].mxu0
        %v9820 = vpop.f32.mrb[0].mxu0
        %v9821 = vadd.f32 %v9660, %v9820
        %v9822 = vpop.f32.mrb[0].mxu0
        %9823 = vmatprep.mubr.bf16.mxu0 %v8761
        %9824 = vmatmul.mubr.bf16.gmra.mrb[0].mxu0 %v8760
        %v9825 = vpop.f32.mrb[0].mxu0
        %v9826 = vadd.f32 %v9665, %v9825
        %v9827 = vpop.f32.mrb[0].mxu0
        %v9828 = vpop.f32.mrb[0].mxu0
        %v9829 = vadd.f32 %v9668, %v9828
        %v9830 = vpop.f32.mrb[0].mxu0
        %9831 = vmatprep.mubr.bf16.mxu0 %v8770
        %9832 = vmatmul.mubr.bf16.gmra.mrb[0].mxu0 %v8769
        %v9833 = vpop.f32.mrb[0].mxu0
        %v9834 = vadd.f32 %v9673, %v9833
        %v9835 = vpop.f32.mrb[0].mxu0
        %v9836 = vpop.f32.mrb[0].mxu0
        %v9837 = vadd.f32 %v9676, %v9836
        %v9838 = vpop.f32.mrb[0].mxu0
        %9839 = vdwg.mxu0
        %9840 = vmatprep.subr.bf16.mxu0 0
        %9841 = vmatpush1.bf16.msra.mxu0 %v9261
        %9842 = vmatprep.subr.bf16.mxu0 0
        %9843 = vmatpush1.bf16.msra.mxu0 %v9262
        %9844 = vmatprep.subr.bf16.mxu0 0
        %9845 = vmatpush1.bf16.msra.mxu0 %v9263
        %9846 = vmatprep.subr.bf16.mxu0 0
        %9847 = vmatpush1.bf16.msra.mxu0 %v9264
        %9848 = vmatprep.subr.bf16.mxu0 0
        %9849 = vmatpush1.bf16.msra.mxu0 %v9265
        %9850 = vmatprep.subr.bf16.mxu0 0
        %9851 = vmatpush1.bf16.msra.mxu0 %v9266
        %9852 = vmatprep.subr.bf16.mxu0 0
        %9853 = vmatpush1.bf16.msra.mxu0 %v9267
        %9854 = vmatprep.subr.bf16.mxu0 0
        %9855 = vmatpush1.bf16.msra.mxu0 %v9268
        %9856 = vmatprep.subr.bf16.mxu0 0
        %9857 = vmatpush1.bf16.msra.mxu0 %v9269
        %9858 = vmatprep.subr.bf16.mxu0 0
        %9859 = vmatpush1.bf16.msra.mxu0 %v9270
        %9860 = vmatprep.subr.bf16.mxu0 0
        %9861 = vmatpush1.bf16.msra.mxu0 %v9271
        %9862 = vmatprep.subr.bf16.mxu0 0
        %9863 = vmatpush1.bf16.msra.mxu0 %v9272
        %9864 = vmatprep.subr.bf16.mxu0 0
        %9865 = vmatpush1.bf16.msra.mxu0 %v9273
        %9866 = vmatprep.subr.bf16.mxu0 0
        %9867 = vmatpush1.bf16.msra.mxu0 %v9274
        %9868 = vmatprep.subr.bf16.mxu0 0
        %9869 = vmatpush1.bf16.msra.mxu0 %v9275
        %9870 = vmatprep.subr.bf16.mxu0 0
        %9871 = vmatpush1.bf16.msra.mxu0 %v9276
        %9872 = vmatprep.mubr.bf16.mxu0 %v8637
        %9873 = vmatmul.mubr.bf16.gmra.mrb[0].mxu0 %v8636
        %v9874 = vpop.f32.mrb[0].mxu0
        %v9875 = vadd.f32 %v9714, %v9874
        %v9876 = vpop.f32.mrb[0].mxu0
        %v9877 = vpop.f32.mrb[0].mxu0
        %v9878 = vadd.f32 %v9717, %v9877
        %v9879 = vpop.f32.mrb[0].mxu0
        %9880 = vmatprep.mubr.bf16.mxu0 %v8646
        %9881 = vmatmul.mubr.bf16.gmra.mrb[0].mxu0 %v8645
        %v9882 = vpop.f32.mrb[0].mxu0
        %v9883 = vadd.f32 %v9722, %v9882
        %v9884 = vpop.f32.mrb[0].mxu0
        %v9885 = vpop.f32.mrb[0].mxu0
        %v9886 = vadd.f32 %v9725, %v9885
        %v9887 = vpop.f32.mrb[0].mxu0
        %9888 = vmatprep.mubr.bf16.mxu0 %v8655
        %9889 = vmatmul.mubr.bf16.gmra.mrb[0].mxu0 %v8654
        %v9890 = vpop.f32.mrb[0].mxu0
        %v9891 = vadd.f32 %v9730, %v9890
        %v9892 = vpop.f32.mrb[0].mxu0
        %v9893 = vpop.f32.mrb[0].mxu0
        %v9894 = vadd.f32 %v9733, %v9893
        %v9895 = vpop.f32.mrb[0].mxu0
        %9896 = vmatprep.mubr.bf16.mxu0 %v8664
        %9897 = vmatmul.mubr.bf16.gmra.mrb[0].mxu0 %v8663
        %v9898 = vpop.f32.mrb[0].mxu0
        %v9899 = vadd.f32 %v9738, %v9898
        %v9900 = vpop.f32.mrb[0].mxu0
        %v9901 = vpop.f32.mrb[0].mxu0
        %v9902 = vadd.f32 %v9741, %v9901
        %v9903 = vpop.f32.mrb[0].mxu0
        %9904 = vmatprep.mubr.bf16.mxu0 %v8673
        %9905 = vmatmul.mubr.bf16.gmra.mrb[0].mxu0 %v8672
        %v9906 = vpop.f32.mrb[0].mxu0
        %v9907 = vadd.f32 %v9746, %v9906
        %v9908 = vpop.f32.mrb[0].mxu0
        %v9909 = vpop.f32.mrb[0].mxu0
        %v9910 = vadd.f32 %v9749, %v9909
        %v9911 = vpop.f32.mrb[0].mxu0
        %9912 = vmatprep.mubr.bf16.mxu0 %v8682
        %9913 = vmatmul.mubr.bf16.gmra.mrb[0].mxu0 %v8681
        %v9914 = vpop.f32.mrb[0].mxu0
        %v9915 = vadd.f32 %v9754, %v9914
        %v9916 = vpop.f32.mrb[0].mxu0
        %v9917 = vpop.f32.mrb[0].mxu0
        %v9918 = vadd.f32 %v9757, %v9917
        %v9919 = vpop.f32.mrb[0].mxu0
        %9920 = vmatprep.mubr.bf16.mxu0 %v8691
        %9921 = vmatmul.mubr.bf16.gmra.mrb[0].mxu0 %v8690
        %v9922 = vpop.f32.mrb[0].mxu0
        %v9923 = vadd.f32 %v9762, %v9922
        %v9924 = vpop.f32.mrb[0].mxu0
        %v9925 = vpop.f32.mrb[0].mxu0
        %v9926 = vadd.f32 %v9765, %v9925
        %v9927 = vpop.f32.mrb[0].mxu0
        %9928 = vmatprep.mubr.bf16.mxu0 %v8700
        %9929 = vmatmul.mubr.bf16.gmra.mrb[0].mxu0 %v8699
        %v9930 = vpop.f32.mrb[0].mxu0
        %v9931 = vadd.f32 %v9770, %v9930
        %v9932 = vpop.f32.mrb[0].mxu0
        %v9933 = vpop.f32.mrb[0].mxu0
        %v9934 = vadd.f32 %v9773, %v9933
        %v9935 = vpop.f32.mrb[0].mxu0
        %9936 = vmatprep.mubr.bf16.mxu0 %v8709
        %9937 = vmatmul.mubr.bf16.gmra.mrb[0].mxu0 %v8708
        %v9938 = vpop.f32.mrb[0].mxu0
        %v9939 = vadd.f32 %v9778, %v9938
        %v9940 = vpop.f32.mrb[0].mxu0
        %v9941 = vpop.f32.mrb[0].mxu0
        %v9942 = vadd.f32 %v9781, %v9941
        %v9943 = vpop.f32.mrb[0].mxu0
        %9944 = vmatprep.mubr.bf16.mxu0 %v8718
        %9945 = vmatmul.mubr.bf16.gmra.mrb[0].mxu0 %v8717
        %v9946 = vpop.f32.mrb[0].mxu0
        %v9947 = vadd.f32 %v9786, %v9946
        %v9948 = vpop.f32.mrb[0].mxu0
        %v9949 = vpop.f32.mrb[0].mxu0
        %v9950 = vadd.f32 %v9789, %v9949
        %v9951 = vpop.f32.mrb[0].mxu0
        %9952 = vmatprep.mubr.bf16.mxu0 %v8727
        %9953 = vmatmul.mubr.bf16.gmra.mrb[0].mxu0 %v8726
        %v9954 = vpop.f32.mrb[0].mxu0
        %v9955 = vadd.f32 %v9794, %v9954
        %v9956 = vpop.f32.mrb[0].mxu0
        %v9957 = vpop.f32.mrb[0].mxu0
        %v9958 = vadd.f32 %v9797, %v9957
        %v9959 = vpop.f32.mrb[0].mxu0
        %9960 = vmatprep.mubr.bf16.mxu0 %v8736
        %9961 = vmatmul.mubr.bf16.gmra.mrb[0].mxu0 %v8735
        %v9962 = vpop.f32.mrb[0].mxu0
        %v9963 = vadd.f32 %v9802, %v9962
        %v9964 = vpop.f32.mrb[0].mxu0
        %v9965 = vpop.f32.mrb[0].mxu0
        %v9966 = vadd.f32 %v9805, %v9965
        %v9967 = vpop.f32.mrb[0].mxu0
        %9968 = vmatprep.mubr.bf16.mxu0 %v8745
        %9969 = vmatmul.mubr.bf16.gmra.mrb[0].mxu0 %v8744
        %v9970 = vpop.f32.mrb[0].mxu0
        %v9971 = vadd.f32 %v9810, %v9970
        %v9972 = vpop.f32.mrb[0].mxu0
        %v9973 = vpop.f32.mrb[0].mxu0
        %v9974 = vadd.f32 %v9813, %v9973
        %v9975 = vpop.f32.mrb[0].mxu0
        %9976 = vmatprep.mubr.bf16.mxu0 %v8754
        %9977 = vmatmul.mubr.bf16.gmra.mrb[0].mxu0 %v8753
        %v9978 = vpop.f32.mrb[0].mxu0
        %v9979 = vadd.f32 %v9818, %v9978
        %v9980 = vpop.f32.mrb[0].mxu0
        %v9981 = vpop.f32.mrb[0].mxu0
        %v9982 = vadd.f32 %v9821, %v9981
        %v9983 = vpop.f32.mrb[0].mxu0
        %9984 = vmatprep.mubr.bf16.mxu0 %v8763
        %9985 = vmatmul.mubr.bf16.gmra.mrb[0].mxu0 %v8762
        %v9986 = vpop.f32.mrb[0].mxu0
        %v9987 = vadd.f32 %v9826, %v9986
        %v9988 = vpop.f32.mrb[0].mxu0
        %v9989 = vpop.f32.mrb[0].mxu0
        %v9990 = vadd.f32 %v9829, %v9989
        %v9991 = vpop.f32.mrb[0].mxu0
        %9992 = vmatprep.mubr.bf16.mxu0 %v8772
        %9993 = vmatmul.mubr.bf16.gmra.mrb[0].mxu0 %v8771
        %v9994 = vpop.f32.mrb[0].mxu0
        %v9995 = vadd.f32 %v9834, %v9994
        %v9996 = vpop.f32.mrb[0].mxu0
        %v9997 = vpop.f32.mrb[0].mxu0
        %v9998 = vadd.f32 %v9837, %v9997
        %v9999 = vpop.f32.mrb[0].mxu0
        %10000 = vdwg.mxu0
        %10001 = vmatprep.subr.bf16.mxu0 0
        %10002 = vmatpush1.bf16.msra.mxu0 %v9277
        %10003 = vmatprep.subr.bf16.mxu0 0
        %10004 = vmatpush1.bf16.msra.mxu0 %v9278
        %10005 = vmatprep.subr.bf16.mxu0 0
        %10006 = vmatpush1.bf16.msra.mxu0 %v9279
        %10007 = vmatprep.subr.bf16.mxu0 0
        %10008 = vmatpush1.bf16.msra.mxu0 %v9280
        %10009 = vmatprep.subr.bf16.mxu0 0
        %10010 = vmatpush1.bf16.msra.mxu0 %v9281
        %10011 = vmatprep.subr.bf16.mxu0 0
        %10012 = vmatpush1.bf16.msra.mxu0 %v9282
        %10013 = vmatprep.subr.bf16.mxu0 0
        %10014 = vmatpush1.bf16.msra.mxu0 %v9283
        %10015 = vmatprep.subr.bf16.mxu0 0
        %10016 = vmatpush1.bf16.msra.mxu0 %v9284
        %10017 = vmatprep.subr.bf16.mxu0 0
        %10018 = vmatpush1.bf16.msra.mxu0 0
        %10019 = vmatprep.subr.bf16.mxu0 0
        %10020 = vmatpush1.bf16.msra.mxu0 0
        %10021 = vmatprep.subr.bf16.mxu0 0
        %10022 = vmatpush1.bf16.msra.mxu0 0
        %10023 = vmatprep.subr.bf16.mxu0 0
        %10024 = vmatpush1.bf16.msra.mxu0 0
        %10025 = vmatprep.subr.bf16.mxu0 0
        %10026 = vmatpush1.bf16.msra.mxu0 0
        %10027 = vmatprep.subr.bf16.mxu0 0
        %10028 = vmatpush1.bf16.msra.mxu0 0
        %10029 = vmatprep.subr.bf16.mxu0 0
        %10030 = vmatpush1.bf16.msra.mxu0 0
        %10031 = vmatprep.subr.bf16.mxu0 0
        %10032 = vmatpush1.bf16.msra.mxu0 0
        %10033 = vmatprep.mubr.bf16.mxu0 0
        %10034 = vmatmul.mubr.bf16.gmra.mrb[0].mxu0 %v8638
        %v10035 = vpop.f32.mrb[0].mxu0
        %v10036 = vadd.f32 %v9875, %v10035
        %v10037 = vpop.f32.mrb[0].mxu0
        %v10038 = vpop.f32.mrb[0].mxu0
        %v10039 = vadd.f32 %v9878, %v10038
        %v10040 = vpop.f32.mrb[0].mxu0
        %10041 = vmatprep.mubr.bf16.mxu0 0
        %10042 = vmatmul.mubr.bf16.gmra.mrb[0].mxu0 %v8647
        %v10043 = vpop.f32.mrb[0].mxu0
        %v10044 = vadd.f32 %v9883, %v10043
        %v10045 = vpop.f32.mrb[0].mxu0
        %v10046 = vpop.f32.mrb[0].mxu0
        %v10047 = vadd.f32 %v9886, %v10046
        %v10048 = vpop.f32.mrb[0].mxu0
        %10049 = vmatprep.mubr.bf16.mxu0 0
        %10050 = vmatmul.mubr.bf16.gmra.mrb[0].mxu0 %v8656
        %v10051 = vpop.f32.mrb[0].mxu0
        %v10052 = vadd.f32 %v9891, %v10051
        %v10053 = vpop.f32.mrb[0].mxu0
        %v10054 = vpop.f32.mrb[0].mxu0
        %v10055 = vadd.f32 %v9894, %v10054
        %v10056 = vpop.f32.mrb[0].mxu0
        %10057 = vmatprep.mubr.bf16.mxu0 0
        %10058 = vmatmul.mubr.bf16.gmra.mrb[0].mxu0 %v8665
        %v10059 = vpop.f32.mrb[0].mxu0
        %v10060 = vadd.f32 %v9899, %v10059
        %v10061 = vpop.f32.mrb[0].mxu0
        %v10062 = vpop.f32.mrb[0].mxu0
        %v10063 = vadd.f32 %v9902, %v10062
        %v10064 = vpop.f32.mrb[0].mxu0
        %10065 = vmatprep.mubr.bf16.mxu0 0
        %10066 = vmatmul.mubr.bf16.gmra.mrb[0].mxu0 %v8674
        %v10067 = vpop.f32.mrb[0].mxu0
        %v10068 = vadd.f32 %v9907, %v10067
        %v10069 = vpop.f32.mrb[0].mxu0
        %v10070 = vpop.f32.mrb[0].mxu0
        %v10071 = vadd.f32 %v9910, %v10070
        %v10072 = vpop.f32.mrb[0].mxu0
        %10073 = vmatprep.mubr.bf16.mxu0 0
        %10074 = vmatmul.mubr.bf16.gmra.mrb[0].mxu0 %v8683
        %v10075 = vpop.f32.mrb[0].mxu0
        %v10076 = vadd.f32 %v9915, %v10075
        %v10077 = vpop.f32.mrb[0].mxu0
        %v10078 = vpop.f32.mrb[0].mxu0
        %v10079 = vadd.f32 %v9918, %v10078
        %v10080 = vpop.f32.mrb[0].mxu0
        %10081 = vmatprep.mubr.bf16.mxu0 0
        %10082 = vmatmul.mubr.bf16.gmra.mrb[0].mxu0 %v8692
        %v10083 = vpop.f32.mrb[0].mxu0
        %v10084 = vadd.f32 %v9923, %v10083
        %v10085 = vpop.f32.mrb[0].mxu0
        %v10086 = vpop.f32.mrb[0].mxu0
        %v10087 = vadd.f32 %v9926, %v10086
        %v10088 = vpop.f32.mrb[0].mxu0
        %10089 = vmatprep.mubr.bf16.mxu0 0
        %10090 = vmatmul.mubr.bf16.gmra.mrb[0].mxu0 %v8701
        %v10091 = vpop.f32.mrb[0].mxu0
        %v10092 = vadd.f32 %v9931, %v10091
        %v10093 = vpop.f32.mrb[0].mxu0
        %v10094 = vpop.f32.mrb[0].mxu0
        %v10095 = vadd.f32 %v9934, %v10094
        %v10096 = vpop.f32.mrb[0].mxu0
        %10097 = vmatprep.mubr.bf16.mxu0 0
        %10098 = vmatmul.mubr.bf16.gmra.mrb[0].mxu0 %v8710
        %v10099 = vpop.f32.mrb[0].mxu0
        %v10100 = vadd.f32 %v9939, %v10099
        %v10101 = vpop.f32.mrb[0].mxu0
        %v10102 = vpop.f32.mrb[0].mxu0
        %v10103 = vadd.f32 %v9942, %v10102
        %v10104 = vpop.f32.mrb[0].mxu0
        %10105 = vmatprep.mubr.bf16.mxu0 0
        %10106 = vmatmul.mubr.bf16.gmra.mrb[0].mxu0 %v8719
        %v10107 = vpop.f32.mrb[0].mxu0
        %v10108 = vadd.f32 %v9947, %v10107
        %v10109 = vpop.f32.mrb[0].mxu0
        %v10110 = vpop.f32.mrb[0].mxu0
        %v10111 = vadd.f32 %v9950, %v10110
        %v10112 = vpop.f32.mrb[0].mxu0
        %10113 = vmatprep.mubr.bf16.mxu0 0
        %10114 = vmatmul.mubr.bf16.gmra.mrb[0].mxu0 %v8728
        %v10115 = vpop.f32.mrb[0].mxu0
        %v10116 = vadd.f32 %v9955, %v10115
        %v10117 = vpop.f32.mrb[0].mxu0
        %v10118 = vpop.f32.mrb[0].mxu0
        %v10119 = vadd.f32 %v9958, %v10118
        %v10120 = vpop.f32.mrb[0].mxu0
        %10121 = vmatprep.mubr.bf16.mxu0 0
        %10122 = vmatmul.mubr.bf16.gmra.mrb[0].mxu0 %v8737
        %v10123 = vpop.f32.mrb[0].mxu0
        %v10124 = vadd.f32 %v9963, %v10123
        %v10125 = vpop.f32.mrb[0].mxu0
        %v10126 = vpop.f32.mrb[0].mxu0
        %v10127 = vadd.f32 %v9966, %v10126
        %v10128 = vpop.f32.mrb[0].mxu0
        %10129 = vmatprep.mubr.bf16.mxu0 0
        %10130 = vmatmul.mubr.bf16.gmra.mrb[0].mxu0 %v8746
        %v10131 = vpop.f32.mrb[0].mxu0
        %v10132 = vadd.f32 %v9971, %v10131
        %v10133 = vpop.f32.mrb[0].mxu0
        %v10134 = vpop.f32.mrb[0].mxu0
        %v10135 = vadd.f32 %v9974, %v10134
        %v10136 = vpop.f32.mrb[0].mxu0
        %10137 = vmatprep.mubr.bf16.mxu0 0
        %10138 = vmatmul.mubr.bf16.gmra.mrb[0].mxu0 %v8755
        %v10139 = vpop.f32.mrb[0].mxu0
        %v10140 = vadd.f32 %v9979, %v10139
        %v10141 = vpop.f32.mrb[0].mxu0
        %v10142 = vpop.f32.mrb[0].mxu0
        %v10143 = vadd.f32 %v9982, %v10142
        %v10144 = vpop.f32.mrb[0].mxu0
        %10145 = vmatprep.mubr.bf16.mxu0 0
        %10146 = vmatmul.mubr.bf16.gmra.mrb[0].mxu0 %v8764
        %v10147 = vpop.f32.mrb[0].mxu0
        %v10148 = vadd.f32 %v9987, %v10147
        %v10149 = vpop.f32.mrb[0].mxu0
        %v10150 = vpop.f32.mrb[0].mxu0
        %v10151 = vadd.f32 %v9990, %v10150
        %v10152 = vpop.f32.mrb[0].mxu0
        %10153 = vmatprep.mubr.bf16.mxu0 0
        %10154 = vmatmul.mubr.bf16.gmra.mrb[0].mxu0 %v8773
        %v10155 = vpop.f32.mrb[0].mxu0
        %v10156 = vadd.f32 %v9995, %v10155
        %v10157 = vpop.f32.mrb[0].mxu0
        %v10158 = vpop.f32.mrb[0].mxu0
        %v10159 = vadd.f32 %v9998, %v10158
        %v10160 = vpop.f32.mrb[0].mxu0
        %10161 = vdwg.mxu0
        %v10162 = vmax.f32 %v10036, 0.0
        %v10163 = vmax.f32 %v10039, 0.0
        %v10164 = vmax.f32 %v10044, 0.0
        %v10165 = vmax.f32 %v10047, 0.0
        %v10166 = vmax.f32 %v10052, 0.0
        %v10167 = vmax.f32 %v10055, 0.0
        %v10168 = vmax.f32 %v10060, 0.0
        %v10169 = vmax.f32 %v10063, 0.0
        %v10170 = vmax.f32 %v10068, 0.0
        %v10171 = vmax.f32 %v10071, 0.0
        %v10172 = vmax.f32 %v10076, 0.0
        %v10173 = vmax.f32 %v10079, 0.0
        %v10174 = vmax.f32 %v10084, 0.0
        %v10175 = vmax.f32 %v10087, 0.0
        %v10176 = vmax.f32 %v10092, 0.0
        %v10177 = vmax.f32 %v10095, 0.0
        %v10178 = vmax.f32 %v10100, 0.0
        %v10179 = vmax.f32 %v10103, 0.0
        %v10180 = vmax.f32 %v10108, 0.0
        %v10181 = vmax.f32 %v10111, 0.0
        %v10182 = vmax.f32 %v10116, 0.0
        %v10183 = vmax.f32 %v10119, 0.0
        %v10184 = vmax.f32 %v10124, 0.0
        %v10185 = vmax.f32 %v10127, 0.0
        %v10186 = vmax.f32 %v10132, 0.0
        %v10187 = vmax.f32 %v10135, 0.0
        %v10188 = vmax.f32 %v10140, 0.0
        %v10189 = vmax.f32 %v10143, 0.0
        %v10190 = vmax.f32 %v10148, 0.0
        %v10191 = vmax.f32 %v10151, 0.0
        %v10192 = vmax.f32 %v10156, 0.0
        %v10193 = vmax.f32 %v10159, 0.0
        %10194 = vst [vmem:[%s232] sm:$0xff] %v10162
        %10195 = vst [vmem:[%s232 + $0x8] sm:$0xff] %v10163
        %10196 = vst [vmem:[%s232 + $0x10] sm:$0xff] %v10164
        %10197 = vst [vmem:[%s232 + $0x18] sm:$0xff] %v10165
        %10198 = vst [vmem:[%s232 + $0x20] sm:$0xff] %v10166
        %10199 = vst [vmem:[%s232 + $0x28] sm:$0xff] %v10167
        %10200 = vst [vmem:[%s232 + $0x30] sm:$0xff] %v10168
        %10201 = vst [vmem:[%s232 + $0x38] sm:$0xff] %v10169
        %10202 = vst [vmem:[%s232 + $0x40] sm:$0xff] %v10170
        %10203 = vst [vmem:[%s232 + $0x48] sm:$0xff] %v10171
        %10204 = vst [vmem:[%s232 + $0x50] sm:$0xff] %v10172
        %10205 = vst [vmem:[%s232 + $0x58] sm:$0xff] %v10173
        %10206 = vst [vmem:[%s232 + $0x60] sm:$0xff] %v10174
        %10207 = vst [vmem:[%s232 + $0x68] sm:$0xff] %v10175
        %10208 = vst [vmem:[%s232 + $0x70] sm:$0xff] %v10176
        %10209 = vst [vmem:[%s232 + $0x78] sm:$0xff] %v10177
        %10210 = vst [vmem:[%s232 + $0x80] sm:$0xff] %v10178
        %10211 = vst [vmem:[%s232 + $0x88] sm:$0xff] %v10179
        %10212 = vst [vmem:[%s232 + $0x90] sm:$0xff] %v10180
        %10213 = vst [vmem:[%s232 + $0x98] sm:$0xff] %v10181
        %10214 = vst [vmem:[%s232 + $0xa0] sm:$0xff] %v10182
        %10215 = vst [vmem:[%s232 + $0xa8] sm:$0xff] %v10183
        %10216 = vst [vmem:[%s232 + $0xb0] sm:$0xff] %v10184
        %10217 = vst [vmem:[%s232 + $0xb8] sm:$0xff] %v10185
        %10218 = vst [vmem:[%s232 + $0xc0] sm:$0xff] %v10186
        %10219 = vst [vmem:[%s232 + $0xc8] sm:$0xff] %v10187
        %10220 = vst [vmem:[%s232 + $0xd0] sm:$0xff] %v10188
        %10221 = vst [vmem:[%s232 + $0xd8] sm:$0xff] %v10189
        %10222 = vst [vmem:[%s232 + $0xe0] sm:$0xff] %v10190
        %10223 = vst [vmem:[%s232 + $0xe8] sm:$0xff] %v10191
        %10224 = vst [vmem:[%s232 + $0xf0] sm:$0xff] %v10192
        %10225 = vst [vmem:[%s232 + $0xf8] sm:$0xff] %v10193
        %s10226 = sand.u32 %s138, 1
        %s10227 = scalar_lea.sflag [#allocation6], %s10226
        %s10228 = sand.u32 %s138, 1
        %s10229 = smul.addr %s10228, 256
        %s10230 = scalar_lea.vmem [#allocation7], %s10229
        // Predicated region
        $region45: #{tpu_custom_call.1} parent=39 // pred_check
          %p10231 = pneg %p148
        $region46: #{tpu_custom_call.1} parent=39 // pred_check_branch
          %10233 = sbr.rel (%p10231) target = $region48
        $region47: #{tpu_custom_call.1} parent=39 // pred_region
          %s10235 = ssub.s32 4096, 4096
          %10236 = vsyncadd %s10227, %s10235
          %s10237 = smul.addr %s20, 32
          %s10238 = smul.addr %s10237, 128
          %s10239 = scalar_lea.hbm %s5, %s10238
          %s10240 = sshll.u32 %s10230, 4
          %s10241 = int_to_ptr.vmem [resolvable:$true] %s10240
          %10246 = dma.vmem_to_hbm [thread:$0]  %s10241, 4096, %s10239, %s10227, 128, 128, 8
        $region48: #{tpu_custom_call.1} parent=39 // pred_fallthru
          _
      $region40: #{tpu_custom_call.1} parent=5 // pred_fallthru
        _
      %p10247 = scmp.le.s32.totalorder 2, %s15
      // Predicated region
      $region49: #{tpu_custom_call.1} parent=5 // pred_check
        %p10248 = pneg %p10247
      $region50: #{tpu_custom_call.1} parent=5 // pred_check_branch
        %10250 = sbr.rel (%p10248) target = $region52
      $region51: #{tpu_custom_call.1} parent=5 // pred_region
        %s10251 = ssub.s32 %s15, 2
        // Predicated region
        $region53: #{tpu_custom_call.1} parent=51 // pred_check
          %p10252 = pneg %p154
        $region54: #{tpu_custom_call.1} parent=51 // pred_check_branch
          %10254 = sbr.rel (%p10252) target = $region56
        $region55: #{tpu_custom_call.1} parent=51 // pred_region
          %s10255 = sand.u32 %s139, 1
          %s10256 = scalar_lea.sflag [#allocation6], %s10255
          %s10257 = sand.u32 %s139, 1
          %s10258 = smul.addr %s10257, 256
          %s10259 = scalar_lea.vmem [#allocation7], %s10258
          %10260 = dma.done %s10256, 4096
        $region56: #{tpu_custom_call.1} parent=51 // pred_fallthru
          _
      $region52: #{tpu_custom_call.1} parent=5 // pred_fallthru
        _
    $region6: #{tpu_custom_call.1} parent=1 // loop_footer
      %s19 = sadd.s32 1, %s15
    $region7: #{tpu_custom_call.1} parent=1 // loop_footer_branch
      %14 = sbr.rel target = $region3
    $region8: #{tpu_custom_call.1} parent=1 // loop_exit
      _
    %10261 = vsyncpa [#allocation5], 1
    %s10262 = scalar_lea.sflag [#allocation5], 1
    %10263 = vsyncpa %s10262, 1
    %10264 = vsyncpa [#allocation6], 1
    %s10265 = scalar_lea.sflag [#allocation6], 1
    %10266 = vsyncpa %s10265, 1

</llo_original>
